<compile_context>
chip_gen: v6e
topology: v6e:2x2x1
jax: 0.10.0
libtpu: 0.0.40
codegen_flags: <defaults>
</compile_context>

<pallas_src>
import functools
import math

import jax
import jax.numpy as jnp
from jax.experimental import pallas as pl
from jax.experimental.pallas import tpu as pltpu


def _vmem_limit_bytes():
    # v7x: 64 MiB physical VMEM per TC; v5e/v6e: 128 MiB.  Leave headroom.
    try:
        cap = int(pltpu.get_tpu_info().vmem_capacity_bytes)
    except Exception:
        cap = 64 * 1024 * 1024
    return max(32 * 1024 * 1024, min(cap * 3 // 4, 100 * 1024 * 1024))


_VMEM_LIMIT = _vmem_limit_bytes()


def _cparams(*dims):
    return pltpu.CompilerParams(dimension_semantics=tuple(dims),
                                vmem_limit_bytes=_VMEM_LIMIT)


def _graphs_per_block(G, Nn, row_target=1024):
    """Largest divisor of G with Gb*Nn*Nn <= row_target: amortizes per-grid-step
    overhead for small molecules while bounding in-kernel VMEM temporaries."""
    cap = max(1, row_target // max(1, Nn * Nn))
    gb = 1
    for d in range(1, min(G, cap) + 1):
        if G % d == 0:
            gb = d
    return gb


# ----------------------------------------------------------------------------
# GATConv ('add' mode, att='edge'): fused node+edge projections, edge score,
# masked edge_softmax, message aggregation, residual / bias / ELU epilogue.
# One grid step = Gb graphs, all heads lane-dense.
# ----------------------------------------------------------------------------
def _gat_kernel(feat_ref, bond_ref, wv_ref, wq_ref, wk_ref, wek_ref, wef_ref,
                bias_ref, sele_ref, selo_ref, o_ref, *,
                num_heads, out_feats, embeding, residual, elu):
    H, E, O = num_heads, embeding, out_feats
    HE, HO = H * E, H * O

    feat = feat_ref[...]                         # (Gb, Nn, Fin_p)
    bond = bond_ref[...]                         # (Gb, Nn, Nn, 8); ch 7 = adjacency
    Gb, Nn = feat.shape[0], feat.shape[1]

    # Fused node projections (value / query / key) on the MXU.
    feat2 = feat.reshape(Gb * Nn, feat.shape[2])
    ft = jnp.dot(feat2, wv_ref[...], preferred_element_type=jnp.float32)    # (GbNn, HO)
    q = jnp.dot(feat2, wq_ref[...], preferred_element_type=jnp.float32)     # (GbNn, HE)
    k = jnp.dot(feat2, wk_ref[...], preferred_element_type=jnp.float32)     # (GbNn, HE)

    # Fused edge projections straight from the 8-channel bond tensor; the
    # adjacency channel doubles as the bias "one" (bias only matters on real
    # edges, everything else is masked below) -> no separate bias adds.
    bond2 = bond.reshape(Gb * Nn * Nn, 8)
    ek = jnp.dot(bond2, wek_ref[...], preferred_element_type=jnp.float32)   # (GbNn^2, HE)
    ef = jnp.dot(bond2, wef_ref[...], preferred_element_type=jnp.float32)   # (GbNn^2, HO)

    mask = bond[:, :, :, 7:8] > 0.0              # (Gb, Nn, Nn, 1)  [g, src, dst]

    # mode='add': e[g,i,j,h] = sum_d (q[g,i,h,d] + k[g,j,h,d]) * ek[g,i,j,h,d]
    q3 = q.reshape(Gb, Nn, HE)
    k3 = k.reshape(Gb, Nn, HE)
    ek4 = ek.reshape(Gb, Nn, Nn, HE)
    s = (q3[:, :, None, :] + k3[:, None, :, :]) * ek4                       # lane-dense
    # per-head chunk reduction as an MXU matmul with a hoisted 0/1 selector
    e = jnp.dot(s.reshape(Gb * Nn * Nn, HE), sele_ref[...],
                preferred_element_type=jnp.float32).reshape(Gb, Nn, Nn, H)

    # edge_softmax: normalize over incoming edges of each destination (src = axis 1)
    e = jnp.where(mask, e, jnp.float32(-1e30))
    e_max = jnp.max(e, axis=1, keepdims=True)                               # (Gb,1,Nn,H)
    p = jnp.where(mask, jnp.exp(e - e_max), 0.0)
    denom = jnp.sum(p, axis=1, keepdims=True)
    a = p * pl.reciprocal(jnp.maximum(denom, jnp.float32(1e-20)), approx=False)

    # broadcast per-head attention back to lane-dense H*O via a 0/1 selector
    a_wide = jnp.dot(a.reshape(Gb * Nn * Nn, H), selo_ref[...],
                     preferred_element_type=jnp.float32).reshape(Gb, Nn, Nn, HO)

    # message[g,i,j,c] = ft[g,i,c] * edge_feat[g,i,j,c] * a[g,i,j,head(c)]
    ft3 = ft.reshape(Gb, Nn, HO)
    ef4 = ef.reshape(Gb, Nn, Nn, HO)
    rst = jnp.sum(ft3[:, :, None, :] * ef4 * a_wide, axis=1)                # (Gb, Nn, HO)

    if residual:                      # res_fc = nn.Identity(): rst + feat
        rst = rst + feat[:, :, :HO]
    rst = rst + bias_ref[...]         # explicit bias (zeros in the reference)
    if elu:                           # activation = F.elu
        rst = jnp.where(rst > 0, rst, jnp.exp(rst) - 1.0)
    o_ref[...] = rst


def gat_conv(feat, bond_adj, params, *, num_heads, out_feats, embeding,
             residual_identity=False, activation_elu=False):
    N, Fin = feat.shape
    G, Nn = bond_adj.shape[0], bond_adj.shape[1]
    H, E, O = num_heads, embeding, out_feats
    HE, HO = H * E, H * O

    # Pad the node-feature contraction dim to a lane multiple (89 -> 128 for gat1).
    Fin_p = max(128, ((Fin + 127) // 128) * 128)

    def pad_w(w):
        w = w.astype(jnp.float32)
        if Fin_p != Fin:
            w = jnp.pad(w, ((0, Fin_p - Fin), (0, 0)))
        return w

    wv, wq, wk = pad_w(params["v_w"]), pad_w(params["q_w"]), pad_w(params["k_w"])
    featp = feat.astype(jnp.float32)
    if Fin_p != Fin:
        featp = jnp.pad(featp, ((0, 0), (0, Fin_p - Fin)))
    featp = featp.reshape(G, Nn, Fin_p)

    # Edge weights with bias folded into the adjacency channel (channel 7).
    wek = jnp.concatenate([params["edge_k_w"].astype(jnp.float32),
                           params["edge_k_b"].astype(jnp.float32)[None, :]], axis=0)
    wef = jnp.concatenate([params["edge_fc_w"].astype(jnp.float32),
                           params["edge_fc_b"].astype(jnp.float32)[None, :]], axis=0)
    bias2 = params["bias"].reshape(1, HO).astype(jnp.float32)

    # Hoisted 0/1 selectors: per-head lane-chunk reduce and per-head broadcast.
    sel_e = (jax.lax.broadcasted_iota(jnp.int32, (HE, H), 0) // E ==
             jax.lax.broadcasted_iota(jnp.int32, (HE, H), 1)).astype(jnp.float32)
    sel_o = (jax.lax.broadcasted_iota(jnp.int32, (H, HO), 0) ==
             jax.lax.broadcasted_iota(jnp.int32, (H, HO), 1) // O).astype(jnp.float32)

    Gb = _graphs_per_block(G, Nn)
    NB = G // Gb

    rows = G * Nn * Nn
    flops = int(2 * N * Fin_p * (HO + 2 * HE)
                + 2 * rows * 8 * (HE + HO)
                + 2 * rows * (HE * H + H * HO)
                + rows * (2 * HE + 3 * HO + 6 * H))
    transc = int(rows * H + (N * HO if activation_elu else 0))
    bytes_acc = int(4 * (N * Fin_p + rows * 8 + N * HO
                         + Fin_p * (HO + 2 * HE) + 8 * (HE + HO)
                         + HE * H + H * HO + HO))

    rst = pl.pallas_call(
        functools.partial(_gat_kernel, num_heads=H, out_feats=O, embeding=E,
                          residual=residual_identity, elu=activation_elu),
        out_shape=jax.ShapeDtypeStruct((G, Nn, HO), jnp.float32),
        grid=(NB,),
        in_specs=[
            pl.BlockSpec((Gb, Nn, Fin_p), lambda b: (b, 0, 0)),       # node feats
            pl.BlockSpec((Gb, Nn, Nn, 8), lambda b: (b, 0, 0, 0)),    # bond + adj
            pl.BlockSpec((Fin_p, HO), lambda b: (0, 0)),              # w_v (resident)
            pl.BlockSpec((Fin_p, HE), lambda b: (0, 0)),              # w_q
            pl.BlockSpec((Fin_p, HE), lambda b: (0, 0)),              # w_k
            pl.BlockSpec((8, HE), lambda b: (0, 0)),                  # edge_k (+bias row)
            pl.BlockSpec((8, HO), lambda b: (0, 0)),                  # edge_fc (+bias row)
            pl.BlockSpec((1, HO), lambda b: (0, 0)),                  # explicit bias
            pl.BlockSpec((HE, H), lambda b: (0, 0)),                  # sel_e
            pl.BlockSpec((H, HO), lambda b: (0, 0)),                  # sel_o
        ],
        out_specs=pl.BlockSpec((Gb, Nn, HO), lambda b: (b, 0, 0)),
        compiler_params=_cparams("parallel"),
        cost_estimate=pl.CostEstimate(flops=flops, transcendentals=transc,
                                      bytes_accessed=bytes_acc),
    )(featp, bond_adj, wv, wq, wk, wek, wef, bias2, sel_e, sel_o)

    return rst.reshape(N, HO)


# ----------------------------------------------------------------------------
# MPNN (fc1 / attfc / weighted aggregation / fc2 / LeakyReLU) + full per-graph
# readout + final graph-level Linear, fused per block of Gb graphs.
# mpnn_feat and the (G, 6F) readout never touch HBM.
# ----------------------------------------------------------------------------
def _mpnn_readout_fc_kernel(belta_ref, gat_ref, dist_ref, mask_ref,
                            w1_ref, b1_ref, wa_ref, w2_ref, b2_ref,
                            wfc_ref, bfc_ref, o_ref, *, n_nodes):
    gat = gat_ref[...]                            # (Gb, Nn, F)
    Gb, Nn, F = gat.shape
    gat2d = gat.reshape(Gb * Nn, F)

    # fc1 + LeakyReLU(0.2) and attfc fused on the MXU
    fs = jnp.dot(gat2d, w1_ref[...], preferred_element_type=jnp.float32) + b1_ref[...]
    fs = jnp.where(fs > 0, fs, 0.2 * fs)
    e = jnp.dot(gat2d, wa_ref[...], preferred_element_type=jnp.float32)    # (Gb*Nn, 1)

    # edge weight = belta / dist on existing edges, 0 elsewhere
    dist = dist_ref[...]                          # (Gb, Nn, Nn)  [g, dst, src]
    mask = mask_ref[...] > 0.0
    belta = belta_ref[0]
    w = jnp.where(mask, belta * pl.reciprocal(jnp.where(mask, dist, 1.0),
                                              approx=False), 0.0)

    # ft[g,d,f] = sum_s w[g,d,s] * fs[g,s,f]  (plain batched matmul, no transpose)
    fs3 = fs.reshape(Gb, Nn, F)
    ft = jnp.einsum('gds,gsf->gdf', w, fs3, preferred_element_type=jnp.float32)

    rst = ft + e.reshape(Gb, Nn, 1) * gat
    mp = jnp.dot(rst.reshape(Gb * Nn, F), w2_ref[...],
                 preferred_element_type=jnp.float32) + b2_ref[...]
    mp = jnp.where(mp > 0, mp, 0.2 * mp)          # LeakyReLU(0.2)
    mp3 = mp.reshape(Gb, Nn, F)

    inv_n = jnp.float32(1.0 / n_nodes)
    sum_g = jnp.sum(gat, axis=1)                  # (Gb, F)
    max_g = jnp.max(gat, axis=1)
    sum_m = jnp.sum(mp3, axis=1)
    max_m = jnp.max(mp3, axis=1)
    # readout = [sum_gat, max_gat, sum_mpnn, max_mpnn, mean_mpnn, mean_gat] @ fc
    pooled = jnp.concatenate(
        [sum_g, max_g, sum_m, max_m, sum_m * inv_n, sum_g * inv_n], axis=-1)
    out = jnp.dot(pooled, wfc_ref[...], preferred_element_type=jnp.float32)
    o_ref[0] = out + bfc_ref[...]


def mpnn_readout_fc(gat_feat, dist, dist_mask, mpnn_params, fc_w, fc_b, G, Nn):
    N, F = gat_feat.shape
    hidden = fc_w.shape[1]
    Gb = _graphs_per_block(G, Nn)
    NB = G // Gb

    # feed dist/mask transposed so the aggregation is a standard (dst,src)@(src,F)
    dist_t = jnp.swapaxes(dist.astype(jnp.float32), 1, 2)
    mask_t = jnp.swapaxes(dist_mask.astype(jnp.float32), 1, 2)

    flops = int(4 * N * F * F + 2 * N * F + 2 * G * Nn * Nn * F
                + 2 * G * 6 * F * hidden + 12 * N * F)
    bytes_acc = int(4 * (N * F + 2 * G * Nn * Nn + G * hidden
                         + 2 * F * F + 6 * F * hidden + 3 * F + hidden + 1))

    out = pl.pallas_call(
        functools.partial(_mpnn_readout_fc_kernel, n_nodes=Nn),
        out_shape=jax.ShapeDtypeStruct((NB, Gb, hidden), jnp.float32),
        grid=(NB,),
        in_specs=[
            pl.BlockSpec(memory_space=pltpu.MemorySpace.SMEM),        # belta (scalar)
            pl.BlockSpec((Gb, Nn, F), lambda b: (b, 0, 0)),           # gat_feat
            pl.BlockSpec((Gb, Nn, Nn), lambda b: (b, 0, 0)),          # dist^T
            pl.BlockSpec((Gb, Nn, Nn), lambda b: (b, 0, 0)),          # dist_mask^T
            pl.BlockSpec((F, F), lambda b: (0, 0)),                   # fc1_w (resident)
            pl.BlockSpec((1, F), lambda b: (0, 0)),                   # fc1_b
            pl.BlockSpec((F, 1), lambda b: (0, 0)),                   # attfc_w
            pl.BlockSpec((F, F), lambda b: (0, 0)),                   # fc2_w
            pl.BlockSpec((1, F), lambda b: (0, 0)),                   # fc2_b
            pl.BlockSpec((6 * F, hidden), lambda b: (0, 0)),          # final fc_w
            pl.BlockSpec((1, hidden), lambda b: (0, 0)),              # final fc_b
        ],
        out_specs=pl.BlockSpec((1, Gb, hidden), lambda b: (b, 0, 0)),
        compiler_params=_cparams("parallel"),
        cost_estimate=pl.CostEstimate(flops=flops, transcendentals=0,
                                      bytes_accessed=bytes_acc),
    )(mpnn_params["belta"].reshape(1).astype(jnp.float32),
      gat_feat.reshape(G, Nn, F),
      dist_t, mask_t,
      mpnn_params["fc1_w"].astype(jnp.float32),
      mpnn_params["fc1_b"].reshape(1, F).astype(jnp.float32),
      mpnn_params["attfc_w"].astype(jnp.float32),
      mpnn_params["fc2_w"].astype(jnp.float32),
      mpnn_params["fc2_b"].reshape(1, F).astype(jnp.float32),
      fc_w.astype(jnp.float32),
      fc_b.reshape(1, hidden).astype(jnp.float32))

    return out.reshape(G, hidden)


# ----------------------------------------------------------------------------
# Full GNN forward (3 pallas_calls total)
# ----------------------------------------------------------------------------
def gnn_forward(params, atom_feature, adj, bond, dist, dist_mask, G, Nn):
    # 8-channel edge tensor: [7 bond features | adjacency {0,1}]
    bond_adj = jnp.concatenate(
        [bond.astype(jnp.float32), adj.astype(jnp.float32)[..., None]], axis=-1)
    # gat: 89 -> 8 heads x 32 (explicit zero bias, no residual, no activation)
    batch_feature = gat_conv(atom_feature, bond_adj, params["gat1"],
                             num_heads=8, out_feats=32, embeding=32)
    # gat2: 256 -> 1 head x 256, identity residual, explicit zero bias, ELU
    gat_feat = gat_conv(batch_feature, bond_adj, params["gat2"],
                        num_heads=1, out_feats=256, embeding=32,
                        residual_identity=True, activation_elu=True)
    # MPNN + graph readout + final Linear fused -> (G, hidden)
    return mpnn_readout_fc(gat_feat, dist, dist_mask, params["mpnn"],
                           params["fc_w"], params["fc_b"], G, Nn)


# ----------------------------------------------------------------------------
# Deterministic parameter init (shapes from the module's __init__)
# ----------------------------------------------------------------------------
def init_params(key, hidden_size):
    gain = math.sqrt(2.0)   # nn.init.calculate_gain('relu')
    keys = iter(jax.random.split(key, 40))

    def xavier(fi, fo):
        std = gain * math.sqrt(2.0 / (fi + fo))
        return std * jax.random.normal(next(keys), (fi, fo), jnp.float32)

    def default_w(fi, fo):
        bound = 1.0 / math.sqrt(fi)
        return jax.random.uniform(next(keys), (fi, fo), jnp.float32, -bound, bound)

    def default_b(fi, fo):
        bound = 1.0 / math.sqrt(fi)
        return jax.random.uniform(next(keys), (fo,), jnp.float32, -bound, bound)

    gat1 = dict(
        q_w=xavier(89, 8 * 32), k_w=xavier(89, 8 * 32), v_w=xavier(89, 8 * 32),
        edge_fc_w=default_w(7, 8 * 32), edge_fc_b=default_b(7, 8 * 32),
        edge_k_w=default_w(7, 8 * 32), edge_k_b=default_b(7, 8 * 32),
        bias=jnp.zeros((8 * 32,), jnp.float32),
    )
    gat2 = dict(
        q_w=xavier(256, 1 * 32), k_w=xavier(256, 1 * 32), v_w=xavier(256, 1 * 256),
        edge_fc_w=default_w(7, 256), edge_fc_b=default_b(7, 256),
        edge_k_w=default_w(7, 32), edge_k_b=default_b(7, 32),
        bias=jnp.zeros((256,), jnp.float32),
    )
    mpnn_p = dict(
        fc1_w=default_w(256, 256), fc1_b=default_b(256, 256),
        fc2_w=default_w(256, 256), fc2_b=default_b(256, 256),
        attfc_w=default_w(256, 1),
        belta=jnp.full((1,), 0.5, jnp.float32),  # uninitialized nn.Parameter in reference
    )
    return dict(gat1=gat1, gat2=gat2, mpnn=mpnn_p,
                fc_w=default_w(32 * 8 * 6, hidden_size),
                fc_b=default_b(32 * 8 * 6, hidden_size))


if __name__ == "__main__":
    # TODO(synk): RDKit/DGL graph construction + pickle loading (prepare_data /
    # generate_graph) has no Pallas equivalent; synthetic dense graphs are built here.
    G, Nn = 2, 16            # 2 molecule graphs, 16 atoms each
    N = G * Nn
    hidden_size = 32

    key = jax.random.PRNGKey(0)
    ks = jax.random.split(key, 8)

    atom_feature = jax.random.normal(ks[0], (N, 89), jnp.float32)

    # symmetric adjacency with self loops (guarantees in-degree >= 1)
    r = jax.random.uniform(ks[1], (G, Nn, Nn))
    adj = (0.5 * (r + jnp.swapaxes(r, 1, 2)) > 0.6).astype(jnp.float32)
    eye = jnp.eye(Nn, dtype=jnp.float32)[None]
    adj = jnp.maximum(adj, eye)

    # dense 7-dim bond features; only entries on edges matter (rest masked out)
    bond = jax.random.uniform(ks[2], (G, Nn, Nn, 7), jnp.float32) * adj[..., None]

    # distance graph: symmetric mask (no self loops) + positive distances
    rd = jax.random.uniform(ks[3], (G, Nn, Nn))
    dist_mask = (0.5 * (rd + jnp.swapaxes(rd, 1, 2)) > 0.5).astype(jnp.float32)
    dist_mask = dist_mask * (1.0 - eye)
    d = 0.5 + 2.5 * jax.random.uniform(ks[4], (G, Nn, Nn), jnp.float32)
    dist = 0.5 * (d + jnp.swapaxes(d, 1, 2))

    params = init_params(ks[5], hidden_size)

    fwd = jax.jit(gnn_forward, static_argnums=(6, 7))
    out = fwd(params, atom_feature, adj, bond, dist, dist_mask, G, Nn)
    out = jax.block_until_ready(out)
    assert out.shape == (G, hidden_size), out.shape
    assert bool(jnp.all(jnp.isfinite(out)))
    print("KERNEL_OK")
</pallas_src>

<mosaic_0001>
module attributes {stable_mosaic.version = 11 : i64} {
  func.func @_gat_kernel(%arg0: i32, %arg1: memref<2x16x128xf32, #tpu.memory_space<vmem>>, %arg2: memref<2x16x16x8xf32, #tpu.memory_space<vmem>>, %arg3: memref<128x256xf32, #tpu.memory_space<vmem>>, %arg4: memref<128x256xf32, #tpu.memory_space<vmem>>, %arg5: memref<128x256xf32, #tpu.memory_space<vmem>>, %arg6: memref<8x256xf32, #tpu.memory_space<vmem>>, %arg7: memref<8x256xf32, #tpu.memory_space<vmem>>, %arg8: memref<1x256xf32, #tpu.memory_space<vmem>>, %arg9: memref<256x8xf32, #tpu.memory_space<vmem>>, %arg10: memref<8x256xf32, #tpu.memory_space<vmem>>, %arg11: memref<2x16x256xf32, #tpu.memory_space<vmem>>) attributes {dimension_semantics = [#tpu.dimension_semantics<parallel>], iteration_bounds = array<i64: 1>, scalar_prefetch = 0 : i64, scratch_operands = 0 : i64, tpu.core_type = #tpu.core_type<tc>, window_params = [{transform_indices = @transform_0, window_bounds = array<i64: 2, 16, 128>}, {transform_indices = @transform_1, window_bounds = array<i64: 2, 16, 16, 8>}, {pipeline_mode = #tpu.pipeline_mode<synchronous>, transform_indices = @transform_2, window_bounds = array<i64: 128, 256>}, {pipeline_mode = #tpu.pipeline_mode<synchronous>, transform_indices = @transform_3, window_bounds = array<i64: 128, 256>}, {pipeline_mode = #tpu.pipeline_mode<synchronous>, transform_indices = @transform_4, window_bounds = array<i64: 128, 256>}, {pipeline_mode = #tpu.pipeline_mode<synchronous>, transform_indices = @transform_5, window_bounds = array<i64: 8, 256>}, {pipeline_mode = #tpu.pipeline_mode<synchronous>, transform_indices = @transform_6, window_bounds = array<i64: 8, 256>}, {pipeline_mode = #tpu.pipeline_mode<synchronous>, transform_indices = @transform_7, window_bounds = array<i64: 1, 256>}, {pipeline_mode = #tpu.pipeline_mode<synchronous>, transform_indices = @transform_8, window_bounds = array<i64: 256, 8>}, {pipeline_mode = #tpu.pipeline_mode<synchronous>, transform_indices = @transform_9, window_bounds = array<i64: 8, 256>}, {transform_indices = @transform_10, window_bounds = array<i64: 2, 16, 256>}]} {
    %c0 = arith.constant 0 : index
    %c0_0 = arith.constant 0 : index
    %c0_1 = arith.constant 0 : index
    %0 = vector.load %arg1[%c0, %c0_0, %c0_1] : memref<2x16x128xf32, #tpu.memory_space<vmem>>, vector<2x16x128xf32>
    %c0_2 = arith.constant 0 : index
    %c0_3 = arith.constant 0 : index
    %c0_4 = arith.constant 0 : index
    %c0_5 = arith.constant 0 : index
    %1 = vector.load %arg2[%c0_2, %c0_3, %c0_4, %c0_5] : memref<2x16x16x8xf32, #tpu.memory_space<vmem>>, vector<2x16x16x8xf32>
    %2 = vector.shape_cast %0 : vector<2x16x128xf32> to vector<32x128xf32>
    %c0_6 = arith.constant 0 : index
    %c0_7 = arith.constant 0 : index
    %3 = vector.load %arg3[%c0_6, %c0_7] : memref<128x256xf32, #tpu.memory_space<vmem>>, vector<128x256xf32>
    %cst = arith.constant dense<0.000000e+00> : vector<32x256xf32>
    %4 = tpu.matmul %2, %3, %cst {dimension_numbers = #tpu.dot_dimension_numbers<[1], [0], [0], [1], [0, 0, 1, 1], [], []>} : vector<32x128xf32>, vector<128x256xf32>, vector<32x256xf32> -> vector<32x256xf32>
    %c0_8 = arith.constant 0 : index
    %c0_9 = arith.constant 0 : index
    %5 = vector.load %arg4[%c0_8, %c0_9] : memref<128x256xf32, #tpu.memory_space<vmem>>, vector<128x256xf32>
    %cst_10 = arith.constant dense<0.000000e+00> : vector<32x256xf32>
    %6 = tpu.matmul %2, %5, %cst_10 {dimension_numbers = #tpu.dot_dimension_numbers<[1], [0], [0], [1], [0, 0, 1, 1], [], []>} : vector<32x128xf32>, vector<128x256xf32>, vector<32x256xf32> -> vector<32x256xf32>
    %c0_11 = arith.constant 0 : index
    %c0_12 = arith.constant 0 : index
    %7 = vector.load %arg5[%c0_11, %c0_12] : memref<128x256xf32, #tpu.memory_space<vmem>>, vector<128x256xf32>
    %cst_13 = arith.constant dense<0.000000e+00> : vector<32x256xf32>
    %8 = tpu.matmul %2, %7, %cst_13 {dimension_numbers = #tpu.dot_dimension_numbers<[1], [0], [0], [1], [0, 0, 1, 1], [], []>} : vector<32x128xf32>, vector<128x256xf32>, vector<32x256xf32> -> vector<32x256xf32>
    %9 = vector.shape_cast %1 : vector<2x16x16x8xf32> to vector<512x8xf32>
    %c0_14 = arith.constant 0 : index
    %c0_15 = arith.constant 0 : index
    %10 = vector.load %arg6[%c0_14, %c0_15] : memref<8x256xf32, #tpu.memory_space<vmem>>, vector<8x256xf32>
    %cst_16 = arith.constant dense<0.000000e+00> : vector<512x256xf32>
    %11 = tpu.matmul %9, %10, %cst_16 {dimension_numbers = #tpu.dot_dimension_numbers<[1], [0], [0], [1], [0, 0, 1, 1], [], []>} : vector<512x8xf32>, vector<8x256xf32>, vector<512x256xf32> -> vector<512x256xf32>
    %c0_17 = arith.constant 0 : index
    %c0_18 = arith.constant 0 : index
    %12 = vector.load %arg7[%c0_17, %c0_18] : memref<8x256xf32, #tpu.memory_space<vmem>>, vector<8x256xf32>
    %cst_19 = arith.constant dense<0.000000e+00> : vector<512x256xf32>
    %13 = tpu.matmul %9, %12, %cst_19 {dimension_numbers = #tpu.dot_dimension_numbers<[1], [0], [0], [1], [0, 0, 1, 1], [], []>} : vector<512x8xf32>, vector<8x256xf32>, vector<512x256xf32> -> vector<512x256xf32>
    %14 = vector.extract_strided_slice %1 {offsets = [0, 0, 0, 7], sizes = [2, 16, 16, 1], strides = [1, 1, 1, 1]} : vector<2x16x16x8xf32> to vector<2x16x16x1xf32>
    %cst_20 = arith.constant 0.000000e+00 : f32
    %15 = vector.broadcast %cst_20 : f32 to vector<2x16x16x1xf32>
    %16 = arith.cmpf ogt, %14, %15 : vector<2x16x16x1xf32>
    %17 = vector.shape_cast %6 : vector<32x256xf32> to vector<2x16x256xf32>
    %18 = vector.shape_cast %8 : vector<32x256xf32> to vector<2x16x256xf32>
    %19 = vector.shape_cast %11 : vector<512x256xf32> to vector<2x16x16x256xf32>
    %20 = vector.shape_cast %17 : vector<2x16x256xf32> to vector<2x16x1x256xf32>
    %21 = vector.shape_cast %18 : vector<2x16x256xf32> to vector<2x1x16x256xf32>
    %22 = vector.broadcast %20 : vector<2x16x1x256xf32> to vector<2x16x16x256xf32>
    %23 = vector.broadcast %21 : vector<2x1x16x256xf32> to vector<2x16x16x256xf32>
    %24 = arith.addf %22, %23 : vector<2x16x16x256xf32>
    %25 = arith.mulf %24, %19 : vector<2x16x16x256xf32>
    %26 = vector.shape_cast %25 : vector<2x16x16x256xf32> to vector<512x256xf32>
    %c0_21 = arith.constant 0 : index
    %c0_22 = arith.constant 0 : index
    %27 = vector.load %arg9[%c0_21, %c0_22] : memref<256x8xf32, #tpu.memory_space<vmem>>, vector<256x8xf32>
    %cst_23 = arith.constant dense<0.000000e+00> : vector<512x8xf32>
    %28 = tpu.matmul %26, %27, %cst_23 {dimension_numbers = #tpu.dot_dimension_numbers<[1], [0], [0], [1], [0, 0, 1, 1], [], []>} : vector<512x256xf32>, vector<256x8xf32>, vector<512x8xf32> -> vector<512x8xf32>
    %29 = vector.shape_cast %28 : vector<512x8xf32> to vector<2x16x16x8xf32>
    %cst_24 = arith.constant -1.000000e+30 : f32
    %30 = vector.shape_cast %16 : vector<2x16x16x1xi1> to vector<2x16x16x1xi1>
    %31 = vector.broadcast %30 : vector<2x16x16x1xi1> to vector<2x16x16x8xi1>
    %32 = vector.broadcast %cst_24 : f32 to vector<2x16x16x8xf32>
    %33 = arith.select %31, %29, %32 : vector<2x16x16x8xi1>, vector<2x16x16x8xf32>
    %cst_25 = arith.constant dense<0xFF800000> : vector<2x16x8xf32>
    %34 = vector.multi_reduction <maximumf>, %33, %cst_25 [1] : vector<2x16x16x8xf32> to vector<2x16x8xf32>
    %35 = vector.shape_cast %34 : vector<2x16x8xf32> to vector<2x1x16x8xf32>
    %36 = vector.broadcast %35 : vector<2x1x16x8xf32> to vector<2x16x16x8xf32>
    %37 = arith.subf %33, %36 : vector<2x16x16x8xf32>
    %38 = math.exp %37 : vector<2x16x16x8xf32>
    %cst_26 = arith.constant 0.000000e+00 : f32
    %39 = vector.shape_cast %16 : vector<2x16x16x1xi1> to vector<2x16x16x1xi1>
    %40 = vector.broadcast %39 : vector<2x16x16x1xi1> to vector<2x16x16x8xi1>
    %41 = vector.broadcast %cst_26 : f32 to vector<2x16x16x8xf32>
    %42 = arith.select %40, %38, %41 : vector<2x16x16x8xi1>, vector<2x16x16x8xf32>
    %cst_27 = arith.constant dense<0.000000e+00> : vector<2x16x8xf32>
    %43 = vector.multi_reduction <add>, %42, %cst_27 [1] : vector<2x16x16x8xf32> to vector<2x16x8xf32>
    %44 = vector.shape_cast %43 : vector<2x16x8xf32> to vector<2x1x16x8xf32>
    %cst_28 = arith.constant 9.99999968E-21 : f32
    %45 = vector.broadcast %cst_28 : f32 to vector<2x1x16x8xf32>
    %46 = arith.maximumf %44, %45 : vector<2x1x16x8xf32>
    %47 = tpu.reciprocal %46 : vector<2x1x16x8xf32> -> vector<2x1x16x8xf32>
    %48 = vector.broadcast %47 : vector<2x1x16x8xf32> to vector<2x16x16x8xf32>
    %49 = arith.mulf %42, %48 : vector<2x16x16x8xf32>
    %50 = vector.shape_cast %49 : vector<2x16x16x8xf32> to vector<512x8xf32>
    %c0_29 = arith.constant 0 : index
    %c0_30 = arith.constant 0 : index
    %51 = vector.load %arg10[%c0_29, %c0_30] : memref<8x256xf32, #tpu.memory_space<vmem>>, vector<8x256xf32>
    %cst_31 = arith.constant dense<0.000000e+00> : vector<512x256xf32>
    %52 = tpu.matmul %50, %51, %cst_31 {dimension_numbers = #tpu.dot_dimension_numbers<[1], [0], [0], [1], [0, 0, 1, 1], [], []>} : vector<512x8xf32>, vector<8x256xf32>, vector<512x256xf32> -> vector<512x256xf32>
    %53 = vector.shape_cast %52 : vector<512x256xf32> to vector<2x16x16x256xf32>
    %54 = vector.shape_cast %4 : vector<32x256xf32> to vector<2x16x256xf32>
    %55 = vector.shape_cast %13 : vector<512x256xf32> to vector<2x16x16x256xf32>
    %56 = vector.shape_cast %54 : vector<2x16x256xf32> to vector<2x16x1x256xf32>
    %57 = vector.broadcast %56 : vector<2x16x1x256xf32> to vector<2x16x16x256xf32>
    %58 = arith.mulf %57, %55 : vector<2x16x16x256xf32>
    %59 = arith.mulf %58, %53 : vector<2x16x16x256xf32>
    %cst_32 = arith.constant dense<0.000000e+00> : vector<2x16x256xf32>
    %60 = vector.multi_reduction <add>, %59, %cst_32 [1] : vector<2x16x16x256xf32> to vector<2x16x256xf32>
    %c0_33 = arith.constant 0 : index
    %c0_34 = arith.constant 0 : index
    %61 = vector.load %arg8[%c0_33, %c0_34] : memref<1x256xf32, #tpu.memory_space<vmem>>, vector<1x256xf32>
    %62 = vector.shape_cast %61 : vector<1x256xf32> to vector<1x1x256xf32>
    %63 = vector.broadcast %62 : vector<1x1x256xf32> to vector<2x16x256xf32>
    %64 = arith.addf %60, %63 : vector<2x16x256xf32>
    %c0_35 = arith.constant 0 : index
    %c0_36 = arith.constant 0 : index
    %c0_37 = arith.constant 0 : index
    %65 = vector.load %arg11[%c0_35, %c0_36, %c0_37] : memref<2x16x256xf32, #tpu.memory_space<vmem>>, vector<2x16x256xf32>
    tpu.vector_store %arg11[%c0_35, %c0_36, %c0_37], %64 {strides = array<i32>} : memref<2x16x256xf32, #tpu.memory_space<vmem>>, vector<2x16x256xf32>,
    return
  }
  func.func @transform_0(%arg0: i32) -> (i32, i32, i32) {
    %c0_i32 = arith.constant 0 : i32
    %c0_i32_0 = arith.constant 0 : i32
    %c0_i32_1 = arith.constant 0 : i32
    return %arg0, %c0_i32, %c0_i32_0 : i32, i32, i32
  }
  func.func @transform_1(%arg0: i32) -> (i32, i32, i32, i32) {
    %c0_i32 = arith.constant 0 : i32
    %c0_i32_0 = arith.constant 0 : i32
    %c0_i32_1 = arith.constant 0 : i32
    %c0_i32_2 = arith.constant 0 : i32
    return %arg0, %c0_i32, %c0_i32_0, %c0_i32_1 : i32, i32, i32, i32
  }
  func.func @transform_2(%arg0: i32) -> (i32, i32) {
    %c0_i32 = arith.constant 0 : i32
    %c0_i32_0 = arith.constant 0 : i32
    %c0_i32_1 = arith.constant 0 : i32
    return %c0_i32, %c0_i32_0 : i32, i32
  }
  func.func @transform_3(%arg0: i32) -> (i32, i32) {
    %c0_i32 = arith.constant 0 : i32
    %c0_i32_0 = arith.constant 0 : i32
    %c0_i32_1 = arith.constant 0 : i32
    return %c0_i32, %c0_i32_0 : i32, i32
  }
  func.func @transform_4(%arg0: i32) -> (i32, i32) {
    %c0_i32 = arith.constant 0 : i32
    %c0_i32_0 = arith.constant 0 : i32
    %c0_i32_1 = arith.constant 0 : i32
    return %c0_i32, %c0_i32_0 : i32, i32
  }
  func.func @transform_5(%arg0: i32) -> (i32, i32) {
    %c0_i32 = arith.constant 0 : i32
    %c0_i32_0 = arith.constant 0 : i32
    %c0_i32_1 = arith.constant 0 : i32
    return %c0_i32, %c0_i32_0 : i32, i32
  }
  func.func @transform_6(%arg0: i32) -> (i32, i32) {
    %c0_i32 = arith.constant 0 : i32
    %c0_i32_0 = arith.constant 0 : i32
    %c0_i32_1 = arith.constant 0 : i32
    return %c0_i32, %c0_i32_0 : i32, i32
  }
  func.func @transform_7(%arg0: i32) -> (i32, i32) {
    %c0_i32 = arith.constant 0 : i32
    %c0_i32_0 = arith.constant 0 : i32
    %c0_i32_1 = arith.constant 0 : i32
    return %c0_i32, %c0_i32_0 : i32, i32
  }
  func.func @transform_8(%arg0: i32) -> (i32, i32) {
    %c0_i32 = arith.constant 0 : i32
    %c0_i32_0 = arith.constant 0 : i32
    %c0_i32_1 = arith.constant 0 : i32
    return %c0_i32, %c0_i32_0 : i32, i32
  }
  func.func @transform_9(%arg0: i32) -> (i32, i32) {
    %c0_i32 = arith.constant 0 : i32
    %c0_i32_0 = arith.constant 0 : i32
    %c0_i32_1 = arith.constant 0 : i32
    return %c0_i32, %c0_i32_0 : i32, i32
  }
  func.func @transform_10(%arg0: i32) -> (i32, i32, i32) {
    %c0_i32 = arith.constant 0 : i32
    %c0_i32_0 = arith.constant 0 : i32
    %c0_i32_1 = arith.constant 0 : i32
    return %arg0, %c0_i32, %c0_i32_0 : i32, i32, i32
  }
}

module attributes {stable_mosaic.version = 11 : i64} {
  func.func @_gat_kernel(%arg0: i32, %arg1: memref<2x16x256xf32, #tpu.memory_space<vmem>>, %arg2: memref<2x16x16x8xf32, #tpu.memory_space<vmem>>, %arg3: memref<256x256xf32, #tpu.memory_space<vmem>>, %arg4: memref<256x32xf32, #tpu.memory_space<vmem>>, %arg5: memref<256x32xf32, #tpu.memory_space<vmem>>, %arg6: memref<8x32xf32, #tpu.memory_space<vmem>>, %arg7: memref<8x256xf32, #tpu.memory_space<vmem>>, %arg8: memref<1x256xf32, #tpu.memory_space<vmem>>, %arg9: memref<32x1xf32, #tpu.memory_space<vmem>>, %arg10: memref<1x256xf32, #tpu.memory_space<vmem>>, %arg11: memref<2x16x256xf32, #tpu.memory_space<vmem>>) attributes {dimension_semantics = [#tpu.dimension_semantics<parallel>], iteration_bounds = array<i64: 1>, scalar_prefetch = 0 : i64, scratch_operands = 0 : i64, tpu.core_type = #tpu.core_type<tc>, window_params = [{transform_indices = @transform_0, window_bounds = array<i64: 2, 16, 256>}, {transform_indices = @transform_1, window_bounds = array<i64: 2, 16, 16, 8>}, {pipeline_mode = #tpu.pipeline_mode<synchronous>, transform_indices = @transform_2, window_bounds = array<i64: 256, 256>}, {pipeline_mode = #tpu.pipeline_mode<synchronous>, transform_indices = @transform_3, window_bounds = array<i64: 256, 32>}, {pipeline_mode = #tpu.pipeline_mode<synchronous>, transform_indices = @transform_4, window_bounds = array<i64: 256, 32>}, {pipeline_mode = #tpu.pipeline_mode<synchronous>, transform_indices = @transform_5, window_bounds = array<i64: 8, 32>}, {pipeline_mode = #tpu.pipeline_mode<synchronous>, transform_indices = @transform_6, window_bounds = array<i64: 8, 256>}, {pipeline_mode = #tpu.pipeline_mode<synchronous>, transform_indices = @transform_7, window_bounds = array<i64: 1, 256>}, {pipeline_mode = #tpu.pipeline_mode<synchronous>, transform_indices = @transform_8, window_bounds = array<i64: 32, 1>}, {pipeline_mode = #tpu.pipeline_mode<synchronous>, transform_indices = @transform_9, window_bounds = array<i64: 1, 256>}, {transform_indices = @transform_10, window_bounds = array<i64: 2, 16, 256>}]} {
    %c0 = arith.constant 0 : index
    %c0_0 = arith.constant 0 : index
    %c0_1 = arith.constant 0 : index
    %0 = vector.load %arg1[%c0, %c0_0, %c0_1] : memref<2x16x256xf32, #tpu.memory_space<vmem>>, vector<2x16x256xf32>
    %c0_2 = arith.constant 0 : index
    %c0_3 = arith.constant 0 : index
    %c0_4 = arith.constant 0 : index
    %c0_5 = arith.constant 0 : index
    %1 = vector.load %arg2[%c0_2, %c0_3, %c0_4, %c0_5] : memref<2x16x16x8xf32, #tpu.memory_space<vmem>>, vector<2x16x16x8xf32>
    %2 = vector.shape_cast %0 : vector<2x16x256xf32> to vector<32x256xf32>
    %c0_6 = arith.constant 0 : index
    %c0_7 = arith.constant 0 : index
    %3 = vector.load %arg3[%c0_6, %c0_7] : memref<256x256xf32, #tpu.memory_space<vmem>>, vector<256x256xf32>
    %cst = arith.constant dense<0.000000e+00> : vector<32x256xf32>
    %4 = tpu.matmul %2, %3, %cst {dimension_numbers = #tpu.dot_dimension_numbers<[1], [0], [0], [1], [0, 0, 1, 1], [], []>} : vector<32x256xf32>, vector<256x256xf32>, vector<32x256xf32> -> vector<32x256xf32>
    %c0_8 = arith.constant 0 : index
    %c0_9 = arith.constant 0 : index
    %5 = vector.load %arg4[%c0_8, %c0_9] : memref<256x32xf32, #tpu.memory_space<vmem>>, vector<256x32xf32>
    %cst_10 = arith.constant dense<0.000000e+00> : vector<32x32xf32>
    %6 = tpu.matmul %2, %5, %cst_10 {dimension_numbers = #tpu.dot_dimension_numbers<[1], [0], [0], [1], [0, 0, 1, 1], [], []>} : vector<32x256xf32>, vector<256x32xf32>, vector<32x32xf32> -> vector<32x32xf32>
    %c0_11 = arith.constant 0 : index
    %c0_12 = arith.constant 0 : index
    %7 = vector.load %arg5[%c0_11, %c0_12] : memref<256x32xf32, #tpu.memory_space<vmem>>, vector<256x32xf32>
    %cst_13 = arith.constant dense<0.000000e+00> : vector<32x32xf32>
    %8 = tpu.matmul %2, %7, %cst_13 {dimension_numbers = #tpu.dot_dimension_numbers<[1], [0], [0], [1], [0, 0, 1, 1], [], []>} : vector<32x256xf32>, vector<256x32xf32>, vector<32x32xf32> -> vector<32x32xf32>
    %9 = vector.shape_cast %1 : vector<2x16x16x8xf32> to vector<512x8xf32>
    %c0_14 = arith.constant 0 : index
    %c0_15 = arith.constant 0 : index
    %10 = vector.load %arg6[%c0_14, %c0_15] : memref<8x32xf32, #tpu.memory_space<vmem>>, vector<8x32xf32>
    %cst_16 = arith.constant dense<0.000000e+00> : vector<512x32xf32>
    %11 = tpu.matmul %9, %10, %cst_16 {dimension_numbers = #tpu.dot_dimension_numbers<[1], [0], [0], [1], [0, 0, 1, 1], [], []>} : vector<512x8xf32>, vector<8x32xf32>, vector<512x32xf32> -> vector<512x32xf32>
    %c0_17 = arith.constant 0 : index
    %c0_18 = arith.constant 0 : index
    %12 = vector.load %arg7[%c0_17, %c0_18] : memref<8x256xf32, #tpu.memory_space<vmem>>, vector<8x256xf32>
    %cst_19 = arith.constant dense<0.000000e+00> : vector<512x256xf32>
    %13 = tpu.matmul %9, %12, %cst_19 {dimension_numbers = #tpu.dot_dimension_numbers<[1], [0], [0], [1], [0, 0, 1, 1], [], []>} : vector<512x8xf32>, vector<8x256xf32>, vector<512x256xf32> -> vector<512x256xf32>
    %14 = vector.extract_strided_slice %1 {offsets = [0, 0, 0, 7], sizes = [2, 16, 16, 1], strides = [1, 1, 1, 1]} : vector<2x16x16x8xf32> to vector<2x16x16x1xf32>
    %cst_20 = arith.constant 0.000000e+00 : f32
    %15 = vector.broadcast %cst_20 : f32 to vector<2x16x16x1xf32>
    %16 = arith.cmpf ogt, %14, %15 : vector<2x16x16x1xf32>
    %17 = vector.shape_cast %6 : vector<32x32xf32> to vector<2x16x32xf32>
    %18 = vector.shape_cast %8 : vector<32x32xf32> to vector<2x16x32xf32>
    %19 = vector.shape_cast %11 : vector<512x32xf32> to vector<2x16x16x32xf32>
    %20 = vector.shape_cast %17 : vector<2x16x32xf32> to vector<2x16x1x32xf32>
    %21 = vector.shape_cast %18 : vector<2x16x32xf32> to vector<2x1x16x32xf32>
    %22 = vector.broadcast %20 : vector<2x16x1x32xf32> to vector<2x16x16x32xf32>
    %23 = vector.broadcast %21 : vector<2x1x16x32xf32> to vector<2x16x16x32xf32>
    %24 = arith.addf %22, %23 : vector<2x16x16x32xf32>
    %25 = arith.mulf %24, %19 : vector<2x16x16x32xf32>
    %26 = vector.shape_cast %25 : vector<2x16x16x32xf32> to vector<512x32xf32>
    %c0_21 = arith.constant 0 : index
    %c0_22 = arith.constant 0 : index
    %27 = vector.load %arg9[%c0_21, %c0_22] : memref<32x1xf32, #tpu.memory_space<vmem>>, vector<32x1xf32>
    %cst_23 = arith.constant dense<0.000000e+00> : vector<512x1xf32>
    %28 = tpu.matmul %26, %27, %cst_23 {dimension_numbers = #tpu.dot_dimension_numbers<[1], [0], [0], [1], [0, 0, 1, 1], [], []>} : vector<512x32xf32>, vector<32x1xf32>, vector<512x1xf32> -> vector<512x1xf32>
    %29 = vector.shape_cast %28 : vector<512x1xf32> to vector<2x16x16x1xf32>
    %cst_24 = arith.constant -1.000000e+30 : f32
    %30 = vector.broadcast %cst_24 : f32 to vector<2x16x16x1xf32>
    %31 = arith.select %16, %29, %30 : vector<2x16x16x1xi1>, vector<2x16x16x1xf32>
    %cst_25 = arith.constant dense<0xFF800000> : vector<2x16x1xf32>
    %32 = vector.multi_reduction <maximumf>, %31, %cst_25 [1] : vector<2x16x16x1xf32> to vector<2x16x1xf32>
    %33 = vector.shape_cast %32 : vector<2x16x1xf32> to vector<2x1x16x1xf32>
    %34 = vector.broadcast %33 : vector<2x1x16x1xf32> to vector<2x16x16x1xf32>
    %35 = arith.subf %31, %34 : vector<2x16x16x1xf32>
    %36 = math.exp %35 : vector<2x16x16x1xf32>
    %cst_26 = arith.constant 0.000000e+00 : f32
    %37 = vector.broadcast %cst_26 : f32 to vector<2x16x16x1xf32>
    %38 = arith.select %16, %36, %37 : vector<2x16x16x1xi1>, vector<2x16x16x1xf32>
    %cst_27 = arith.constant dense<0.000000e+00> : vector<2x16x1xf32>
    %39 = vector.multi_reduction <add>, %38, %cst_27 [1] : vector<2x16x16x1xf32> to vector<2x16x1xf32>
    %40 = vector.shape_cast %39 : vector<2x16x1xf32> to vector<2x1x16x1xf32>
    %cst_28 = arith.constant 9.99999968E-21 : f32
    %41 = vector.broadcast %cst_28 : f32 to vector<2x1x16x1xf32>
    %42 = arith.maximumf %40, %41 : vector<2x1x16x1xf32>
    %43 = tpu.reciprocal %42 : vector<2x1x16x1xf32> -> vector<2x1x16x1xf32>
    %44 = vector.broadcast %43 : vector<2x1x16x1xf32> to vector<2x16x16x1xf32>
    %45 = arith.mulf %38, %44 : vector<2x16x16x1xf32>
    %46 = vector.shape_cast %45 : vector<2x16x16x1xf32> to vector<512x1xf32>
    %c0_29 = arith.constant 0 : index
    %c0_30 = arith.constant 0 : index
    %47 = vector.load %arg10[%c0_29, %c0_30] : memref<1x256xf32, #tpu.memory_space<vmem>>, vector<1x256xf32>
    %cst_31 = arith.constant dense<0.000000e+00> : vector<512x256xf32>
    %48 = tpu.matmul %46, %47, %cst_31 {dimension_numbers = #tpu.dot_dimension_numbers<[1], [0], [0], [1], [0, 0, 1, 1], [], []>} : vector<512x1xf32>, vector<1x256xf32>, vector<512x256xf32> -> vector<512x256xf32>
    %49 = vector.shape_cast %48 : vector<512x256xf32> to vector<2x16x16x256xf32>
    %50 = vector.shape_cast %4 : vector<32x256xf32> to vector<2x16x256xf32>
    %51 = vector.shape_cast %13 : vector<512x256xf32> to vector<2x16x16x256xf32>
    %52 = vector.shape_cast %50 : vector<2x16x256xf32> to vector<2x16x1x256xf32>
    %53 = vector.broadcast %52 : vector<2x16x1x256xf32> to vector<2x16x16x256xf32>
    %54 = arith.mulf %53, %51 : vector<2x16x16x256xf32>
    %55 = arith.mulf %54, %49 : vector<2x16x16x256xf32>
    %cst_32 = arith.constant dense<0.000000e+00> : vector<2x16x256xf32>
    %56 = vector.multi_reduction <add>, %55, %cst_32 [1] : vector<2x16x16x256xf32> to vector<2x16x256xf32>
    %57 = arith.addf %56, %0 : vector<2x16x256xf32>
    %c0_33 = arith.constant 0 : index
    %c0_34 = arith.constant 0 : index
    %58 = vector.load %arg8[%c0_33, %c0_34] : memref<1x256xf32, #tpu.memory_space<vmem>>, vector<1x256xf32>
    %59 = vector.shape_cast %58 : vector<1x256xf32> to vector<1x1x256xf32>
    %60 = vector.broadcast %59 : vector<1x1x256xf32> to vector<2x16x256xf32>
    %61 = arith.addf %57, %60 : vector<2x16x256xf32>
    %cst_35 = arith.constant 0.000000e+00 : f32
    %62 = vector.broadcast %cst_35 : f32 to vector<2x16x256xf32>
    %63 = arith.cmpf ogt, %61, %62 : vector<2x16x256xf32>
    %64 = math.exp %61 : vector<2x16x256xf32>
    %cst_36 = arith.constant 1.000000e+00 : f32
    %65 = vector.broadcast %cst_36 : f32 to vector<2x16x256xf32>
    %66 = arith.subf %64, %65 : vector<2x16x256xf32>
    %67 = arith.select %63, %61, %66 : vector<2x16x256xi1>, vector<2x16x256xf32>
    %c0_37 = arith.constant 0 : index
    %c0_38 = arith.constant 0 : index
    %c0_39 = arith.constant 0 : index
    %68 = vector.load %arg11[%c0_37, %c0_38, %c0_39] : memref<2x16x256xf32, #tpu.memory_space<vmem>>, vector<2x16x256xf32>
    tpu.vector_store %arg11[%c0_37, %c0_38, %c0_39], %67 {strides = array<i32>} : memref<2x16x256xf32, #tpu.memory_space<vmem>>, vector<2x16x256xf32>,
    return
  }
  func.func @transform_0(%arg0: i32) -> (i32, i32, i32) {
    %c0_i32 = arith.constant 0 : i32
    %c0_i32_0 = arith.constant 0 : i32
    %c0_i32_1 = arith.constant 0 : i32
    return %arg0, %c0_i32, %c0_i32_0 : i32, i32, i32
  }
  func.func @transform_1(%arg0: i32) -> (i32, i32, i32, i32) {
    %c0_i32 = arith.constant 0 : i32
    %c0_i32_0 = arith.constant 0 : i32
    %c0_i32_1 = arith.constant 0 : i32
    %c0_i32_2 = arith.constant 0 : i32
    return %arg0, %c0_i32, %c0_i32_0, %c0_i32_1 : i32, i32, i32, i32
  }
  func.func @transform_2(%arg0: i32) -> (i32, i32) {
    %c0_i32 = arith.constant 0 : i32
    %c0_i32_0 = arith.constant 0 : i32
    %c0_i32_1 = arith.constant 0 : i32
    return %c0_i32, %c0_i32_0 : i32, i32
  }
  func.func @transform_3(%arg0: i32) -> (i32, i32) {
    %c0_i32 = arith.constant 0 : i32
    %c0_i32_0 = arith.constant 0 : i32
    %c0_i32_1 = arith.constant 0 : i32
    return %c0_i32, %c0_i32_0 : i32, i32
  }
  func.func @transform_4(%arg0: i32) -> (i32, i32) {
    %c0_i32 = arith.constant 0 : i32
    %c0_i32_0 = arith.constant 0 : i32
    %c0_i32_1 = arith.constant 0 : i32
    return %c0_i32, %c0_i32_0 : i32, i32
  }
  func.func @transform_5(%arg0: i32) -> (i32, i32) {
    %c0_i32 = arith.constant 0 : i32
    %c0_i32_0 = arith.constant 0 : i32
    %c0_i32_1 = arith.constant 0 : i32
    return %c0_i32, %c0_i32_0 : i32, i32
  }
  func.func @transform_6(%arg0: i32) -> (i32, i32) {
    %c0_i32 = arith.constant 0 : i32
    %c0_i32_0 = arith.constant 0 : i32
    %c0_i32_1 = arith.constant 0 : i32
    return %c0_i32, %c0_i32_0 : i32, i32
  }
  func.func @transform_7(%arg0: i32) -> (i32, i32) {
    %c0_i32 = arith.constant 0 : i32
    %c0_i32_0 = arith.constant 0 : i32
    %c0_i32_1 = arith.constant 0 : i32
    return %c0_i32, %c0_i32_0 : i32, i32
  }
  func.func @transform_8(%arg0: i32) -> (i32, i32) {
    %c0_i32 = arith.constant 0 : i32
    %c0_i32_0 = arith.constant 0 : i32
    %c0_i32_1 = arith.constant 0 : i32
    return %c0_i32, %c0_i32_0 : i32, i32
  }
  func.func @transform_9(%arg0: i32) -> (i32, i32) {
    %c0_i32 = arith.constant 0 : i32
    %c0_i32_0 = arith.constant 0 : i32
    %c0_i32_1 = arith.constant 0 : i32
    return %c0_i32, %c0_i32_0 : i32, i32
  }
  func.func @transform_10(%arg0: i32) -> (i32, i32, i32) {
    %c0_i32 = arith.constant 0 : i32
    %c0_i32_0 = arith.constant 0 : i32
    %c0_i32_1 = arith.constant 0 : i32
    return %arg0, %c0_i32, %c0_i32_0 : i32, i32, i32
  }
}

module attributes {stable_mosaic.version = 11 : i64} {
  func.func @_mpnn_readout_fc_kernel(%arg0: i32, %arg1: memref<1xf32, #tpu.memory_space<smem>>, %arg2: memref<2x16x256xf32, #tpu.memory_space<vmem>>, %arg3: memref<2x16x16xf32, #tpu.memory_space<vmem>>, %arg4: memref<2x16x16xf32, #tpu.memory_space<vmem>>, %arg5: memref<256x256xf32, #tpu.memory_space<vmem>>, %arg6: memref<1x256xf32, #tpu.memory_space<vmem>>, %arg7: memref<256x1xf32, #tpu.memory_space<vmem>>, %arg8: memref<256x256xf32, #tpu.memory_space<vmem>>, %arg9: memref<1x256xf32, #tpu.memory_space<vmem>>, %arg10: memref<1536x32xf32, #tpu.memory_space<vmem>>, %arg11: memref<1x32xf32, #tpu.memory_space<vmem>>, %arg12: memref<1x2x32xf32, #tpu.memory_space<vmem>>) attributes {dimension_semantics = [#tpu.dimension_semantics<parallel>], iteration_bounds = array<i64: 1>, scalar_prefetch = 0 : i64, scratch_operands = 0 : i64, tpu.core_type = #tpu.core_type<tc>, window_params = [{transform_indices = @transform_0, window_bounds = array<i64: 1>}, {transform_indices = @transform_1, window_bounds = array<i64: 2, 16, 256>}, {transform_indices = @transform_2, window_bounds = array<i64: 2, 16, 16>}, {transform_indices = @transform_3, window_bounds = array<i64: 2, 16, 16>}, {pipeline_mode = #tpu.pipeline_mode<synchronous>, transform_indices = @transform_4, window_bounds = array<i64: 256, 256>}, {pipeline_mode = #tpu.pipeline_mode<synchronous>, transform_indices = @transform_5, window_bounds = array<i64: 1, 256>}, {pipeline_mode = #tpu.pipeline_mode<synchronous>, transform_indices = @transform_6, window_bounds = array<i64: 256, 1>}, {pipeline_mode = #tpu.pipeline_mode<synchronous>, transform_indices = @transform_7, window_bounds = array<i64: 256, 256>}, {pipeline_mode = #tpu.pipeline_mode<synchronous>, transform_indices = @transform_8, window_bounds = array<i64: 1, 256>}, {pipeline_mode = #tpu.pipeline_mode<synchronous>, transform_indices = @transform_9, window_bounds = array<i64: 1536, 32>}, {pipeline_mode = #tpu.pipeline_mode<synchronous>, transform_indices = @transform_10, window_bounds = array<i64: 1, 32>}, {transform_indices = @transform_11, window_bounds = array<i64: 1, 2, 32>}]} {
    %c0 = arith.constant 0 : index
    %c0_0 = arith.constant 0 : index
    %c0_1 = arith.constant 0 : index
    %0 = vector.load %arg2[%c0, %c0_0, %c0_1] : memref<2x16x256xf32, #tpu.memory_space<vmem>>, vector<2x16x256xf32>
    %1 = vector.shape_cast %0 : vector<2x16x256xf32> to vector<32x256xf32>
    %c0_2 = arith.constant 0 : index
    %c0_3 = arith.constant 0 : index
    %2 = vector.load %arg5[%c0_2, %c0_3] : memref<256x256xf32, #tpu.memory_space<vmem>>, vector<256x256xf32>
    %cst = arith.constant dense<0.000000e+00> : vector<32x256xf32>
    %3 = tpu.matmul %1, %2, %cst {dimension_numbers = #tpu.dot_dimension_numbers<[1], [0], [0], [1], [0, 0, 1, 1], [], []>} : vector<32x256xf32>, vector<256x256xf32>, vector<32x256xf32> -> vector<32x256xf32>
    %c0_4 = arith.constant 0 : index
    %c0_5 = arith.constant 0 : index
    %4 = vector.load %arg6[%c0_4, %c0_5] : memref<1x256xf32, #tpu.memory_space<vmem>>, vector<1x256xf32>
    %5 = vector.broadcast %4 : vector<1x256xf32> to vector<32x256xf32>
    %6 = arith.addf %3, %5 : vector<32x256xf32>
    %cst_6 = arith.constant 0.000000e+00 : f32
    %7 = vector.broadcast %cst_6 : f32 to vector<32x256xf32>
    %8 = arith.cmpf ogt, %6, %7 : vector<32x256xf32>
    %cst_7 = arith.constant 2.000000e-01 : f32
    %9 = vector.broadcast %cst_7 : f32 to vector<32x256xf32>
    %10 = arith.mulf %9, %6 : vector<32x256xf32>
    %11 = arith.select %8, %6, %10 : vector<32x256xi1>, vector<32x256xf32>
    %c0_8 = arith.constant 0 : index
    %c0_9 = arith.constant 0 : index
    %12 = vector.load %arg7[%c0_8, %c0_9] : memref<256x1xf32, #tpu.memory_space<vmem>>, vector<256x1xf32>
    %cst_10 = arith.constant dense<0.000000e+00> : vector<32x1xf32>
    %13 = tpu.matmul %1, %12, %cst_10 {dimension_numbers = #tpu.dot_dimension_numbers<[1], [0], [0], [1], [0, 0, 1, 1], [], []>} : vector<32x256xf32>, vector<256x1xf32>, vector<32x1xf32> -> vector<32x1xf32>
    %c0_11 = arith.constant 0 : index
    %c0_12 = arith.constant 0 : index
    %c0_13 = arith.constant 0 : index
    %14 = vector.load %arg3[%c0_11, %c0_12, %c0_13] : memref<2x16x16xf32, #tpu.memory_space<vmem>>, vector<2x16x16xf32>
    %c0_14 = arith.constant 0 : index
    %c0_15 = arith.constant 0 : index
    %c0_16 = arith.constant 0 : index
    %15 = vector.load %arg4[%c0_14, %c0_15, %c0_16] : memref<2x16x16xf32, #tpu.memory_space<vmem>>, vector<2x16x16xf32>
    %cst_17 = arith.constant 0.000000e+00 : f32
    %16 = vector.broadcast %cst_17 : f32 to vector<2x16x16xf32>
    %17 = arith.cmpf ogt, %15, %16 : vector<2x16x16xf32>
    %c0_18 = arith.constant 0 : index
    %18 = memref.load %arg1[%c0_18] : memref<1xf32, #tpu.memory_space<smem>>
    %cst_19 = arith.constant 1.000000e+00 : f32
    %19 = vector.broadcast %cst_19 : f32 to vector<2x16x16xf32>
    %20 = arith.select %17, %14, %19 : vector<2x16x16xi1>, vector<2x16x16xf32>
    %21 = tpu.reciprocal %20 : vector<2x16x16xf32> -> vector<2x16x16xf32>
    %22 = vector.broadcast %18 : f32 to vector<2x16x16xf32>
    %23 = arith.mulf %22, %21 : vector<2x16x16xf32>
    %cst_20 = arith.constant 0.000000e+00 : f32
    %24 = vector.broadcast %cst_20 : f32 to vector<2x16x16xf32>
    %25 = arith.select %17, %23, %24 : vector<2x16x16xi1>, vector<2x16x16xf32>
    %26 = vector.shape_cast %11 : vector<32x256xf32> to vector<2x16x256xf32>
    "tpu.trace_start"() <{level = 10 : i32, message = "gds,gsf->gdf"}> : () -> ()
    %cst_21 = arith.constant dense<0.000000e+00> : vector<2x16x256xf32>
    %27 = tpu.matmul %25, %26, %cst_21 {dimension_numbers = #tpu.dot_dimension_numbers<[2], [1], [1], [2], [0, 0, 0, 1, 1, 2], [0], [0]>} : vector<2x16x16xf32>, vector<2x16x256xf32>, vector<2x16x256xf32> -> vector<2x16x256xf32>
    "tpu.trace_stop"() : () -> ()
    %28 = vector.shape_cast %13 : vector<32x1xf32> to vector<2x16x1xf32>
    %29 = vector.broadcast %28 : vector<2x16x1xf32> to vector<2x16x256xf32>
    %30 = arith.mulf %29, %0 : vector<2x16x256xf32>
    %31 = arith.addf %27, %30 : vector<2x16x256xf32>
    %32 = vector.shape_cast %31 : vector<2x16x256xf32> to vector<32x256xf32>
    %c0_22 = arith.constant 0 : index
    %c0_23 = arith.constant 0 : index
    %33 = vector.load %arg8[%c0_22, %c0_23] : memref<256x256xf32, #tpu.memory_space<vmem>>, vector<256x256xf32>
    %cst_24 = arith.constant dense<0.000000e+00> : vector<32x256xf32>
    %34 = tpu.matmul %32, %33, %cst_24 {dimension_numbers = #tpu.dot_dimension_numbers<[1], [0], [0], [1], [0, 0, 1, 1], [], []>} : vector<32x256xf32>, vector<256x256xf32>, vector<32x256xf32> -> vector<32x256xf32>
    %c0_25 = arith.constant 0 : index
    %c0_26 = arith.constant 0 : index
    %35 = vector.load %arg9[%c0_25, %c0_26] : memref<1x256xf32, #tpu.memory_space<vmem>>, vector<1x256xf32>
    %36 = vector.broadcast %35 : vector<1x256xf32> to vector<32x256xf32>
    %37 = arith.addf %34, %36 : vector<32x256xf32>
    %cst_27 = arith.constant 0.000000e+00 : f32
    %38 = vector.broadcast %cst_27 : f32 to vector<32x256xf32>
    %39 = arith.cmpf ogt, %37, %38 : vector<32x256xf32>
    %cst_28 = arith.constant 2.000000e-01 : f32
    %40 = vector.broadcast %cst_28 : f32 to vector<32x256xf32>
    %41 = arith.mulf %40, %37 : vector<32x256xf32>
    %42 = arith.select %39, %37, %41 : vector<32x256xi1>, vector<32x256xf32>
    %43 = vector.shape_cast %42 : vector<32x256xf32> to vector<2x16x256xf32>
    %cst_29 = arith.constant dense<0.000000e+00> : vector<2x256xf32>
    %44 = vector.multi_reduction <add>, %0, %cst_29 [1] : vector<2x16x256xf32> to vector<2x256xf32>
    %cst_30 = arith.constant dense<0xFF800000> : vector<2x256xf32>
    %45 = vector.multi_reduction <maximumf>, %0, %cst_30 [1] : vector<2x16x256xf32> to vector<2x256xf32>
    %cst_31 = arith.constant dense<0.000000e+00> : vector<2x256xf32>
    %46 = vector.multi_reduction <add>, %43, %cst_31 [1] : vector<2x16x256xf32> to vector<2x256xf32>
    %cst_32 = arith.constant dense<0xFF800000> : vector<2x256xf32>
    %47 = vector.multi_reduction <maximumf>, %43, %cst_32 [1] : vector<2x16x256xf32> to vector<2x256xf32>
    %cst_33 = arith.constant 6.250000e-02 : f32
    %48 = vector.broadcast %cst_33 : f32 to vector<2x256xf32>
    %49 = arith.mulf %46, %48 : vector<2x256xf32>
    %cst_34 = arith.constant 6.250000e-02 : f32
    %50 = vector.broadcast %cst_34 : f32 to vector<2x256xf32>
    %51 = arith.mulf %44, %50 : vector<2x256xf32>
    %52 = tpu.concatenate %44, %45, %46, %47, %49, %51 in 1 : vector<2x256xf32>, vector<2x256xf32>, vector<2x256xf32>, vector<2x256xf32>, vector<2x256xf32>, vector<2x256xf32> -> vector<2x1536xf32>
    %c0_35 = arith.constant 0 : index
    %c0_36 = arith.constant 0 : index
    %53 = vector.load %arg10[%c0_35, %c0_36] : memref<1536x32xf32, #tpu.memory_space<vmem>>, vector<1536x32xf32>
    %cst_37 = arith.constant dense<0.000000e+00> : vector<2x32xf32>
    %54 = tpu.matmul %52, %53, %cst_37 {dimension_numbers = #tpu.dot_dimension_numbers<[1], [0], [0], [1], [0, 0, 1, 1], [], []>} : vector<2x1536xf32>, vector<1536x32xf32>, vector<2x32xf32> -> vector<2x32xf32>
    %c0_38 = arith.constant 0 : index
    %c0_39 = arith.constant 0 : index
    %55 = vector.load %arg11[%c0_38, %c0_39] : memref<1x32xf32, #tpu.memory_space<vmem>>, vector<1x32xf32>
    %56 = vector.broadcast %55 : vector<1x32xf32> to vector<2x32xf32>
    %57 = arith.addf %54, %56 : vector<2x32xf32>
    %c0_40 = arith.constant 0 : index
    %c0_41 = arith.constant 0 : index
    %c0_42 = arith.constant 0 : index
    %58 = vector.load %arg12[%c0_40, %c0_41, %c0_42] : memref<1x2x32xf32, #tpu.memory_space<vmem>>, vector<1x2x32xf32>
    %59 = vector.shape_cast %58 : vector<1x2x32xf32> to vector<2x32xf32>
    %60 = vector.shape_cast %57 : vector<2x32xf32> to vector<1x2x32xf32>
    tpu.vector_store %arg12[%c0_40, %c0_41, %c0_42], %60 {strides = array<i32>} : memref<1x2x32xf32, #tpu.memory_space<vmem>>, vector<1x2x32xf32>,
    return
  }
  func.func @transform_0(%arg0: i32) -> i32 {
    %c0_i32 = arith.constant 0 : i32
    %c0_i32_0 = arith.constant 0 : i32
    return %c0_i32 : i32
  }
  func.func @transform_1(%arg0: i32) -> (i32, i32, i32) {
    %c0_i32 = arith.constant 0 : i32
    %c0_i32_0 = arith.constant 0 : i32
    %c0_i32_1 = arith.constant 0 : i32
    return %arg0, %c0_i32, %c0_i32_0 : i32, i32, i32
  }
  func.func @transform_2(%arg0: i32) -> (i32, i32, i32) {
    %c0_i32 = arith.constant 0 : i32
    %c0_i32_0 = arith.constant 0 : i32
    %c0_i32_1 = arith.constant 0 : i32
    return %arg0, %c0_i32, %c0_i32_0 : i32, i32, i32
  }
  func.func @transform_3(%arg0: i32) -> (i32, i32, i32) {
    %c0_i32 = arith.constant 0 : i32
    %c0_i32_0 = arith.constant 0 : i32
    %c0_i32_1 = arith.constant 0 : i32
    return %arg0, %c0_i32, %c0_i32_0 : i32, i32, i32
  }
  func.func @transform_4(%arg0: i32) -> (i32, i32) {
    %c0_i32 = arith.constant 0 : i32
    %c0_i32_0 = arith.constant 0 : i32
    %c0_i32_1 = arith.constant 0 : i32
    return %c0_i32, %c0_i32_0 : i32, i32
  }
  func.func @transform_5(%arg0: i32) -> (i32, i32) {
    %c0_i32 = arith.constant 0 : i32
    %c0_i32_0 = arith.constant 0 : i32
    %c0_i32_1 = arith.constant 0 : i32
    return %c0_i32, %c0_i32_0 : i32, i32
  }
  func.func @transform_6(%arg0: i32) -> (i32, i32) {
    %c0_i32 = arith.constant 0 : i32
    %c0_i32_0 = arith.constant 0 : i32
    %c0_i32_1 = arith.constant 0 : i32
    return %c0_i32, %c0_i32_0 : i32, i32
  }
  func.func @transform_7(%arg0: i32) -> (i32, i32) {
    %c0_i32 = arith.constant 0 : i32
    %c0_i32_0 = arith.constant 0 : i32
    %c0_i32_1 = arith.constant 0 : i32
    return %c0_i32, %c0_i32_0 : i32, i32
  }
  func.func @transform_8(%arg0: i32) -> (i32, i32) {
    %c0_i32 = arith.constant 0 : i32
    %c0_i32_0 = arith.constant 0 : i32
    %c0_i32_1 = arith.constant 0 : i32
    return %c0_i32, %c0_i32_0 : i32, i32
  }
  func.func @transform_9(%arg0: i32) -> (i32, i32) {
    %c0_i32 = arith.constant 0 : i32
    %c0_i32_0 = arith.constant 0 : i32
    %c0_i32_1 = arith.constant 0 : i32
    return %c0_i32, %c0_i32_0 : i32, i32
  }
  func.func @transform_10(%arg0: i32) -> (i32, i32) {
    %c0_i32 = arith.constant 0 : i32
    %c0_i32_0 = arith.constant 0 : i32
    %c0_i32_1 = arith.constant 0 : i32
    return %c0_i32, %c0_i32_0 : i32, i32
  }
  func.func @transform_11(%arg0: i32) -> (i32, i32, i32) {
    %c0_i32 = arith.constant 0 : i32
    %c0_i32_0 = arith.constant 0 : i32
    %c0_i32_1 = arith.constant 0 : i32
    return %arg0, %c0_i32, %c0_i32_0 : i32, i32, i32
  }
}

</mosaic_0001>

<llo_original>
// kernel: gnn_forward.3
$region0: #{gnn_forward.3}
  #allocation0 [shape = 'u32[]', space=smem, size = 0x4, offset = 0x4, fixed_abs, tag = 'smem constant byte address 0x4 - core index']
  #allocation1 [shape = 'u32[144,128]{1,0:T(1,128)}', space=vmem, size = 0x12000, scoped, tag = 'internal scratch']
  %s0 = inlined_call_operand.vmem [shape: f32[2,16,128], index: 0, kind: input, shape index: {}]
  %s1 = inlined_call_operand.vmem [shape: f32[2,16,16,8], index: 1, kind: input, shape index: {}]
  %s2 = inlined_call_operand.vmem [shape: f32[128,256], index: 2, kind: input, shape index: {}]
  %s3 = inlined_call_operand.vmem [shape: f32[128,256], index: 3, kind: input, shape index: {}]
  %s4 = inlined_call_operand.vmem [shape: f32[128,256], index: 4, kind: input, shape index: {}]
  %s5 = inlined_call_operand.vmem [shape: f32[8,256], index: 5, kind: input, shape index: {}]
  %s6 = inlined_call_operand.vmem [shape: f32[8,256], index: 6, kind: input, shape index: {}]
  %s7 = inlined_call_operand.vmem [shape: f32[1,256], index: 7, kind: input, shape index: {}]
  %s8 = inlined_call_operand.vmem [shape: f32[256,8], index: 8, kind: input, shape index: {}]
  %s9 = inlined_call_operand.vmem [shape: f32[8,256], index: 9, kind: input, shape index: {}]
  %s10 = inlined_call_operand.vmem [shape: f32[2,16,256], index: 10, kind: output, shape index: {}]
  %s11 = sld [smem:[#allocation0]]
  $region50: #{gnn_forward.3} parent=0
    _
  %s13 = ssub.s32 1, %s11
  %s14 = scalar_select 0, %s13, %s11
  // Predicated region
  $region2: #{gnn_forward.3} parent=0 // pred_check
    _
  $region3: #{gnn_forward.3} parent=0 // pred_check_branch
    %16 = sbr.rel (0) target = $region5
  $region4: #{gnn_forward.3} parent=0 // pred_region
    _
  $region5: #{gnn_forward.3} parent=0 // pred_fallthru
    _
  // Predicated region
  $region6: #{gnn_forward.3} parent=0 // pred_check
    _
  $region7: #{gnn_forward.3} parent=0 // pred_check_branch
    %18 = sbr.rel (0) target = $region9
  $region8: #{gnn_forward.3} parent=0 // pred_region
    _
  $region9: #{gnn_forward.3} parent=0 // pred_fallthru
    _
  // Predicated region
  $region10: #{gnn_forward.3} parent=0 // pred_check
    _
  $region11: #{gnn_forward.3} parent=0 // pred_check_branch
    %20 = sbr.rel (0) target = $region13
  $region12: #{gnn_forward.3} parent=0 // pred_region
    _
  $region13: #{gnn_forward.3} parent=0 // pred_fallthru
    _
  // Predicated region
  $region14: #{gnn_forward.3} parent=0 // pred_check
    _
  $region15: #{gnn_forward.3} parent=0 // pred_check_branch
    %22 = sbr.rel (0) target = $region17
  $region16: #{gnn_forward.3} parent=0 // pred_region
    _
  $region17: #{gnn_forward.3} parent=0 // pred_fallthru
    _
  // Predicated region
  $region18: #{gnn_forward.3} parent=0 // pred_check
    _
  $region19: #{gnn_forward.3} parent=0 // pred_check_branch
    %24 = sbr.rel (0) target = $region21
  $region20: #{gnn_forward.3} parent=0 // pred_region
    _
  $region21: #{gnn_forward.3} parent=0 // pred_fallthru
    _
  // Predicated region
  $region22: #{gnn_forward.3} parent=0 // pred_check
    _
  $region23: #{gnn_forward.3} parent=0 // pred_check_branch
    %26 = sbr.rel (0) target = $region25
  $region24: #{gnn_forward.3} parent=0 // pred_region
    _
  $region25: #{gnn_forward.3} parent=0 // pred_fallthru
    _
  // Predicated region
  $region26: #{gnn_forward.3} parent=0 // pred_check
    _
  $region27: #{gnn_forward.3} parent=0 // pred_check_branch
    %28 = sbr.rel (0) target = $region29
  $region28: #{gnn_forward.3} parent=0 // pred_region
    _
  $region29: #{gnn_forward.3} parent=0 // pred_fallthru
    _
  // Predicated region
  $region30: #{gnn_forward.3} parent=0 // pred_check
    _
  $region31: #{gnn_forward.3} parent=0 // pred_check_branch
    %30 = sbr.rel (0) target = $region33
  $region32: #{gnn_forward.3} parent=0 // pred_region
    _
  $region33: #{gnn_forward.3} parent=0 // pred_fallthru
    _
  // Predicated region
  $region34: #{gnn_forward.3} parent=0 // pred_check
    _
  $region35: #{gnn_forward.3} parent=0 // pred_check_branch
    %32 = sbr.rel (0) target = $region37
  $region36: #{gnn_forward.3} parent=0 // pred_region
    _
  $region37: #{gnn_forward.3} parent=0 // pred_fallthru
    _
  // Predicated region
  $region38: #{gnn_forward.3} parent=0 // pred_check
    _
  $region39: #{gnn_forward.3} parent=0 // pred_check_branch
    %34 = sbr.rel (0) target = $region41
  $region40: #{gnn_forward.3} parent=0 // pred_region
    _
  $region41: #{gnn_forward.3} parent=0 // pred_fallthru
    _
  %v35 = vld [vmem:[%s0] sm:$0xff]
  %v36 = vld [vmem:[%s0 + $0x8] sm:$0xff]
  %v37 = vld [vmem:[%s0 + $0x10] sm:$0xff]
  %v38 = vld [vmem:[%s0 + $0x18] sm:$0xff]
  %v39 = vld [vmem:[%s1] sm:$0xff]
  %v40 = vld [vmem:[%s1 + $0x8] sm:$0xff]
  %v41 = vld [vmem:[%s1 + $0x10] sm:$0xff]
  %v42 = vld [vmem:[%s1 + $0x18] sm:$0xff]
  %v43 = vld [vmem:[%s1 + $0x20] sm:$0xff]
  %v44 = vld [vmem:[%s1 + $0x28] sm:$0xff]
  %v45 = vld [vmem:[%s1 + $0x30] sm:$0xff]
  %v46 = vld [vmem:[%s1 + $0x38] sm:$0xff]
  %v47 = vld [vmem:[%s1 + $0x40] sm:$0xff]
  %v48 = vld [vmem:[%s1 + $0x48] sm:$0xff]
  %v49 = vld [vmem:[%s1 + $0x50] sm:$0xff]
  %v50 = vld [vmem:[%s1 + $0x58] sm:$0xff]
  %v51 = vld [vmem:[%s1 + $0x60] sm:$0xff]
  %v52 = vld [vmem:[%s1 + $0x68] sm:$0xff]
  %v53 = vld [vmem:[%s1 + $0x70] sm:$0xff]
  %v54 = vld [vmem:[%s1 + $0x78] sm:$0xff]
  %v55 = vld [vmem:[%s1 + $0x80] sm:$0xff]
  %v56 = vld [vmem:[%s1 + $0x88] sm:$0xff]
  %v57 = vld [vmem:[%s1 + $0x90] sm:$0xff]
  %v58 = vld [vmem:[%s1 + $0x98] sm:$0xff]
  %v59 = vld [vmem:[%s1 + $0xa0] sm:$0xff]
  %v60 = vld [vmem:[%s1 + $0xa8] sm:$0xff]
  %v61 = vld [vmem:[%s1 + $0xb0] sm:$0xff]
  %v62 = vld [vmem:[%s1 + $0xb8] sm:$0xff]
  %v63 = vld [vmem:[%s1 + $0xc0] sm:$0xff]
  %v64 = vld [vmem:[%s1 + $0xc8] sm:$0xff]
  %v65 = vld [vmem:[%s1 + $0xd0] sm:$0xff]
  %v66 = vld [vmem:[%s1 + $0xd8] sm:$0xff]
  %v67 = vld [vmem:[%s1 + $0xe0] sm:$0xff]
  %v68 = vld [vmem:[%s1 + $0xe8] sm:$0xff]
  %v69 = vld [vmem:[%s1 + $0xf0] sm:$0xff]
  %v70 = vld [vmem:[%s1 + $0xf8] sm:$0xff]
  %v71 = vld [vmem:[%s1 + $0x100] sm:$0xff]
  %v72 = vld [vmem:[%s1 + $0x108] sm:$0xff]
  %v73 = vld [vmem:[%s1 + $0x110] sm:$0xff]
  %v74 = vld [vmem:[%s1 + $0x118] sm:$0xff]
  %v75 = vld [vmem:[%s1 + $0x120] sm:$0xff]
  %v76 = vld [vmem:[%s1 + $0x128] sm:$0xff]
  %v77 = vld [vmem:[%s1 + $0x130] sm:$0xff]
  %v78 = vld [vmem:[%s1 + $0x138] sm:$0xff]
  %v79 = vld [vmem:[%s1 + $0x140] sm:$0xff]
  %v80 = vld [vmem:[%s1 + $0x148] sm:$0xff]
  %v81 = vld [vmem:[%s1 + $0x150] sm:$0xff]
  %v82 = vld [vmem:[%s1 + $0x158] sm:$0xff]
  %v83 = vld [vmem:[%s1 + $0x160] sm:$0xff]
  %v84 = vld [vmem:[%s1 + $0x168] sm:$0xff]
  %v85 = vld [vmem:[%s1 + $0x170] sm:$0xff]
  %v86 = vld [vmem:[%s1 + $0x178] sm:$0xff]
  %v87 = vld [vmem:[%s1 + $0x180] sm:$0xff]
  %v88 = vld [vmem:[%s1 + $0x188] sm:$0xff]
  %v89 = vld [vmem:[%s1 + $0x190] sm:$0xff]
  %v90 = vld [vmem:[%s1 + $0x198] sm:$0xff]
  %v91 = vld [vmem:[%s1 + $0x1a0] sm:$0xff]
  %v92 = vld [vmem:[%s1 + $0x1a8] sm:$0xff]
  %v93 = vld [vmem:[%s1 + $0x1b0] sm:$0xff]
  %v94 = vld [vmem:[%s1 + $0x1b8] sm:$0xff]
  %v95 = vld [vmem:[%s1 + $0x1c0] sm:$0xff]
  %v96 = vld [vmem:[%s1 + $0x1c8] sm:$0xff]
  %v97 = vld [vmem:[%s1 + $0x1d0] sm:$0xff]
  %v98 = vld [vmem:[%s1 + $0x1d8] sm:$0xff]
  %v99 = vld [vmem:[%s1 + $0x1e0] sm:$0xff]
  %v100 = vld [vmem:[%s1 + $0x1e8] sm:$0xff]
  %v101 = vld [vmem:[%s1 + $0x1f0] sm:$0xff]
  %v102 = vld [vmem:[%s1 + $0x1f8] sm:$0xff]
  %v103 = vld [vmem:[%s2] sm:$0xff]
  %v104 = vld [vmem:[%s2 + $0x8] sm:$0xff]
  %v105 = vld [vmem:[%s2 + $0x10] sm:$0xff]
  %v106 = vld [vmem:[%s2 + $0x18] sm:$0xff]
  %v107 = vld [vmem:[%s2 + $0x20] sm:$0xff]
  %v108 = vld [vmem:[%s2 + $0x28] sm:$0xff]
  %v109 = vld [vmem:[%s2 + $0x30] sm:$0xff]
  %v110 = vld [vmem:[%s2 + $0x38] sm:$0xff]
  %v111 = vld [vmem:[%s2 + $0x40] sm:$0xff]
  %v112 = vld [vmem:[%s2 + $0x48] sm:$0xff]
  %v113 = vld [vmem:[%s2 + $0x50] sm:$0xff]
  %v114 = vld [vmem:[%s2 + $0x58] sm:$0xff]
  %v115 = vld [vmem:[%s2 + $0x60] sm:$0xff]
  %v116 = vld [vmem:[%s2 + $0x68] sm:$0xff]
  %v117 = vld [vmem:[%s2 + $0x70] sm:$0xff]
  %v118 = vld [vmem:[%s2 + $0x78] sm:$0xff]
  %v119 = vld [vmem:[%s2 + $0x80] sm:$0xff]
  %v120 = vld [vmem:[%s2 + $0x88] sm:$0xff]
  %v121 = vld [vmem:[%s2 + $0x90] sm:$0xff]
  %v122 = vld [vmem:[%s2 + $0x98] sm:$0xff]
  %v123 = vld [vmem:[%s2 + $0xa0] sm:$0xff]
  %v124 = vld [vmem:[%s2 + $0xa8] sm:$0xff]
  %v125 = vld [vmem:[%s2 + $0xb0] sm:$0xff]
  %v126 = vld [vmem:[%s2 + $0xb8] sm:$0xff]
  %v127 = vld [vmem:[%s2 + $0xc0] sm:$0xff]
  %v128 = vld [vmem:[%s2 + $0xc8] sm:$0xff]
  %v129 = vld [vmem:[%s2 + $0xd0] sm:$0xff]
  %v130 = vld [vmem:[%s2 + $0xd8] sm:$0xff]
  %v131 = vld [vmem:[%s2 + $0xe0] sm:$0xff]
  %v132 = vld [vmem:[%s2 + $0xe8] sm:$0xff]
  %v133 = vld [vmem:[%s2 + $0xf0] sm:$0xff]
  %v134 = vld [vmem:[%s2 + $0xf8] sm:$0xff]
  %135 = vmatprep.subr.mxu0 %v134
  %136 = vmatpush1.msra.mxu0 %v133
  %137 = vmatprep.subr.mxu0 %v132
  %138 = vmatpush1.msra.mxu0 %v131
  %139 = vmatprep.subr.mxu0 %v130
  %140 = vmatpush1.msra.mxu0 %v129
  %141 = vmatprep.subr.mxu0 %v128
  %142 = vmatpush1.msra.mxu0 %v127
  %143 = vmatprep.subr.mxu0 %v126
  %144 = vmatpush1.msra.mxu0 %v125
  %145 = vmatprep.subr.mxu0 %v124
  %146 = vmatpush1.msra.mxu0 %v123
  %147 = vmatprep.subr.mxu0 %v122
  %148 = vmatpush1.msra.mxu0 %v121
  %149 = vmatprep.subr.mxu0 %v120
  %150 = vmatpush1.msra.mxu0 %v119
  %151 = vmatprep.subr.mxu0 %v118
  %152 = vmatpush1.msra.mxu0 %v117
  %153 = vmatprep.subr.mxu0 %v116
  %154 = vmatpush1.msra.mxu0 %v115
  %155 = vmatprep.subr.mxu0 %v114
  %156 = vmatpush1.msra.mxu0 %v113
  %157 = vmatprep.subr.mxu0 %v112
  %158 = vmatpush1.msra.mxu0 %v111
  %159 = vmatprep.subr.mxu0 %v110
  %160 = vmatpush1.msra.mxu0 %v109
  %161 = vmatprep.subr.mxu0 %v108
  %162 = vmatpush1.msra.mxu0 %v107
  %163 = vmatprep.subr.mxu0 %v106
  %164 = vmatpush1.msra.mxu0 %v105
  %165 = vmatprep.subr.mxu0 %v104
  %166 = vmatpush1.msra.mxu0 %v103
  %167 = vmatprep.subr.mxu0 0.0
  %168 = vmatpush2.msra.mxu0 0.0
  %169 = vmatprep.subr.mxu0 0.0
  %170 = vmatpush2.msra.mxu0 0.0
  %171 = vmatprep.subr.mxu0 0.0
  %172 = vmatpush2.msra.mxu0 0.0
  %173 = vmatprep.subr.mxu0 0.0
  %174 = vmatpush2.msra.mxu0 0.0
  %175 = vmatprep.subr.mxu0 0.0
  %176 = vmatpush2.msra.mxu0 0.0
  %177 = vmatprep.subr.mxu0 0.0
  %178 = vmatpush2.msra.mxu0 0.0
  %179 = vmatprep.subr.mxu0 0.0
  %180 = vmatpush2.msra.mxu0 0.0
  %181 = vmatprep.subr.mxu0 0.0
  %182 = vmatpush2.msra.mxu0 0.0
  %183 = vmatprep.subr.mxu0 0.0
  %184 = vmatpush2.msra.mxu0 0.0
  %185 = vmatprep.subr.mxu0 0.0
  %186 = vmatpush2.msra.mxu0 0.0
  %187 = vmatprep.subr.mxu0 0.0
  %188 = vmatpush2.msra.mxu0 0.0
  %189 = vmatprep.subr.mxu0 0.0
  %190 = vmatpush2.msra.mxu0 0.0
  %191 = vmatprep.subr.mxu0 0.0
  %192 = vmatpush2.msra.mxu0 0.0
  %193 = vmatprep.subr.mxu0 0.0
  %194 = vmatpush2.msra.mxu0 0.0
  %195 = vmatprep.subr.mxu0 0.0
  %196 = vmatpush2.msra.mxu0 0.0
  %197 = vmatprep.subr.mxu0 0.0
  %198 = vmatpush2.msra.mxu0 0.0
  %199 = vmatprep.mubr.f32.mxu0 0.0
  %200 = vmatmul.mubr.f32.gmra.mxu0 %v35
  %v201 = vpop.f32.mrf.mxu0
  %v202 = vadd.f32 0.0, %v201
  %v203 = vpop.f32.mrf.mxu0
  %v204 = vadd.f32 0.0, %v203
  %205 = vmatprep.mubr.f32.mxu0 0.0
  %206 = vmatmul.mubr.f32.gmra.mxu0 %v36
  %v207 = vpop.f32.mrf.mxu0
  %v208 = vadd.f32 0.0, %v207
  %v209 = vpop.f32.mrf.mxu0
  %v210 = vadd.f32 0.0, %v209
  %211 = vmatprep.mubr.f32.mxu0 0.0
  %212 = vmatmul.mubr.f32.gmra.mxu0 %v37
  %v213 = vpop.f32.mrf.mxu0
  %v214 = vadd.f32 0.0, %v213
  %v215 = vpop.f32.mrf.mxu0
  %v216 = vadd.f32 0.0, %v215
  %217 = vmatprep.mubr.f32.mxu0 0.0
  %218 = vmatmul.mubr.f32.gmra.mxu0 %v38
  %v219 = vpop.f32.mrf.mxu0
  %v220 = vadd.f32 0.0, %v219
  %v221 = vpop.f32.mrf.mxu0
  %v222 = vadd.f32 0.0, %v221
  %223 = vdwg.mxu0
  %v224 = vld [vmem:[%s3] sm:$0xff]
  %v225 = vld [vmem:[%s3 + $0x8] sm:$0xff]
  %v226 = vld [vmem:[%s3 + $0x10] sm:$0xff]
  %v227 = vld [vmem:[%s3 + $0x18] sm:$0xff]
  %v228 = vld [vmem:[%s3 + $0x20] sm:$0xff]
  %v229 = vld [vmem:[%s3 + $0x28] sm:$0xff]
  %v230 = vld [vmem:[%s3 + $0x30] sm:$0xff]
  %v231 = vld [vmem:[%s3 + $0x38] sm:$0xff]
  %v232 = vld [vmem:[%s3 + $0x40] sm:$0xff]
  %v233 = vld [vmem:[%s3 + $0x48] sm:$0xff]
  %v234 = vld [vmem:[%s3 + $0x50] sm:$0xff]
  %v235 = vld [vmem:[%s3 + $0x58] sm:$0xff]
  %v236 = vld [vmem:[%s3 + $0x60] sm:$0xff]
  %v237 = vld [vmem:[%s3 + $0x68] sm:$0xff]
  %v238 = vld [vmem:[%s3 + $0x70] sm:$0xff]
  %v239 = vld [vmem:[%s3 + $0x78] sm:$0xff]
  %v240 = vld [vmem:[%s3 + $0x80] sm:$0xff]
  %v241 = vld [vmem:[%s3 + $0x88] sm:$0xff]
  %v242 = vld [vmem:[%s3 + $0x90] sm:$0xff]
  %v243 = vld [vmem:[%s3 + $0x98] sm:$0xff]
  %v244 = vld [vmem:[%s3 + $0xa0] sm:$0xff]
  %v245 = vld [vmem:[%s3 + $0xa8] sm:$0xff]
  %v246 = vld [vmem:[%s3 + $0xb0] sm:$0xff]
  %v247 = vld [vmem:[%s3 + $0xb8] sm:$0xff]
  %v248 = vld [vmem:[%s3 + $0xc0] sm:$0xff]
  %v249 = vld [vmem:[%s3 + $0xc8] sm:$0xff]
  %v250 = vld [vmem:[%s3 + $0xd0] sm:$0xff]
  %v251 = vld [vmem:[%s3 + $0xd8] sm:$0xff]
  %v252 = vld [vmem:[%s3 + $0xe0] sm:$0xff]
  %v253 = vld [vmem:[%s3 + $0xe8] sm:$0xff]
  %v254 = vld [vmem:[%s3 + $0xf0] sm:$0xff]
  %v255 = vld [vmem:[%s3 + $0xf8] sm:$0xff]
  %256 = vmatprep.subr.mxu0 %v255
  %257 = vmatpush1.msra.mxu0 %v254
  %258 = vmatprep.subr.mxu0 %v253
  %259 = vmatpush1.msra.mxu0 %v252
  %260 = vmatprep.subr.mxu0 %v251
  %261 = vmatpush1.msra.mxu0 %v250
  %262 = vmatprep.subr.mxu0 %v249
  %263 = vmatpush1.msra.mxu0 %v248
  %264 = vmatprep.subr.mxu0 %v247
  %265 = vmatpush1.msra.mxu0 %v246
  %266 = vmatprep.subr.mxu0 %v245
  %267 = vmatpush1.msra.mxu0 %v244
  %268 = vmatprep.subr.mxu0 %v243
  %269 = vmatpush1.msra.mxu0 %v242
  %270 = vmatprep.subr.mxu0 %v241
  %271 = vmatpush1.msra.mxu0 %v240
  %272 = vmatprep.subr.mxu0 %v239
  %273 = vmatpush1.msra.mxu0 %v238
  %274 = vmatprep.subr.mxu0 %v237
  %275 = vmatpush1.msra.mxu0 %v236
  %276 = vmatprep.subr.mxu0 %v235
  %277 = vmatpush1.msra.mxu0 %v234
  %278 = vmatprep.subr.mxu0 %v233
  %279 = vmatpush1.msra.mxu0 %v232
  %280 = vmatprep.subr.mxu0 %v231
  %281 = vmatpush1.msra.mxu0 %v230
  %282 = vmatprep.subr.mxu0 %v229
  %283 = vmatpush1.msra.mxu0 %v228
  %284 = vmatprep.subr.mxu0 %v227
  %285 = vmatpush1.msra.mxu0 %v226
  %286 = vmatprep.subr.mxu0 %v225
  %287 = vmatpush1.msra.mxu0 %v224
  %288 = vmatprep.subr.mxu0 0.0
  %289 = vmatpush2.msra.mxu0 0.0
  %290 = vmatprep.subr.mxu0 0.0
  %291 = vmatpush2.msra.mxu0 0.0
  %292 = vmatprep.subr.mxu0 0.0
  %293 = vmatpush2.msra.mxu0 0.0
  %294 = vmatprep.subr.mxu0 0.0
  %295 = vmatpush2.msra.mxu0 0.0
  %296 = vmatprep.subr.mxu0 0.0
  %297 = vmatpush2.msra.mxu0 0.0
  %298 = vmatprep.subr.mxu0 0.0
  %299 = vmatpush2.msra.mxu0 0.0
  %300 = vmatprep.subr.mxu0 0.0
  %301 = vmatpush2.msra.mxu0 0.0
  %302 = vmatprep.subr.mxu0 0.0
  %303 = vmatpush2.msra.mxu0 0.0
  %304 = vmatprep.subr.mxu0 0.0
  %305 = vmatpush2.msra.mxu0 0.0
  %306 = vmatprep.subr.mxu0 0.0
  %307 = vmatpush2.msra.mxu0 0.0
  %308 = vmatprep.subr.mxu0 0.0
  %309 = vmatpush2.msra.mxu0 0.0
  %310 = vmatprep.subr.mxu0 0.0
  %311 = vmatpush2.msra.mxu0 0.0
  %312 = vmatprep.subr.mxu0 0.0
  %313 = vmatpush2.msra.mxu0 0.0
  %314 = vmatprep.subr.mxu0 0.0
  %315 = vmatpush2.msra.mxu0 0.0
  %316 = vmatprep.subr.mxu0 0.0
  %317 = vmatpush2.msra.mxu0 0.0
  %318 = vmatprep.subr.mxu0 0.0
  %319 = vmatpush2.msra.mxu0 0.0
  %320 = vmatprep.mubr.f32.mxu0 0.0
  %321 = vmatmul.mubr.f32.gmra.mxu0 %v35
  %v322 = vpop.f32.mrf.mxu0
  %v323 = vadd.f32 0.0, %v322
  %v324 = vpop.f32.mrf.mxu0
  %v325 = vadd.f32 0.0, %v324
  %326 = vmatprep.mubr.f32.mxu0 0.0
  %327 = vmatmul.mubr.f32.gmra.mxu0 %v36
  %v328 = vpop.f32.mrf.mxu0
  %v329 = vadd.f32 0.0, %v328
  %v330 = vpop.f32.mrf.mxu0
  %v331 = vadd.f32 0.0, %v330
  %332 = vmatprep.mubr.f32.mxu0 0.0
  %333 = vmatmul.mubr.f32.gmra.mxu0 %v37
  %v334 = vpop.f32.mrf.mxu0
  %v335 = vadd.f32 0.0, %v334
  %v336 = vpop.f32.mrf.mxu0
  %v337 = vadd.f32 0.0, %v336
  %338 = vmatprep.mubr.f32.mxu0 0.0
  %339 = vmatmul.mubr.f32.gmra.mxu0 %v38
  %v340 = vpop.f32.mrf.mxu0
  %v341 = vadd.f32 0.0, %v340
  %v342 = vpop.f32.mrf.mxu0
  %v343 = vadd.f32 0.0, %v342
  %344 = vdwg.mxu0
  %v345 = vld [vmem:[%s4] sm:$0xff]
  %v346 = vld [vmem:[%s4 + $0x8] sm:$0xff]
  %v347 = vld [vmem:[%s4 + $0x10] sm:$0xff]
  %v348 = vld [vmem:[%s4 + $0x18] sm:$0xff]
  %v349 = vld [vmem:[%s4 + $0x20] sm:$0xff]
  %v350 = vld [vmem:[%s4 + $0x28] sm:$0xff]
  %v351 = vld [vmem:[%s4 + $0x30] sm:$0xff]
  %v352 = vld [vmem:[%s4 + $0x38] sm:$0xff]
  %v353 = vld [vmem:[%s4 + $0x40] sm:$0xff]
  %v354 = vld [vmem:[%s4 + $0x48] sm:$0xff]
  %v355 = vld [vmem:[%s4 + $0x50] sm:$0xff]
  %v356 = vld [vmem:[%s4 + $0x58] sm:$0xff]
  %v357 = vld [vmem:[%s4 + $0x60] sm:$0xff]
  %v358 = vld [vmem:[%s4 + $0x68] sm:$0xff]
  %v359 = vld [vmem:[%s4 + $0x70] sm:$0xff]
  %v360 = vld [vmem:[%s4 + $0x78] sm:$0xff]
  %v361 = vld [vmem:[%s4 + $0x80] sm:$0xff]
  %v362 = vld [vmem:[%s4 + $0x88] sm:$0xff]
  %v363 = vld [vmem:[%s4 + $0x90] sm:$0xff]
  %v364 = vld [vmem:[%s4 + $0x98] sm:$0xff]
  %v365 = vld [vmem:[%s4 + $0xa0] sm:$0xff]
  %v366 = vld [vmem:[%s4 + $0xa8] sm:$0xff]
  %v367 = vld [vmem:[%s4 + $0xb0] sm:$0xff]
  %v368 = vld [vmem:[%s4 + $0xb8] sm:$0xff]
  %v369 = vld [vmem:[%s4 + $0xc0] sm:$0xff]
  %v370 = vld [vmem:[%s4 + $0xc8] sm:$0xff]
  %v371 = vld [vmem:[%s4 + $0xd0] sm:$0xff]
  %v372 = vld [vmem:[%s4 + $0xd8] sm:$0xff]
  %v373 = vld [vmem:[%s4 + $0xe0] sm:$0xff]
  %v374 = vld [vmem:[%s4 + $0xe8] sm:$0xff]
  %v375 = vld [vmem:[%s4 + $0xf0] sm:$0xff]
  %v376 = vld [vmem:[%s4 + $0xf8] sm:$0xff]
  %377 = vmatprep.subr.mxu0 %v376
  %378 = vmatpush1.msra.mxu0 %v375
  %379 = vmatprep.subr.mxu0 %v374
  %380 = vmatpush1.msra.mxu0 %v373
  %381 = vmatprep.subr.mxu0 %v372
  %382 = vmatpush1.msra.mxu0 %v371
  %383 = vmatprep.subr.mxu0 %v370
  %384 = vmatpush1.msra.mxu0 %v369
  %385 = vmatprep.subr.mxu0 %v368
  %386 = vmatpush1.msra.mxu0 %v367
  %387 = vmatprep.subr.mxu0 %v366
  %388 = vmatpush1.msra.mxu0 %v365
  %389 = vmatprep.subr.mxu0 %v364
  %390 = vmatpush1.msra.mxu0 %v363
  %391 = vmatprep.subr.mxu0 %v362
  %392 = vmatpush1.msra.mxu0 %v361
  %393 = vmatprep.subr.mxu0 %v360
  %394 = vmatpush1.msra.mxu0 %v359
  %395 = vmatprep.subr.mxu0 %v358
  %396 = vmatpush1.msra.mxu0 %v357
  %397 = vmatprep.subr.mxu0 %v356
  %398 = vmatpush1.msra.mxu0 %v355
  %399 = vmatprep.subr.mxu0 %v354
  %400 = vmatpush1.msra.mxu0 %v353
  %401 = vmatprep.subr.mxu0 %v352
  %402 = vmatpush1.msra.mxu0 %v351
  %403 = vmatprep.subr.mxu0 %v350
  %404 = vmatpush1.msra.mxu0 %v349
  %405 = vmatprep.subr.mxu0 %v348
  %406 = vmatpush1.msra.mxu0 %v347
  %407 = vmatprep.subr.mxu0 %v346
  %408 = vmatpush1.msra.mxu0 %v345
  %409 = vmatprep.subr.mxu0 0.0
  %410 = vmatpush2.msra.mxu0 0.0
  %411 = vmatprep.subr.mxu0 0.0
  %412 = vmatpush2.msra.mxu0 0.0
  %413 = vmatprep.subr.mxu0 0.0
  %414 = vmatpush2.msra.mxu0 0.0
  %415 = vmatprep.subr.mxu0 0.0
  %416 = vmatpush2.msra.mxu0 0.0
  %417 = vmatprep.subr.mxu0 0.0
  %418 = vmatpush2.msra.mxu0 0.0
  %419 = vmatprep.subr.mxu0 0.0
  %420 = vmatpush2.msra.mxu0 0.0
  %421 = vmatprep.subr.mxu0 0.0
  %422 = vmatpush2.msra.mxu0 0.0
  %423 = vmatprep.subr.mxu0 0.0
  %424 = vmatpush2.msra.mxu0 0.0
  %425 = vmatprep.subr.mxu0 0.0
  %426 = vmatpush2.msra.mxu0 0.0
  %427 = vmatprep.subr.mxu0 0.0
  %428 = vmatpush2.msra.mxu0 0.0
  %429 = vmatprep.subr.mxu0 0.0
  %430 = vmatpush2.msra.mxu0 0.0
  %431 = vmatprep.subr.mxu0 0.0
  %432 = vmatpush2.msra.mxu0 0.0
  %433 = vmatprep.subr.mxu0 0.0
  %434 = vmatpush2.msra.mxu0 0.0
  %435 = vmatprep.subr.mxu0 0.0
  %436 = vmatpush2.msra.mxu0 0.0
  %437 = vmatprep.subr.mxu0 0.0
  %438 = vmatpush2.msra.mxu0 0.0
  %439 = vmatprep.subr.mxu0 0.0
  %440 = vmatpush2.msra.mxu0 0.0
  %441 = vmatprep.mubr.f32.mxu0 0.0
  %442 = vmatmul.mubr.f32.gmra.mxu0 %v35
  %v443 = vpop.f32.mrf.mxu0
  %v444 = vadd.f32 0.0, %v443
  %v445 = vpop.f32.mrf.mxu0
  %v446 = vadd.f32 0.0, %v445
  %447 = vmatprep.mubr.f32.mxu0 0.0
  %448 = vmatmul.mubr.f32.gmra.mxu0 %v36
  %v449 = vpop.f32.mrf.mxu0
  %v450 = vadd.f32 0.0, %v449
  %v451 = vpop.f32.mrf.mxu0
  %v452 = vadd.f32 0.0, %v451
  %453 = vmatprep.mubr.f32.mxu0 0.0
  %454 = vmatmul.mubr.f32.gmra.mxu0 %v37
  %v455 = vpop.f32.mrf.mxu0
  %v456 = vadd.f32 0.0, %v455
  %v457 = vpop.f32.mrf.mxu0
  %v458 = vadd.f32 0.0, %v457
  %459 = vmatprep.mubr.f32.mxu0 0.0
  %460 = vmatmul.mubr.f32.gmra.mxu0 %v38
  %v461 = vpop.f32.mrf.mxu0
  %v462 = vadd.f32 0.0, %v461
  %v463 = vpop.f32.mrf.mxu0
  %v464 = vadd.f32 0.0, %v463
  %465 = vdwg.mxu0
  %v466 = vld [vmem:[%s5] sm:$0xff]
  %v467 = vld [vmem:[%s5 + $0x8] sm:$0xff]
  %vm468 = vcmask 64512
  %v470 = vsel %vm468, %v39, 0
  %v473 = vsel %vm468, %v40, 0
  %v476 = vsel %vm468, %v41, 0
  %v479 = vsel %vm468, %v42, 0
  %v482 = vsel %vm468, %v43, 0
  %v485 = vsel %vm468, %v44, 0
  %v488 = vsel %vm468, %v45, 0
  %v491 = vsel %vm468, %v46, 0
  %v494 = vsel %vm468, %v47, 0
  %v497 = vsel %vm468, %v48, 0
  %v500 = vsel %vm468, %v49, 0
  %v503 = vsel %vm468, %v50, 0
  %v506 = vsel %vm468, %v51, 0
  %v509 = vsel %vm468, %v52, 0
  %v512 = vsel %vm468, %v53, 0
  %v515 = vsel %vm468, %v54, 0
  %v518 = vsel %vm468, %v55, 0
  %v521 = vsel %vm468, %v56, 0
  %v524 = vsel %vm468, %v57, 0
  %v527 = vsel %vm468, %v58, 0
  %v530 = vsel %vm468, %v59, 0
  %v533 = vsel %vm468, %v60, 0
  %v536 = vsel %vm468, %v61, 0
  %v539 = vsel %vm468, %v62, 0
  %v542 = vsel %vm468, %v63, 0
  %v545 = vsel %vm468, %v64, 0
  %v548 = vsel %vm468, %v65, 0
  %v551 = vsel %vm468, %v66, 0
  %v554 = vsel %vm468, %v67, 0
  %v557 = vsel %vm468, %v68, 0
  %v560 = vsel %vm468, %v69, 0
  %v563 = vsel %vm468, %v70, 0
  %v566 = vsel %vm468, %v71, 0
  %v569 = vsel %vm468, %v72, 0
  %v572 = vsel %vm468, %v73, 0
  %v575 = vsel %vm468, %v74, 0
  %v578 = vsel %vm468, %v75, 0
  %v581 = vsel %vm468, %v76, 0
  %v584 = vsel %vm468, %v77, 0
  %v587 = vsel %vm468, %v78, 0
  %v590 = vsel %vm468, %v79, 0
  %v593 = vsel %vm468, %v80, 0
  %v596 = vsel %vm468, %v81, 0
  %v599 = vsel %vm468, %v82, 0
  %v602 = vsel %vm468, %v83, 0
  %v605 = vsel %vm468, %v84, 0
  %v608 = vsel %vm468, %v85, 0
  %v611 = vsel %vm468, %v86, 0
  %v614 = vsel %vm468, %v87, 0
  %v617 = vsel %vm468, %v88, 0
  %v620 = vsel %vm468, %v89, 0
  %v623 = vsel %vm468, %v90, 0
  %v626 = vsel %vm468, %v91, 0
  %v629 = vsel %vm468, %v92, 0
  %v632 = vsel %vm468, %v93, 0
  %v635 = vsel %vm468, %v94, 0
  %v638 = vsel %vm468, %v95, 0
  %v641 = vsel %vm468, %v96, 0
  %v644 = vsel %vm468, %v97, 0
  %v647 = vsel %vm468, %v98, 0
  %v650 = vsel %vm468, %v99, 0
  %v653 = vsel %vm468, %v100, 0
  %v656 = vsel %vm468, %v101, 0
  %v659 = vsel %vm468, %v102, 0
  %661 = vmatprep.subr.mxu0 0.0
  %662 = vmatpush1.msra.mxu0 0.0
  %663 = vmatprep.subr.mxu0 0.0
  %664 = vmatpush1.msra.mxu0 0.0
  %665 = vmatprep.subr.mxu0 0.0
  %666 = vmatpush1.msra.mxu0 0.0
  %667 = vmatprep.subr.mxu0 0.0
  %668 = vmatpush1.msra.mxu0 0.0
  %669 = vmatprep.subr.mxu0 0.0
  %670 = vmatpush1.msra.mxu0 0.0
  %671 = vmatprep.subr.mxu0 0.0
  %672 = vmatpush1.msra.mxu0 0.0
  %673 = vmatprep.subr.mxu0 0.0
  %674 = vmatpush1.msra.mxu0 0.0
  %675 = vmatprep.subr.mxu0 0.0
  %676 = vmatpush1.msra.mxu0 0.0
  %677 = vmatprep.subr.mxu0 0.0
  %678 = vmatpush1.msra.mxu0 0.0
  %679 = vmatprep.subr.mxu0 0.0
  %680 = vmatpush1.msra.mxu0 0.0
  %681 = vmatprep.subr.mxu0 0.0
  %682 = vmatpush1.msra.mxu0 0.0
  %683 = vmatprep.subr.mxu0 0.0
  %684 = vmatpush1.msra.mxu0 0.0
  %685 = vmatprep.subr.mxu0 0.0
  %686 = vmatpush1.msra.mxu0 0.0
  %687 = vmatprep.subr.mxu0 0.0
  %688 = vmatpush1.msra.mxu0 0.0
  %689 = vmatprep.subr.mxu0 0.0
  %690 = vmatpush1.msra.mxu0 0.0
  %691 = vmatprep.subr.mxu0 %v467
  %692 = vmatpush1.msra.mxu0 %v466
  %693 = vmatprep.subr.mxu0 0.0
  %694 = vmatpush2.msra.mxu0 0.0
  %695 = vmatprep.subr.mxu0 0.0
  %696 = vmatpush2.msra.mxu0 0.0
  %697 = vmatprep.subr.mxu0 0.0
  %698 = vmatpush2.msra.mxu0 0.0
  %699 = vmatprep.subr.mxu0 0.0
  %700 = vmatpush2.msra.mxu0 0.0
  %701 = vmatprep.subr.mxu0 0.0
  %702 = vmatpush2.msra.mxu0 0.0
  %703 = vmatprep.subr.mxu0 0.0
  %704 = vmatpush2.msra.mxu0 0.0
  %705 = vmatprep.subr.mxu0 0.0
  %706 = vmatpush2.msra.mxu0 0.0
  %707 = vmatprep.subr.mxu0 0.0
  %708 = vmatpush2.msra.mxu0 0.0
  %709 = vmatprep.subr.mxu0 0.0
  %710 = vmatpush2.msra.mxu0 0.0
  %711 = vmatprep.subr.mxu0 0.0
  %712 = vmatpush2.msra.mxu0 0.0
  %713 = vmatprep.subr.mxu0 0.0
  %714 = vmatpush2.msra.mxu0 0.0
  %715 = vmatprep.subr.mxu0 0.0
  %716 = vmatpush2.msra.mxu0 0.0
  %717 = vmatprep.subr.mxu0 0.0
  %718 = vmatpush2.msra.mxu0 0.0
  %719 = vmatprep.subr.mxu0 0.0
  %720 = vmatpush2.msra.mxu0 0.0
  %721 = vmatprep.subr.mxu0 0.0
  %722 = vmatpush2.msra.mxu0 0.0
  %723 = vmatprep.subr.mxu0 0.0
  %724 = vmatpush2.msra.mxu0 0.0
  %725 = vmatprep.mubr.f32.mxu0 0.0
  %726 = vmatmul.mubr.f32.gmra.mxu0 %v470
  %v727 = vpop.f32.mrf.mxu0
  %v728 = vadd.f32 0.0, %v727
  %v729 = vpop.f32.mrf.mxu0
  %v730 = vadd.f32 0.0, %v729
  %731 = vmatprep.mubr.f32.mxu0 0.0
  %732 = vmatmul.mubr.f32.gmra.mxu0 %v473
  %v733 = vpop.f32.mrf.mxu0
  %v734 = vadd.f32 0.0, %v733
  %v735 = vpop.f32.mrf.mxu0
  %v736 = vadd.f32 0.0, %v735
  %737 = vmatprep.mubr.f32.mxu0 0.0
  %738 = vmatmul.mubr.f32.gmra.mxu0 %v476
  %v739 = vpop.f32.mrf.mxu0
  %v740 = vadd.f32 0.0, %v739
  %v741 = vpop.f32.mrf.mxu0
  %v742 = vadd.f32 0.0, %v741
  %743 = vmatprep.mubr.f32.mxu0 0.0
  %744 = vmatmul.mubr.f32.gmra.mxu0 %v479
  %v745 = vpop.f32.mrf.mxu0
  %v746 = vadd.f32 0.0, %v745
  %v747 = vpop.f32.mrf.mxu0
  %v748 = vadd.f32 0.0, %v747
  %749 = vmatprep.mubr.f32.mxu0 0.0
  %750 = vmatmul.mubr.f32.gmra.mxu0 %v482
  %v751 = vpop.f32.mrf.mxu0
  %v752 = vadd.f32 0.0, %v751
  %v753 = vpop.f32.mrf.mxu0
  %v754 = vadd.f32 0.0, %v753
  %755 = vmatprep.mubr.f32.mxu0 0.0
  %756 = vmatmul.mubr.f32.gmra.mxu0 %v485
  %v757 = vpop.f32.mrf.mxu0
  %v758 = vadd.f32 0.0, %v757
  %v759 = vpop.f32.mrf.mxu0
  %v760 = vadd.f32 0.0, %v759
  %761 = vmatprep.mubr.f32.mxu0 0.0
  %762 = vmatmul.mubr.f32.gmra.mxu0 %v488
  %v763 = vpop.f32.mrf.mxu0
  %v764 = vadd.f32 0.0, %v763
  %v765 = vpop.f32.mrf.mxu0
  %v766 = vadd.f32 0.0, %v765
  %767 = vmatprep.mubr.f32.mxu0 0.0
  %768 = vmatmul.mubr.f32.gmra.mxu0 %v491
  %v769 = vpop.f32.mrf.mxu0
  %v770 = vadd.f32 0.0, %v769
  %v771 = vpop.f32.mrf.mxu0
  %v772 = vadd.f32 0.0, %v771
  %773 = vmatprep.mubr.f32.mxu0 0.0
  %774 = vmatmul.mubr.f32.gmra.mxu0 %v494
  %v775 = vpop.f32.mrf.mxu0
  %v776 = vadd.f32 0.0, %v775
  %v777 = vpop.f32.mrf.mxu0
  %v778 = vadd.f32 0.0, %v777
  %779 = vmatprep.mubr.f32.mxu0 0.0
  %780 = vmatmul.mubr.f32.gmra.mxu0 %v497
  %v781 = vpop.f32.mrf.mxu0
  %v782 = vadd.f32 0.0, %v781
  %v783 = vpop.f32.mrf.mxu0
  %v784 = vadd.f32 0.0, %v783
  %785 = vmatprep.mubr.f32.mxu0 0.0
  %786 = vmatmul.mubr.f32.gmra.mxu0 %v500
  %v787 = vpop.f32.mrf.mxu0
  %v788 = vadd.f32 0.0, %v787
  %v789 = vpop.f32.mrf.mxu0
  %v790 = vadd.f32 0.0, %v789
  %791 = vmatprep.mubr.f32.mxu0 0.0
  %792 = vmatmul.mubr.f32.gmra.mxu0 %v503
  %v793 = vpop.f32.mrf.mxu0
  %v794 = vadd.f32 0.0, %v793
  %v795 = vpop.f32.mrf.mxu0
  %v796 = vadd.f32 0.0, %v795
  %797 = vmatprep.mubr.f32.mxu0 0.0
  %798 = vmatmul.mubr.f32.gmra.mxu0 %v506
  %v799 = vpop.f32.mrf.mxu0
  %v800 = vadd.f32 0.0, %v799
  %v801 = vpop.f32.mrf.mxu0
  %v802 = vadd.f32 0.0, %v801
  %803 = vmatprep.mubr.f32.mxu0 0.0
  %804 = vmatmul.mubr.f32.gmra.mxu0 %v509
  %v805 = vpop.f32.mrf.mxu0
  %v806 = vadd.f32 0.0, %v805
  %v807 = vpop.f32.mrf.mxu0
  %v808 = vadd.f32 0.0, %v807
  %809 = vmatprep.mubr.f32.mxu0 0.0
  %810 = vmatmul.mubr.f32.gmra.mxu0 %v512
  %v811 = vpop.f32.mrf.mxu0
  %v812 = vadd.f32 0.0, %v811
  %v813 = vpop.f32.mrf.mxu0
  %v814 = vadd.f32 0.0, %v813
  %815 = vmatprep.mubr.f32.mxu0 0.0
  %816 = vmatmul.mubr.f32.gmra.mxu0 %v515
  %v817 = vpop.f32.mrf.mxu0
  %v818 = vadd.f32 0.0, %v817
  %v819 = vpop.f32.mrf.mxu0
  %v820 = vadd.f32 0.0, %v819
  %821 = vmatprep.mubr.f32.mxu0 0.0
  %822 = vmatmul.mubr.f32.gmra.mxu0 %v518
  %v823 = vpop.f32.mrf.mxu0
  %v824 = vadd.f32 0.0, %v823
  %v825 = vpop.f32.mrf.mxu0
  %v826 = vadd.f32 0.0, %v825
  %827 = vmatprep.mubr.f32.mxu0 0.0
  %828 = vmatmul.mubr.f32.gmra.mxu0 %v521
  %v829 = vpop.f32.mrf.mxu0
  %v830 = vadd.f32 0.0, %v829
  %v831 = vpop.f32.mrf.mxu0
  %v832 = vadd.f32 0.0, %v831
  %833 = vmatprep.mubr.f32.mxu0 0.0
  %834 = vmatmul.mubr.f32.gmra.mxu0 %v524
  %v835 = vpop.f32.mrf.mxu0
  %v836 = vadd.f32 0.0, %v835
  %v837 = vpop.f32.mrf.mxu0
  %v838 = vadd.f32 0.0, %v837
  %839 = vmatprep.mubr.f32.mxu0 0.0
  %840 = vmatmul.mubr.f32.gmra.mxu0 %v527
  %v841 = vpop.f32.mrf.mxu0
  %v842 = vadd.f32 0.0, %v841
  %v843 = vpop.f32.mrf.mxu0
  %v844 = vadd.f32 0.0, %v843
  %845 = vmatprep.mubr.f32.mxu0 0.0
  %846 = vmatmul.mubr.f32.gmra.mxu0 %v530
  %v847 = vpop.f32.mrf.mxu0
  %v848 = vadd.f32 0.0, %v847
  %v849 = vpop.f32.mrf.mxu0
  %v850 = vadd.f32 0.0, %v849
  %851 = vmatprep.mubr.f32.mxu0 0.0
  %852 = vmatmul.mubr.f32.gmra.mxu0 %v533
  %v853 = vpop.f32.mrf.mxu0
  %v854 = vadd.f32 0.0, %v853
  %v855 = vpop.f32.mrf.mxu0
  %v856 = vadd.f32 0.0, %v855
  %857 = vmatprep.mubr.f32.mxu0 0.0
  %858 = vmatmul.mubr.f32.gmra.mxu0 %v536
  %v859 = vpop.f32.mrf.mxu0
  %v860 = vadd.f32 0.0, %v859
  %v861 = vpop.f32.mrf.mxu0
  %v862 = vadd.f32 0.0, %v861
  %863 = vmatprep.mubr.f32.mxu0 0.0
  %864 = vmatmul.mubr.f32.gmra.mxu0 %v539
  %v865 = vpop.f32.mrf.mxu0
  %v866 = vadd.f32 0.0, %v865
  %v867 = vpop.f32.mrf.mxu0
  %v868 = vadd.f32 0.0, %v867
  %869 = vmatprep.mubr.f32.mxu0 0.0
  %870 = vmatmul.mubr.f32.gmra.mxu0 %v542
  %v871 = vpop.f32.mrf.mxu0
  %v872 = vadd.f32 0.0, %v871
  %v873 = vpop.f32.mrf.mxu0
  %v874 = vadd.f32 0.0, %v873
  %875 = vmatprep.mubr.f32.mxu0 0.0
  %876 = vmatmul.mubr.f32.gmra.mxu0 %v545
  %v877 = vpop.f32.mrf.mxu0
  %v878 = vadd.f32 0.0, %v877
  %v879 = vpop.f32.mrf.mxu0
  %v880 = vadd.f32 0.0, %v879
  %881 = vmatprep.mubr.f32.mxu0 0.0
  %882 = vmatmul.mubr.f32.gmra.mxu0 %v548
  %v883 = vpop.f32.mrf.mxu0
  %v884 = vadd.f32 0.0, %v883
  %v885 = vpop.f32.mrf.mxu0
  %v886 = vadd.f32 0.0, %v885
  %887 = vmatprep.mubr.f32.mxu0 0.0
  %888 = vmatmul.mubr.f32.gmra.mxu0 %v551
  %v889 = vpop.f32.mrf.mxu0
  %v890 = vadd.f32 0.0, %v889
  %v891 = vpop.f32.mrf.mxu0
  %v892 = vadd.f32 0.0, %v891
  %893 = vmatprep.mubr.f32.mxu0 0.0
  %894 = vmatmul.mubr.f32.gmra.mxu0 %v554
  %v895 = vpop.f32.mrf.mxu0
  %v896 = vadd.f32 0.0, %v895
  %v897 = vpop.f32.mrf.mxu0
  %v898 = vadd.f32 0.0, %v897
  %899 = vmatprep.mubr.f32.mxu0 0.0
  %900 = vmatmul.mubr.f32.gmra.mxu0 %v557
  %v901 = vpop.f32.mrf.mxu0
  %v902 = vadd.f32 0.0, %v901
  %v903 = vpop.f32.mrf.mxu0
  %v904 = vadd.f32 0.0, %v903
  %905 = vmatprep.mubr.f32.mxu0 0.0
  %906 = vmatmul.mubr.f32.gmra.mxu0 %v560
  %v907 = vpop.f32.mrf.mxu0
  %v908 = vadd.f32 0.0, %v907
  %v909 = vpop.f32.mrf.mxu0
  %v910 = vadd.f32 0.0, %v909
  %911 = vmatprep.mubr.f32.mxu0 0.0
  %912 = vmatmul.mubr.f32.gmra.mxu0 %v563
  %v913 = vpop.f32.mrf.mxu0
  %v914 = vadd.f32 0.0, %v913
  %v915 = vpop.f32.mrf.mxu0
  %v916 = vadd.f32 0.0, %v915
  %917 = vmatprep.mubr.f32.mxu0 0.0
  %918 = vmatmul.mubr.f32.gmra.mxu0 %v566
  %v919 = vpop.f32.mrf.mxu0
  %v920 = vadd.f32 0.0, %v919
  %v921 = vpop.f32.mrf.mxu0
  %v922 = vadd.f32 0.0, %v921
  %923 = vmatprep.mubr.f32.mxu0 0.0
  %924 = vmatmul.mubr.f32.gmra.mxu0 %v569
  %v925 = vpop.f32.mrf.mxu0
  %v926 = vadd.f32 0.0, %v925
  %v927 = vpop.f32.mrf.mxu0
  %v928 = vadd.f32 0.0, %v927
  %929 = vmatprep.mubr.f32.mxu0 0.0
  %930 = vmatmul.mubr.f32.gmra.mxu0 %v572
  %v931 = vpop.f32.mrf.mxu0
  %v932 = vadd.f32 0.0, %v931
  %v933 = vpop.f32.mrf.mxu0
  %v934 = vadd.f32 0.0, %v933
  %935 = vmatprep.mubr.f32.mxu0 0.0
  %936 = vmatmul.mubr.f32.gmra.mxu0 %v575
  %v937 = vpop.f32.mrf.mxu0
  %v938 = vadd.f32 0.0, %v937
  %v939 = vpop.f32.mrf.mxu0
  %v940 = vadd.f32 0.0, %v939
  %941 = vmatprep.mubr.f32.mxu0 0.0
  %942 = vmatmul.mubr.f32.gmra.mxu0 %v578
  %v943 = vpop.f32.mrf.mxu0
  %v944 = vadd.f32 0.0, %v943
  %v945 = vpop.f32.mrf.mxu0
  %v946 = vadd.f32 0.0, %v945
  %947 = vmatprep.mubr.f32.mxu0 0.0
  %948 = vmatmul.mubr.f32.gmra.mxu0 %v581
  %v949 = vpop.f32.mrf.mxu0
  %v950 = vadd.f32 0.0, %v949
  %v951 = vpop.f32.mrf.mxu0
  %v952 = vadd.f32 0.0, %v951
  %953 = vmatprep.mubr.f32.mxu0 0.0
  %954 = vmatmul.mubr.f32.gmra.mxu0 %v584
  %v955 = vpop.f32.mrf.mxu0
  %v956 = vadd.f32 0.0, %v955
  %v957 = vpop.f32.mrf.mxu0
  %v958 = vadd.f32 0.0, %v957
  %959 = vmatprep.mubr.f32.mxu0 0.0
  %960 = vmatmul.mubr.f32.gmra.mxu0 %v587
  %v961 = vpop.f32.mrf.mxu0
  %v962 = vadd.f32 0.0, %v961
  %v963 = vpop.f32.mrf.mxu0
  %v964 = vadd.f32 0.0, %v963
  %965 = vmatprep.mubr.f32.mxu0 0.0
  %966 = vmatmul.mubr.f32.gmra.mxu0 %v590
  %v967 = vpop.f32.mrf.mxu0
  %v968 = vadd.f32 0.0, %v967
  %v969 = vpop.f32.mrf.mxu0
  %v970 = vadd.f32 0.0, %v969
  %971 = vmatprep.mubr.f32.mxu0 0.0
  %972 = vmatmul.mubr.f32.gmra.mxu0 %v593
  %v973 = vpop.f32.mrf.mxu0
  %v974 = vadd.f32 0.0, %v973
  %v975 = vpop.f32.mrf.mxu0
  %v976 = vadd.f32 0.0, %v975
  %977 = vmatprep.mubr.f32.mxu0 0.0
  %978 = vmatmul.mubr.f32.gmra.mxu0 %v596
  %v979 = vpop.f32.mrf.mxu0
  %v980 = vadd.f32 0.0, %v979
  %v981 = vpop.f32.mrf.mxu0
  %v982 = vadd.f32 0.0, %v981
  %983 = vmatprep.mubr.f32.mxu0 0.0
  %984 = vmatmul.mubr.f32.gmra.mxu0 %v599
  %v985 = vpop.f32.mrf.mxu0
  %v986 = vadd.f32 0.0, %v985
  %v987 = vpop.f32.mrf.mxu0
  %v988 = vadd.f32 0.0, %v987
  %989 = vmatprep.mubr.f32.mxu0 0.0
  %990 = vmatmul.mubr.f32.gmra.mxu0 %v602
  %v991 = vpop.f32.mrf.mxu0
  %v992 = vadd.f32 0.0, %v991
  %v993 = vpop.f32.mrf.mxu0
  %v994 = vadd.f32 0.0, %v993
  %995 = vmatprep.mubr.f32.mxu0 0.0
  %996 = vmatmul.mubr.f32.gmra.mxu0 %v605
  %v997 = vpop.f32.mrf.mxu0
  %v998 = vadd.f32 0.0, %v997
  %v999 = vpop.f32.mrf.mxu0
  %v1000 = vadd.f32 0.0, %v999
  %1001 = vmatprep.mubr.f32.mxu0 0.0
  %1002 = vmatmul.mubr.f32.gmra.mxu0 %v608
  %v1003 = vpop.f32.mrf.mxu0
  %v1004 = vadd.f32 0.0, %v1003
  %v1005 = vpop.f32.mrf.mxu0
  %v1006 = vadd.f32 0.0, %v1005
  %1007 = vmatprep.mubr.f32.mxu0 0.0
  %1008 = vmatmul.mubr.f32.gmra.mxu0 %v611
  %v1009 = vpop.f32.mrf.mxu0
  %v1010 = vadd.f32 0.0, %v1009
  %v1011 = vpop.f32.mrf.mxu0
  %v1012 = vadd.f32 0.0, %v1011
  %1013 = vmatprep.mubr.f32.mxu0 0.0
  %1014 = vmatmul.mubr.f32.gmra.mxu0 %v614
  %v1015 = vpop.f32.mrf.mxu0
  %v1016 = vadd.f32 0.0, %v1015
  %v1017 = vpop.f32.mrf.mxu0
  %v1018 = vadd.f32 0.0, %v1017
  %1019 = vmatprep.mubr.f32.mxu0 0.0
  %1020 = vmatmul.mubr.f32.gmra.mxu0 %v617
  %v1021 = vpop.f32.mrf.mxu0
  %v1022 = vadd.f32 0.0, %v1021
  %v1023 = vpop.f32.mrf.mxu0
  %v1024 = vadd.f32 0.0, %v1023
  %1025 = vmatprep.mubr.f32.mxu0 0.0
  %1026 = vmatmul.mubr.f32.gmra.mxu0 %v620
  %v1027 = vpop.f32.mrf.mxu0
  %v1028 = vadd.f32 0.0, %v1027
  %v1029 = vpop.f32.mrf.mxu0
  %v1030 = vadd.f32 0.0, %v1029
  %1031 = vmatprep.mubr.f32.mxu0 0.0
  %1032 = vmatmul.mubr.f32.gmra.mxu0 %v623
  %v1033 = vpop.f32.mrf.mxu0
  %v1034 = vadd.f32 0.0, %v1033
  %v1035 = vpop.f32.mrf.mxu0
  %v1036 = vadd.f32 0.0, %v1035
  %1037 = vmatprep.mubr.f32.mxu0 0.0
  %1038 = vmatmul.mubr.f32.gmra.mxu0 %v626
  %v1039 = vpop.f32.mrf.mxu0
  %v1040 = vadd.f32 0.0, %v1039
  %v1041 = vpop.f32.mrf.mxu0
  %v1042 = vadd.f32 0.0, %v1041
  %1043 = vmatprep.mubr.f32.mxu0 0.0
  %1044 = vmatmul.mubr.f32.gmra.mxu0 %v629
  %v1045 = vpop.f32.mrf.mxu0
  %v1046 = vadd.f32 0.0, %v1045
  %v1047 = vpop.f32.mrf.mxu0
  %v1048 = vadd.f32 0.0, %v1047
  %1049 = vmatprep.mubr.f32.mxu0 0.0
  %1050 = vmatmul.mubr.f32.gmra.mxu0 %v632
  %v1051 = vpop.f32.mrf.mxu0
  %v1052 = vadd.f32 0.0, %v1051
  %v1053 = vpop.f32.mrf.mxu0
  %v1054 = vadd.f32 0.0, %v1053
  %1055 = vmatprep.mubr.f32.mxu0 0.0
  %1056 = vmatmul.mubr.f32.gmra.mxu0 %v635
  %v1057 = vpop.f32.mrf.mxu0
  %v1058 = vadd.f32 0.0, %v1057
  %v1059 = vpop.f32.mrf.mxu0
  %v1060 = vadd.f32 0.0, %v1059
  %1061 = vmatprep.mubr.f32.mxu0 0.0
  %1062 = vmatmul.mubr.f32.gmra.mxu0 %v638
  %v1063 = vpop.f32.mrf.mxu0
  %v1064 = vadd.f32 0.0, %v1063
  %v1065 = vpop.f32.mrf.mxu0
  %v1066 = vadd.f32 0.0, %v1065
  %1067 = vmatprep.mubr.f32.mxu0 0.0
  %1068 = vmatmul.mubr.f32.gmra.mxu0 %v641
  %v1069 = vpop.f32.mrf.mxu0
  %v1070 = vadd.f32 0.0, %v1069
  %v1071 = vpop.f32.mrf.mxu0
  %v1072 = vadd.f32 0.0, %v1071
  %1073 = vmatprep.mubr.f32.mxu0 0.0
  %1074 = vmatmul.mubr.f32.gmra.mxu0 %v644
  %v1075 = vpop.f32.mrf.mxu0
  %v1076 = vadd.f32 0.0, %v1075
  %v1077 = vpop.f32.mrf.mxu0
  %v1078 = vadd.f32 0.0, %v1077
  %1079 = vmatprep.mubr.f32.mxu0 0.0
  %1080 = vmatmul.mubr.f32.gmra.mxu0 %v647
  %v1081 = vpop.f32.mrf.mxu0
  %v1082 = vadd.f32 0.0, %v1081
  %v1083 = vpop.f32.mrf.mxu0
  %v1084 = vadd.f32 0.0, %v1083
  %1085 = vmatprep.mubr.f32.mxu0 0.0
  %1086 = vmatmul.mubr.f32.gmra.mxu0 %v650
  %v1087 = vpop.f32.mrf.mxu0
  %v1088 = vadd.f32 0.0, %v1087
  %v1089 = vpop.f32.mrf.mxu0
  %v1090 = vadd.f32 0.0, %v1089
  %1091 = vmatprep.mubr.f32.mxu0 0.0
  %1092 = vmatmul.mubr.f32.gmra.mxu0 %v653
  %v1093 = vpop.f32.mrf.mxu0
  %v1094 = vadd.f32 0.0, %v1093
  %v1095 = vpop.f32.mrf.mxu0
  %v1096 = vadd.f32 0.0, %v1095
  %1097 = vmatprep.mubr.f32.mxu0 0.0
  %1098 = vmatmul.mubr.f32.gmra.mxu0 %v656
  %v1099 = vpop.f32.mrf.mxu0
  %v1100 = vadd.f32 0.0, %v1099
  %v1101 = vpop.f32.mrf.mxu0
  %v1102 = vadd.f32 0.0, %v1101
  %1103 = vmatprep.mubr.f32.mxu0 0.0
  %1104 = vmatmul.mubr.f32.gmra.mxu0 %v659
  %v1105 = vpop.f32.mrf.mxu0
  %v1106 = vadd.f32 0.0, %v1105
  %v1107 = vpop.f32.mrf.mxu0
  %v1108 = vadd.f32 0.0, %v1107
  %1109 = vdwg.mxu0
  %v1110 = vld [vmem:[%s6] sm:$0xff]
  %v1111 = vld [vmem:[%s6 + $0x8] sm:$0xff]
  %1112 = vmatprep.subr.mxu0 0.0
  %1113 = vmatpush1.msra.mxu0 0.0
  %1114 = vmatprep.subr.mxu0 0.0
  %1115 = vmatpush1.msra.mxu0 0.0
  %1116 = vmatprep.subr.mxu0 0.0
  %1117 = vmatpush1.msra.mxu0 0.0
  %1118 = vmatprep.subr.mxu0 0.0
  %1119 = vmatpush1.msra.mxu0 0.0
  %1120 = vmatprep.subr.mxu0 0.0
  %1121 = vmatpush1.msra.mxu0 0.0
  %1122 = vmatprep.subr.mxu0 0.0
  %1123 = vmatpush1.msra.mxu0 0.0
  %1124 = vmatprep.subr.mxu0 0.0
  %1125 = vmatpush1.msra.mxu0 0.0
  %1126 = vmatprep.subr.mxu0 0.0
  %1127 = vmatpush1.msra.mxu0 0.0
  %1128 = vmatprep.subr.mxu0 0.0
  %1129 = vmatpush1.msra.mxu0 0.0
  %1130 = vmatprep.subr.mxu0 0.0
  %1131 = vmatpush1.msra.mxu0 0.0
  %1132 = vmatprep.subr.mxu0 0.0
  %1133 = vmatpush1.msra.mxu0 0.0
  %1134 = vmatprep.subr.mxu0 0.0
  %1135 = vmatpush1.msra.mxu0 0.0
  %1136 = vmatprep.subr.mxu0 0.0
  %1137 = vmatpush1.msra.mxu0 0.0
  %1138 = vmatprep.subr.mxu0 0.0
  %1139 = vmatpush1.msra.mxu0 0.0
  %1140 = vmatprep.subr.mxu0 0.0
  %1141 = vmatpush1.msra.mxu0 0.0
  %1142 = vmatprep.subr.mxu0 %v1111
  %1143 = vmatpush1.msra.mxu0 %v1110
  %1144 = vmatprep.subr.mxu0 0.0
  %1145 = vmatpush2.msra.mxu0 0.0
  %1146 = vmatprep.subr.mxu0 0.0
  %1147 = vmatpush2.msra.mxu0 0.0
  %1148 = vmatprep.subr.mxu0 0.0
  %1149 = vmatpush2.msra.mxu0 0.0
  %1150 = vmatprep.subr.mxu0 0.0
  %1151 = vmatpush2.msra.mxu0 0.0
  %1152 = vmatprep.subr.mxu0 0.0
  %1153 = vmatpush2.msra.mxu0 0.0
  %1154 = vmatprep.subr.mxu0 0.0
  %1155 = vmatpush2.msra.mxu0 0.0
  %1156 = vmatprep.subr.mxu0 0.0
  %1157 = vmatpush2.msra.mxu0 0.0
  %1158 = vmatprep.subr.mxu0 0.0
  %1159 = vmatpush2.msra.mxu0 0.0
  %1160 = vmatprep.subr.mxu0 0.0
  %1161 = vmatpush2.msra.mxu0 0.0
  %1162 = vmatprep.subr.mxu0 0.0
  %1163 = vmatpush2.msra.mxu0 0.0
  %1164 = vmatprep.subr.mxu0 0.0
  %1165 = vmatpush2.msra.mxu0 0.0
  %1166 = vmatprep.subr.mxu0 0.0
  %1167 = vmatpush2.msra.mxu0 0.0
  %1168 = vmatprep.subr.mxu0 0.0
  %1169 = vmatpush2.msra.mxu0 0.0
  %1170 = vmatprep.subr.mxu0 0.0
  %1171 = vmatpush2.msra.mxu0 0.0
  %1172 = vmatprep.subr.mxu0 0.0
  %1173 = vmatpush2.msra.mxu0 0.0
  %1174 = vmatprep.subr.mxu0 0.0
  %1175 = vmatpush2.msra.mxu0 0.0
  %1176 = vmatprep.mubr.f32.mxu0 0.0
  %1177 = vmatmul.mubr.f32.gmra.mxu0 %v470
  %v1178 = vpop.f32.mrf.mxu0
  %v1179 = vadd.f32 0.0, %v1178
  %v1180 = vpop.f32.mrf.mxu0
  %v1181 = vadd.f32 0.0, %v1180
  %1182 = vmatprep.mubr.f32.mxu0 0.0
  %1183 = vmatmul.mubr.f32.gmra.mxu0 %v473
  %v1184 = vpop.f32.mrf.mxu0
  %v1185 = vadd.f32 0.0, %v1184
  %v1186 = vpop.f32.mrf.mxu0
  %v1187 = vadd.f32 0.0, %v1186
  %1188 = vmatprep.mubr.f32.mxu0 0.0
  %1189 = vmatmul.mubr.f32.gmra.mxu0 %v476
  %v1190 = vpop.f32.mrf.mxu0
  %v1191 = vadd.f32 0.0, %v1190
  %v1192 = vpop.f32.mrf.mxu0
  %v1193 = vadd.f32 0.0, %v1192
  %1194 = vmatprep.mubr.f32.mxu0 0.0
  %1195 = vmatmul.mubr.f32.gmra.mxu0 %v479
  %v1196 = vpop.f32.mrf.mxu0
  %v1197 = vadd.f32 0.0, %v1196
  %v1198 = vpop.f32.mrf.mxu0
  %v1199 = vadd.f32 0.0, %v1198
  %1200 = vmatprep.mubr.f32.mxu0 0.0
  %1201 = vmatmul.mubr.f32.gmra.mxu0 %v482
  %v1202 = vpop.f32.mrf.mxu0
  %v1203 = vadd.f32 0.0, %v1202
  %v1204 = vpop.f32.mrf.mxu0
  %v1205 = vadd.f32 0.0, %v1204
  %1206 = vmatprep.mubr.f32.mxu0 0.0
  %1207 = vmatmul.mubr.f32.gmra.mxu0 %v485
  %v1208 = vpop.f32.mrf.mxu0
  %v1209 = vadd.f32 0.0, %v1208
  %v1210 = vpop.f32.mrf.mxu0
  %v1211 = vadd.f32 0.0, %v1210
  %1212 = vmatprep.mubr.f32.mxu0 0.0
  %1213 = vmatmul.mubr.f32.gmra.mxu0 %v488
  %v1214 = vpop.f32.mrf.mxu0
  %v1215 = vadd.f32 0.0, %v1214
  %v1216 = vpop.f32.mrf.mxu0
  %v1217 = vadd.f32 0.0, %v1216
  %1218 = vmatprep.mubr.f32.mxu0 0.0
  %1219 = vmatmul.mubr.f32.gmra.mxu0 %v491
  %v1220 = vpop.f32.mrf.mxu0
  %v1221 = vadd.f32 0.0, %v1220
  %v1222 = vpop.f32.mrf.mxu0
  %v1223 = vadd.f32 0.0, %v1222
  %1224 = vmatprep.mubr.f32.mxu0 0.0
  %1225 = vmatmul.mubr.f32.gmra.mxu0 %v494
  %v1226 = vpop.f32.mrf.mxu0
  %v1227 = vadd.f32 0.0, %v1226
  %v1228 = vpop.f32.mrf.mxu0
  %v1229 = vadd.f32 0.0, %v1228
  %1230 = vmatprep.mubr.f32.mxu0 0.0
  %1231 = vmatmul.mubr.f32.gmra.mxu0 %v497
  %v1232 = vpop.f32.mrf.mxu0
  %v1233 = vadd.f32 0.0, %v1232
  %v1234 = vpop.f32.mrf.mxu0
  %v1235 = vadd.f32 0.0, %v1234
  %1236 = vmatprep.mubr.f32.mxu0 0.0
  %1237 = vmatmul.mubr.f32.gmra.mxu0 %v500
  %v1238 = vpop.f32.mrf.mxu0
  %v1239 = vadd.f32 0.0, %v1238
  %v1240 = vpop.f32.mrf.mxu0
  %v1241 = vadd.f32 0.0, %v1240
  %1242 = vmatprep.mubr.f32.mxu0 0.0
  %1243 = vmatmul.mubr.f32.gmra.mxu0 %v503
  %v1244 = vpop.f32.mrf.mxu0
  %v1245 = vadd.f32 0.0, %v1244
  %v1246 = vpop.f32.mrf.mxu0
  %v1247 = vadd.f32 0.0, %v1246
  %1248 = vmatprep.mubr.f32.mxu0 0.0
  %1249 = vmatmul.mubr.f32.gmra.mxu0 %v506
  %v1250 = vpop.f32.mrf.mxu0
  %v1251 = vadd.f32 0.0, %v1250
  %v1252 = vpop.f32.mrf.mxu0
  %v1253 = vadd.f32 0.0, %v1252
  %1254 = vmatprep.mubr.f32.mxu0 0.0
  %1255 = vmatmul.mubr.f32.gmra.mxu0 %v509
  %v1256 = vpop.f32.mrf.mxu0
  %v1257 = vadd.f32 0.0, %v1256
  %v1258 = vpop.f32.mrf.mxu0
  %v1259 = vadd.f32 0.0, %v1258
  %1260 = vmatprep.mubr.f32.mxu0 0.0
  %1261 = vmatmul.mubr.f32.gmra.mxu0 %v512
  %v1262 = vpop.f32.mrf.mxu0
  %v1263 = vadd.f32 0.0, %v1262
  %v1264 = vpop.f32.mrf.mxu0
  %v1265 = vadd.f32 0.0, %v1264
  %1266 = vmatprep.mubr.f32.mxu0 0.0
  %1267 = vmatmul.mubr.f32.gmra.mxu0 %v515
  %v1268 = vpop.f32.mrf.mxu0
  %v1269 = vadd.f32 0.0, %v1268
  %v1270 = vpop.f32.mrf.mxu0
  %v1271 = vadd.f32 0.0, %v1270
  %1272 = vmatprep.mubr.f32.mxu0 0.0
  %1273 = vmatmul.mubr.f32.gmra.mxu0 %v518
  %v1274 = vpop.f32.mrf.mxu0
  %v1275 = vadd.f32 0.0, %v1274
  %v1276 = vpop.f32.mrf.mxu0
  %v1277 = vadd.f32 0.0, %v1276
  %1278 = vmatprep.mubr.f32.mxu0 0.0
  %1279 = vmatmul.mubr.f32.gmra.mxu0 %v521
  %v1280 = vpop.f32.mrf.mxu0
  %v1281 = vadd.f32 0.0, %v1280
  %v1282 = vpop.f32.mrf.mxu0
  %v1283 = vadd.f32 0.0, %v1282
  %1284 = vmatprep.mubr.f32.mxu0 0.0
  %1285 = vmatmul.mubr.f32.gmra.mxu0 %v524
  %v1286 = vpop.f32.mrf.mxu0
  %v1287 = vadd.f32 0.0, %v1286
  %v1288 = vpop.f32.mrf.mxu0
  %v1289 = vadd.f32 0.0, %v1288
  %1290 = vmatprep.mubr.f32.mxu0 0.0
  %1291 = vmatmul.mubr.f32.gmra.mxu0 %v527
  %v1292 = vpop.f32.mrf.mxu0
  %v1293 = vadd.f32 0.0, %v1292
  %v1294 = vpop.f32.mrf.mxu0
  %v1295 = vadd.f32 0.0, %v1294
  %1296 = vmatprep.mubr.f32.mxu0 0.0
  %1297 = vmatmul.mubr.f32.gmra.mxu0 %v530
  %v1298 = vpop.f32.mrf.mxu0
  %v1299 = vadd.f32 0.0, %v1298
  %v1300 = vpop.f32.mrf.mxu0
  %v1301 = vadd.f32 0.0, %v1300
  %1302 = vmatprep.mubr.f32.mxu0 0.0
  %1303 = vmatmul.mubr.f32.gmra.mxu0 %v533
  %v1304 = vpop.f32.mrf.mxu0
  %v1305 = vadd.f32 0.0, %v1304
  %v1306 = vpop.f32.mrf.mxu0
  %v1307 = vadd.f32 0.0, %v1306
  %1308 = vmatprep.mubr.f32.mxu0 0.0
  %1309 = vmatmul.mubr.f32.gmra.mxu0 %v536
  %v1310 = vpop.f32.mrf.mxu0
  %v1311 = vadd.f32 0.0, %v1310
  %v1312 = vpop.f32.mrf.mxu0
  %v1313 = vadd.f32 0.0, %v1312
  %1314 = vmatprep.mubr.f32.mxu0 0.0
  %1315 = vmatmul.mubr.f32.gmra.mxu0 %v539
  %v1316 = vpop.f32.mrf.mxu0
  %v1317 = vadd.f32 0.0, %v1316
  %v1318 = vpop.f32.mrf.mxu0
  %v1319 = vadd.f32 0.0, %v1318
  %1320 = vmatprep.mubr.f32.mxu0 0.0
  %1321 = vmatmul.mubr.f32.gmra.mxu0 %v542
  %v1322 = vpop.f32.mrf.mxu0
  %v1323 = vadd.f32 0.0, %v1322
  %v1324 = vpop.f32.mrf.mxu0
  %v1325 = vadd.f32 0.0, %v1324
  %1326 = vmatprep.mubr.f32.mxu0 0.0
  %1327 = vmatmul.mubr.f32.gmra.mxu0 %v545
  %v1328 = vpop.f32.mrf.mxu0
  %v1329 = vadd.f32 0.0, %v1328
  %v1330 = vpop.f32.mrf.mxu0
  %v1331 = vadd.f32 0.0, %v1330
  %1332 = vmatprep.mubr.f32.mxu0 0.0
  %1333 = vmatmul.mubr.f32.gmra.mxu0 %v548
  %v1334 = vpop.f32.mrf.mxu0
  %v1335 = vadd.f32 0.0, %v1334
  %v1336 = vpop.f32.mrf.mxu0
  %v1337 = vadd.f32 0.0, %v1336
  %1338 = vmatprep.mubr.f32.mxu0 0.0
  %1339 = vmatmul.mubr.f32.gmra.mxu0 %v551
  %v1340 = vpop.f32.mrf.mxu0
  %v1341 = vadd.f32 0.0, %v1340
  %v1342 = vpop.f32.mrf.mxu0
  %v1343 = vadd.f32 0.0, %v1342
  %1344 = vmatprep.mubr.f32.mxu0 0.0
  %1345 = vmatmul.mubr.f32.gmra.mxu0 %v554
  %v1346 = vpop.f32.mrf.mxu0
  %v1347 = vadd.f32 0.0, %v1346
  %v1348 = vpop.f32.mrf.mxu0
  %v1349 = vadd.f32 0.0, %v1348
  %1350 = vmatprep.mubr.f32.mxu0 0.0
  %1351 = vmatmul.mubr.f32.gmra.mxu0 %v557
  %v1352 = vpop.f32.mrf.mxu0
  %v1353 = vadd.f32 0.0, %v1352
  %v1354 = vpop.f32.mrf.mxu0
  %v1355 = vadd.f32 0.0, %v1354
  %1356 = vmatprep.mubr.f32.mxu0 0.0
  %1357 = vmatmul.mubr.f32.gmra.mxu0 %v560
  %v1358 = vpop.f32.mrf.mxu0
  %v1359 = vadd.f32 0.0, %v1358
  %v1360 = vpop.f32.mrf.mxu0
  %v1361 = vadd.f32 0.0, %v1360
  %1362 = vmatprep.mubr.f32.mxu0 0.0
  %1363 = vmatmul.mubr.f32.gmra.mxu0 %v563
  %v1364 = vpop.f32.mrf.mxu0
  %v1365 = vadd.f32 0.0, %v1364
  %v1366 = vpop.f32.mrf.mxu0
  %v1367 = vadd.f32 0.0, %v1366
  %1368 = vmatprep.mubr.f32.mxu0 0.0
  %1369 = vmatmul.mubr.f32.gmra.mxu0 %v566
  %v1370 = vpop.f32.mrf.mxu0
  %v1371 = vadd.f32 0.0, %v1370
  %v1372 = vpop.f32.mrf.mxu0
  %v1373 = vadd.f32 0.0, %v1372
  %1374 = vmatprep.mubr.f32.mxu0 0.0
  %1375 = vmatmul.mubr.f32.gmra.mxu0 %v569
  %v1376 = vpop.f32.mrf.mxu0
  %v1377 = vadd.f32 0.0, %v1376
  %v1378 = vpop.f32.mrf.mxu0
  %v1379 = vadd.f32 0.0, %v1378
  %1380 = vmatprep.mubr.f32.mxu0 0.0
  %1381 = vmatmul.mubr.f32.gmra.mxu0 %v572
  %v1382 = vpop.f32.mrf.mxu0
  %v1383 = vadd.f32 0.0, %v1382
  %v1384 = vpop.f32.mrf.mxu0
  %v1385 = vadd.f32 0.0, %v1384
  %1386 = vmatprep.mubr.f32.mxu0 0.0
  %1387 = vmatmul.mubr.f32.gmra.mxu0 %v575
  %v1388 = vpop.f32.mrf.mxu0
  %v1389 = vadd.f32 0.0, %v1388
  %v1390 = vpop.f32.mrf.mxu0
  %v1391 = vadd.f32 0.0, %v1390
  %1392 = vmatprep.mubr.f32.mxu0 0.0
  %1393 = vmatmul.mubr.f32.gmra.mxu0 %v578
  %v1394 = vpop.f32.mrf.mxu0
  %v1395 = vadd.f32 0.0, %v1394
  %v1396 = vpop.f32.mrf.mxu0
  %v1397 = vadd.f32 0.0, %v1396
  %1398 = vmatprep.mubr.f32.mxu0 0.0
  %1399 = vmatmul.mubr.f32.gmra.mxu0 %v581
  %v1400 = vpop.f32.mrf.mxu0
  %v1401 = vadd.f32 0.0, %v1400
  %v1402 = vpop.f32.mrf.mxu0
  %v1403 = vadd.f32 0.0, %v1402
  %1404 = vmatprep.mubr.f32.mxu0 0.0
  %1405 = vmatmul.mubr.f32.gmra.mxu0 %v584
  %v1406 = vpop.f32.mrf.mxu0
  %v1407 = vadd.f32 0.0, %v1406
  %v1408 = vpop.f32.mrf.mxu0
  %v1409 = vadd.f32 0.0, %v1408
  %1410 = vmatprep.mubr.f32.mxu0 0.0
  %1411 = vmatmul.mubr.f32.gmra.mxu0 %v587
  %v1412 = vpop.f32.mrf.mxu0
  %v1413 = vadd.f32 0.0, %v1412
  %v1414 = vpop.f32.mrf.mxu0
  %v1415 = vadd.f32 0.0, %v1414
  %1416 = vmatprep.mubr.f32.mxu0 0.0
  %1417 = vmatmul.mubr.f32.gmra.mxu0 %v590
  %v1418 = vpop.f32.mrf.mxu0
  %v1419 = vadd.f32 0.0, %v1418
  %v1420 = vpop.f32.mrf.mxu0
  %v1421 = vadd.f32 0.0, %v1420
  %1422 = vmatprep.mubr.f32.mxu0 0.0
  %1423 = vmatmul.mubr.f32.gmra.mxu0 %v593
  %v1424 = vpop.f32.mrf.mxu0
  %v1425 = vadd.f32 0.0, %v1424
  %v1426 = vpop.f32.mrf.mxu0
  %v1427 = vadd.f32 0.0, %v1426
  %1428 = vmatprep.mubr.f32.mxu0 0.0
  %1429 = vmatmul.mubr.f32.gmra.mxu0 %v596
  %v1430 = vpop.f32.mrf.mxu0
  %v1431 = vadd.f32 0.0, %v1430
  %v1432 = vpop.f32.mrf.mxu0
  %v1433 = vadd.f32 0.0, %v1432
  %1434 = vmatprep.mubr.f32.mxu0 0.0
  %1435 = vmatmul.mubr.f32.gmra.mxu0 %v599
  %v1436 = vpop.f32.mrf.mxu0
  %v1437 = vadd.f32 0.0, %v1436
  %v1438 = vpop.f32.mrf.mxu0
  %v1439 = vadd.f32 0.0, %v1438
  %1440 = vmatprep.mubr.f32.mxu0 0.0
  %1441 = vmatmul.mubr.f32.gmra.mxu0 %v602
  %v1442 = vpop.f32.mrf.mxu0
  %v1443 = vadd.f32 0.0, %v1442
  %v1444 = vpop.f32.mrf.mxu0
  %v1445 = vadd.f32 0.0, %v1444
  %1446 = vmatprep.mubr.f32.mxu0 0.0
  %1447 = vmatmul.mubr.f32.gmra.mxu0 %v605
  %v1448 = vpop.f32.mrf.mxu0
  %v1449 = vadd.f32 0.0, %v1448
  %v1450 = vpop.f32.mrf.mxu0
  %v1451 = vadd.f32 0.0, %v1450
  %1452 = vmatprep.mubr.f32.mxu0 0.0
  %1453 = vmatmul.mubr.f32.gmra.mxu0 %v608
  %v1454 = vpop.f32.mrf.mxu0
  %v1455 = vadd.f32 0.0, %v1454
  %v1456 = vpop.f32.mrf.mxu0
  %v1457 = vadd.f32 0.0, %v1456
  %1458 = vmatprep.mubr.f32.mxu0 0.0
  %1459 = vmatmul.mubr.f32.gmra.mxu0 %v611
  %v1460 = vpop.f32.mrf.mxu0
  %v1461 = vadd.f32 0.0, %v1460
  %v1462 = vpop.f32.mrf.mxu0
  %v1463 = vadd.f32 0.0, %v1462
  %1464 = vmatprep.mubr.f32.mxu0 0.0
  %1465 = vmatmul.mubr.f32.gmra.mxu0 %v614
  %v1466 = vpop.f32.mrf.mxu0
  %v1467 = vadd.f32 0.0, %v1466
  %v1468 = vpop.f32.mrf.mxu0
  %v1469 = vadd.f32 0.0, %v1468
  %1470 = vmatprep.mubr.f32.mxu0 0.0
  %1471 = vmatmul.mubr.f32.gmra.mxu0 %v617
  %v1472 = vpop.f32.mrf.mxu0
  %v1473 = vadd.f32 0.0, %v1472
  %v1474 = vpop.f32.mrf.mxu0
  %v1475 = vadd.f32 0.0, %v1474
  %1476 = vmatprep.mubr.f32.mxu0 0.0
  %1477 = vmatmul.mubr.f32.gmra.mxu0 %v620
  %v1478 = vpop.f32.mrf.mxu0
  %v1479 = vadd.f32 0.0, %v1478
  %v1480 = vpop.f32.mrf.mxu0
  %v1481 = vadd.f32 0.0, %v1480
  %1482 = vmatprep.mubr.f32.mxu0 0.0
  %1483 = vmatmul.mubr.f32.gmra.mxu0 %v623
  %v1484 = vpop.f32.mrf.mxu0
  %v1485 = vadd.f32 0.0, %v1484
  %v1486 = vpop.f32.mrf.mxu0
  %v1487 = vadd.f32 0.0, %v1486
  %1488 = vmatprep.mubr.f32.mxu0 0.0
  %1489 = vmatmul.mubr.f32.gmra.mxu0 %v626
  %v1490 = vpop.f32.mrf.mxu0
  %v1491 = vadd.f32 0.0, %v1490
  %v1492 = vpop.f32.mrf.mxu0
  %v1493 = vadd.f32 0.0, %v1492
  %1494 = vmatprep.mubr.f32.mxu0 0.0
  %1495 = vmatmul.mubr.f32.gmra.mxu0 %v629
  %v1496 = vpop.f32.mrf.mxu0
  %v1497 = vadd.f32 0.0, %v1496
  %v1498 = vpop.f32.mrf.mxu0
  %v1499 = vadd.f32 0.0, %v1498
  %1500 = vmatprep.mubr.f32.mxu0 0.0
  %1501 = vmatmul.mubr.f32.gmra.mxu0 %v632
  %v1502 = vpop.f32.mrf.mxu0
  %v1503 = vadd.f32 0.0, %v1502
  %v1504 = vpop.f32.mrf.mxu0
  %v1505 = vadd.f32 0.0, %v1504
  %1506 = vmatprep.mubr.f32.mxu0 0.0
  %1507 = vmatmul.mubr.f32.gmra.mxu0 %v635
  %v1508 = vpop.f32.mrf.mxu0
  %v1509 = vadd.f32 0.0, %v1508
  %v1510 = vpop.f32.mrf.mxu0
  %v1511 = vadd.f32 0.0, %v1510
  %1512 = vmatprep.mubr.f32.mxu0 0.0
  %1513 = vmatmul.mubr.f32.gmra.mxu0 %v638
  %v1514 = vpop.f32.mrf.mxu0
  %v1515 = vadd.f32 0.0, %v1514
  %v1516 = vpop.f32.mrf.mxu0
  %v1517 = vadd.f32 0.0, %v1516
  %1518 = vmatprep.mubr.f32.mxu0 0.0
  %1519 = vmatmul.mubr.f32.gmra.mxu0 %v641
  %v1520 = vpop.f32.mrf.mxu0
  %v1521 = vadd.f32 0.0, %v1520
  %v1522 = vpop.f32.mrf.mxu0
  %v1523 = vadd.f32 0.0, %v1522
  %1524 = vmatprep.mubr.f32.mxu0 0.0
  %1525 = vmatmul.mubr.f32.gmra.mxu0 %v644
  %v1526 = vpop.f32.mrf.mxu0
  %v1527 = vadd.f32 0.0, %v1526
  %v1528 = vpop.f32.mrf.mxu0
  %v1529 = vadd.f32 0.0, %v1528
  %1530 = vmatprep.mubr.f32.mxu0 0.0
  %1531 = vmatmul.mubr.f32.gmra.mxu0 %v647
  %v1532 = vpop.f32.mrf.mxu0
  %v1533 = vadd.f32 0.0, %v1532
  %v1534 = vpop.f32.mrf.mxu0
  %v1535 = vadd.f32 0.0, %v1534
  %1536 = vmatprep.mubr.f32.mxu0 0.0
  %1537 = vmatmul.mubr.f32.gmra.mxu0 %v650
  %v1538 = vpop.f32.mrf.mxu0
  %v1539 = vadd.f32 0.0, %v1538
  %v1540 = vpop.f32.mrf.mxu0
  %v1541 = vadd.f32 0.0, %v1540
  %1542 = vmatprep.mubr.f32.mxu0 0.0
  %1543 = vmatmul.mubr.f32.gmra.mxu0 %v653
  %v1544 = vpop.f32.mrf.mxu0
  %v1545 = vadd.f32 0.0, %v1544
  %v1546 = vpop.f32.mrf.mxu0
  %v1547 = vadd.f32 0.0, %v1546
  %1548 = vmatprep.mubr.f32.mxu0 0.0
  %1549 = vmatmul.mubr.f32.gmra.mxu0 %v656
  %v1550 = vpop.f32.mrf.mxu0
  %v1551 = vadd.f32 0.0, %v1550
  %v1552 = vpop.f32.mrf.mxu0
  %v1553 = vadd.f32 0.0, %v1552
  %1554 = vmatprep.mubr.f32.mxu0 0.0
  %1555 = vmatmul.mubr.f32.gmra.mxu0 %v659
  %v1556 = vpop.f32.mrf.mxu0
  %v1557 = vadd.f32 0.0, %v1556
  %v1558 = vpop.f32.mrf.mxu0
  %v1559 = vadd.f32 0.0, %v1558
  %1560 = vdwg.mxu0
  %vm1561 = vcmp.gt.f32.partialorder %v39, 0.0
  %vm1562 = vcmp.gt.f32.partialorder %v40, 0.0
  %vm1563 = vcmp.gt.f32.partialorder %v41, 0.0
  %vm1564 = vcmp.gt.f32.partialorder %v42, 0.0
  %vm1565 = vcmp.gt.f32.partialorder %v43, 0.0
  %vm1566 = vcmp.gt.f32.partialorder %v44, 0.0
  %vm1567 = vcmp.gt.f32.partialorder %v45, 0.0
  %vm1568 = vcmp.gt.f32.partialorder %v46, 0.0
  %vm1569 = vcmp.gt.f32.partialorder %v47, 0.0
  %vm1570 = vcmp.gt.f32.partialorder %v48, 0.0
  %vm1571 = vcmp.gt.f32.partialorder %v49, 0.0
  %vm1572 = vcmp.gt.f32.partialorder %v50, 0.0
  %vm1573 = vcmp.gt.f32.partialorder %v51, 0.0
  %vm1574 = vcmp.gt.f32.partialorder %v52, 0.0
  %vm1575 = vcmp.gt.f32.partialorder %v53, 0.0
  %vm1576 = vcmp.gt.f32.partialorder %v54, 0.0
  %vm1577 = vcmp.gt.f32.partialorder %v55, 0.0
  %vm1578 = vcmp.gt.f32.partialorder %v56, 0.0
  %vm1579 = vcmp.gt.f32.partialorder %v57, 0.0
  %vm1580 = vcmp.gt.f32.partialorder %v58, 0.0
  %vm1581 = vcmp.gt.f32.partialorder %v59, 0.0
  %vm1582 = vcmp.gt.f32.partialorder %v60, 0.0
  %vm1583 = vcmp.gt.f32.partialorder %v61, 0.0
  %vm1584 = vcmp.gt.f32.partialorder %v62, 0.0
  %vm1585 = vcmp.gt.f32.partialorder %v63, 0.0
  %vm1586 = vcmp.gt.f32.partialorder %v64, 0.0
  %vm1587 = vcmp.gt.f32.partialorder %v65, 0.0
  %vm1588 = vcmp.gt.f32.partialorder %v66, 0.0
  %vm1589 = vcmp.gt.f32.partialorder %v67, 0.0
  %vm1590 = vcmp.gt.f32.partialorder %v68, 0.0
  %vm1591 = vcmp.gt.f32.partialorder %v69, 0.0
  %vm1592 = vcmp.gt.f32.partialorder %v70, 0.0
  %vm1593 = vcmp.gt.f32.partialorder %v71, 0.0
  %vm1594 = vcmp.gt.f32.partialorder %v72, 0.0
  %vm1595 = vcmp.gt.f32.partialorder %v73, 0.0
  %vm1596 = vcmp.gt.f32.partialorder %v74, 0.0
  %vm1597 = vcmp.gt.f32.partialorder %v75, 0.0
  %vm1598 = vcmp.gt.f32.partialorder %v76, 0.0
  %vm1599 = vcmp.gt.f32.partialorder %v77, 0.0
  %vm1600 = vcmp.gt.f32.partialorder %v78, 0.0
  %vm1601 = vcmp.gt.f32.partialorder %v79, 0.0
  %vm1602 = vcmp.gt.f32.partialorder %v80, 0.0
  %vm1603 = vcmp.gt.f32.partialorder %v81, 0.0
  %vm1604 = vcmp.gt.f32.partialorder %v82, 0.0
  %vm1605 = vcmp.gt.f32.partialorder %v83, 0.0
  %vm1606 = vcmp.gt.f32.partialorder %v84, 0.0
  %vm1607 = vcmp.gt.f32.partialorder %v85, 0.0
  %vm1608 = vcmp.gt.f32.partialorder %v86, 0.0
  %vm1609 = vcmp.gt.f32.partialorder %v87, 0.0
  %vm1610 = vcmp.gt.f32.partialorder %v88, 0.0
  %vm1611 = vcmp.gt.f32.partialorder %v89, 0.0
  %vm1612 = vcmp.gt.f32.partialorder %v90, 0.0
  %vm1613 = vcmp.gt.f32.partialorder %v91, 0.0
  %vm1614 = vcmp.gt.f32.partialorder %v92, 0.0
  %vm1615 = vcmp.gt.f32.partialorder %v93, 0.0
  %vm1616 = vcmp.gt.f32.partialorder %v94, 0.0
  %vm1617 = vcmp.gt.f32.partialorder %v95, 0.0
  %vm1618 = vcmp.gt.f32.partialorder %v96, 0.0
  %vm1619 = vcmp.gt.f32.partialorder %v97, 0.0
  %vm1620 = vcmp.gt.f32.partialorder %v98, 0.0
  %vm1621 = vcmp.gt.f32.partialorder %v99, 0.0
  %vm1622 = vcmp.gt.f32.partialorder %v100, 0.0
  %vm1623 = vcmp.gt.f32.partialorder %v101, 0.0
  %vm1624 = vcmp.gt.f32.partialorder %v102, 0.0
  %v1633 = vcombine.low %v323, %v325
  %v1634 = vcombine.high %v323, %v325
  %v1636 = vunpack.c.l.s4 1966171168
  %v1637 = vunpack.c.0.s8 %v1636
  %v1638 = vlaneseq
  %v1639 = vshrl.u32 %v1638, 7
  %v1640 = vsub.s32 %v1637, %v1639
  %v1641 = vrot.slane %v1633, %v1640
  %v1643 = vunpack.c.l.s4 1966171168
  %v1644 = vunpack.c.0.s8 %v1643
  %v1645 = vlaneseq
  %v1646 = vshrl.u32 %v1645, 7
  %v1647 = vsub.s32 %v1644, %v1646
  %v1648 = vrot.slane %v1634, %v1647
  %v1649 = vcombine.high %v1641, %v1641
  %v1650 = vcombine.high %v1648, %v1648
  %v1652 = vunpack.c.l.s4 1966171168
  %v1653 = vunpack.c.0.s8 %v1652
  %v1654 = vlaneseq
  %v1655 = vshrl.u32 %v1654, 7
  %v1656 = vsub.s32 %v1653, %v1655
  %v1657 = vrot.slane %v1641, %v1656
  %v1659 = vunpack.c.l.s4 1966171168
  %v1660 = vunpack.c.0.s8 %v1659
  %v1661 = vlaneseq
  %v1662 = vshrl.u32 %v1661, 7
  %v1663 = vsub.s32 %v1660, %v1662
  %v1664 = vrot.slane %v1648, %v1663
  %v1666 = vunpack.c.l.s4 1966171168
  %v1667 = vunpack.c.0.s8 %v1666
  %v1668 = vlaneseq
  %v1669 = vshrl.u32 %v1668, 7
  %v1670 = vsub.s32 %v1667, %v1669
  %v1671 = vrot.slane %v1649, %v1670
  %v1673 = vunpack.c.l.s4 1966171168
  %v1674 = vunpack.c.0.s8 %v1673
  %v1675 = vlaneseq
  %v1676 = vshrl.u32 %v1675, 7
  %v1677 = vsub.s32 %v1674, %v1676
  %v1678 = vrot.slane %v1650, %v1677
  %v1679 = vcombine.high %v1657, %v1657
  %v1680 = vcombine.high %v1664, %v1664
  %v1681 = vcombine.high %v1671, %v1671
  %v1682 = vcombine.high %v1678, %v1678
  %v1683 = vcombine.low %v329, %v331
  %v1684 = vcombine.high %v329, %v331
  %v1686 = vunpack.c.l.s4 1966171168
  %v1687 = vunpack.c.0.s8 %v1686
  %v1688 = vlaneseq
  %v1689 = vshrl.u32 %v1688, 7
  %v1690 = vsub.s32 %v1687, %v1689
  %v1691 = vrot.slane %v1683, %v1690
  %v1693 = vunpack.c.l.s4 1966171168
  %v1694 = vunpack.c.0.s8 %v1693
  %v1695 = vlaneseq
  %v1696 = vshrl.u32 %v1695, 7
  %v1697 = vsub.s32 %v1694, %v1696
  %v1698 = vrot.slane %v1684, %v1697
  %v1699 = vcombine.high %v1691, %v1691
  %v1700 = vcombine.high %v1698, %v1698
  %v1702 = vunpack.c.l.s4 1966171168
  %v1703 = vunpack.c.0.s8 %v1702
  %v1704 = vlaneseq
  %v1705 = vshrl.u32 %v1704, 7
  %v1706 = vsub.s32 %v1703, %v1705
  %v1707 = vrot.slane %v1691, %v1706
  %v1709 = vunpack.c.l.s4 1966171168
  %v1710 = vunpack.c.0.s8 %v1709
  %v1711 = vlaneseq
  %v1712 = vshrl.u32 %v1711, 7
  %v1713 = vsub.s32 %v1710, %v1712
  %v1714 = vrot.slane %v1698, %v1713
  %v1716 = vunpack.c.l.s4 1966171168
  %v1717 = vunpack.c.0.s8 %v1716
  %v1718 = vlaneseq
  %v1719 = vshrl.u32 %v1718, 7
  %v1720 = vsub.s32 %v1717, %v1719
  %v1721 = vrot.slane %v1699, %v1720
  %v1723 = vunpack.c.l.s4 1966171168
  %v1724 = vunpack.c.0.s8 %v1723
  %v1725 = vlaneseq
  %v1726 = vshrl.u32 %v1725, 7
  %v1727 = vsub.s32 %v1724, %v1726
  %v1728 = vrot.slane %v1700, %v1727
  %v1729 = vcombine.high %v1707, %v1707
  %v1730 = vcombine.high %v1714, %v1714
  %v1731 = vcombine.high %v1721, %v1721
  %v1732 = vcombine.high %v1728, %v1728
  %v1733 = vcombine.low %v335, %v337
  %v1734 = vcombine.high %v335, %v337
  %v1736 = vunpack.c.l.s4 1966171168
  %v1737 = vunpack.c.0.s8 %v1736
  %v1738 = vlaneseq
  %v1739 = vshrl.u32 %v1738, 7
  %v1740 = vsub.s32 %v1737, %v1739
  %v1741 = vrot.slane %v1733, %v1740
  %v1743 = vunpack.c.l.s4 1966171168
  %v1744 = vunpack.c.0.s8 %v1743
  %v1745 = vlaneseq
  %v1746 = vshrl.u32 %v1745, 7
  %v1747 = vsub.s32 %v1744, %v1746
  %v1748 = vrot.slane %v1734, %v1747
  %v1749 = vcombine.high %v1741, %v1741
  %v1750 = vcombine.high %v1748, %v1748
  %v1752 = vunpack.c.l.s4 1966171168
  %v1753 = vunpack.c.0.s8 %v1752
  %v1754 = vlaneseq
  %v1755 = vshrl.u32 %v1754, 7
  %v1756 = vsub.s32 %v1753, %v1755
  %v1757 = vrot.slane %v1741, %v1756
  %v1759 = vunpack.c.l.s4 1966171168
  %v1760 = vunpack.c.0.s8 %v1759
  %v1761 = vlaneseq
  %v1762 = vshrl.u32 %v1761, 7
  %v1763 = vsub.s32 %v1760, %v1762
  %v1764 = vrot.slane %v1748, %v1763
  %v1766 = vunpack.c.l.s4 1966171168
  %v1767 = vunpack.c.0.s8 %v1766
  %v1768 = vlaneseq
  %v1769 = vshrl.u32 %v1768, 7
  %v1770 = vsub.s32 %v1767, %v1769
  %v1771 = vrot.slane %v1749, %v1770
  %v1773 = vunpack.c.l.s4 1966171168
  %v1774 = vunpack.c.0.s8 %v1773
  %v1775 = vlaneseq
  %v1776 = vshrl.u32 %v1775, 7
  %v1777 = vsub.s32 %v1774, %v1776
  %v1778 = vrot.slane %v1750, %v1777
  %v1779 = vcombine.high %v1757, %v1757
  %v1780 = vcombine.high %v1764, %v1764
  %v1781 = vcombine.high %v1771, %v1771
  %v1782 = vcombine.high %v1778, %v1778
  %v1783 = vcombine.low %v341, %v343
  %v1784 = vcombine.high %v341, %v343
  %v1786 = vunpack.c.l.s4 1966171168
  %v1787 = vunpack.c.0.s8 %v1786
  %v1788 = vlaneseq
  %v1789 = vshrl.u32 %v1788, 7
  %v1790 = vsub.s32 %v1787, %v1789
  %v1791 = vrot.slane %v1783, %v1790
  %v1793 = vunpack.c.l.s4 1966171168
  %v1794 = vunpack.c.0.s8 %v1793
  %v1795 = vlaneseq
  %v1796 = vshrl.u32 %v1795, 7
  %v1797 = vsub.s32 %v1794, %v1796
  %v1798 = vrot.slane %v1784, %v1797
  %v1799 = vcombine.high %v1791, %v1791
  %v1800 = vcombine.high %v1798, %v1798
  %v1802 = vunpack.c.l.s4 1966171168
  %v1803 = vunpack.c.0.s8 %v1802
  %v1804 = vlaneseq
  %v1805 = vshrl.u32 %v1804, 7
  %v1806 = vsub.s32 %v1803, %v1805
  %v1807 = vrot.slane %v1791, %v1806
  %v1809 = vunpack.c.l.s4 1966171168
  %v1810 = vunpack.c.0.s8 %v1809
  %v1811 = vlaneseq
  %v1812 = vshrl.u32 %v1811, 7
  %v1813 = vsub.s32 %v1810, %v1812
  %v1814 = vrot.slane %v1798, %v1813
  %v1816 = vunpack.c.l.s4 1966171168
  %v1817 = vunpack.c.0.s8 %v1816
  %v1818 = vlaneseq
  %v1819 = vshrl.u32 %v1818, 7
  %v1820 = vsub.s32 %v1817, %v1819
  %v1821 = vrot.slane %v1799, %v1820
  %v1823 = vunpack.c.l.s4 1966171168
  %v1824 = vunpack.c.0.s8 %v1823
  %v1825 = vlaneseq
  %v1826 = vshrl.u32 %v1825, 7
  %v1827 = vsub.s32 %v1824, %v1826
  %v1828 = vrot.slane %v1800, %v1827
  %v1829 = vcombine.high %v1807, %v1807
  %v1830 = vcombine.high %v1814, %v1814
  %v1831 = vcombine.high %v1821, %v1821
  %v1832 = vcombine.high %v1828, %v1828
  %v1833 = vlaneseq
  %v1834 = vshrl.u32 %v1833, 7
  %v1835 = vsub.s32 0, %v1834
  %v1836 = vrot.slane %v1657, %v1835
  %v1837 = vlaneseq
  %v1838 = vshrl.u32 %v1837, 7
  %v1839 = vsub.s32 1, %v1838
  %v1840 = vrot.slane %v1657, %v1839
  %v1841 = vlaneseq
  %v1842 = vshrl.u32 %v1841, 7
  %v1843 = vsub.s32 0, %v1842
  %v1844 = vrot.slane %v1671, %v1843
  %v1845 = vlaneseq
  %v1846 = vshrl.u32 %v1845, 7
  %v1847 = vsub.s32 1, %v1846
  %v1848 = vrot.slane %v1671, %v1847
  %v1849 = vlaneseq
  %v1850 = vshrl.u32 %v1849, 7
  %v1851 = vsub.s32 0, %v1850
  %v1852 = vrot.slane %v1679, %v1851
  %v1853 = vlaneseq
  %v1854 = vshrl.u32 %v1853, 7
  %v1855 = vsub.s32 1, %v1854
  %v1856 = vrot.slane %v1679, %v1855
  %v1857 = vlaneseq
  %v1858 = vshrl.u32 %v1857, 7
  %v1859 = vsub.s32 0, %v1858
  %v1860 = vrot.slane %v1681, %v1859
  %v1861 = vlaneseq
  %v1862 = vshrl.u32 %v1861, 7
  %v1863 = vsub.s32 1, %v1862
  %v1864 = vrot.slane %v1681, %v1863
  %v1865 = vlaneseq
  %v1866 = vshrl.u32 %v1865, 7
  %v1867 = vsub.s32 0, %v1866
  %v1868 = vrot.slane %v1664, %v1867
  %v1869 = vlaneseq
  %v1870 = vshrl.u32 %v1869, 7
  %v1871 = vsub.s32 1, %v1870
  %v1872 = vrot.slane %v1664, %v1871
  %v1873 = vlaneseq
  %v1874 = vshrl.u32 %v1873, 7
  %v1875 = vsub.s32 0, %v1874
  %v1876 = vrot.slane %v1678, %v1875
  %v1877 = vlaneseq
  %v1878 = vshrl.u32 %v1877, 7
  %v1879 = vsub.s32 1, %v1878
  %v1880 = vrot.slane %v1678, %v1879
  %v1881 = vlaneseq
  %v1882 = vshrl.u32 %v1881, 7
  %v1883 = vsub.s32 0, %v1882
  %v1884 = vrot.slane %v1680, %v1883
  %v1885 = vlaneseq
  %v1886 = vshrl.u32 %v1885, 7
  %v1887 = vsub.s32 1, %v1886
  %v1888 = vrot.slane %v1680, %v1887
  %v1889 = vlaneseq
  %v1890 = vshrl.u32 %v1889, 7
  %v1891 = vsub.s32 0, %v1890
  %v1892 = vrot.slane %v1682, %v1891
  %v1893 = vlaneseq
  %v1894 = vshrl.u32 %v1893, 7
  %v1895 = vsub.s32 1, %v1894
  %v1896 = vrot.slane %v1682, %v1895
  %v1897 = vlaneseq
  %v1898 = vshrl.u32 %v1897, 7
  %v1899 = vsub.s32 0, %v1898
  %v1900 = vrot.slane %v1707, %v1899
  %v1901 = vlaneseq
  %v1902 = vshrl.u32 %v1901, 7
  %v1903 = vsub.s32 1, %v1902
  %v1904 = vrot.slane %v1707, %v1903
  %v1905 = vlaneseq
  %v1906 = vshrl.u32 %v1905, 7
  %v1907 = vsub.s32 0, %v1906
  %v1908 = vrot.slane %v1721, %v1907
  %v1909 = vlaneseq
  %v1910 = vshrl.u32 %v1909, 7
  %v1911 = vsub.s32 1, %v1910
  %v1912 = vrot.slane %v1721, %v1911
  %v1913 = vlaneseq
  %v1914 = vshrl.u32 %v1913, 7
  %v1915 = vsub.s32 0, %v1914
  %v1916 = vrot.slane %v1729, %v1915
  %v1917 = vlaneseq
  %v1918 = vshrl.u32 %v1917, 7
  %v1919 = vsub.s32 1, %v1918
  %v1920 = vrot.slane %v1729, %v1919
  %v1921 = vlaneseq
  %v1922 = vshrl.u32 %v1921, 7
  %v1923 = vsub.s32 0, %v1922
  %v1924 = vrot.slane %v1731, %v1923
  %v1925 = vlaneseq
  %v1926 = vshrl.u32 %v1925, 7
  %v1927 = vsub.s32 1, %v1926
  %v1928 = vrot.slane %v1731, %v1927
  %v1929 = vlaneseq
  %v1930 = vshrl.u32 %v1929, 7
  %v1931 = vsub.s32 0, %v1930
  %v1932 = vrot.slane %v1714, %v1931
  %v1933 = vlaneseq
  %v1934 = vshrl.u32 %v1933, 7
  %v1935 = vsub.s32 1, %v1934
  %v1936 = vrot.slane %v1714, %v1935
  %v1937 = vlaneseq
  %v1938 = vshrl.u32 %v1937, 7
  %v1939 = vsub.s32 0, %v1938
  %v1940 = vrot.slane %v1728, %v1939
  %v1941 = vlaneseq
  %v1942 = vshrl.u32 %v1941, 7
  %v1943 = vsub.s32 1, %v1942
  %v1944 = vrot.slane %v1728, %v1943
  %v1945 = vlaneseq
  %v1946 = vshrl.u32 %v1945, 7
  %v1947 = vsub.s32 0, %v1946
  %v1948 = vrot.slane %v1730, %v1947
  %v1949 = vlaneseq
  %v1950 = vshrl.u32 %v1949, 7
  %v1951 = vsub.s32 1, %v1950
  %v1952 = vrot.slane %v1730, %v1951
  %v1953 = vlaneseq
  %v1954 = vshrl.u32 %v1953, 7
  %v1955 = vsub.s32 0, %v1954
  %v1956 = vrot.slane %v1732, %v1955
  %v1957 = vlaneseq
  %v1958 = vshrl.u32 %v1957, 7
  %v1959 = vsub.s32 1, %v1958
  %v1960 = vrot.slane %v1732, %v1959
  %v1961 = vlaneseq
  %v1962 = vshrl.u32 %v1961, 7
  %v1963 = vsub.s32 0, %v1962
  %v1964 = vrot.slane %v1757, %v1963
  %v1965 = vlaneseq
  %v1966 = vshrl.u32 %v1965, 7
  %v1967 = vsub.s32 1, %v1966
  %v1968 = vrot.slane %v1757, %v1967
  %v1969 = vlaneseq
  %v1970 = vshrl.u32 %v1969, 7
  %v1971 = vsub.s32 0, %v1970
  %v1972 = vrot.slane %v1771, %v1971
  %v1973 = vlaneseq
  %v1974 = vshrl.u32 %v1973, 7
  %v1975 = vsub.s32 1, %v1974
  %v1976 = vrot.slane %v1771, %v1975
  %v1977 = vlaneseq
  %v1978 = vshrl.u32 %v1977, 7
  %v1979 = vsub.s32 0, %v1978
  %v1980 = vrot.slane %v1779, %v1979
  %v1981 = vlaneseq
  %v1982 = vshrl.u32 %v1981, 7
  %v1983 = vsub.s32 1, %v1982
  %v1984 = vrot.slane %v1779, %v1983
  %v1985 = vlaneseq
  %v1986 = vshrl.u32 %v1985, 7
  %v1987 = vsub.s32 0, %v1986
  %v1988 = vrot.slane %v1781, %v1987
  %v1989 = vlaneseq
  %v1990 = vshrl.u32 %v1989, 7
  %v1991 = vsub.s32 1, %v1990
  %v1992 = vrot.slane %v1781, %v1991
  %v1993 = vlaneseq
  %v1994 = vshrl.u32 %v1993, 7
  %v1995 = vsub.s32 0, %v1994
  %v1996 = vrot.slane %v1764, %v1995
  %v1997 = vlaneseq
  %v1998 = vshrl.u32 %v1997, 7
  %v1999 = vsub.s32 1, %v1998
  %v2000 = vrot.slane %v1764, %v1999
  %v2001 = vlaneseq
  %v2002 = vshrl.u32 %v2001, 7
  %v2003 = vsub.s32 0, %v2002
  %v2004 = vrot.slane %v1778, %v2003
  %v2005 = vlaneseq
  %v2006 = vshrl.u32 %v2005, 7
  %v2007 = vsub.s32 1, %v2006
  %v2008 = vrot.slane %v1778, %v2007
  %v2009 = vlaneseq
  %v2010 = vshrl.u32 %v2009, 7
  %v2011 = vsub.s32 0, %v2010
  %v2012 = vrot.slane %v1780, %v2011
  %v2013 = vlaneseq
  %v2014 = vshrl.u32 %v2013, 7
  %v2015 = vsub.s32 1, %v2014
  %v2016 = vrot.slane %v1780, %v2015
  %v2017 = vlaneseq
  %v2018 = vshrl.u32 %v2017, 7
  %v2019 = vsub.s32 0, %v2018
  %v2020 = vrot.slane %v1782, %v2019
  %v2021 = vlaneseq
  %v2022 = vshrl.u32 %v2021, 7
  %v2023 = vsub.s32 1, %v2022
  %v2024 = vrot.slane %v1782, %v2023
  %v2025 = vlaneseq
  %v2026 = vshrl.u32 %v2025, 7
  %v2027 = vsub.s32 0, %v2026
  %v2028 = vrot.slane %v1807, %v2027
  %v2029 = vlaneseq
  %v2030 = vshrl.u32 %v2029, 7
  %v2031 = vsub.s32 1, %v2030
  %v2032 = vrot.slane %v1807, %v2031
  %v2033 = vlaneseq
  %v2034 = vshrl.u32 %v2033, 7
  %v2035 = vsub.s32 0, %v2034
  %v2036 = vrot.slane %v1821, %v2035
  %v2037 = vlaneseq
  %v2038 = vshrl.u32 %v2037, 7
  %v2039 = vsub.s32 1, %v2038
  %v2040 = vrot.slane %v1821, %v2039
  %v2041 = vlaneseq
  %v2042 = vshrl.u32 %v2041, 7
  %v2043 = vsub.s32 0, %v2042
  %v2044 = vrot.slane %v1829, %v2043
  %v2045 = vlaneseq
  %v2046 = vshrl.u32 %v2045, 7
  %v2047 = vsub.s32 1, %v2046
  %v2048 = vrot.slane %v1829, %v2047
  %v2049 = vlaneseq
  %v2050 = vshrl.u32 %v2049, 7
  %v2051 = vsub.s32 0, %v2050
  %v2052 = vrot.slane %v1831, %v2051
  %v2053 = vlaneseq
  %v2054 = vshrl.u32 %v2053, 7
  %v2055 = vsub.s32 1, %v2054
  %v2056 = vrot.slane %v1831, %v2055
  %v2057 = vlaneseq
  %v2058 = vshrl.u32 %v2057, 7
  %v2059 = vsub.s32 0, %v2058
  %v2060 = vrot.slane %v1814, %v2059
  %v2061 = vlaneseq
  %v2062 = vshrl.u32 %v2061, 7
  %v2063 = vsub.s32 1, %v2062
  %v2064 = vrot.slane %v1814, %v2063
  %v2065 = vlaneseq
  %v2066 = vshrl.u32 %v2065, 7
  %v2067 = vsub.s32 0, %v2066
  %v2068 = vrot.slane %v1828, %v2067
  %v2069 = vlaneseq
  %v2070 = vshrl.u32 %v2069, 7
  %v2071 = vsub.s32 1, %v2070
  %v2072 = vrot.slane %v1828, %v2071
  %v2073 = vlaneseq
  %v2074 = vshrl.u32 %v2073, 7
  %v2075 = vsub.s32 0, %v2074
  %v2076 = vrot.slane %v1830, %v2075
  %v2077 = vlaneseq
  %v2078 = vshrl.u32 %v2077, 7
  %v2079 = vsub.s32 1, %v2078
  %v2080 = vrot.slane %v1830, %v2079
  %v2081 = vlaneseq
  %v2082 = vshrl.u32 %v2081, 7
  %v2083 = vsub.s32 0, %v2082
  %v2084 = vrot.slane %v1832, %v2083
  %v2085 = vlaneseq
  %v2086 = vshrl.u32 %v2085, 7
  %v2087 = vsub.s32 1, %v2086
  %v2088 = vrot.slane %v1832, %v2087
  %v2153 = vadd.f32 %v1836, %v444
  %v2154 = vadd.f32 %v1840, %v446
  %v2155 = vadd.f32 %v1836, %v450
  %v2156 = vadd.f32 %v1840, %v452
  %v2157 = vadd.f32 %v1844, %v444
  %v2158 = vadd.f32 %v1848, %v446
  %v2159 = vadd.f32 %v1844, %v450
  %v2160 = vadd.f32 %v1848, %v452
  %v2161 = vadd.f32 %v1852, %v444
  %v2162 = vadd.f32 %v1856, %v446
  %v2163 = vadd.f32 %v1852, %v450
  %v2164 = vadd.f32 %v1856, %v452
  %v2165 = vadd.f32 %v1860, %v444
  %v2166 = vadd.f32 %v1864, %v446
  %v2167 = vadd.f32 %v1860, %v450
  %v2168 = vadd.f32 %v1864, %v452
  %v2169 = vadd.f32 %v1868, %v444
  %v2170 = vadd.f32 %v1872, %v446
  %v2171 = vadd.f32 %v1868, %v450
  %v2172 = vadd.f32 %v1872, %v452
  %v2173 = vadd.f32 %v1876, %v444
  %v2174 = vadd.f32 %v1880, %v446
  %v2175 = vadd.f32 %v1876, %v450
  %v2176 = vadd.f32 %v1880, %v452
  %v2177 = vadd.f32 %v1884, %v444
  %v2178 = vadd.f32 %v1888, %v446
  %v2179 = vadd.f32 %v1884, %v450
  %v2180 = vadd.f32 %v1888, %v452
  %v2181 = vadd.f32 %v1892, %v444
  %v2182 = vadd.f32 %v1896, %v446
  %v2183 = vadd.f32 %v1892, %v450
  %v2184 = vadd.f32 %v1896, %v452
  %v2185 = vadd.f32 %v1900, %v444
  %v2186 = vadd.f32 %v1904, %v446
  %v2187 = vadd.f32 %v1900, %v450
  %v2188 = vadd.f32 %v1904, %v452
  %v2189 = vadd.f32 %v1908, %v444
  %v2190 = vadd.f32 %v1912, %v446
  %v2191 = vadd.f32 %v1908, %v450
  %v2192 = vadd.f32 %v1912, %v452
  %v2193 = vadd.f32 %v1916, %v444
  %v2194 = vadd.f32 %v1920, %v446
  %v2195 = vadd.f32 %v1916, %v450
  %v2196 = vadd.f32 %v1920, %v452
  %v2197 = vadd.f32 %v1924, %v444
  %v2198 = vadd.f32 %v1928, %v446
  %v2199 = vadd.f32 %v1924, %v450
  %v2200 = vadd.f32 %v1928, %v452
  %v2201 = vadd.f32 %v1932, %v444
  %v2202 = vadd.f32 %v1936, %v446
  %v2203 = vadd.f32 %v1932, %v450
  %v2204 = vadd.f32 %v1936, %v452
  %v2205 = vadd.f32 %v1940, %v444
  %v2206 = vadd.f32 %v1944, %v446
  %v2207 = vadd.f32 %v1940, %v450
  %v2208 = vadd.f32 %v1944, %v452
  %v2209 = vadd.f32 %v1948, %v444
  %v2210 = vadd.f32 %v1952, %v446
  %v2211 = vadd.f32 %v1948, %v450
  %v2212 = vadd.f32 %v1952, %v452
  %v2213 = vadd.f32 %v1956, %v444
  %v2214 = vadd.f32 %v1960, %v446
  %v2215 = vadd.f32 %v1956, %v450
  %v2216 = vadd.f32 %v1960, %v452
  %v2217 = vadd.f32 %v1964, %v456
  %v2218 = vadd.f32 %v1968, %v458
  %v2219 = vadd.f32 %v1964, %v462
  %v2220 = vadd.f32 %v1968, %v464
  %v2221 = vadd.f32 %v1972, %v456
  %v2222 = vadd.f32 %v1976, %v458
  %v2223 = vadd.f32 %v1972, %v462
  %v2224 = vadd.f32 %v1976, %v464
  %v2225 = vadd.f32 %v1980, %v456
  %v2226 = vadd.f32 %v1984, %v458
  %v2227 = vadd.f32 %v1980, %v462
  %v2228 = vadd.f32 %v1984, %v464
  %v2229 = vadd.f32 %v1988, %v456
  %v2230 = vadd.f32 %v1992, %v458
  %v2231 = vadd.f32 %v1988, %v462
  %v2232 = vadd.f32 %v1992, %v464
  %v2233 = vadd.f32 %v1996, %v456
  %v2234 = vadd.f32 %v2000, %v458
  %v2235 = vadd.f32 %v1996, %v462
  %v2236 = vadd.f32 %v2000, %v464
  %v2237 = vadd.f32 %v2004, %v456
  %v2238 = vadd.f32 %v2008, %v458
  %v2239 = vadd.f32 %v2004, %v462
  %v2240 = vadd.f32 %v2008, %v464
  %v2241 = vadd.f32 %v2012, %v456
  %v2242 = vadd.f32 %v2016, %v458
  %v2243 = vadd.f32 %v2012, %v462
  %v2244 = vadd.f32 %v2016, %v464
  %v2245 = vadd.f32 %v2020, %v456
  %v2246 = vadd.f32 %v2024, %v458
  %v2247 = vadd.f32 %v2020, %v462
  %v2248 = vadd.f32 %v2024, %v464
  %v2249 = vadd.f32 %v2028, %v456
  %v2250 = vadd.f32 %v2032, %v458
  %v2251 = vadd.f32 %v2028, %v462
  %v2252 = vadd.f32 %v2032, %v464
  %v2253 = vadd.f32 %v2036, %v456
  %v2254 = vadd.f32 %v2040, %v458
  %v2255 = vadd.f32 %v2036, %v462
  %v2256 = vadd.f32 %v2040, %v464
  %v2257 = vadd.f32 %v2044, %v456
  %v2258 = vadd.f32 %v2048, %v458
  %v2259 = vadd.f32 %v2044, %v462
  %v2260 = vadd.f32 %v2048, %v464
  %v2261 = vadd.f32 %v2052, %v456
  %v2262 = vadd.f32 %v2056, %v458
  %v2263 = vadd.f32 %v2052, %v462
  %v2264 = vadd.f32 %v2056, %v464
  %v2265 = vadd.f32 %v2060, %v456
  %v2266 = vadd.f32 %v2064, %v458
  %v2267 = vadd.f32 %v2060, %v462
  %v2268 = vadd.f32 %v2064, %v464
  %v2269 = vadd.f32 %v2068, %v456
  %v2270 = vadd.f32 %v2072, %v458
  %v2271 = vadd.f32 %v2068, %v462
  %v2272 = vadd.f32 %v2072, %v464
  %v2273 = vadd.f32 %v2076, %v456
  %v2274 = vadd.f32 %v2080, %v458
  %v2275 = vadd.f32 %v2076, %v462
  %v2276 = vadd.f32 %v2080, %v464
  %v2277 = vadd.f32 %v2084, %v456
  %v2278 = vadd.f32 %v2088, %v458
  %v2279 = vadd.f32 %v2084, %v462
  %v2280 = vadd.f32 %v2088, %v464
  %v2281 = vmul.f32 %v2153, %v728
  %v2282 = vmul.f32 %v2154, %v730
  %v2283 = vmul.f32 %v2155, %v734
  %v2284 = vmul.f32 %v2156, %v736
  %v2285 = vmul.f32 %v2157, %v740
  %v2286 = vmul.f32 %v2158, %v742
  %v2287 = vmul.f32 %v2159, %v746
  %v2288 = vmul.f32 %v2160, %v748
  %v2289 = vmul.f32 %v2161, %v752
  %v2290 = vmul.f32 %v2162, %v754
  %v2291 = vmul.f32 %v2163, %v758
  %v2292 = vmul.f32 %v2164, %v760
  %v2293 = vmul.f32 %v2165, %v764
  %v2294 = vmul.f32 %v2166, %v766
  %v2295 = vmul.f32 %v2167, %v770
  %v2296 = vmul.f32 %v2168, %v772
  %v2297 = vmul.f32 %v2169, %v776
  %v2298 = vmul.f32 %v2170, %v778
  %v2299 = vmul.f32 %v2171, %v782
  %v2300 = vmul.f32 %v2172, %v784
  %v2301 = vmul.f32 %v2173, %v788
  %v2302 = vmul.f32 %v2174, %v790
  %v2303 = vmul.f32 %v2175, %v794
  %v2304 = vmul.f32 %v2176, %v796
  %v2305 = vmul.f32 %v2177, %v800
  %v2306 = vmul.f32 %v2178, %v802
  %v2307 = vmul.f32 %v2179, %v806
  %v2308 = vmul.f32 %v2180, %v808
  %v2309 = vmul.f32 %v2181, %v812
  %v2310 = vmul.f32 %v2182, %v814
  %v2311 = vmul.f32 %v2183, %v818
  %v2312 = vmul.f32 %v2184, %v820
  %v2313 = vmul.f32 %v2185, %v824
  %v2314 = vmul.f32 %v2186, %v826
  %v2315 = vmul.f32 %v2187, %v830
  %v2316 = vmul.f32 %v2188, %v832
  %v2317 = vmul.f32 %v2189, %v836
  %v2318 = vmul.f32 %v2190, %v838
  %v2319 = vmul.f32 %v2191, %v842
  %v2320 = vmul.f32 %v2192, %v844
  %v2321 = vmul.f32 %v2193, %v848
  %v2322 = vmul.f32 %v2194, %v850
  %v2323 = vmul.f32 %v2195, %v854
  %v2324 = vmul.f32 %v2196, %v856
  %v2325 = vmul.f32 %v2197, %v860
  %v2326 = vmul.f32 %v2198, %v862
  %v2327 = vmul.f32 %v2199, %v866
  %v2328 = vmul.f32 %v2200, %v868
  %v2329 = vmul.f32 %v2201, %v872
  %v2330 = vmul.f32 %v2202, %v874
  %v2331 = vmul.f32 %v2203, %v878
  %v2332 = vmul.f32 %v2204, %v880
  %v2333 = vmul.f32 %v2205, %v884
  %v2334 = vmul.f32 %v2206, %v886
  %v2335 = vmul.f32 %v2207, %v890
  %v2336 = vmul.f32 %v2208, %v892
  %v2337 = vmul.f32 %v2209, %v896
  %v2338 = vmul.f32 %v2210, %v898
  %v2339 = vmul.f32 %v2211, %v902
  %v2340 = vmul.f32 %v2212, %v904
  %v2341 = vmul.f32 %v2213, %v908
  %v2342 = vmul.f32 %v2214, %v910
  %v2343 = vmul.f32 %v2215, %v914
  %v2344 = vmul.f32 %v2216, %v916
  %v2345 = vmul.f32 %v2217, %v920
  %v2346 = vmul.f32 %v2218, %v922
  %v2347 = vmul.f32 %v2219, %v926
  %v2348 = vmul.f32 %v2220, %v928
  %v2349 = vmul.f32 %v2221, %v932
  %v2350 = vmul.f32 %v2222, %v934
  %v2351 = vmul.f32 %v2223, %v938
  %v2352 = vmul.f32 %v2224, %v940
  %v2353 = vmul.f32 %v2225, %v944
  %v2354 = vmul.f32 %v2226, %v946
  %v2355 = vmul.f32 %v2227, %v950
  %v2356 = vmul.f32 %v2228, %v952
  %v2357 = vmul.f32 %v2229, %v956
  %v2358 = vmul.f32 %v2230, %v958
  %v2359 = vmul.f32 %v2231, %v962
  %v2360 = vmul.f32 %v2232, %v964
  %v2361 = vmul.f32 %v2233, %v968
  %v2362 = vmul.f32 %v2234, %v970
  %v2363 = vmul.f32 %v2235, %v974
  %v2364 = vmul.f32 %v2236, %v976
  %v2365 = vmul.f32 %v2237, %v980
  %v2366 = vmul.f32 %v2238, %v982
  %v2367 = vmul.f32 %v2239, %v986
  %v2368 = vmul.f32 %v2240, %v988
  %v2369 = vmul.f32 %v2241, %v992
  %v2370 = vmul.f32 %v2242, %v994
  %v2371 = vmul.f32 %v2243, %v998
  %v2372 = vmul.f32 %v2244, %v1000
  %v2373 = vmul.f32 %v2245, %v1004
  %v2374 = vmul.f32 %v2246, %v1006
  %v2375 = vmul.f32 %v2247, %v1010
  %v2376 = vmul.f32 %v2248, %v1012
  %v2377 = vmul.f32 %v2249, %v1016
  %v2378 = vmul.f32 %v2250, %v1018
  %v2379 = vmul.f32 %v2251, %v1022
  %v2380 = vmul.f32 %v2252, %v1024
  %v2381 = vmul.f32 %v2253, %v1028
  %v2382 = vmul.f32 %v2254, %v1030
  %v2383 = vmul.f32 %v2255, %v1034
  %v2384 = vmul.f32 %v2256, %v1036
  %v2385 = vmul.f32 %v2257, %v1040
  %v2386 = vmul.f32 %v2258, %v1042
  %v2387 = vmul.f32 %v2259, %v1046
  %v2388 = vmul.f32 %v2260, %v1048
  %v2389 = vmul.f32 %v2261, %v1052
  %v2390 = vmul.f32 %v2262, %v1054
  %v2391 = vmul.f32 %v2263, %v1058
  %v2392 = vmul.f32 %v2264, %v1060
  %v2393 = vmul.f32 %v2265, %v1064
  %v2394 = vmul.f32 %v2266, %v1066
  %v2395 = vmul.f32 %v2267, %v1070
  %v2396 = vmul.f32 %v2268, %v1072
  %v2397 = vmul.f32 %v2269, %v1076
  %v2398 = vmul.f32 %v2270, %v1078
  %v2399 = vmul.f32 %v2271, %v1082
  %v2400 = vmul.f32 %v2272, %v1084
  %v2401 = vmul.f32 %v2273, %v1088
  %v2402 = vmul.f32 %v2274, %v1090
  %v2403 = vmul.f32 %v2275, %v1094
  %v2404 = vmul.f32 %v2276, %v1096
  %v2405 = vmul.f32 %v2277, %v1100
  %v2406 = vmul.f32 %v2278, %v1102
  %v2407 = vmul.f32 %v2279, %v1106
  %v2408 = vmul.f32 %v2280, %v1108
  %v2409 = vld [vmem:[%s8] sm:$0xff]
  %v2410 = vld [vmem:[%s8 + $0x8] sm:$0xff]
  %v2411 = vld [vmem:[%s8 + $0x10] sm:$0xff]
  %v2412 = vld [vmem:[%s8 + $0x18] sm:$0xff]
  %v2413 = vld [vmem:[%s8 + $0x20] sm:$0xff]
  %v2414 = vld [vmem:[%s8 + $0x28] sm:$0xff]
  %v2415 = vld [vmem:[%s8 + $0x30] sm:$0xff]
  %v2416 = vld [vmem:[%s8 + $0x38] sm:$0xff]
  %v2417 = vld [vmem:[%s8 + $0x40] sm:$0xff]
  %v2418 = vld [vmem:[%s8 + $0x48] sm:$0xff]
  %v2419 = vld [vmem:[%s8 + $0x50] sm:$0xff]
  %v2420 = vld [vmem:[%s8 + $0x58] sm:$0xff]
  %v2421 = vld [vmem:[%s8 + $0x60] sm:$0xff]
  %v2422 = vld [vmem:[%s8 + $0x68] sm:$0xff]
  %v2423 = vld [vmem:[%s8 + $0x70] sm:$0xff]
  %v2424 = vld [vmem:[%s8 + $0x78] sm:$0xff]
  %v2425 = vld [vmem:[%s8 + $0x80] sm:$0xff]
  %v2426 = vld [vmem:[%s8 + $0x88] sm:$0xff]
  %v2427 = vld [vmem:[%s8 + $0x90] sm:$0xff]
  %v2428 = vld [vmem:[%s8 + $0x98] sm:$0xff]
  %v2429 = vld [vmem:[%s8 + $0xa0] sm:$0xff]
  %v2430 = vld [vmem:[%s8 + $0xa8] sm:$0xff]
  %v2431 = vld [vmem:[%s8 + $0xb0] sm:$0xff]
  %v2432 = vld [vmem:[%s8 + $0xb8] sm:$0xff]
  %v2433 = vld [vmem:[%s8 + $0xc0] sm:$0xff]
  %v2434 = vld [vmem:[%s8 + $0xc8] sm:$0xff]
  %v2435 = vld [vmem:[%s8 + $0xd0] sm:$0xff]
  %v2436 = vld [vmem:[%s8 + $0xd8] sm:$0xff]
  %v2437 = vld [vmem:[%s8 + $0xe0] sm:$0xff]
  %v2438 = vld [vmem:[%s8 + $0xe8] sm:$0xff]
  %v2439 = vld [vmem:[%s8 + $0xf0] sm:$0xff]
  %v2440 = vld [vmem:[%s8 + $0xf8] sm:$0xff]
  %2441 = vmatprep.subr.mxu0 0.0
  %2442 = vmatpush1.msra.mxu0 %v2424
  %2443 = vmatprep.subr.mxu0 0.0
  %2444 = vmatpush1.msra.mxu0 %v2423
  %2445 = vmatprep.subr.mxu0 0.0
  %2446 = vmatpush1.msra.mxu0 %v2422
  %2447 = vmatprep.subr.mxu0 0.0
  %2448 = vmatpush1.msra.mxu0 %v2421
  %2449 = vmatprep.subr.mxu0 0.0
  %2450 = vmatpush1.msra.mxu0 %v2420
  %2451 = vmatprep.subr.mxu0 0.0
  %2452 = vmatpush1.msra.mxu0 %v2419
  %2453 = vmatprep.subr.mxu0 0.0
  %2454 = vmatpush1.msra.mxu0 %v2418
  %2455 = vmatprep.subr.mxu0 0.0
  %2456 = vmatpush1.msra.mxu0 %v2417
  %2457 = vmatprep.subr.mxu0 0.0
  %2458 = vmatpush1.msra.mxu0 %v2416
  %2459 = vmatprep.subr.mxu0 0.0
  %2460 = vmatpush1.msra.mxu0 %v2415
  %2461 = vmatprep.subr.mxu0 0.0
  %2462 = vmatpush1.msra.mxu0 %v2414
  %2463 = vmatprep.subr.mxu0 0.0
  %2464 = vmatpush1.msra.mxu0 %v2413
  %2465 = vmatprep.subr.mxu0 0.0
  %2466 = vmatpush1.msra.mxu0 %v2412
  %2467 = vmatprep.subr.mxu0 0.0
  %2468 = vmatpush1.msra.mxu0 %v2411
  %2469 = vmatprep.subr.mxu0 0.0
  %2470 = vmatpush1.msra.mxu0 %v2410
  %2471 = vmatprep.subr.mxu0 0.0
  %2472 = vmatpush1.msra.mxu0 %v2409
  %2473 = vmatprep.subr.mxu0 0.0
  %2474 = vmatpush2.msra.mxu0 %v2440
  %2475 = vmatprep.subr.mxu0 0.0
  %2476 = vmatpush2.msra.mxu0 %v2439
  %2477 = vmatprep.subr.mxu0 0.0
  %2478 = vmatpush2.msra.mxu0 %v2438
  %2479 = vmatprep.subr.mxu0 0.0
  %2480 = vmatpush2.msra.mxu0 %v2437
  %2481 = vmatprep.subr.mxu0 0.0
  %2482 = vmatpush2.msra.mxu0 %v2436
  %2483 = vmatprep.subr.mxu0 0.0
  %2484 = vmatpush2.msra.mxu0 %v2435
  %2485 = vmatprep.subr.mxu0 0.0
  %2486 = vmatpush2.msra.mxu0 %v2434
  %2487 = vmatprep.subr.mxu0 0.0
  %2488 = vmatpush2.msra.mxu0 %v2433
  %2489 = vmatprep.subr.mxu0 0.0
  %2490 = vmatpush2.msra.mxu0 %v2432
  %2491 = vmatprep.subr.mxu0 0.0
  %2492 = vmatpush2.msra.mxu0 %v2431
  %2493 = vmatprep.subr.mxu0 0.0
  %2494 = vmatpush2.msra.mxu0 %v2430
  %2495 = vmatprep.subr.mxu0 0.0
  %2496 = vmatpush2.msra.mxu0 %v2429
  %2497 = vmatprep.subr.mxu0 0.0
  %2498 = vmatpush2.msra.mxu0 %v2428
  %2499 = vmatprep.subr.mxu0 0.0
  %2500 = vmatpush2.msra.mxu0 %v2427
  %2501 = vmatprep.subr.mxu0 0.0
  %2502 = vmatpush2.msra.mxu0 %v2426
  %2503 = vmatprep.subr.mxu0 0.0
  %2504 = vmatpush2.msra.mxu0 %v2425
  %2505 = vmatprep.mubr.f32.mxu0 %v2282
  %2506 = vmatmul.mubr.f32.gmra.mxu0 %v2281
  %v2507 = vpop.f32.mrf.mxu0
  %v2508 = vadd.f32 0.0, %v2507
  %v2509 = vpop.f32.mrf.mxu0
  %2510 = vmatprep.mubr.f32.mxu0 %v2284
  %2511 = vmatmul.mubr.f32.gmra.mxu0 %v2283
  %v2512 = vpop.f32.mrf.mxu0
  %v2513 = vadd.f32 0.0, %v2512
  %v2514 = vpop.f32.mrf.mxu0
  %2515 = vmatprep.mubr.f32.mxu0 %v2286
  %2516 = vmatmul.mubr.f32.gmra.mxu0 %v2285
  %v2517 = vpop.f32.mrf.mxu0
  %v2518 = vadd.f32 0.0, %v2517
  %v2519 = vpop.f32.mrf.mxu0
  %2520 = vmatprep.mubr.f32.mxu0 %v2288
  %2521 = vmatmul.mubr.f32.gmra.mxu0 %v2287
  %v2522 = vpop.f32.mrf.mxu0
  %v2523 = vadd.f32 0.0, %v2522
  %v2524 = vpop.f32.mrf.mxu0
  %2525 = vmatprep.mubr.f32.mxu0 %v2290
  %2526 = vmatmul.mubr.f32.gmra.mxu0 %v2289
  %v2527 = vpop.f32.mrf.mxu0
  %v2528 = vadd.f32 0.0, %v2527
  %v2529 = vpop.f32.mrf.mxu0
  %2530 = vmatprep.mubr.f32.mxu0 %v2292
  %2531 = vmatmul.mubr.f32.gmra.mxu0 %v2291
  %v2532 = vpop.f32.mrf.mxu0
  %v2533 = vadd.f32 0.0, %v2532
  %v2534 = vpop.f32.mrf.mxu0
  %2535 = vmatprep.mubr.f32.mxu0 %v2294
  %2536 = vmatmul.mubr.f32.gmra.mxu0 %v2293
  %v2537 = vpop.f32.mrf.mxu0
  %v2538 = vadd.f32 0.0, %v2537
  %v2539 = vpop.f32.mrf.mxu0
  %2540 = vmatprep.mubr.f32.mxu0 %v2296
  %2541 = vmatmul.mubr.f32.gmra.mxu0 %v2295
  %v2542 = vpop.f32.mrf.mxu0
  %v2543 = vadd.f32 0.0, %v2542
  %v2544 = vpop.f32.mrf.mxu0
  %2545 = vmatprep.mubr.f32.mxu0 %v2298
  %2546 = vmatmul.mubr.f32.gmra.mxu0 %v2297
  %v2547 = vpop.f32.mrf.mxu0
  %v2548 = vadd.f32 0.0, %v2547
  %v2549 = vpop.f32.mrf.mxu0
  %2550 = vmatprep.mubr.f32.mxu0 %v2300
  %2551 = vmatmul.mubr.f32.gmra.mxu0 %v2299
  %v2552 = vpop.f32.mrf.mxu0
  %v2553 = vadd.f32 0.0, %v2552
  %v2554 = vpop.f32.mrf.mxu0
  %2555 = vmatprep.mubr.f32.mxu0 %v2302
  %2556 = vmatmul.mubr.f32.gmra.mxu0 %v2301
  %v2557 = vpop.f32.mrf.mxu0
  %v2558 = vadd.f32 0.0, %v2557
  %v2559 = vpop.f32.mrf.mxu0
  %2560 = vmatprep.mubr.f32.mxu0 %v2304
  %2561 = vmatmul.mubr.f32.gmra.mxu0 %v2303
  %v2562 = vpop.f32.mrf.mxu0
  %v2563 = vadd.f32 0.0, %v2562
  %v2564 = vpop.f32.mrf.mxu0
  %2565 = vmatprep.mubr.f32.mxu0 %v2306
  %2566 = vmatmul.mubr.f32.gmra.mxu0 %v2305
  %v2567 = vpop.f32.mrf.mxu0
  %v2568 = vadd.f32 0.0, %v2567
  %v2569 = vpop.f32.mrf.mxu0
  %2570 = vmatprep.mubr.f32.mxu0 %v2308
  %2571 = vmatmul.mubr.f32.gmra.mxu0 %v2307
  %v2572 = vpop.f32.mrf.mxu0
  %v2573 = vadd.f32 0.0, %v2572
  %v2574 = vpop.f32.mrf.mxu0
  %2575 = vmatprep.mubr.f32.mxu0 %v2310
  %2576 = vmatmul.mubr.f32.gmra.mxu0 %v2309
  %v2577 = vpop.f32.mrf.mxu0
  %v2578 = vadd.f32 0.0, %v2577
  %v2579 = vpop.f32.mrf.mxu0
  %2580 = vmatprep.mubr.f32.mxu0 %v2312
  %2581 = vmatmul.mubr.f32.gmra.mxu0 %v2311
  %v2582 = vpop.f32.mrf.mxu0
  %v2583 = vadd.f32 0.0, %v2582
  %v2584 = vpop.f32.mrf.mxu0
  %2585 = vmatprep.mubr.f32.mxu0 %v2314
  %2586 = vmatmul.mubr.f32.gmra.mxu0 %v2313
  %v2587 = vpop.f32.mrf.mxu0
  %v2588 = vadd.f32 0.0, %v2587
  %v2589 = vpop.f32.mrf.mxu0
  %2590 = vmatprep.mubr.f32.mxu0 %v2316
  %2591 = vmatmul.mubr.f32.gmra.mxu0 %v2315
  %v2592 = vpop.f32.mrf.mxu0
  %v2593 = vadd.f32 0.0, %v2592
  %v2594 = vpop.f32.mrf.mxu0
  %2595 = vmatprep.mubr.f32.mxu0 %v2318
  %2596 = vmatmul.mubr.f32.gmra.mxu0 %v2317
  %v2597 = vpop.f32.mrf.mxu0
  %v2598 = vadd.f32 0.0, %v2597
  %v2599 = vpop.f32.mrf.mxu0
  %2600 = vmatprep.mubr.f32.mxu0 %v2320
  %2601 = vmatmul.mubr.f32.gmra.mxu0 %v2319
  %v2602 = vpop.f32.mrf.mxu0
  %v2603 = vadd.f32 0.0, %v2602
  %v2604 = vpop.f32.mrf.mxu0
  %2605 = vmatprep.mubr.f32.mxu0 %v2322
  %2606 = vmatmul.mubr.f32.gmra.mxu0 %v2321
  %v2607 = vpop.f32.mrf.mxu0
  %v2608 = vadd.f32 0.0, %v2607
  %v2609 = vpop.f32.mrf.mxu0
  %2610 = vmatprep.mubr.f32.mxu0 %v2324
  %2611 = vmatmul.mubr.f32.gmra.mxu0 %v2323
  %v2612 = vpop.f32.mrf.mxu0
  %v2613 = vadd.f32 0.0, %v2612
  %v2614 = vpop.f32.mrf.mxu0
  %2615 = vmatprep.mubr.f32.mxu0 %v2326
  %2616 = vmatmul.mubr.f32.gmra.mxu0 %v2325
  %v2617 = vpop.f32.mrf.mxu0
  %v2618 = vadd.f32 0.0, %v2617
  %v2619 = vpop.f32.mrf.mxu0
  %2620 = vmatprep.mubr.f32.mxu0 %v2328
  %2621 = vmatmul.mubr.f32.gmra.mxu0 %v2327
  %v2622 = vpop.f32.mrf.mxu0
  %v2623 = vadd.f32 0.0, %v2622
  %v2624 = vpop.f32.mrf.mxu0
  %2625 = vmatprep.mubr.f32.mxu0 %v2330
  %2626 = vmatmul.mubr.f32.gmra.mxu0 %v2329
  %v2627 = vpop.f32.mrf.mxu0
  %v2628 = vadd.f32 0.0, %v2627
  %v2629 = vpop.f32.mrf.mxu0
  %2630 = vmatprep.mubr.f32.mxu0 %v2332
  %2631 = vmatmul.mubr.f32.gmra.mxu0 %v2331
  %v2632 = vpop.f32.mrf.mxu0
  %v2633 = vadd.f32 0.0, %v2632
  %v2634 = vpop.f32.mrf.mxu0
  %2635 = vmatprep.mubr.f32.mxu0 %v2334
  %2636 = vmatmul.mubr.f32.gmra.mxu0 %v2333
  %v2637 = vpop.f32.mrf.mxu0
  %v2638 = vadd.f32 0.0, %v2637
  %v2639 = vpop.f32.mrf.mxu0
  %2640 = vmatprep.mubr.f32.mxu0 %v2336
  %2641 = vmatmul.mubr.f32.gmra.mxu0 %v2335
  %v2642 = vpop.f32.mrf.mxu0
  %v2643 = vadd.f32 0.0, %v2642
  %v2644 = vpop.f32.mrf.mxu0
  %2645 = vmatprep.mubr.f32.mxu0 %v2338
  %2646 = vmatmul.mubr.f32.gmra.mxu0 %v2337
  %v2647 = vpop.f32.mrf.mxu0
  %v2648 = vadd.f32 0.0, %v2647
  %v2649 = vpop.f32.mrf.mxu0
  %2650 = vmatprep.mubr.f32.mxu0 %v2340
  %2651 = vmatmul.mubr.f32.gmra.mxu0 %v2339
  %v2652 = vpop.f32.mrf.mxu0
  %v2653 = vadd.f32 0.0, %v2652
  %v2654 = vpop.f32.mrf.mxu0
  %2655 = vmatprep.mubr.f32.mxu0 %v2342
  %2656 = vmatmul.mubr.f32.gmra.mxu0 %v2341
  %v2657 = vpop.f32.mrf.mxu0
  %v2658 = vadd.f32 0.0, %v2657
  %v2659 = vpop.f32.mrf.mxu0
  %2660 = vmatprep.mubr.f32.mxu0 %v2344
  %2661 = vmatmul.mubr.f32.gmra.mxu0 %v2343
  %v2662 = vpop.f32.mrf.mxu0
  %v2663 = vadd.f32 0.0, %v2662
  %v2664 = vpop.f32.mrf.mxu0
  %2665 = vmatprep.mubr.f32.mxu0 %v2346
  %2666 = vmatmul.mubr.f32.gmra.mxu0 %v2345
  %v2667 = vpop.f32.mrf.mxu0
  %v2668 = vadd.f32 0.0, %v2667
  %v2669 = vpop.f32.mrf.mxu0
  %2670 = vmatprep.mubr.f32.mxu0 %v2348
  %2671 = vmatmul.mubr.f32.gmra.mxu0 %v2347
  %v2672 = vpop.f32.mrf.mxu0
  %v2673 = vadd.f32 0.0, %v2672
  %v2674 = vpop.f32.mrf.mxu0
  %2675 = vmatprep.mubr.f32.mxu0 %v2350
  %2676 = vmatmul.mubr.f32.gmra.mxu0 %v2349
  %v2677 = vpop.f32.mrf.mxu0
  %v2678 = vadd.f32 0.0, %v2677
  %v2679 = vpop.f32.mrf.mxu0
  %2680 = vmatprep.mubr.f32.mxu0 %v2352
  %2681 = vmatmul.mubr.f32.gmra.mxu0 %v2351
  %v2682 = vpop.f32.mrf.mxu0
  %v2683 = vadd.f32 0.0, %v2682
  %v2684 = vpop.f32.mrf.mxu0
  %2685 = vmatprep.mubr.f32.mxu0 %v2354
  %2686 = vmatmul.mubr.f32.gmra.mxu0 %v2353
  %v2687 = vpop.f32.mrf.mxu0
  %v2688 = vadd.f32 0.0, %v2687
  %v2689 = vpop.f32.mrf.mxu0
  %2690 = vmatprep.mubr.f32.mxu0 %v2356
  %2691 = vmatmul.mubr.f32.gmra.mxu0 %v2355
  %v2692 = vpop.f32.mrf.mxu0
  %v2693 = vadd.f32 0.0, %v2692
  %v2694 = vpop.f32.mrf.mxu0
  %2695 = vmatprep.mubr.f32.mxu0 %v2358
  %2696 = vmatmul.mubr.f32.gmra.mxu0 %v2357
  %v2697 = vpop.f32.mrf.mxu0
  %v2698 = vadd.f32 0.0, %v2697
  %v2699 = vpop.f32.mrf.mxu0
  %2700 = vmatprep.mubr.f32.mxu0 %v2360
  %2701 = vmatmul.mubr.f32.gmra.mxu0 %v2359
  %v2702 = vpop.f32.mrf.mxu0
  %v2703 = vadd.f32 0.0, %v2702
  %v2704 = vpop.f32.mrf.mxu0
  %2705 = vmatprep.mubr.f32.mxu0 %v2362
  %2706 = vmatmul.mubr.f32.gmra.mxu0 %v2361
  %v2707 = vpop.f32.mrf.mxu0
  %v2708 = vadd.f32 0.0, %v2707
  %v2709 = vpop.f32.mrf.mxu0
  %2710 = vmatprep.mubr.f32.mxu0 %v2364
  %2711 = vmatmul.mubr.f32.gmra.mxu0 %v2363
  %v2712 = vpop.f32.mrf.mxu0
  %v2713 = vadd.f32 0.0, %v2712
  %v2714 = vpop.f32.mrf.mxu0
  %2715 = vmatprep.mubr.f32.mxu0 %v2366
  %2716 = vmatmul.mubr.f32.gmra.mxu0 %v2365
  %v2717 = vpop.f32.mrf.mxu0
  %v2718 = vadd.f32 0.0, %v2717
  %v2719 = vpop.f32.mrf.mxu0
  %2720 = vmatprep.mubr.f32.mxu0 %v2368
  %2721 = vmatmul.mubr.f32.gmra.mxu0 %v2367
  %v2722 = vpop.f32.mrf.mxu0
  %v2723 = vadd.f32 0.0, %v2722
  %v2724 = vpop.f32.mrf.mxu0
  %2725 = vmatprep.mubr.f32.mxu0 %v2370
  %2726 = vmatmul.mubr.f32.gmra.mxu0 %v2369
  %v2727 = vpop.f32.mrf.mxu0
  %v2728 = vadd.f32 0.0, %v2727
  %v2729 = vpop.f32.mrf.mxu0
  %2730 = vmatprep.mubr.f32.mxu0 %v2372
  %2731 = vmatmul.mubr.f32.gmra.mxu0 %v2371
  %v2732 = vpop.f32.mrf.mxu0
  %v2733 = vadd.f32 0.0, %v2732
  %v2734 = vpop.f32.mrf.mxu0
  %2735 = vmatprep.mubr.f32.mxu0 %v2374
  %2736 = vmatmul.mubr.f32.gmra.mxu0 %v2373
  %v2737 = vpop.f32.mrf.mxu0
  %v2738 = vadd.f32 0.0, %v2737
  %v2739 = vpop.f32.mrf.mxu0
  %2740 = vmatprep.mubr.f32.mxu0 %v2376
  %2741 = vmatmul.mubr.f32.gmra.mxu0 %v2375
  %v2742 = vpop.f32.mrf.mxu0
  %v2743 = vadd.f32 0.0, %v2742
  %v2744 = vpop.f32.mrf.mxu0
  %2745 = vmatprep.mubr.f32.mxu0 %v2378
  %2746 = vmatmul.mubr.f32.gmra.mxu0 %v2377
  %v2747 = vpop.f32.mrf.mxu0
  %v2748 = vadd.f32 0.0, %v2747
  %v2749 = vpop.f32.mrf.mxu0
  %2750 = vmatprep.mubr.f32.mxu0 %v2380
  %2751 = vmatmul.mubr.f32.gmra.mxu0 %v2379
  %v2752 = vpop.f32.mrf.mxu0
  %v2753 = vadd.f32 0.0, %v2752
  %v2754 = vpop.f32.mrf.mxu0
  %2755 = vmatprep.mubr.f32.mxu0 %v2382
  %2756 = vmatmul.mubr.f32.gmra.mxu0 %v2381
  %v2757 = vpop.f32.mrf.mxu0
  %v2758 = vadd.f32 0.0, %v2757
  %v2759 = vpop.f32.mrf.mxu0
  %2760 = vmatprep.mubr.f32.mxu0 %v2384
  %2761 = vmatmul.mubr.f32.gmra.mxu0 %v2383
  %v2762 = vpop.f32.mrf.mxu0
  %v2763 = vadd.f32 0.0, %v2762
  %v2764 = vpop.f32.mrf.mxu0
  %2765 = vmatprep.mubr.f32.mxu0 %v2386
  %2766 = vmatmul.mubr.f32.gmra.mxu0 %v2385
  %v2767 = vpop.f32.mrf.mxu0
  %v2768 = vadd.f32 0.0, %v2767
  %v2769 = vpop.f32.mrf.mxu0
  %2770 = vmatprep.mubr.f32.mxu0 %v2388
  %2771 = vmatmul.mubr.f32.gmra.mxu0 %v2387
  %v2772 = vpop.f32.mrf.mxu0
  %v2773 = vadd.f32 0.0, %v2772
  %v2774 = vpop.f32.mrf.mxu0
  %2775 = vmatprep.mubr.f32.mxu0 %v2390
  %2776 = vmatmul.mubr.f32.gmra.mxu0 %v2389
  %v2777 = vpop.f32.mrf.mxu0
  %v2778 = vadd.f32 0.0, %v2777
  %v2779 = vpop.f32.mrf.mxu0
  %2780 = vmatprep.mubr.f32.mxu0 %v2392
  %2781 = vmatmul.mubr.f32.gmra.mxu0 %v2391
  %v2782 = vpop.f32.mrf.mxu0
  %v2783 = vadd.f32 0.0, %v2782
  %v2784 = vpop.f32.mrf.mxu0
  %2785 = vmatprep.mubr.f32.mxu0 %v2394
  %2786 = vmatmul.mubr.f32.gmra.mxu0 %v2393
  %v2787 = vpop.f32.mrf.mxu0
  %v2788 = vadd.f32 0.0, %v2787
  %v2789 = vpop.f32.mrf.mxu0
  %2790 = vmatprep.mubr.f32.mxu0 %v2396
  %2791 = vmatmul.mubr.f32.gmra.mxu0 %v2395
  %v2792 = vpop.f32.mrf.mxu0
  %v2793 = vadd.f32 0.0, %v2792
  %v2794 = vpop.f32.mrf.mxu0
  %2795 = vmatprep.mubr.f32.mxu0 %v2398
  %2796 = vmatmul.mubr.f32.gmra.mxu0 %v2397
  %v2797 = vpop.f32.mrf.mxu0
  %v2798 = vadd.f32 0.0, %v2797
  %v2799 = vpop.f32.mrf.mxu0
  %2800 = vmatprep.mubr.f32.mxu0 %v2400
  %2801 = vmatmul.mubr.f32.gmra.mxu0 %v2399
  %v2802 = vpop.f32.mrf.mxu0
  %v2803 = vadd.f32 0.0, %v2802
  %v2804 = vpop.f32.mrf.mxu0
  %2805 = vmatprep.mubr.f32.mxu0 %v2402
  %2806 = vmatmul.mubr.f32.gmra.mxu0 %v2401
  %v2807 = vpop.f32.mrf.mxu0
  %v2808 = vadd.f32 0.0, %v2807
  %v2809 = vpop.f32.mrf.mxu0
  %2810 = vmatprep.mubr.f32.mxu0 %v2404
  %2811 = vmatmul.mubr.f32.gmra.mxu0 %v2403
  %v2812 = vpop.f32.mrf.mxu0
  %v2813 = vadd.f32 0.0, %v2812
  %v2814 = vpop.f32.mrf.mxu0
  %2815 = vmatprep.mubr.f32.mxu0 %v2406
  %2816 = vmatmul.mubr.f32.gmra.mxu0 %v2405
  %v2817 = vpop.f32.mrf.mxu0
  %v2818 = vadd.f32 0.0, %v2817
  %v2819 = vpop.f32.mrf.mxu0
  %2820 = vmatprep.mubr.f32.mxu0 %v2408
  %2821 = vmatmul.mubr.f32.gmra.mxu0 %v2407
  %v2822 = vpop.f32.mrf.mxu0
  %v2823 = vadd.f32 0.0, %v2822
  %v2824 = vpop.f32.mrf.mxu0
  %2825 = vdwg.mxu0
  %v2826 = vsel %vm1561, 1, 0
  %v2827 = vsel %vm1562, 1, 0
  %v2828 = vsel %vm1563, 1, 0
  %v2829 = vsel %vm1564, 1, 0
  %v2830 = vsel %vm1565, 1, 0
  %v2831 = vsel %vm1566, 1, 0
  %v2832 = vsel %vm1567, 1, 0
  %v2833 = vsel %vm1568, 1, 0
  %v2834 = vsel %vm1569, 1, 0
  %v2835 = vsel %vm1570, 1, 0
  %v2836 = vsel %vm1571, 1, 0
  %v2837 = vsel %vm1572, 1, 0
  %v2838 = vsel %vm1573, 1, 0
  %v2839 = vsel %vm1574, 1, 0
  %v2840 = vsel %vm1575, 1, 0
  %v2841 = vsel %vm1576, 1, 0
  %v2842 = vsel %vm1577, 1, 0
  %v2843 = vsel %vm1578, 1, 0
  %v2844 = vsel %vm1579, 1, 0
  %v2845 = vsel %vm1580, 1, 0
  %v2846 = vsel %vm1581, 1, 0
  %v2847 = vsel %vm1582, 1, 0
  %v2848 = vsel %vm1583, 1, 0
  %v2849 = vsel %vm1584, 1, 0
  %v2850 = vsel %vm1585, 1, 0
  %v2851 = vsel %vm1586, 1, 0
  %v2852 = vsel %vm1587, 1, 0
  %v2853 = vsel %vm1588, 1, 0
  %v2854 = vsel %vm1589, 1, 0
  %v2855 = vsel %vm1590, 1, 0
  %v2856 = vsel %vm1591, 1, 0
  %v2857 = vsel %vm1592, 1, 0
  %v2858 = vsel %vm1593, 1, 0
  %v2859 = vsel %vm1594, 1, 0
  %v2860 = vsel %vm1595, 1, 0
  %v2861 = vsel %vm1596, 1, 0
  %v2862 = vsel %vm1597, 1, 0
  %v2863 = vsel %vm1598, 1, 0
  %v2864 = vsel %vm1599, 1, 0
  %v2865 = vsel %vm1600, 1, 0
  %v2866 = vsel %vm1601, 1, 0
  %v2867 = vsel %vm1602, 1, 0
  %v2868 = vsel %vm1603, 1, 0
  %v2869 = vsel %vm1604, 1, 0
  %v2870 = vsel %vm1605, 1, 0
  %v2871 = vsel %vm1606, 1, 0
  %v2872 = vsel %vm1607, 1, 0
  %v2873 = vsel %vm1608, 1, 0
  %v2874 = vsel %vm1609, 1, 0
  %v2875 = vsel %vm1610, 1, 0
  %v2876 = vsel %vm1611, 1, 0
  %v2877 = vsel %vm1612, 1, 0
  %v2878 = vsel %vm1613, 1, 0
  %v2879 = vsel %vm1614, 1, 0
  %v2880 = vsel %vm1615, 1, 0
  %v2881 = vsel %vm1616, 1, 0
  %v2882 = vsel %vm1617, 1, 0
  %v2883 = vsel %vm1618, 1, 0
  %v2884 = vsel %vm1619, 1, 0
  %v2885 = vsel %vm1620, 1, 0
  %v2886 = vsel %vm1621, 1, 0
  %v2887 = vsel %vm1622, 1, 0
  %v2888 = vsel %vm1623, 1, 0
  %v2889 = vsel %vm1624, 1, 0
  %2890 = vset.pattern.permute.xlu0 7
  %2891 = vperm.xlu0 %2890, %v2826
  %v2892 = vpop.permute.xlu0 %2891
  %2893 = vset.pattern.permute.xlu0 7
  %2894 = vperm.xlu0 %2893, %v2827
  %v2895 = vpop.permute.xlu0 %2894
  %2896 = vset.pattern.permute.xlu0 7
  %2897 = vperm.xlu0 %2896, %v2828
  %v2898 = vpop.permute.xlu0 %2897
  %2899 = vset.pattern.permute.xlu0 7
  %2900 = vperm.xlu0 %2899, %v2829
  %v2901 = vpop.permute.xlu0 %2900
  %2902 = vset.pattern.permute.xlu0 7
  %2903 = vperm.xlu0 %2902, %v2830
  %v2904 = vpop.permute.xlu0 %2903
  %2905 = vset.pattern.permute.xlu0 7
  %2906 = vperm.xlu0 %2905, %v2831
  %v2907 = vpop.permute.xlu0 %2906
  %2908 = vset.pattern.permute.xlu0 7
  %2909 = vperm.xlu0 %2908, %v2832
  %v2910 = vpop.permute.xlu0 %2909
  %2911 = vset.pattern.permute.xlu0 7
  %2912 = vperm.xlu0 %2911, %v2833
  %v2913 = vpop.permute.xlu0 %2912
  %2914 = vset.pattern.permute.xlu0 7
  %2915 = vperm.xlu0 %2914, %v2834
  %v2916 = vpop.permute.xlu0 %2915
  %2917 = vset.pattern.permute.xlu0 7
  %2918 = vperm.xlu0 %2917, %v2835
  %v2919 = vpop.permute.xlu0 %2918
  %2920 = vset.pattern.permute.xlu0 7
  %2921 = vperm.xlu0 %2920, %v2836
  %v2922 = vpop.permute.xlu0 %2921
  %2923 = vset.pattern.permute.xlu0 7
  %2924 = vperm.xlu0 %2923, %v2837
  %v2925 = vpop.permute.xlu0 %2924
  %2926 = vset.pattern.permute.xlu0 7
  %2927 = vperm.xlu0 %2926, %v2838
  %v2928 = vpop.permute.xlu0 %2927
  %2929 = vset.pattern.permute.xlu0 7
  %2930 = vperm.xlu0 %2929, %v2839
  %v2931 = vpop.permute.xlu0 %2930
  %2932 = vset.pattern.permute.xlu0 7
  %2933 = vperm.xlu0 %2932, %v2840
  %v2934 = vpop.permute.xlu0 %2933
  %2935 = vset.pattern.permute.xlu0 7
  %2936 = vperm.xlu0 %2935, %v2841
  %v2937 = vpop.permute.xlu0 %2936
  %2938 = vset.pattern.permute.xlu0 7
  %2939 = vperm.xlu0 %2938, %v2842
  %v2940 = vpop.permute.xlu0 %2939
  %2941 = vset.pattern.permute.xlu0 7
  %2942 = vperm.xlu0 %2941, %v2843
  %v2943 = vpop.permute.xlu0 %2942
  %2944 = vset.pattern.permute.xlu0 7
  %2945 = vperm.xlu0 %2944, %v2844
  %v2946 = vpop.permute.xlu0 %2945
  %2947 = vset.pattern.permute.xlu0 7
  %2948 = vperm.xlu0 %2947, %v2845
  %v2949 = vpop.permute.xlu0 %2948
  %2950 = vset.pattern.permute.xlu0 7
  %2951 = vperm.xlu0 %2950, %v2846
  %v2952 = vpop.permute.xlu0 %2951
  %2953 = vset.pattern.permute.xlu0 7
  %2954 = vperm.xlu0 %2953, %v2847
  %v2955 = vpop.permute.xlu0 %2954
  %2956 = vset.pattern.permute.xlu0 7
  %2957 = vperm.xlu0 %2956, %v2848
  %v2958 = vpop.permute.xlu0 %2957
  %2959 = vset.pattern.permute.xlu0 7
  %2960 = vperm.xlu0 %2959, %v2849
  %v2961 = vpop.permute.xlu0 %2960
  %2962 = vset.pattern.permute.xlu0 7
  %2963 = vperm.xlu0 %2962, %v2850
  %v2964 = vpop.permute.xlu0 %2963
  %2965 = vset.pattern.permute.xlu0 7
  %2966 = vperm.xlu0 %2965, %v2851
  %v2967 = vpop.permute.xlu0 %2966
  %2968 = vset.pattern.permute.xlu0 7
  %2969 = vperm.xlu0 %2968, %v2852
  %v2970 = vpop.permute.xlu0 %2969
  %2971 = vset.pattern.permute.xlu0 7
  %2972 = vperm.xlu0 %2971, %v2853
  %v2973 = vpop.permute.xlu0 %2972
  %2974 = vset.pattern.permute.xlu0 7
  %2975 = vperm.xlu0 %2974, %v2854
  %v2976 = vpop.permute.xlu0 %2975
  %2977 = vset.pattern.permute.xlu0 7
  %2978 = vperm.xlu0 %2977, %v2855
  %v2979 = vpop.permute.xlu0 %2978
  %2980 = vset.pattern.permute.xlu0 7
  %2981 = vperm.xlu0 %2980, %v2856
  %v2982 = vpop.permute.xlu0 %2981
  %2983 = vset.pattern.permute.xlu0 7
  %2984 = vperm.xlu0 %2983, %v2857
  %v2985 = vpop.permute.xlu0 %2984
  %2986 = vset.pattern.permute.xlu0 7
  %2987 = vperm.xlu0 %2986, %v2858
  %v2988 = vpop.permute.xlu0 %2987
  %2989 = vset.pattern.permute.xlu0 7
  %2990 = vperm.xlu0 %2989, %v2859
  %v2991 = vpop.permute.xlu0 %2990
  %2992 = vset.pattern.permute.xlu0 7
  %2993 = vperm.xlu0 %2992, %v2860
  %v2994 = vpop.permute.xlu0 %2993
  %2995 = vset.pattern.permute.xlu0 7
  %2996 = vperm.xlu0 %2995, %v2861
  %v2997 = vpop.permute.xlu0 %2996
  %2998 = vset.pattern.permute.xlu0 7
  %2999 = vperm.xlu0 %2998, %v2862
  %v3000 = vpop.permute.xlu0 %2999
  %3001 = vset.pattern.permute.xlu0 7
  %3002 = vperm.xlu0 %3001, %v2863
  %v3003 = vpop.permute.xlu0 %3002
  %3004 = vset.pattern.permute.xlu0 7
  %3005 = vperm.xlu0 %3004, %v2864
  %v3006 = vpop.permute.xlu0 %3005
  %3007 = vset.pattern.permute.xlu0 7
  %3008 = vperm.xlu0 %3007, %v2865
  %v3009 = vpop.permute.xlu0 %3008
  %3010 = vset.pattern.permute.xlu0 7
  %3011 = vperm.xlu0 %3010, %v2866
  %v3012 = vpop.permute.xlu0 %3011
  %3013 = vset.pattern.permute.xlu0 7
  %3014 = vperm.xlu0 %3013, %v2867
  %v3015 = vpop.permute.xlu0 %3014
  %3016 = vset.pattern.permute.xlu0 7
  %3017 = vperm.xlu0 %3016, %v2868
  %v3018 = vpop.permute.xlu0 %3017
  %3019 = vset.pattern.permute.xlu0 7
  %3020 = vperm.xlu0 %3019, %v2869
  %v3021 = vpop.permute.xlu0 %3020
  %3022 = vset.pattern.permute.xlu0 7
  %3023 = vperm.xlu0 %3022, %v2870
  %v3024 = vpop.permute.xlu0 %3023
  %3025 = vset.pattern.permute.xlu0 7
  %3026 = vperm.xlu0 %3025, %v2871
  %v3027 = vpop.permute.xlu0 %3026
  %3028 = vset.pattern.permute.xlu0 7
  %3029 = vperm.xlu0 %3028, %v2872
  %v3030 = vpop.permute.xlu0 %3029
  %3031 = vset.pattern.permute.xlu0 7
  %3032 = vperm.xlu0 %3031, %v2873
  %v3033 = vpop.permute.xlu0 %3032
  %3034 = vset.pattern.permute.xlu0 7
  %3035 = vperm.xlu0 %3034, %v2874
  %v3036 = vpop.permute.xlu0 %3035
  %3037 = vset.pattern.permute.xlu0 7
  %3038 = vperm.xlu0 %3037, %v2875
  %v3039 = vpop.permute.xlu0 %3038
  %3040 = vset.pattern.permute.xlu0 7
  %3041 = vperm.xlu0 %3040, %v2876
  %v3042 = vpop.permute.xlu0 %3041
  %3043 = vset.pattern.permute.xlu0 7
  %3044 = vperm.xlu0 %3043, %v2877
  %v3045 = vpop.permute.xlu0 %3044
  %3046 = vset.pattern.permute.xlu0 7
  %3047 = vperm.xlu0 %3046, %v2878
  %v3048 = vpop.permute.xlu0 %3047
  %3049 = vset.pattern.permute.xlu0 7
  %3050 = vperm.xlu0 %3049, %v2879
  %v3051 = vpop.permute.xlu0 %3050
  %3052 = vset.pattern.permute.xlu0 7
  %3053 = vperm.xlu0 %3052, %v2880
  %v3054 = vpop.permute.xlu0 %3053
  %3055 = vset.pattern.permute.xlu0 7
  %3056 = vperm.xlu0 %3055, %v2881
  %v3057 = vpop.permute.xlu0 %3056
  %3058 = vset.pattern.permute.xlu0 7
  %3059 = vperm.xlu0 %3058, %v2882
  %v3060 = vpop.permute.xlu0 %3059
  %3061 = vset.pattern.permute.xlu0 7
  %3062 = vperm.xlu0 %3061, %v2883
  %v3063 = vpop.permute.xlu0 %3062
  %3064 = vset.pattern.permute.xlu0 7
  %3065 = vperm.xlu0 %3064, %v2884
  %v3066 = vpop.permute.xlu0 %3065
  %3067 = vset.pattern.permute.xlu0 7
  %3068 = vperm.xlu0 %3067, %v2885
  %v3069 = vpop.permute.xlu0 %3068
  %3070 = vset.pattern.permute.xlu0 7
  %3071 = vperm.xlu0 %3070, %v2886
  %v3072 = vpop.permute.xlu0 %3071
  %3073 = vset.pattern.permute.xlu0 7
  %3074 = vperm.xlu0 %3073, %v2887
  %v3075 = vpop.permute.xlu0 %3074
  %3076 = vset.pattern.permute.xlu0 7
  %3077 = vperm.xlu0 %3076, %v2888
  %v3078 = vpop.permute.xlu0 %3077
  %3079 = vset.pattern.permute.xlu0 7
  %3080 = vperm.xlu0 %3079, %v2889
  %v3081 = vpop.permute.xlu0 %3080
  %vm3082 = vcmp.eq.s32.totalorder %v2892, 1
  %vm3083 = vcmp.eq.s32.totalorder %v2895, 1
  %vm3084 = vcmp.eq.s32.totalorder %v2898, 1
  %vm3085 = vcmp.eq.s32.totalorder %v2901, 1
  %vm3086 = vcmp.eq.s32.totalorder %v2904, 1
  %vm3087 = vcmp.eq.s32.totalorder %v2907, 1
  %vm3088 = vcmp.eq.s32.totalorder %v2910, 1
  %vm3089 = vcmp.eq.s32.totalorder %v2913, 1
  %vm3090 = vcmp.eq.s32.totalorder %v2916, 1
  %vm3091 = vcmp.eq.s32.totalorder %v2919, 1
  %vm3092 = vcmp.eq.s32.totalorder %v2922, 1
  %vm3093 = vcmp.eq.s32.totalorder %v2925, 1
  %vm3094 = vcmp.eq.s32.totalorder %v2928, 1
  %vm3095 = vcmp.eq.s32.totalorder %v2931, 1
  %vm3096 = vcmp.eq.s32.totalorder %v2934, 1
  %vm3097 = vcmp.eq.s32.totalorder %v2937, 1
  %vm3098 = vcmp.eq.s32.totalorder %v2940, 1
  %vm3099 = vcmp.eq.s32.totalorder %v2943, 1
  %vm3100 = vcmp.eq.s32.totalorder %v2946, 1
  %vm3101 = vcmp.eq.s32.totalorder %v2949, 1
  %vm3102 = vcmp.eq.s32.totalorder %v2952, 1
  %vm3103 = vcmp.eq.s32.totalorder %v2955, 1
  %vm3104 = vcmp.eq.s32.totalorder %v2958, 1
  %vm3105 = vcmp.eq.s32.totalorder %v2961, 1
  %vm3106 = vcmp.eq.s32.totalorder %v2964, 1
  %vm3107 = vcmp.eq.s32.totalorder %v2967, 1
  %vm3108 = vcmp.eq.s32.totalorder %v2970, 1
  %vm3109 = vcmp.eq.s32.totalorder %v2973, 1
  %vm3110 = vcmp.eq.s32.totalorder %v2976, 1
  %vm3111 = vcmp.eq.s32.totalorder %v2979, 1
  %vm3112 = vcmp.eq.s32.totalorder %v2982, 1
  %vm3113 = vcmp.eq.s32.totalorder %v2985, 1
  %vm3114 = vcmp.eq.s32.totalorder %v2988, 1
  %vm3115 = vcmp.eq.s32.totalorder %v2991, 1
  %vm3116 = vcmp.eq.s32.totalorder %v2994, 1
  %vm3117 = vcmp.eq.s32.totalorder %v2997, 1
  %vm3118 = vcmp.eq.s32.totalorder %v3000, 1
  %vm3119 = vcmp.eq.s32.totalorder %v3003, 1
  %vm3120 = vcmp.eq.s32.totalorder %v3006, 1
  %vm3121 = vcmp.eq.s32.totalorder %v3009, 1
  %vm3122 = vcmp.eq.s32.totalorder %v3012, 1
  %vm3123 = vcmp.eq.s32.totalorder %v3015, 1
  %vm3124 = vcmp.eq.s32.totalorder %v3018, 1
  %vm3125 = vcmp.eq.s32.totalorder %v3021, 1
  %vm3126 = vcmp.eq.s32.totalorder %v3024, 1
  %vm3127 = vcmp.eq.s32.totalorder %v3027, 1
  %vm3128 = vcmp.eq.s32.totalorder %v3030, 1
  %vm3129 = vcmp.eq.s32.totalorder %v3033, 1
  %vm3130 = vcmp.eq.s32.totalorder %v3036, 1
  %vm3131 = vcmp.eq.s32.totalorder %v3039, 1
  %vm3132 = vcmp.eq.s32.totalorder %v3042, 1
  %vm3133 = vcmp.eq.s32.totalorder %v3045, 1
  %vm3134 = vcmp.eq.s32.totalorder %v3048, 1
  %vm3135 = vcmp.eq.s32.totalorder %v3051, 1
  %vm3136 = vcmp.eq.s32.totalorder %v3054, 1
  %vm3137 = vcmp.eq.s32.totalorder %v3057, 1
  %vm3138 = vcmp.eq.s32.totalorder %v3060, 1
  %vm3139 = vcmp.eq.s32.totalorder %v3063, 1
  %vm3140 = vcmp.eq.s32.totalorder %v3066, 1
  %vm3141 = vcmp.eq.s32.totalorder %v3069, 1
  %vm3142 = vcmp.eq.s32.totalorder %v3072, 1
  %vm3143 = vcmp.eq.s32.totalorder %v3075, 1
  %vm3144 = vcmp.eq.s32.totalorder %v3078, 1
  %vm3145 = vcmp.eq.s32.totalorder %v3081, 1
  %v3146 = vsel %vm3082, %v2508, -1e+30
  %v3147 = vsel %vm3083, %v2513, -1e+30
  %v3148 = vsel %vm3084, %v2518, -1e+30
  %v3149 = vsel %vm3085, %v2523, -1e+30
  %v3150 = vsel %vm3086, %v2528, -1e+30
  %v3151 = vsel %vm3087, %v2533, -1e+30
  %v3152 = vsel %vm3088, %v2538, -1e+30
  %v3153 = vsel %vm3089, %v2543, -1e+30
  %v3154 = vsel %vm3090, %v2548, -1e+30
  %v3155 = vsel %vm3091, %v2553, -1e+30
  %v3156 = vsel %vm3092, %v2558, -1e+30
  %v3157 = vsel %vm3093, %v2563, -1e+30
  %v3158 = vsel %vm3094, %v2568, -1e+30
  %v3159 = vsel %vm3095, %v2573, -1e+30
  %v3160 = vsel %vm3096, %v2578, -1e+30
  %v3161 = vsel %vm3097, %v2583, -1e+30
  %v3162 = vsel %vm3098, %v2588, -1e+30
  %v3163 = vsel %vm3099, %v2593, -1e+30
  %v3164 = vsel %vm3100, %v2598, -1e+30
  %v3165 = vsel %vm3101, %v2603, -1e+30
  %v3166 = vsel %vm3102, %v2608, -1e+30
  %v3167 = vsel %vm3103, %v2613, -1e+30
  %v3168 = vsel %vm3104, %v2618, -1e+30
  %v3169 = vsel %vm3105, %v2623, -1e+30
  %v3170 = vsel %vm3106, %v2628, -1e+30
  %v3171 = vsel %vm3107, %v2633, -1e+30
  %v3172 = vsel %vm3108, %v2638, -1e+30
  %v3173 = vsel %vm3109, %v2643, -1e+30
  %v3174 = vsel %vm3110, %v2648, -1e+30
  %v3175 = vsel %vm3111, %v2653, -1e+30
  %v3176 = vsel %vm3112, %v2658, -1e+30
  %v3177 = vsel %vm3113, %v2663, -1e+30
  %v3178 = vsel %vm3114, %v2668, -1e+30
  %v3179 = vsel %vm3115, %v2673, -1e+30
  %v3180 = vsel %vm3116, %v2678, -1e+30
  %v3181 = vsel %vm3117, %v2683, -1e+30
  %v3182 = vsel %vm3118, %v2688, -1e+30
  %v3183 = vsel %vm3119, %v2693, -1e+30
  %v3184 = vsel %vm3120, %v2698, -1e+30
  %v3185 = vsel %vm3121, %v2703, -1e+30
  %v3186 = vsel %vm3122, %v2708, -1e+30
  %v3187 = vsel %vm3123, %v2713, -1e+30
  %v3188 = vsel %vm3124, %v2718, -1e+30
  %v3189 = vsel %vm3125, %v2723, -1e+30
  %v3190 = vsel %vm3126, %v2728, -1e+30
  %v3191 = vsel %vm3127, %v2733, -1e+30
  %v3192 = vsel %vm3128, %v2738, -1e+30
  %v3193 = vsel %vm3129, %v2743, -1e+30
  %v3194 = vsel %vm3130, %v2748, -1e+30
  %v3195 = vsel %vm3131, %v2753, -1e+30
  %v3196 = vsel %vm3132, %v2758, -1e+30
  %v3197 = vsel %vm3133, %v2763, -1e+30
  %v3198 = vsel %vm3134, %v2768, -1e+30
  %v3199 = vsel %vm3135, %v2773, -1e+30
  %v3200 = vsel %vm3136, %v2778, -1e+30
  %v3201 = vsel %vm3137, %v2783, -1e+30
  %v3202 = vsel %vm3138, %v2788, -1e+30
  %v3203 = vsel %vm3139, %v2793, -1e+30
  %v3204 = vsel %vm3140, %v2798, -1e+30
  %v3205 = vsel %vm3141, %v2803, -1e+30
  %v3206 = vsel %vm3142, %v2808, -1e+30
  %v3207 = vsel %vm3143, %v2813, -1e+30
  %v3208 = vsel %vm3144, %v2818, -1e+30
  %v3209 = vsel %vm3145, %v2823, -1e+30
  %v3210 = vsel %vm468, %v3146, -inf
  %v3211 = vsel %vm468, %v3148, -inf
  %v3212 = vmax.f32 %v3210, %v3211
  %v3213 = vsel %vm468, %v3150, -inf
  %v3214 = vmax.f32 %v3212, %v3213
  %v3215 = vsel %vm468, %v3152, -inf
  %v3216 = vmax.f32 %v3214, %v3215
  %v3217 = vsel %vm468, %v3154, -inf
  %v3218 = vmax.f32 %v3216, %v3217
  %v3219 = vsel %vm468, %v3156, -inf
  %v3220 = vmax.f32 %v3218, %v3219
  %v3221 = vsel %vm468, %v3158, -inf
  %v3222 = vmax.f32 %v3220, %v3221
  %v3223 = vsel %vm468, %v3160, -inf
  %v3224 = vmax.f32 %v3222, %v3223
  %v3225 = vsel %vm468, %v3162, -inf
  %v3226 = vmax.f32 %v3224, %v3225
  %v3227 = vsel %vm468, %v3164, -inf
  %v3228 = vmax.f32 %v3226, %v3227
  %v3229 = vsel %vm468, %v3166, -inf
  %v3230 = vmax.f32 %v3228, %v3229
  %v3231 = vsel %vm468, %v3168, -inf
  %v3232 = vmax.f32 %v3230, %v3231
  %v3233 = vsel %vm468, %v3170, -inf
  %v3234 = vmax.f32 %v3232, %v3233
  %v3235 = vsel %vm468, %v3172, -inf
  %v3236 = vmax.f32 %v3234, %v3235
  %v3237 = vsel %vm468, %v3174, -inf
  %v3238 = vmax.f32 %v3236, %v3237
  %v3239 = vsel %vm468, %v3176, -inf
  %v3240 = vmax.f32 %v3238, %v3239
  %v3241 = vsel %vm468, %v3147, -inf
  %v3242 = vsel %vm468, %v3149, -inf
  %v3243 = vmax.f32 %v3241, %v3242
  %v3244 = vsel %vm468, %v3151, -inf
  %v3245 = vmax.f32 %v3243, %v3244
  %v3246 = vsel %vm468, %v3153, -inf
  %v3247 = vmax.f32 %v3245, %v3246
  %v3248 = vsel %vm468, %v3155, -inf
  %v3249 = vmax.f32 %v3247, %v3248
  %v3250 = vsel %vm468, %v3157, -inf
  %v3251 = vmax.f32 %v3249, %v3250
  %v3252 = vsel %vm468, %v3159, -inf
  %v3253 = vmax.f32 %v3251, %v3252
  %v3254 = vsel %vm468, %v3161, -inf
  %v3255 = vmax.f32 %v3253, %v3254
  %v3256 = vsel %vm468, %v3163, -inf
  %v3257 = vmax.f32 %v3255, %v3256
  %v3258 = vsel %vm468, %v3165, -inf
  %v3259 = vmax.f32 %v3257, %v3258
  %v3260 = vsel %vm468, %v3167, -inf
  %v3261 = vmax.f32 %v3259, %v3260
  %v3262 = vsel %vm468, %v3169, -inf
  %v3263 = vmax.f32 %v3261, %v3262
  %v3264 = vsel %vm468, %v3171, -inf
  %v3265 = vmax.f32 %v3263, %v3264
  %v3266 = vsel %vm468, %v3173, -inf
  %v3267 = vmax.f32 %v3265, %v3266
  %v3268 = vsel %vm468, %v3175, -inf
  %v3269 = vmax.f32 %v3267, %v3268
  %v3270 = vsel %vm468, %v3177, -inf
  %v3271 = vmax.f32 %v3269, %v3270
  %v3272 = vsel %vm468, %v3178, -inf
  %v3273 = vsel %vm468, %v3180, -inf
  %v3274 = vmax.f32 %v3272, %v3273
  %v3275 = vsel %vm468, %v3182, -inf
  %v3276 = vmax.f32 %v3274, %v3275
  %v3277 = vsel %vm468, %v3184, -inf
  %v3278 = vmax.f32 %v3276, %v3277
  %v3279 = vsel %vm468, %v3186, -inf
  %v3280 = vmax.f32 %v3278, %v3279
  %v3281 = vsel %vm468, %v3188, -inf
  %v3282 = vmax.f32 %v3280, %v3281
  %v3283 = vsel %vm468, %v3190, -inf
  %v3284 = vmax.f32 %v3282, %v3283
  %v3285 = vsel %vm468, %v3192, -inf
  %v3286 = vmax.f32 %v3284, %v3285
  %v3287 = vsel %vm468, %v3194, -inf
  %v3288 = vmax.f32 %v3286, %v3287
  %v3289 = vsel %vm468, %v3196, -inf
  %v3290 = vmax.f32 %v3288, %v3289
  %v3291 = vsel %vm468, %v3198, -inf
  %v3292 = vmax.f32 %v3290, %v3291
  %v3293 = vsel %vm468, %v3200, -inf
  %v3294 = vmax.f32 %v3292, %v3293
  %v3295 = vsel %vm468, %v3202, -inf
  %v3296 = vmax.f32 %v3294, %v3295
  %v3297 = vsel %vm468, %v3204, -inf
  %v3298 = vmax.f32 %v3296, %v3297
  %v3299 = vsel %vm468, %v3206, -inf
  %v3300 = vmax.f32 %v3298, %v3299
  %v3301 = vsel %vm468, %v3208, -inf
  %v3302 = vmax.f32 %v3300, %v3301
  %v3303 = vsel %vm468, %v3179, -inf
  %v3304 = vsel %vm468, %v3181, -inf
  %v3305 = vmax.f32 %v3303, %v3304
  %v3306 = vsel %vm468, %v3183, -inf
  %v3307 = vmax.f32 %v3305, %v3306
  %v3308 = vsel %vm468, %v3185, -inf
  %v3309 = vmax.f32 %v3307, %v3308
  %v3310 = vsel %vm468, %v3187, -inf
  %v3311 = vmax.f32 %v3309, %v3310
  %v3312 = vsel %vm468, %v3189, -inf
  %v3313 = vmax.f32 %v3311, %v3312
  %v3314 = vsel %vm468, %v3191, -inf
  %v3315 = vmax.f32 %v3313, %v3314
  %v3316 = vsel %vm468, %v3193, -inf
  %v3317 = vmax.f32 %v3315, %v3316
  %v3318 = vsel %vm468, %v3195, -inf
  %v3319 = vmax.f32 %v3317, %v3318
  %v3320 = vsel %vm468, %v3197, -inf
  %v3321 = vmax.f32 %v3319, %v3320
  %v3322 = vsel %vm468, %v3199, -inf
  %v3323 = vmax.f32 %v3321, %v3322
  %v3324 = vsel %vm468, %v3201, -inf
  %v3325 = vmax.f32 %v3323, %v3324
  %v3326 = vsel %vm468, %v3203, -inf
  %v3327 = vmax.f32 %v3325, %v3326
  %v3328 = vsel %vm468, %v3205, -inf
  %v3329 = vmax.f32 %v3327, %v3328
  %v3330 = vsel %vm468, %v3207, -inf
  %v3331 = vmax.f32 %v3329, %v3330
  %v3332 = vsel %vm468, %v3209, -inf
  %v3333 = vmax.f32 %v3331, %v3332
  %v3334 = vsub.f32 %v3146, %v3240
  %v3335 = vsub.f32 %v3147, %v3271
  %v3336 = vsub.f32 %v3148, %v3240
  %v3337 = vsub.f32 %v3149, %v3271
  %v3338 = vsub.f32 %v3150, %v3240
  %v3339 = vsub.f32 %v3151, %v3271
  %v3340 = vsub.f32 %v3152, %v3240
  %v3341 = vsub.f32 %v3153, %v3271
  %v3342 = vsub.f32 %v3154, %v3240
  %v3343 = vsub.f32 %v3155, %v3271
  %v3344 = vsub.f32 %v3156, %v3240
  %v3345 = vsub.f32 %v3157, %v3271
  %v3346 = vsub.f32 %v3158, %v3240
  %v3347 = vsub.f32 %v3159, %v3271
  %v3348 = vsub.f32 %v3160, %v3240
  %v3349 = vsub.f32 %v3161, %v3271
  %v3350 = vsub.f32 %v3162, %v3240
  %v3351 = vsub.f32 %v3163, %v3271
  %v3352 = vsub.f32 %v3164, %v3240
  %v3353 = vsub.f32 %v3165, %v3271
  %v3354 = vsub.f32 %v3166, %v3240
  %v3355 = vsub.f32 %v3167, %v3271
  %v3356 = vsub.f32 %v3168, %v3240
  %v3357 = vsub.f32 %v3169, %v3271
  %v3358 = vsub.f32 %v3170, %v3240
  %v3359 = vsub.f32 %v3171, %v3271
  %v3360 = vsub.f32 %v3172, %v3240
  %v3361 = vsub.f32 %v3173, %v3271
  %v3362 = vsub.f32 %v3174, %v3240
  %v3363 = vsub.f32 %v3175, %v3271
  %v3364 = vsub.f32 %v3176, %v3240
  %v3365 = vsub.f32 %v3177, %v3271
  %v3366 = vsub.f32 %v3178, %v3302
  %v3367 = vsub.f32 %v3179, %v3333
  %v3368 = vsub.f32 %v3180, %v3302
  %v3369 = vsub.f32 %v3181, %v3333
  %v3370 = vsub.f32 %v3182, %v3302
  %v3371 = vsub.f32 %v3183, %v3333
  %v3372 = vsub.f32 %v3184, %v3302
  %v3373 = vsub.f32 %v3185, %v3333
  %v3374 = vsub.f32 %v3186, %v3302
  %v3375 = vsub.f32 %v3187, %v3333
  %v3376 = vsub.f32 %v3188, %v3302
  %v3377 = vsub.f32 %v3189, %v3333
  %v3378 = vsub.f32 %v3190, %v3302
  %v3379 = vsub.f32 %v3191, %v3333
  %v3380 = vsub.f32 %v3192, %v3302
  %v3381 = vsub.f32 %v3193, %v3333
  %v3382 = vsub.f32 %v3194, %v3302
  %v3383 = vsub.f32 %v3195, %v3333
  %v3384 = vsub.f32 %v3196, %v3302
  %v3385 = vsub.f32 %v3197, %v3333
  %v3386 = vsub.f32 %v3198, %v3302
  %v3387 = vsub.f32 %v3199, %v3333
  %v3388 = vsub.f32 %v3200, %v3302
  %v3389 = vsub.f32 %v3201, %v3333
  %v3390 = vsub.f32 %v3202, %v3302
  %v3391 = vsub.f32 %v3203, %v3333
  %v3392 = vsub.f32 %v3204, %v3302
  %v3393 = vsub.f32 %v3205, %v3333
  %v3394 = vsub.f32 %v3206, %v3302
  %v3395 = vsub.f32 %v3207, %v3333
  %v3396 = vsub.f32 %v3208, %v3302
  %v3397 = vsub.f32 %v3209, %v3333
  %v3398 = vmul.f32 %v3334, 1.442695
  %v3399 = vpow.pop %v3398
  %v3400 = vmul.f32 %v3335, 1.442695
  %v3401 = vpow.pop %v3400
  %v3402 = vmul.f32 %v3336, 1.442695
  %v3403 = vpow.pop %v3402
  %v3404 = vmul.f32 %v3337, 1.442695
  %v3405 = vpow.pop %v3404
  %v3406 = vmul.f32 %v3338, 1.442695
  %v3407 = vpow.pop %v3406
  %v3408 = vmul.f32 %v3339, 1.442695
  %v3409 = vpow.pop %v3408
  %v3410 = vmul.f32 %v3340, 1.442695
  %v3411 = vpow.pop %v3410
  %v3412 = vmul.f32 %v3341, 1.442695
  %v3413 = vpow.pop %v3412
  %v3414 = vmul.f32 %v3342, 1.442695
  %v3415 = vpow.pop %v3414
  %v3416 = vmul.f32 %v3343, 1.442695
  %v3417 = vpow.pop %v3416
  %v3418 = vmul.f32 %v3344, 1.442695
  %v3419 = vpow.pop %v3418
  %v3420 = vmul.f32 %v3345, 1.442695
  %v3421 = vpow.pop %v3420
  %v3422 = vmul.f32 %v3346, 1.442695
  %v3423 = vpow.pop %v3422
  %v3424 = vmul.f32 %v3347, 1.442695
  %v3425 = vpow.pop %v3424
  %v3426 = vmul.f32 %v3348, 1.442695
  %v3427 = vpow.pop %v3426
  %v3428 = vmul.f32 %v3349, 1.442695
  %v3429 = vpow.pop %v3428
  %v3430 = vmul.f32 %v3350, 1.442695
  %v3431 = vpow.pop %v3430
  %v3432 = vmul.f32 %v3351, 1.442695
  %v3433 = vpow.pop %v3432
  %v3434 = vmul.f32 %v3352, 1.442695
  %v3435 = vpow.pop %v3434
  %v3436 = vmul.f32 %v3353, 1.442695
  %v3437 = vpow.pop %v3436
  %v3438 = vmul.f32 %v3354, 1.442695
  %v3439 = vpow.pop %v3438
  %v3440 = vmul.f32 %v3355, 1.442695
  %v3441 = vpow.pop %v3440
  %v3442 = vmul.f32 %v3356, 1.442695
  %v3443 = vpow.pop %v3442
  %v3444 = vmul.f32 %v3357, 1.442695
  %v3445 = vpow.pop %v3444
  %v3446 = vmul.f32 %v3358, 1.442695
  %v3447 = vpow.pop %v3446
  %v3448 = vmul.f32 %v3359, 1.442695
  %v3449 = vpow.pop %v3448
  %v3450 = vmul.f32 %v3360, 1.442695
  %v3451 = vpow.pop %v3450
  %v3452 = vmul.f32 %v3361, 1.442695
  %v3453 = vpow.pop %v3452
  %v3454 = vmul.f32 %v3362, 1.442695
  %v3455 = vpow.pop %v3454
  %v3456 = vmul.f32 %v3363, 1.442695
  %v3457 = vpow.pop %v3456
  %v3458 = vmul.f32 %v3364, 1.442695
  %v3459 = vpow.pop %v3458
  %v3460 = vmul.f32 %v3365, 1.442695
  %v3461 = vpow.pop %v3460
  %v3462 = vmul.f32 %v3366, 1.442695
  %v3463 = vpow.pop %v3462
  %v3464 = vmul.f32 %v3367, 1.442695
  %v3465 = vpow.pop %v3464
  %v3466 = vmul.f32 %v3368, 1.442695
  %v3467 = vpow.pop %v3466
  %v3468 = vmul.f32 %v3369, 1.442695
  %v3469 = vpow.pop %v3468
  %v3470 = vmul.f32 %v3370, 1.442695
  %v3471 = vpow.pop %v3470
  %v3472 = vmul.f32 %v3371, 1.442695
  %v3473 = vpow.pop %v3472
  %v3474 = vmul.f32 %v3372, 1.442695
  %v3475 = vpow.pop %v3474
  %v3476 = vmul.f32 %v3373, 1.442695
  %v3477 = vpow.pop %v3476
  %v3478 = vmul.f32 %v3374, 1.442695
  %v3479 = vpow.pop %v3478
  %v3480 = vmul.f32 %v3375, 1.442695
  %v3481 = vpow.pop %v3480
  %v3482 = vmul.f32 %v3376, 1.442695
  %v3483 = vpow.pop %v3482
  %v3484 = vmul.f32 %v3377, 1.442695
  %v3485 = vpow.pop %v3484
  %v3486 = vmul.f32 %v3378, 1.442695
  %v3487 = vpow.pop %v3486
  %v3488 = vmul.f32 %v3379, 1.442695
  %v3489 = vpow.pop %v3488
  %v3490 = vmul.f32 %v3380, 1.442695
  %v3491 = vpow.pop %v3490
  %v3492 = vmul.f32 %v3381, 1.442695
  %v3493 = vpow.pop %v3492
  %v3494 = vmul.f32 %v3382, 1.442695
  %v3495 = vpow.pop %v3494
  %v3496 = vmul.f32 %v3383, 1.442695
  %v3497 = vpow.pop %v3496
  %v3498 = vmul.f32 %v3384, 1.442695
  %v3499 = vpow.pop %v3498
  %v3500 = vmul.f32 %v3385, 1.442695
  %v3501 = vpow.pop %v3500
  %v3502 = vmul.f32 %v3386, 1.442695
  %v3503 = vpow.pop %v3502
  %v3504 = vmul.f32 %v3387, 1.442695
  %v3505 = vpow.pop %v3504
  %v3506 = vmul.f32 %v3388, 1.442695
  %v3507 = vpow.pop %v3506
  %v3508 = vmul.f32 %v3389, 1.442695
  %v3509 = vpow.pop %v3508
  %v3510 = vmul.f32 %v3390, 1.442695
  %v3511 = vpow.pop %v3510
  %v3512 = vmul.f32 %v3391, 1.442695
  %v3513 = vpow.pop %v3512
  %v3514 = vmul.f32 %v3392, 1.442695
  %v3515 = vpow.pop %v3514
  %v3516 = vmul.f32 %v3393, 1.442695
  %v3517 = vpow.pop %v3516
  %v3518 = vmul.f32 %v3394, 1.442695
  %v3519 = vpow.pop %v3518
  %v3520 = vmul.f32 %v3395, 1.442695
  %v3521 = vpow.pop %v3520
  %v3522 = vmul.f32 %v3396, 1.442695
  %v3523 = vpow.pop %v3522
  %v3524 = vmul.f32 %v3397, 1.442695
  %v3525 = vpow.pop %v3524
  %v3526 = vsel %vm3082, %v3399, 0.0
  %v3527 = vsel %vm3083, %v3401, 0.0
  %v3528 = vsel %vm3084, %v3403, 0.0
  %v3529 = vsel %vm3085, %v3405, 0.0
  %v3530 = vsel %vm3086, %v3407, 0.0
  %v3531 = vsel %vm3087, %v3409, 0.0
  %v3532 = vsel %vm3088, %v3411, 0.0
  %v3533 = vsel %vm3089, %v3413, 0.0
  %v3534 = vsel %vm3090, %v3415, 0.0
  %v3535 = vsel %vm3091, %v3417, 0.0
  %v3536 = vsel %vm3092, %v3419, 0.0
  %v3537 = vsel %vm3093, %v3421, 0.0
  %v3538 = vsel %vm3094, %v3423, 0.0
  %v3539 = vsel %vm3095, %v3425, 0.0
  %v3540 = vsel %vm3096, %v3427, 0.0
  %v3541 = vsel %vm3097, %v3429, 0.0
  %v3542 = vsel %vm3098, %v3431, 0.0
  %v3543 = vsel %vm3099, %v3433, 0.0
  %v3544 = vsel %vm3100, %v3435, 0.0
  %v3545 = vsel %vm3101, %v3437, 0.0
  %v3546 = vsel %vm3102, %v3439, 0.0
  %v3547 = vsel %vm3103, %v3441, 0.0
  %v3548 = vsel %vm3104, %v3443, 0.0
  %v3549 = vsel %vm3105, %v3445, 0.0
  %v3550 = vsel %vm3106, %v3447, 0.0
  %v3551 = vsel %vm3107, %v3449, 0.0
  %v3552 = vsel %vm3108, %v3451, 0.0
  %v3553 = vsel %vm3109, %v3453, 0.0
  %v3554 = vsel %vm3110, %v3455, 0.0
  %v3555 = vsel %vm3111, %v3457, 0.0
  %v3556 = vsel %vm3112, %v3459, 0.0
  %v3557 = vsel %vm3113, %v3461, 0.0
  %v3558 = vsel %vm3114, %v3463, 0.0
  %v3559 = vsel %vm3115, %v3465, 0.0
  %v3560 = vsel %vm3116, %v3467, 0.0
  %v3561 = vsel %vm3117, %v3469, 0.0
  %v3562 = vsel %vm3118, %v3471, 0.0
  %v3563 = vsel %vm3119, %v3473, 0.0
  %v3564 = vsel %vm3120, %v3475, 0.0
  %v3565 = vsel %vm3121, %v3477, 0.0
  %v3566 = vsel %vm3122, %v3479, 0.0
  %v3567 = vsel %vm3123, %v3481, 0.0
  %v3568 = vsel %vm3124, %v3483, 0.0
  %v3569 = vsel %vm3125, %v3485, 0.0
  %v3570 = vsel %vm3126, %v3487, 0.0
  %v3571 = vsel %vm3127, %v3489, 0.0
  %v3572 = vsel %vm3128, %v3491, 0.0
  %v3573 = vsel %vm3129, %v3493, 0.0
  %v3574 = vsel %vm3130, %v3495, 0.0
  %v3575 = vsel %vm3131, %v3497, 0.0
  %v3576 = vsel %vm3132, %v3499, 0.0
  %v3577 = vsel %vm3133, %v3501, 0.0
  %v3578 = vsel %vm3134, %v3503, 0.0
  %v3579 = vsel %vm3135, %v3505, 0.0
  %v3580 = vsel %vm3136, %v3507, 0.0
  %v3581 = vsel %vm3137, %v3509, 0.0
  %v3582 = vsel %vm3138, %v3511, 0.0
  %v3583 = vsel %vm3139, %v3513, 0.0
  %v3584 = vsel %vm3140, %v3515, 0.0
  %v3585 = vsel %vm3141, %v3517, 0.0
  %v3586 = vsel %vm3142, %v3519, 0.0
  %v3587 = vsel %vm3143, %v3521, 0.0
  %v3588 = vsel %vm3144, %v3523, 0.0
  %v3589 = vsel %vm3145, %v3525, 0.0
  %v3590 = vsel %vm468, %v3526, 0.0
  %v3591 = vsel %vm468, %v3528, 0.0
  %v3592 = vadd.f32 %v3590, %v3591
  %v3593 = vsel %vm468, %v3530, 0.0
  %v3594 = vadd.f32 %v3592, %v3593
  %v3595 = vsel %vm468, %v3532, 0.0
  %v3596 = vadd.f32 %v3594, %v3595
  %v3597 = vsel %vm468, %v3534, 0.0
  %v3598 = vadd.f32 %v3596, %v3597
  %v3599 = vsel %vm468, %v3536, 0.0
  %v3600 = vadd.f32 %v3598, %v3599
  %v3601 = vsel %vm468, %v3538, 0.0
  %v3602 = vadd.f32 %v3600, %v3601
  %v3603 = vsel %vm468, %v3540, 0.0
  %v3604 = vadd.f32 %v3602, %v3603
  %v3605 = vsel %vm468, %v3542, 0.0
  %v3606 = vadd.f32 %v3604, %v3605
  %v3607 = vsel %vm468, %v3544, 0.0
  %v3608 = vadd.f32 %v3606, %v3607
  %v3609 = vsel %vm468, %v3546, 0.0
  %v3610 = vadd.f32 %v3608, %v3609
  %v3611 = vsel %vm468, %v3548, 0.0
  %v3612 = vadd.f32 %v3610, %v3611
  %v3613 = vsel %vm468, %v3550, 0.0
  %v3614 = vadd.f32 %v3612, %v3613
  %v3615 = vsel %vm468, %v3552, 0.0
  %v3616 = vadd.f32 %v3614, %v3615
  %v3617 = vsel %vm468, %v3554, 0.0
  %v3618 = vadd.f32 %v3616, %v3617
  %v3619 = vsel %vm468, %v3556, 0.0
  %v3620 = vadd.f32 %v3618, %v3619
  %v3621 = vsel %vm468, %v3527, 0.0
  %v3622 = vsel %vm468, %v3529, 0.0
  %v3623 = vadd.f32 %v3621, %v3622
  %v3624 = vsel %vm468, %v3531, 0.0
  %v3625 = vadd.f32 %v3623, %v3624
  %v3626 = vsel %vm468, %v3533, 0.0
  %v3627 = vadd.f32 %v3625, %v3626
  %v3628 = vsel %vm468, %v3535, 0.0
  %v3629 = vadd.f32 %v3627, %v3628
  %v3630 = vsel %vm468, %v3537, 0.0
  %v3631 = vadd.f32 %v3629, %v3630
  %v3632 = vsel %vm468, %v3539, 0.0
  %v3633 = vadd.f32 %v3631, %v3632
  %v3634 = vsel %vm468, %v3541, 0.0
  %v3635 = vadd.f32 %v3633, %v3634
  %v3636 = vsel %vm468, %v3543, 0.0
  %v3637 = vadd.f32 %v3635, %v3636
  %v3638 = vsel %vm468, %v3545, 0.0
  %v3639 = vadd.f32 %v3637, %v3638
  %v3640 = vsel %vm468, %v3547, 0.0
  %v3641 = vadd.f32 %v3639, %v3640
  %v3642 = vsel %vm468, %v3549, 0.0
  %v3643 = vadd.f32 %v3641, %v3642
  %v3644 = vsel %vm468, %v3551, 0.0
  %v3645 = vadd.f32 %v3643, %v3644
  %v3646 = vsel %vm468, %v3553, 0.0
  %v3647 = vadd.f32 %v3645, %v3646
  %v3648 = vsel %vm468, %v3555, 0.0
  %v3649 = vadd.f32 %v3647, %v3648
  %v3650 = vsel %vm468, %v3557, 0.0
  %v3651 = vadd.f32 %v3649, %v3650
  %v3652 = vsel %vm468, %v3558, 0.0
  %v3653 = vsel %vm468, %v3560, 0.0
  %v3654 = vadd.f32 %v3652, %v3653
  %v3655 = vsel %vm468, %v3562, 0.0
  %v3656 = vadd.f32 %v3654, %v3655
  %v3657 = vsel %vm468, %v3564, 0.0
  %v3658 = vadd.f32 %v3656, %v3657
  %v3659 = vsel %vm468, %v3566, 0.0
  %v3660 = vadd.f32 %v3658, %v3659
  %v3661 = vsel %vm468, %v3568, 0.0
  %v3662 = vadd.f32 %v3660, %v3661
  %v3663 = vsel %vm468, %v3570, 0.0
  %v3664 = vadd.f32 %v3662, %v3663
  %v3665 = vsel %vm468, %v3572, 0.0
  %v3666 = vadd.f32 %v3664, %v3665
  %v3667 = vsel %vm468, %v3574, 0.0
  %v3668 = vadd.f32 %v3666, %v3667
  %v3669 = vsel %vm468, %v3576, 0.0
  %v3670 = vadd.f32 %v3668, %v3669
  %v3671 = vsel %vm468, %v3578, 0.0
  %v3672 = vadd.f32 %v3670, %v3671
  %v3673 = vsel %vm468, %v3580, 0.0
  %v3674 = vadd.f32 %v3672, %v3673
  %v3675 = vsel %vm468, %v3582, 0.0
  %v3676 = vadd.f32 %v3674, %v3675
  %v3677 = vsel %vm468, %v3584, 0.0
  %v3678 = vadd.f32 %v3676, %v3677
  %v3679 = vsel %vm468, %v3586, 0.0
  %v3680 = vadd.f32 %v3678, %v3679
  %v3681 = vsel %vm468, %v3588, 0.0
  %v3682 = vadd.f32 %v3680, %v3681
  %v3683 = vsel %vm468, %v3559, 0.0
  %v3684 = vsel %vm468, %v3561, 0.0
  %v3685 = vadd.f32 %v3683, %v3684
  %v3686 = vsel %vm468, %v3563, 0.0
  %v3687 = vadd.f32 %v3685, %v3686
  %v3688 = vsel %vm468, %v3565, 0.0
  %v3689 = vadd.f32 %v3687, %v3688
  %v3690 = vsel %vm468, %v3567, 0.0
  %v3691 = vadd.f32 %v3689, %v3690
  %v3692 = vsel %vm468, %v3569, 0.0
  %v3693 = vadd.f32 %v3691, %v3692
  %v3694 = vsel %vm468, %v3571, 0.0
  %v3695 = vadd.f32 %v3693, %v3694
  %v3696 = vsel %vm468, %v3573, 0.0
  %v3697 = vadd.f32 %v3695, %v3696
  %v3698 = vsel %vm468, %v3575, 0.0
  %v3699 = vadd.f32 %v3697, %v3698
  %v3700 = vsel %vm468, %v3577, 0.0
  %v3701 = vadd.f32 %v3699, %v3700
  %v3702 = vsel %vm468, %v3579, 0.0
  %v3703 = vadd.f32 %v3701, %v3702
  %v3704 = vsel %vm468, %v3581, 0.0
  %v3705 = vadd.f32 %v3703, %v3704
  %v3706 = vsel %vm468, %v3583, 0.0
  %v3707 = vadd.f32 %v3705, %v3706
  %v3708 = vsel %vm468, %v3585, 0.0
  %v3709 = vadd.f32 %v3707, %v3708
  %v3710 = vsel %vm468, %v3587, 0.0
  %v3711 = vadd.f32 %v3709, %v3710
  %v3712 = vsel %vm468, %v3589, 0.0
  %v3713 = vadd.f32 %v3711, %v3712
  %v3714 = vmax.f32 %v3620, 1e-20
  %v3715 = vmax.f32 %v3651, 1e-20
  %v3716 = vmax.f32 %v3682, 1e-20
  %v3717 = vmax.f32 %v3713, 1e-20
  %v3718 = vrcp.pop %v3714
  %v3719 = vrcp.pop %v3715
  %v3720 = vrcp.pop %v3716
  %v3721 = vrcp.pop %v3717
  %v3722 = vmul.f32 %v3526, %v3718
  %v3723 = vmul.f32 %v3527, %v3719
  %v3724 = vmul.f32 %v3528, %v3718
  %v3725 = vmul.f32 %v3529, %v3719
  %v3726 = vmul.f32 %v3530, %v3718
  %v3727 = vmul.f32 %v3531, %v3719
  %v3728 = vmul.f32 %v3532, %v3718
  %v3729 = vmul.f32 %v3533, %v3719
  %v3730 = vmul.f32 %v3534, %v3718
  %v3731 = vmul.f32 %v3535, %v3719
  %v3732 = vmul.f32 %v3536, %v3718
  %v3733 = vmul.f32 %v3537, %v3719
  %v3734 = vmul.f32 %v3538, %v3718
  %v3735 = vmul.f32 %v3539, %v3719
  %v3736 = vmul.f32 %v3540, %v3718
  %v3737 = vmul.f32 %v3541, %v3719
  %v3738 = vmul.f32 %v3542, %v3718
  %v3739 = vmul.f32 %v3543, %v3719
  %v3740 = vmul.f32 %v3544, %v3718
  %v3741 = vmul.f32 %v3545, %v3719
  %v3742 = vmul.f32 %v3546, %v3718
  %v3743 = vmul.f32 %v3547, %v3719
  %v3744 = vmul.f32 %v3548, %v3718
  %v3745 = vmul.f32 %v3549, %v3719
  %v3746 = vmul.f32 %v3550, %v3718
  %v3747 = vmul.f32 %v3551, %v3719
  %v3748 = vmul.f32 %v3552, %v3718
  %v3749 = vmul.f32 %v3553, %v3719
  %v3750 = vmul.f32 %v3554, %v3718
  %v3751 = vmul.f32 %v3555, %v3719
  %v3752 = vmul.f32 %v3556, %v3718
  %v3753 = vmul.f32 %v3557, %v3719
  %v3754 = vmul.f32 %v3558, %v3720
  %v3755 = vmul.f32 %v3559, %v3721
  %v3756 = vmul.f32 %v3560, %v3720
  %v3757 = vmul.f32 %v3561, %v3721
  %v3758 = vmul.f32 %v3562, %v3720
  %v3759 = vmul.f32 %v3563, %v3721
  %v3760 = vmul.f32 %v3564, %v3720
  %v3761 = vmul.f32 %v3565, %v3721
  %v3762 = vmul.f32 %v3566, %v3720
  %v3763 = vmul.f32 %v3567, %v3721
  %v3764 = vmul.f32 %v3568, %v3720
  %v3765 = vmul.f32 %v3569, %v3721
  %v3766 = vmul.f32 %v3570, %v3720
  %v3767 = vmul.f32 %v3571, %v3721
  %v3768 = vmul.f32 %v3572, %v3720
  %v3769 = vmul.f32 %v3573, %v3721
  %v3770 = vmul.f32 %v3574, %v3720
  %v3771 = vmul.f32 %v3575, %v3721
  %v3772 = vmul.f32 %v3576, %v3720
  %v3773 = vmul.f32 %v3577, %v3721
  %v3774 = vmul.f32 %v3578, %v3720
  %v3775 = vmul.f32 %v3579, %v3721
  %v3776 = vmul.f32 %v3580, %v3720
  %v3777 = vmul.f32 %v3581, %v3721
  %v3778 = vmul.f32 %v3582, %v3720
  %v3779 = vmul.f32 %v3583, %v3721
  %v3780 = vmul.f32 %v3584, %v3720
  %v3781 = vmul.f32 %v3585, %v3721
  %v3782 = vmul.f32 %v3586, %v3720
  %v3783 = vmul.f32 %v3587, %v3721
  %v3784 = vmul.f32 %v3588, %v3720
  %v3785 = vmul.f32 %v3589, %v3721
  %v3786 = vld [vmem:[%s9] sm:$0xff]
  %v3787 = vld [vmem:[%s9 + $0x8] sm:$0xff]
  %v3789 = vsel %vm468, %v3722, 0
  %v3792 = vsel %vm468, %v3723, 0
  %v3795 = vsel %vm468, %v3724, 0
  %v3798 = vsel %vm468, %v3725, 0
  %v3801 = vsel %vm468, %v3726, 0
  %v3804 = vsel %vm468, %v3727, 0
  %v3807 = vsel %vm468, %v3728, 0
  %v3810 = vsel %vm468, %v3729, 0
  %v3813 = vsel %vm468, %v3730, 0
  %v3816 = vsel %vm468, %v3731, 0
  %v3819 = vsel %vm468, %v3732, 0
  %v3822 = vsel %vm468, %v3733, 0
  %v3825 = vsel %vm468, %v3734, 0
  %v3828 = vsel %vm468, %v3735, 0
  %v3831 = vsel %vm468, %v3736, 0
  %v3834 = vsel %vm468, %v3737, 0
  %v3837 = vsel %vm468, %v3738, 0
  %v3840 = vsel %vm468, %v3739, 0
  %v3843 = vsel %vm468, %v3740, 0
  %v3846 = vsel %vm468, %v3741, 0
  %v3849 = vsel %vm468, %v3742, 0
  %v3852 = vsel %vm468, %v3743, 0
  %v3855 = vsel %vm468, %v3744, 0
  %v3858 = vsel %vm468, %v3745, 0
  %v3861 = vsel %vm468, %v3746, 0
  %v3864 = vsel %vm468, %v3747, 0
  %v3867 = vsel %vm468, %v3748, 0
  %v3870 = vsel %vm468, %v3749, 0
  %v3873 = vsel %vm468, %v3750, 0
  %v3876 = vsel %vm468, %v3751, 0
  %v3879 = vsel %vm468, %v3752, 0
  %v3882 = vsel %vm468, %v3753, 0
  %v3885 = vsel %vm468, %v3754, 0
  %v3888 = vsel %vm468, %v3755, 0
  %v3891 = vsel %vm468, %v3756, 0
  %v3894 = vsel %vm468, %v3757, 0
  %v3897 = vsel %vm468, %v3758, 0
  %v3900 = vsel %vm468, %v3759, 0
  %v3903 = vsel %vm468, %v3760, 0
  %v3906 = vsel %vm468, %v3761, 0
  %v3909 = vsel %vm468, %v3762, 0
  %v3912 = vsel %vm468, %v3763, 0
  %v3915 = vsel %vm468, %v3764, 0
  %v3918 = vsel %vm468, %v3765, 0
  %v3921 = vsel %vm468, %v3766, 0
  %v3924 = vsel %vm468, %v3767, 0
  %v3927 = vsel %vm468, %v3768, 0
  %v3930 = vsel %vm468, %v3769, 0
  %v3933 = vsel %vm468, %v3770, 0
  %v3936 = vsel %vm468, %v3771, 0
  %v3939 = vsel %vm468, %v3772, 0
  %v3942 = vsel %vm468, %v3773, 0
  %v3945 = vsel %vm468, %v3774, 0
  %v3948 = vsel %vm468, %v3775, 0
  %v3951 = vsel %vm468, %v3776, 0
  %v3954 = vsel %vm468, %v3777, 0
  %v3957 = vsel %vm468, %v3778, 0
  %v3960 = vsel %vm468, %v3779, 0
  %v3963 = vsel %vm468, %v3780, 0
  %v3966 = vsel %vm468, %v3781, 0
  %v3969 = vsel %vm468, %v3782, 0
  %v3972 = vsel %vm468, %v3783, 0
  %v3975 = vsel %vm468, %v3784, 0
  %v3978 = vsel %vm468, %v3785, 0
  %3980 = vmatprep.subr.mxu0 0.0
  %3981 = vmatpush1.msra.mxu0 0.0
  %3982 = vmatprep.subr.mxu0 0.0
  %3983 = vmatpush1.msra.mxu0 0.0
  %3984 = vmatprep.subr.mxu0 0.0
  %3985 = vmatpush1.msra.mxu0 0.0
  %3986 = vmatprep.subr.mxu0 0.0
  %3987 = vmatpush1.msra.mxu0 0.0
  %3988 = vmatprep.subr.mxu0 0.0
  %3989 = vmatpush1.msra.mxu0 0.0
  %3990 = vmatprep.subr.mxu0 0.0
  %3991 = vmatpush1.msra.mxu0 0.0
  %3992 = vmatprep.subr.mxu0 0.0
  %3993 = vmatpush1.msra.mxu0 0.0
  %3994 = vmatprep.subr.mxu0 0.0
  %3995 = vmatpush1.msra.mxu0 0.0
  %3996 = vmatprep.subr.mxu0 0.0
  %3997 = vmatpush1.msra.mxu0 0.0
  %3998 = vmatprep.subr.mxu0 0.0
  %3999 = vmatpush1.msra.mxu0 0.0
  %4000 = vmatprep.subr.mxu0 0.0
  %4001 = vmatpush1.msra.mxu0 0.0
  %4002 = vmatprep.subr.mxu0 0.0
  %4003 = vmatpush1.msra.mxu0 0.0
  %4004 = vmatprep.subr.mxu0 0.0
  %4005 = vmatpush1.msra.mxu0 0.0
  %4006 = vmatprep.subr.mxu0 0.0
  %4007 = vmatpush1.msra.mxu0 0.0
  %4008 = vmatprep.subr.mxu0 0.0
  %4009 = vmatpush1.msra.mxu0 0.0
  %4010 = vmatprep.subr.mxu0 %v3787
  %4011 = vmatpush1.msra.mxu0 %v3786
  %4012 = vmatprep.subr.mxu0 0.0
  %4013 = vmatpush2.msra.mxu0 0.0
  %4014 = vmatprep.subr.mxu0 0.0
  %4015 = vmatpush2.msra.mxu0 0.0
  %4016 = vmatprep.subr.mxu0 0.0
  %4017 = vmatpush2.msra.mxu0 0.0
  %4018 = vmatprep.subr.mxu0 0.0
  %4019 = vmatpush2.msra.mxu0 0.0
  %4020 = vmatprep.subr.mxu0 0.0
  %4021 = vmatpush2.msra.mxu0 0.0
  %4022 = vmatprep.subr.mxu0 0.0
  %4023 = vmatpush2.msra.mxu0 0.0
  %4024 = vmatprep.subr.mxu0 0.0
  %4025 = vmatpush2.msra.mxu0 0.0
  %4026 = vmatprep.subr.mxu0 0.0
  %4027 = vmatpush2.msra.mxu0 0.0
  %4028 = vmatprep.subr.mxu0 0.0
  %4029 = vmatpush2.msra.mxu0 0.0
  %4030 = vmatprep.subr.mxu0 0.0
  %4031 = vmatpush2.msra.mxu0 0.0
  %4032 = vmatprep.subr.mxu0 0.0
  %4033 = vmatpush2.msra.mxu0 0.0
  %4034 = vmatprep.subr.mxu0 0.0
  %4035 = vmatpush2.msra.mxu0 0.0
  %4036 = vmatprep.subr.mxu0 0.0
  %4037 = vmatpush2.msra.mxu0 0.0
  %4038 = vmatprep.subr.mxu0 0.0
  %4039 = vmatpush2.msra.mxu0 0.0
  %4040 = vmatprep.subr.mxu0 0.0
  %4041 = vmatpush2.msra.mxu0 0.0
  %4042 = vmatprep.subr.mxu0 0.0
  %4043 = vmatpush2.msra.mxu0 0.0
  %4044 = vmatprep.mubr.f32.mxu0 0.0
  %4045 = vmatmul.mubr.f32.gmra.mxu0 %v3789
  %v4046 = vpop.f32.mrf.mxu0
  %v4047 = vadd.f32 0.0, %v4046
  %v4048 = vpop.f32.mrf.mxu0
  %v4049 = vadd.f32 0.0, %v4048
  %4050 = vmatprep.mubr.f32.mxu0 0.0
  %4051 = vmatmul.mubr.f32.gmra.mxu0 %v3792
  %v4052 = vpop.f32.mrf.mxu0
  %v4053 = vadd.f32 0.0, %v4052
  %v4054 = vpop.f32.mrf.mxu0
  %v4055 = vadd.f32 0.0, %v4054
  %4056 = vmatprep.mubr.f32.mxu0 0.0
  %4057 = vmatmul.mubr.f32.gmra.mxu0 %v3795
  %v4058 = vpop.f32.mrf.mxu0
  %v4059 = vadd.f32 0.0, %v4058
  %v4060 = vpop.f32.mrf.mxu0
  %v4061 = vadd.f32 0.0, %v4060
  %4062 = vmatprep.mubr.f32.mxu0 0.0
  %4063 = vmatmul.mubr.f32.gmra.mxu0 %v3798
  %v4064 = vpop.f32.mrf.mxu0
  %v4065 = vadd.f32 0.0, %v4064
  %v4066 = vpop.f32.mrf.mxu0
  %v4067 = vadd.f32 0.0, %v4066
  %4068 = vmatprep.mubr.f32.mxu0 0.0
  %4069 = vmatmul.mubr.f32.gmra.mxu0 %v3801
  %v4070 = vpop.f32.mrf.mxu0
  %v4071 = vadd.f32 0.0, %v4070
  %v4072 = vpop.f32.mrf.mxu0
  %v4073 = vadd.f32 0.0, %v4072
  %4074 = vmatprep.mubr.f32.mxu0 0.0
  %4075 = vmatmul.mubr.f32.gmra.mxu0 %v3804
  %v4076 = vpop.f32.mrf.mxu0
  %v4077 = vadd.f32 0.0, %v4076
  %v4078 = vpop.f32.mrf.mxu0
  %v4079 = vadd.f32 0.0, %v4078
  %4080 = vmatprep.mubr.f32.mxu0 0.0
  %4081 = vmatmul.mubr.f32.gmra.mxu0 %v3807
  %v4082 = vpop.f32.mrf.mxu0
  %v4083 = vadd.f32 0.0, %v4082
  %v4084 = vpop.f32.mrf.mxu0
  %v4085 = vadd.f32 0.0, %v4084
  %4086 = vmatprep.mubr.f32.mxu0 0.0
  %4087 = vmatmul.mubr.f32.gmra.mxu0 %v3810
  %v4088 = vpop.f32.mrf.mxu0
  %v4089 = vadd.f32 0.0, %v4088
  %v4090 = vpop.f32.mrf.mxu0
  %v4091 = vadd.f32 0.0, %v4090
  %4092 = vmatprep.mubr.f32.mxu0 0.0
  %4093 = vmatmul.mubr.f32.gmra.mxu0 %v3813
  %v4094 = vpop.f32.mrf.mxu0
  %v4095 = vadd.f32 0.0, %v4094
  %v4096 = vpop.f32.mrf.mxu0
  %v4097 = vadd.f32 0.0, %v4096
  %4098 = vmatprep.mubr.f32.mxu0 0.0
  %4099 = vmatmul.mubr.f32.gmra.mxu0 %v3816
  %v4100 = vpop.f32.mrf.mxu0
  %v4101 = vadd.f32 0.0, %v4100
  %v4102 = vpop.f32.mrf.mxu0
  %v4103 = vadd.f32 0.0, %v4102
  %4104 = vmatprep.mubr.f32.mxu0 0.0
  %4105 = vmatmul.mubr.f32.gmra.mxu0 %v3819
  %v4106 = vpop.f32.mrf.mxu0
  %v4107 = vadd.f32 0.0, %v4106
  %v4108 = vpop.f32.mrf.mxu0
  %v4109 = vadd.f32 0.0, %v4108
  %4110 = vmatprep.mubr.f32.mxu0 0.0
  %4111 = vmatmul.mubr.f32.gmra.mxu0 %v3822
  %v4112 = vpop.f32.mrf.mxu0
  %v4113 = vadd.f32 0.0, %v4112
  %v4114 = vpop.f32.mrf.mxu0
  %v4115 = vadd.f32 0.0, %v4114
  %4116 = vmatprep.mubr.f32.mxu0 0.0
  %4117 = vmatmul.mubr.f32.gmra.mxu0 %v3825
  %v4118 = vpop.f32.mrf.mxu0
  %v4119 = vadd.f32 0.0, %v4118
  %v4120 = vpop.f32.mrf.mxu0
  %v4121 = vadd.f32 0.0, %v4120
  %4122 = vmatprep.mubr.f32.mxu0 0.0
  %4123 = vmatmul.mubr.f32.gmra.mxu0 %v3828
  %v4124 = vpop.f32.mrf.mxu0
  %v4125 = vadd.f32 0.0, %v4124
  %v4126 = vpop.f32.mrf.mxu0
  %v4127 = vadd.f32 0.0, %v4126
  %4128 = vmatprep.mubr.f32.mxu0 0.0
  %4129 = vmatmul.mubr.f32.gmra.mxu0 %v3831
  %v4130 = vpop.f32.mrf.mxu0
  %v4131 = vadd.f32 0.0, %v4130
  %v4132 = vpop.f32.mrf.mxu0
  %v4133 = vadd.f32 0.0, %v4132
  %4134 = vmatprep.mubr.f32.mxu0 0.0
  %4135 = vmatmul.mubr.f32.gmra.mxu0 %v3834
  %v4136 = vpop.f32.mrf.mxu0
  %v4137 = vadd.f32 0.0, %v4136
  %v4138 = vpop.f32.mrf.mxu0
  %v4139 = vadd.f32 0.0, %v4138
  %4140 = vmatprep.mubr.f32.mxu0 0.0
  %4141 = vmatmul.mubr.f32.gmra.mxu0 %v3837
  %v4142 = vpop.f32.mrf.mxu0
  %v4143 = vadd.f32 0.0, %v4142
  %v4144 = vpop.f32.mrf.mxu0
  %v4145 = vadd.f32 0.0, %v4144
  %4146 = vmatprep.mubr.f32.mxu0 0.0
  %4147 = vmatmul.mubr.f32.gmra.mxu0 %v3840
  %v4148 = vpop.f32.mrf.mxu0
  %v4149 = vadd.f32 0.0, %v4148
  %v4150 = vpop.f32.mrf.mxu0
  %v4151 = vadd.f32 0.0, %v4150
  %4152 = vmatprep.mubr.f32.mxu0 0.0
  %4153 = vmatmul.mubr.f32.gmra.mxu0 %v3843
  %v4154 = vpop.f32.mrf.mxu0
  %v4155 = vadd.f32 0.0, %v4154
  %v4156 = vpop.f32.mrf.mxu0
  %v4157 = vadd.f32 0.0, %v4156
  %4158 = vmatprep.mubr.f32.mxu0 0.0
  %4159 = vmatmul.mubr.f32.gmra.mxu0 %v3846
  %v4160 = vpop.f32.mrf.mxu0
  %v4161 = vadd.f32 0.0, %v4160
  %v4162 = vpop.f32.mrf.mxu0
  %v4163 = vadd.f32 0.0, %v4162
  %4164 = vmatprep.mubr.f32.mxu0 0.0
  %4165 = vmatmul.mubr.f32.gmra.mxu0 %v3849
  %v4166 = vpop.f32.mrf.mxu0
  %v4167 = vadd.f32 0.0, %v4166
  %v4168 = vpop.f32.mrf.mxu0
  %v4169 = vadd.f32 0.0, %v4168
  %4170 = vmatprep.mubr.f32.mxu0 0.0
  %4171 = vmatmul.mubr.f32.gmra.mxu0 %v3852
  %v4172 = vpop.f32.mrf.mxu0
  %v4173 = vadd.f32 0.0, %v4172
  %v4174 = vpop.f32.mrf.mxu0
  %v4175 = vadd.f32 0.0, %v4174
  %4176 = vmatprep.mubr.f32.mxu0 0.0
  %4177 = vmatmul.mubr.f32.gmra.mxu0 %v3855
  %v4178 = vpop.f32.mrf.mxu0
  %v4179 = vadd.f32 0.0, %v4178
  %v4180 = vpop.f32.mrf.mxu0
  %v4181 = vadd.f32 0.0, %v4180
  %4182 = vmatprep.mubr.f32.mxu0 0.0
  %4183 = vmatmul.mubr.f32.gmra.mxu0 %v3858
  %v4184 = vpop.f32.mrf.mxu0
  %v4185 = vadd.f32 0.0, %v4184
  %v4186 = vpop.f32.mrf.mxu0
  %v4187 = vadd.f32 0.0, %v4186
  %4188 = vmatprep.mubr.f32.mxu0 0.0
  %4189 = vmatmul.mubr.f32.gmra.mxu0 %v3861
  %v4190 = vpop.f32.mrf.mxu0
  %v4191 = vadd.f32 0.0, %v4190
  %v4192 = vpop.f32.mrf.mxu0
  %v4193 = vadd.f32 0.0, %v4192
  %4194 = vmatprep.mubr.f32.mxu0 0.0
  %4195 = vmatmul.mubr.f32.gmra.mxu0 %v3864
  %v4196 = vpop.f32.mrf.mxu0
  %v4197 = vadd.f32 0.0, %v4196
  %v4198 = vpop.f32.mrf.mxu0
  %v4199 = vadd.f32 0.0, %v4198
  %4200 = vmatprep.mubr.f32.mxu0 0.0
  %4201 = vmatmul.mubr.f32.gmra.mxu0 %v3867
  %v4202 = vpop.f32.mrf.mxu0
  %v4203 = vadd.f32 0.0, %v4202
  %v4204 = vpop.f32.mrf.mxu0
  %v4205 = vadd.f32 0.0, %v4204
  %4206 = vmatprep.mubr.f32.mxu0 0.0
  %4207 = vmatmul.mubr.f32.gmra.mxu0 %v3870
  %v4208 = vpop.f32.mrf.mxu0
  %v4209 = vadd.f32 0.0, %v4208
  %v4210 = vpop.f32.mrf.mxu0
  %v4211 = vadd.f32 0.0, %v4210
  %4212 = vmatprep.mubr.f32.mxu0 0.0
  %4213 = vmatmul.mubr.f32.gmra.mxu0 %v3873
  %v4214 = vpop.f32.mrf.mxu0
  %v4215 = vadd.f32 0.0, %v4214
  %v4216 = vpop.f32.mrf.mxu0
  %v4217 = vadd.f32 0.0, %v4216
  %4218 = vmatprep.mubr.f32.mxu0 0.0
  %4219 = vmatmul.mubr.f32.gmra.mxu0 %v3876
  %v4220 = vpop.f32.mrf.mxu0
  %v4221 = vadd.f32 0.0, %v4220
  %v4222 = vpop.f32.mrf.mxu0
  %v4223 = vadd.f32 0.0, %v4222
  %4224 = vmatprep.mubr.f32.mxu0 0.0
  %4225 = vmatmul.mubr.f32.gmra.mxu0 %v3879
  %v4226 = vpop.f32.mrf.mxu0
  %v4227 = vadd.f32 0.0, %v4226
  %v4228 = vpop.f32.mrf.mxu0
  %v4229 = vadd.f32 0.0, %v4228
  %4230 = vmatprep.mubr.f32.mxu0 0.0
  %4231 = vmatmul.mubr.f32.gmra.mxu0 %v3882
  %v4232 = vpop.f32.mrf.mxu0
  %v4233 = vadd.f32 0.0, %v4232
  %v4234 = vpop.f32.mrf.mxu0
  %v4235 = vadd.f32 0.0, %v4234
  %4236 = vmatprep.mubr.f32.mxu0 0.0
  %4237 = vmatmul.mubr.f32.gmra.mxu0 %v3885
  %v4238 = vpop.f32.mrf.mxu0
  %v4239 = vadd.f32 0.0, %v4238
  %v4240 = vpop.f32.mrf.mxu0
  %v4241 = vadd.f32 0.0, %v4240
  %4242 = vmatprep.mubr.f32.mxu0 0.0
  %4243 = vmatmul.mubr.f32.gmra.mxu0 %v3888
  %v4244 = vpop.f32.mrf.mxu0
  %v4245 = vadd.f32 0.0, %v4244
  %v4246 = vpop.f32.mrf.mxu0
  %v4247 = vadd.f32 0.0, %v4246
  %4248 = vmatprep.mubr.f32.mxu0 0.0
  %4249 = vmatmul.mubr.f32.gmra.mxu0 %v3891
  %v4250 = vpop.f32.mrf.mxu0
  %v4251 = vadd.f32 0.0, %v4250
  %v4252 = vpop.f32.mrf.mxu0
  %v4253 = vadd.f32 0.0, %v4252
  %4254 = vmatprep.mubr.f32.mxu0 0.0
  %4255 = vmatmul.mubr.f32.gmra.mxu0 %v3894
  %v4256 = vpop.f32.mrf.mxu0
  %v4257 = vadd.f32 0.0, %v4256
  %v4258 = vpop.f32.mrf.mxu0
  %v4259 = vadd.f32 0.0, %v4258
  %4260 = vmatprep.mubr.f32.mxu0 0.0
  %4261 = vmatmul.mubr.f32.gmra.mxu0 %v3897
  %v4262 = vpop.f32.mrf.mxu0
  %v4263 = vadd.f32 0.0, %v4262
  %v4264 = vpop.f32.mrf.mxu0
  %v4265 = vadd.f32 0.0, %v4264
  %4266 = vmatprep.mubr.f32.mxu0 0.0
  %4267 = vmatmul.mubr.f32.gmra.mxu0 %v3900
  %v4268 = vpop.f32.mrf.mxu0
  %v4269 = vadd.f32 0.0, %v4268
  %v4270 = vpop.f32.mrf.mxu0
  %v4271 = vadd.f32 0.0, %v4270
  %4272 = vmatprep.mubr.f32.mxu0 0.0
  %4273 = vmatmul.mubr.f32.gmra.mxu0 %v3903
  %v4274 = vpop.f32.mrf.mxu0
  %v4275 = vadd.f32 0.0, %v4274
  %v4276 = vpop.f32.mrf.mxu0
  %v4277 = vadd.f32 0.0, %v4276
  %4278 = vmatprep.mubr.f32.mxu0 0.0
  %4279 = vmatmul.mubr.f32.gmra.mxu0 %v3906
  %v4280 = vpop.f32.mrf.mxu0
  %v4281 = vadd.f32 0.0, %v4280
  %v4282 = vpop.f32.mrf.mxu0
  %v4283 = vadd.f32 0.0, %v4282
  %4284 = vmatprep.mubr.f32.mxu0 0.0
  %4285 = vmatmul.mubr.f32.gmra.mxu0 %v3909
  %v4286 = vpop.f32.mrf.mxu0
  %v4287 = vadd.f32 0.0, %v4286
  %v4288 = vpop.f32.mrf.mxu0
  %v4289 = vadd.f32 0.0, %v4288
  %4290 = vmatprep.mubr.f32.mxu0 0.0
  %4291 = vmatmul.mubr.f32.gmra.mxu0 %v3912
  %v4292 = vpop.f32.mrf.mxu0
  %v4293 = vadd.f32 0.0, %v4292
  %v4294 = vpop.f32.mrf.mxu0
  %v4295 = vadd.f32 0.0, %v4294
  %4296 = vmatprep.mubr.f32.mxu0 0.0
  %4297 = vmatmul.mubr.f32.gmra.mxu0 %v3915
  %v4298 = vpop.f32.mrf.mxu0
  %v4299 = vadd.f32 0.0, %v4298
  %v4300 = vpop.f32.mrf.mxu0
  %v4301 = vadd.f32 0.0, %v4300
  %4302 = vmatprep.mubr.f32.mxu0 0.0
  %4303 = vmatmul.mubr.f32.gmra.mxu0 %v3918
  %v4304 = vpop.f32.mrf.mxu0
  %v4305 = vadd.f32 0.0, %v4304
  %v4306 = vpop.f32.mrf.mxu0
  %v4307 = vadd.f32 0.0, %v4306
  %4308 = vmatprep.mubr.f32.mxu0 0.0
  %4309 = vmatmul.mubr.f32.gmra.mxu0 %v3921
  %v4310 = vpop.f32.mrf.mxu0
  %v4311 = vadd.f32 0.0, %v4310
  %v4312 = vpop.f32.mrf.mxu0
  %v4313 = vadd.f32 0.0, %v4312
  %4314 = vmatprep.mubr.f32.mxu0 0.0
  %4315 = vmatmul.mubr.f32.gmra.mxu0 %v3924
  %v4316 = vpop.f32.mrf.mxu0
  %v4317 = vadd.f32 0.0, %v4316
  %v4318 = vpop.f32.mrf.mxu0
  %v4319 = vadd.f32 0.0, %v4318
  %4320 = vmatprep.mubr.f32.mxu0 0.0
  %4321 = vmatmul.mubr.f32.gmra.mxu0 %v3927
  %v4322 = vpop.f32.mrf.mxu0
  %v4323 = vadd.f32 0.0, %v4322
  %v4324 = vpop.f32.mrf.mxu0
  %v4325 = vadd.f32 0.0, %v4324
  %4326 = vmatprep.mubr.f32.mxu0 0.0
  %4327 = vmatmul.mubr.f32.gmra.mxu0 %v3930
  %v4328 = vpop.f32.mrf.mxu0
  %v4329 = vadd.f32 0.0, %v4328
  %v4330 = vpop.f32.mrf.mxu0
  %v4331 = vadd.f32 0.0, %v4330
  %4332 = vmatprep.mubr.f32.mxu0 0.0
  %4333 = vmatmul.mubr.f32.gmra.mxu0 %v3933
  %v4334 = vpop.f32.mrf.mxu0
  %v4335 = vadd.f32 0.0, %v4334
  %v4336 = vpop.f32.mrf.mxu0
  %v4337 = vadd.f32 0.0, %v4336
  %4338 = vmatprep.mubr.f32.mxu0 0.0
  %4339 = vmatmul.mubr.f32.gmra.mxu0 %v3936
  %v4340 = vpop.f32.mrf.mxu0
  %v4341 = vadd.f32 0.0, %v4340
  %v4342 = vpop.f32.mrf.mxu0
  %v4343 = vadd.f32 0.0, %v4342
  %4344 = vmatprep.mubr.f32.mxu0 0.0
  %4345 = vmatmul.mubr.f32.gmra.mxu0 %v3939
  %v4346 = vpop.f32.mrf.mxu0
  %v4347 = vadd.f32 0.0, %v4346
  %v4348 = vpop.f32.mrf.mxu0
  %v4349 = vadd.f32 0.0, %v4348
  %4350 = vmatprep.mubr.f32.mxu0 0.0
  %4351 = vmatmul.mubr.f32.gmra.mxu0 %v3942
  %v4352 = vpop.f32.mrf.mxu0
  %v4353 = vadd.f32 0.0, %v4352
  %v4354 = vpop.f32.mrf.mxu0
  %v4355 = vadd.f32 0.0, %v4354
  %4356 = vmatprep.mubr.f32.mxu0 0.0
  %4357 = vmatmul.mubr.f32.gmra.mxu0 %v3945
  %v4358 = vpop.f32.mrf.mxu0
  %v4359 = vadd.f32 0.0, %v4358
  %v4360 = vpop.f32.mrf.mxu0
  %v4361 = vadd.f32 0.0, %v4360
  %4362 = vmatprep.mubr.f32.mxu0 0.0
  %4363 = vmatmul.mubr.f32.gmra.mxu0 %v3948
  %v4364 = vpop.f32.mrf.mxu0
  %v4365 = vadd.f32 0.0, %v4364
  %v4366 = vpop.f32.mrf.mxu0
  %v4367 = vadd.f32 0.0, %v4366
  %4368 = vmatprep.mubr.f32.mxu0 0.0
  %4369 = vmatmul.mubr.f32.gmra.mxu0 %v3951
  %v4370 = vpop.f32.mrf.mxu0
  %v4371 = vadd.f32 0.0, %v4370
  %v4372 = vpop.f32.mrf.mxu0
  %v4373 = vadd.f32 0.0, %v4372
  %4374 = vmatprep.mubr.f32.mxu0 0.0
  %4375 = vmatmul.mubr.f32.gmra.mxu0 %v3954
  %v4376 = vpop.f32.mrf.mxu0
  %v4377 = vadd.f32 0.0, %v4376
  %v4378 = vpop.f32.mrf.mxu0
  %v4379 = vadd.f32 0.0, %v4378
  %4380 = vmatprep.mubr.f32.mxu0 0.0
  %4381 = vmatmul.mubr.f32.gmra.mxu0 %v3957
  %v4382 = vpop.f32.mrf.mxu0
  %v4383 = vadd.f32 0.0, %v4382
  %v4384 = vpop.f32.mrf.mxu0
  %v4385 = vadd.f32 0.0, %v4384
  %4386 = vmatprep.mubr.f32.mxu0 0.0
  %4387 = vmatmul.mubr.f32.gmra.mxu0 %v3960
  %v4388 = vpop.f32.mrf.mxu0
  %v4389 = vadd.f32 0.0, %v4388
  %v4390 = vpop.f32.mrf.mxu0
  %v4391 = vadd.f32 0.0, %v4390
  %4392 = vmatprep.mubr.f32.mxu0 0.0
  %4393 = vmatmul.mubr.f32.gmra.mxu0 %v3963
  %v4394 = vpop.f32.mrf.mxu0
  %v4395 = vadd.f32 0.0, %v4394
  %v4396 = vpop.f32.mrf.mxu0
  %v4397 = vadd.f32 0.0, %v4396
  %4398 = vmatprep.mubr.f32.mxu0 0.0
  %4399 = vmatmul.mubr.f32.gmra.mxu0 %v3966
  %v4400 = vpop.f32.mrf.mxu0
  %v4401 = vadd.f32 0.0, %v4400
  %v4402 = vpop.f32.mrf.mxu0
  %v4403 = vadd.f32 0.0, %v4402
  %4404 = vmatprep.mubr.f32.mxu0 0.0
  %4405 = vmatmul.mubr.f32.gmra.mxu0 %v3969
  %v4406 = vpop.f32.mrf.mxu0
  %v4407 = vadd.f32 0.0, %v4406
  %v4408 = vpop.f32.mrf.mxu0
  %v4409 = vadd.f32 0.0, %v4408
  %4410 = vmatprep.mubr.f32.mxu0 0.0
  %4411 = vmatmul.mubr.f32.gmra.mxu0 %v3972
  %v4412 = vpop.f32.mrf.mxu0
  %v4413 = vadd.f32 0.0, %v4412
  %v4414 = vpop.f32.mrf.mxu0
  %v4415 = vadd.f32 0.0, %v4414
  %4416 = vmatprep.mubr.f32.mxu0 0.0
  %4417 = vmatmul.mubr.f32.gmra.mxu0 %v3975
  %v4418 = vpop.f32.mrf.mxu0
  %v4419 = vadd.f32 0.0, %v4418
  %v4420 = vpop.f32.mrf.mxu0
  %v4421 = vadd.f32 0.0, %v4420
  %4422 = vmatprep.mubr.f32.mxu0 0.0
  %4423 = vmatmul.mubr.f32.gmra.mxu0 %v3978
  %v4424 = vpop.f32.mrf.mxu0
  %v4425 = vadd.f32 0.0, %v4424
  %v4426 = vpop.f32.mrf.mxu0
  %v4427 = vadd.f32 0.0, %v4426
  %4428 = vdwg.mxu0
  %v4437 = vcombine.low %v202, %v204
  %v4438 = vcombine.high %v202, %v204
  %v4440 = vunpack.c.l.s4 1966171168
  %v4441 = vunpack.c.0.s8 %v4440
  %v4442 = vlaneseq
  %v4443 = vshrl.u32 %v4442, 7
  %v4444 = vsub.s32 %v4441, %v4443
  %v4445 = vrot.slane %v4437, %v4444
  %v4447 = vunpack.c.l.s4 1966171168
  %v4448 = vunpack.c.0.s8 %v4447
  %v4449 = vlaneseq
  %v4450 = vshrl.u32 %v4449, 7
  %v4451 = vsub.s32 %v4448, %v4450
  %v4452 = vrot.slane %v4438, %v4451
  %v4453 = vcombine.high %v4445, %v4445
  %v4454 = vcombine.high %v4452, %v4452
  %v4456 = vunpack.c.l.s4 1966171168
  %v4457 = vunpack.c.0.s8 %v4456
  %v4458 = vlaneseq
  %v4459 = vshrl.u32 %v4458, 7
  %v4460 = vsub.s32 %v4457, %v4459
  %v4461 = vrot.slane %v4445, %v4460
  %v4463 = vunpack.c.l.s4 1966171168
  %v4464 = vunpack.c.0.s8 %v4463
  %v4465 = vlaneseq
  %v4466 = vshrl.u32 %v4465, 7
  %v4467 = vsub.s32 %v4464, %v4466
  %v4468 = vrot.slane %v4452, %v4467
  %v4470 = vunpack.c.l.s4 1966171168
  %v4471 = vunpack.c.0.s8 %v4470
  %v4472 = vlaneseq
  %v4473 = vshrl.u32 %v4472, 7
  %v4474 = vsub.s32 %v4471, %v4473
  %v4475 = vrot.slane %v4453, %v4474
  %v4477 = vunpack.c.l.s4 1966171168
  %v4478 = vunpack.c.0.s8 %v4477
  %v4479 = vlaneseq
  %v4480 = vshrl.u32 %v4479, 7
  %v4481 = vsub.s32 %v4478, %v4480
  %v4482 = vrot.slane %v4454, %v4481
  %v4483 = vcombine.high %v4461, %v4461
  %v4484 = vcombine.high %v4468, %v4468
  %v4485 = vcombine.high %v4475, %v4475
  %v4486 = vcombine.high %v4482, %v4482
  %v4487 = vcombine.low %v208, %v210
  %v4488 = vcombine.high %v208, %v210
  %v4490 = vunpack.c.l.s4 1966171168
  %v4491 = vunpack.c.0.s8 %v4490
  %v4492 = vlaneseq
  %v4493 = vshrl.u32 %v4492, 7
  %v4494 = vsub.s32 %v4491, %v4493
  %v4495 = vrot.slane %v4487, %v4494
  %v4497 = vunpack.c.l.s4 1966171168
  %v4498 = vunpack.c.0.s8 %v4497
  %v4499 = vlaneseq
  %v4500 = vshrl.u32 %v4499, 7
  %v4501 = vsub.s32 %v4498, %v4500
  %v4502 = vrot.slane %v4488, %v4501
  %v4503 = vcombine.high %v4495, %v4495
  %v4504 = vcombine.high %v4502, %v4502
  %v4506 = vunpack.c.l.s4 1966171168
  %v4507 = vunpack.c.0.s8 %v4506
  %v4508 = vlaneseq
  %v4509 = vshrl.u32 %v4508, 7
  %v4510 = vsub.s32 %v4507, %v4509
  %v4511 = vrot.slane %v4495, %v4510
  %v4513 = vunpack.c.l.s4 1966171168
  %v4514 = vunpack.c.0.s8 %v4513
  %v4515 = vlaneseq
  %v4516 = vshrl.u32 %v4515, 7
  %v4517 = vsub.s32 %v4514, %v4516
  %v4518 = vrot.slane %v4502, %v4517
  %v4520 = vunpack.c.l.s4 1966171168
  %v4521 = vunpack.c.0.s8 %v4520
  %v4522 = vlaneseq
  %v4523 = vshrl.u32 %v4522, 7
  %v4524 = vsub.s32 %v4521, %v4523
  %v4525 = vrot.slane %v4503, %v4524
  %v4527 = vunpack.c.l.s4 1966171168
  %v4528 = vunpack.c.0.s8 %v4527
  %v4529 = vlaneseq
  %v4530 = vshrl.u32 %v4529, 7
  %v4531 = vsub.s32 %v4528, %v4530
  %v4532 = vrot.slane %v4504, %v4531
  %v4533 = vcombine.high %v4511, %v4511
  %v4534 = vcombine.high %v4518, %v4518
  %v4535 = vcombine.high %v4525, %v4525
  %v4536 = vcombine.high %v4532, %v4532
  %v4537 = vcombine.low %v214, %v216
  %v4538 = vcombine.high %v214, %v216
  %v4540 = vunpack.c.l.s4 1966171168
  %v4541 = vunpack.c.0.s8 %v4540
  %v4542 = vlaneseq
  %v4543 = vshrl.u32 %v4542, 7
  %v4544 = vsub.s32 %v4541, %v4543
  %v4545 = vrot.slane %v4537, %v4544
  %v4547 = vunpack.c.l.s4 1966171168
  %v4548 = vunpack.c.0.s8 %v4547
  %v4549 = vlaneseq
  %v4550 = vshrl.u32 %v4549, 7
  %v4551 = vsub.s32 %v4548, %v4550
  %v4552 = vrot.slane %v4538, %v4551
  %v4553 = vcombine.high %v4545, %v4545
  %v4554 = vcombine.high %v4552, %v4552
  %v4556 = vunpack.c.l.s4 1966171168
  %v4557 = vunpack.c.0.s8 %v4556
  %v4558 = vlaneseq
  %v4559 = vshrl.u32 %v4558, 7
  %v4560 = vsub.s32 %v4557, %v4559
  %v4561 = vrot.slane %v4545, %v4560
  %v4563 = vunpack.c.l.s4 1966171168
  %v4564 = vunpack.c.0.s8 %v4563
  %v4565 = vlaneseq
  %v4566 = vshrl.u32 %v4565, 7
  %v4567 = vsub.s32 %v4564, %v4566
  %v4568 = vrot.slane %v4552, %v4567
  %v4570 = vunpack.c.l.s4 1966171168
  %v4571 = vunpack.c.0.s8 %v4570
  %v4572 = vlaneseq
  %v4573 = vshrl.u32 %v4572, 7
  %v4574 = vsub.s32 %v4571, %v4573
  %v4575 = vrot.slane %v4553, %v4574
  %v4577 = vunpack.c.l.s4 1966171168
  %v4578 = vunpack.c.0.s8 %v4577
  %v4579 = vlaneseq
  %v4580 = vshrl.u32 %v4579, 7
  %v4581 = vsub.s32 %v4578, %v4580
  %v4582 = vrot.slane %v4554, %v4581
  %v4583 = vcombine.high %v4561, %v4561
  %v4584 = vcombine.high %v4568, %v4568
  %v4585 = vcombine.high %v4575, %v4575
  %v4586 = vcombine.high %v4582, %v4582
  %v4587 = vcombine.low %v220, %v222
  %v4588 = vcombine.high %v220, %v222
  %v4590 = vunpack.c.l.s4 1966171168
  %v4591 = vunpack.c.0.s8 %v4590
  %v4592 = vlaneseq
  %v4593 = vshrl.u32 %v4592, 7
  %v4594 = vsub.s32 %v4591, %v4593
  %v4595 = vrot.slane %v4587, %v4594
  %v4597 = vunpack.c.l.s4 1966171168
  %v4598 = vunpack.c.0.s8 %v4597
  %v4599 = vlaneseq
  %v4600 = vshrl.u32 %v4599, 7
  %v4601 = vsub.s32 %v4598, %v4600
  %v4602 = vrot.slane %v4588, %v4601
  %v4603 = vcombine.high %v4595, %v4595
  %v4604 = vcombine.high %v4602, %v4602
  %v4606 = vunpack.c.l.s4 1966171168
  %v4607 = vunpack.c.0.s8 %v4606
  %v4608 = vlaneseq
  %v4609 = vshrl.u32 %v4608, 7
  %v4610 = vsub.s32 %v4607, %v4609
  %v4611 = vrot.slane %v4595, %v4610
  %v4613 = vunpack.c.l.s4 1966171168
  %v4614 = vunpack.c.0.s8 %v4613
  %v4615 = vlaneseq
  %v4616 = vshrl.u32 %v4615, 7
  %v4617 = vsub.s32 %v4614, %v4616
  %v4618 = vrot.slane %v4602, %v4617
  %v4620 = vunpack.c.l.s4 1966171168
  %v4621 = vunpack.c.0.s8 %v4620
  %v4622 = vlaneseq
  %v4623 = vshrl.u32 %v4622, 7
  %v4624 = vsub.s32 %v4621, %v4623
  %v4625 = vrot.slane %v4603, %v4624
  %v4627 = vunpack.c.l.s4 1966171168
  %v4628 = vunpack.c.0.s8 %v4627
  %v4629 = vlaneseq
  %v4630 = vshrl.u32 %v4629, 7
  %v4631 = vsub.s32 %v4628, %v4630
  %v4632 = vrot.slane %v4604, %v4631
  %v4633 = vcombine.high %v4611, %v4611
  %v4634 = vcombine.high %v4618, %v4618
  %v4635 = vcombine.high %v4625, %v4625
  %v4636 = vcombine.high %v4632, %v4632
  %v4637 = vlaneseq
  %v4638 = vshrl.u32 %v4637, 7
  %v4639 = vsub.s32 0, %v4638
  %v4640 = vrot.slane %v4461, %v4639
  %v4641 = vlaneseq
  %v4642 = vshrl.u32 %v4641, 7
  %v4643 = vsub.s32 1, %v4642
  %v4644 = vrot.slane %v4461, %v4643
  %v4645 = vlaneseq
  %v4646 = vshrl.u32 %v4645, 7
  %v4647 = vsub.s32 0, %v4646
  %v4648 = vrot.slane %v4475, %v4647
  %v4649 = vlaneseq
  %v4650 = vshrl.u32 %v4649, 7
  %v4651 = vsub.s32 1, %v4650
  %v4652 = vrot.slane %v4475, %v4651
  %v4653 = vlaneseq
  %v4654 = vshrl.u32 %v4653, 7
  %v4655 = vsub.s32 0, %v4654
  %v4656 = vrot.slane %v4483, %v4655
  %v4657 = vlaneseq
  %v4658 = vshrl.u32 %v4657, 7
  %v4659 = vsub.s32 1, %v4658
  %v4660 = vrot.slane %v4483, %v4659
  %v4661 = vlaneseq
  %v4662 = vshrl.u32 %v4661, 7
  %v4663 = vsub.s32 0, %v4662
  %v4664 = vrot.slane %v4485, %v4663
  %v4665 = vlaneseq
  %v4666 = vshrl.u32 %v4665, 7
  %v4667 = vsub.s32 1, %v4666
  %v4668 = vrot.slane %v4485, %v4667
  %v4669 = vlaneseq
  %v4670 = vshrl.u32 %v4669, 7
  %v4671 = vsub.s32 0, %v4670
  %v4672 = vrot.slane %v4468, %v4671
  %v4673 = vlaneseq
  %v4674 = vshrl.u32 %v4673, 7
  %v4675 = vsub.s32 1, %v4674
  %v4676 = vrot.slane %v4468, %v4675
  %v4677 = vlaneseq
  %v4678 = vshrl.u32 %v4677, 7
  %v4679 = vsub.s32 0, %v4678
  %v4680 = vrot.slane %v4482, %v4679
  %v4681 = vlaneseq
  %v4682 = vshrl.u32 %v4681, 7
  %v4683 = vsub.s32 1, %v4682
  %v4684 = vrot.slane %v4482, %v4683
  %v4685 = vlaneseq
  %v4686 = vshrl.u32 %v4685, 7
  %v4687 = vsub.s32 0, %v4686
  %v4688 = vrot.slane %v4484, %v4687
  %v4689 = vlaneseq
  %v4690 = vshrl.u32 %v4689, 7
  %v4691 = vsub.s32 1, %v4690
  %v4692 = vrot.slane %v4484, %v4691
  %v4693 = vlaneseq
  %v4694 = vshrl.u32 %v4693, 7
  %v4695 = vsub.s32 0, %v4694
  %v4696 = vrot.slane %v4486, %v4695
  %v4697 = vlaneseq
  %v4698 = vshrl.u32 %v4697, 7
  %v4699 = vsub.s32 1, %v4698
  %v4700 = vrot.slane %v4486, %v4699
  %v4701 = vlaneseq
  %v4702 = vshrl.u32 %v4701, 7
  %v4703 = vsub.s32 0, %v4702
  %v4704 = vrot.slane %v4511, %v4703
  %v4705 = vlaneseq
  %v4706 = vshrl.u32 %v4705, 7
  %v4707 = vsub.s32 1, %v4706
  %v4708 = vrot.slane %v4511, %v4707
  %v4709 = vlaneseq
  %v4710 = vshrl.u32 %v4709, 7
  %v4711 = vsub.s32 0, %v4710
  %v4712 = vrot.slane %v4525, %v4711
  %v4713 = vlaneseq
  %v4714 = vshrl.u32 %v4713, 7
  %v4715 = vsub.s32 1, %v4714
  %v4716 = vrot.slane %v4525, %v4715
  %v4717 = vlaneseq
  %v4718 = vshrl.u32 %v4717, 7
  %v4719 = vsub.s32 0, %v4718
  %v4720 = vrot.slane %v4533, %v4719
  %v4721 = vlaneseq
  %v4722 = vshrl.u32 %v4721, 7
  %v4723 = vsub.s32 1, %v4722
  %v4724 = vrot.slane %v4533, %v4723
  %v4725 = vlaneseq
  %v4726 = vshrl.u32 %v4725, 7
  %v4727 = vsub.s32 0, %v4726
  %v4728 = vrot.slane %v4535, %v4727
  %v4729 = vlaneseq
  %v4730 = vshrl.u32 %v4729, 7
  %v4731 = vsub.s32 1, %v4730
  %v4732 = vrot.slane %v4535, %v4731
  %v4733 = vlaneseq
  %v4734 = vshrl.u32 %v4733, 7
  %v4735 = vsub.s32 0, %v4734
  %v4736 = vrot.slane %v4518, %v4735
  %v4737 = vlaneseq
  %v4738 = vshrl.u32 %v4737, 7
  %v4739 = vsub.s32 1, %v4738
  %v4740 = vrot.slane %v4518, %v4739
  %v4741 = vlaneseq
  %v4742 = vshrl.u32 %v4741, 7
  %v4743 = vsub.s32 0, %v4742
  %v4744 = vrot.slane %v4532, %v4743
  %v4745 = vlaneseq
  %v4746 = vshrl.u32 %v4745, 7
  %v4747 = vsub.s32 1, %v4746
  %v4748 = vrot.slane %v4532, %v4747
  %v4749 = vlaneseq
  %v4750 = vshrl.u32 %v4749, 7
  %v4751 = vsub.s32 0, %v4750
  %v4752 = vrot.slane %v4534, %v4751
  %v4753 = vlaneseq
  %v4754 = vshrl.u32 %v4753, 7
  %v4755 = vsub.s32 1, %v4754
  %v4756 = vrot.slane %v4534, %v4755
  %v4757 = vlaneseq
  %v4758 = vshrl.u32 %v4757, 7
  %v4759 = vsub.s32 0, %v4758
  %v4760 = vrot.slane %v4536, %v4759
  %v4761 = vlaneseq
  %v4762 = vshrl.u32 %v4761, 7
  %v4763 = vsub.s32 1, %v4762
  %v4764 = vrot.slane %v4536, %v4763
  %v4765 = vlaneseq
  %v4766 = vshrl.u32 %v4765, 7
  %v4767 = vsub.s32 0, %v4766
  %v4768 = vrot.slane %v4561, %v4767
  %v4769 = vlaneseq
  %v4770 = vshrl.u32 %v4769, 7
  %v4771 = vsub.s32 1, %v4770
  %v4772 = vrot.slane %v4561, %v4771
  %v4773 = vlaneseq
  %v4774 = vshrl.u32 %v4773, 7
  %v4775 = vsub.s32 0, %v4774
  %v4776 = vrot.slane %v4575, %v4775
  %v4777 = vlaneseq
  %v4778 = vshrl.u32 %v4777, 7
  %v4779 = vsub.s32 1, %v4778
  %v4780 = vrot.slane %v4575, %v4779
  %v4781 = vlaneseq
  %v4782 = vshrl.u32 %v4781, 7
  %v4783 = vsub.s32 0, %v4782
  %v4784 = vrot.slane %v4583, %v4783
  %v4785 = vlaneseq
  %v4786 = vshrl.u32 %v4785, 7
  %v4787 = vsub.s32 1, %v4786
  %v4788 = vrot.slane %v4583, %v4787
  %v4789 = vlaneseq
  %v4790 = vshrl.u32 %v4789, 7
  %v4791 = vsub.s32 0, %v4790
  %v4792 = vrot.slane %v4585, %v4791
  %v4793 = vlaneseq
  %v4794 = vshrl.u32 %v4793, 7
  %v4795 = vsub.s32 1, %v4794
  %v4796 = vrot.slane %v4585, %v4795
  %v4797 = vlaneseq
  %v4798 = vshrl.u32 %v4797, 7
  %v4799 = vsub.s32 0, %v4798
  %v4800 = vrot.slane %v4568, %v4799
  %v4801 = vlaneseq
  %v4802 = vshrl.u32 %v4801, 7
  %v4803 = vsub.s32 1, %v4802
  %v4804 = vrot.slane %v4568, %v4803
  %v4805 = vlaneseq
  %v4806 = vshrl.u32 %v4805, 7
  %v4807 = vsub.s32 0, %v4806
  %v4808 = vrot.slane %v4582, %v4807
  %v4809 = vlaneseq
  %v4810 = vshrl.u32 %v4809, 7
  %v4811 = vsub.s32 1, %v4810
  %v4812 = vrot.slane %v4582, %v4811
  %v4813 = vlaneseq
  %v4814 = vshrl.u32 %v4813, 7
  %v4815 = vsub.s32 0, %v4814
  %v4816 = vrot.slane %v4584, %v4815
  %v4817 = vlaneseq
  %v4818 = vshrl.u32 %v4817, 7
  %v4819 = vsub.s32 1, %v4818
  %v4820 = vrot.slane %v4584, %v4819
  %v4821 = vlaneseq
  %v4822 = vshrl.u32 %v4821, 7
  %v4823 = vsub.s32 0, %v4822
  %v4824 = vrot.slane %v4586, %v4823
  %v4825 = vlaneseq
  %v4826 = vshrl.u32 %v4825, 7
  %v4827 = vsub.s32 1, %v4826
  %v4828 = vrot.slane %v4586, %v4827
  %v4829 = vlaneseq
  %v4830 = vshrl.u32 %v4829, 7
  %v4831 = vsub.s32 0, %v4830
  %v4832 = vrot.slane %v4611, %v4831
  %v4833 = vlaneseq
  %v4834 = vshrl.u32 %v4833, 7
  %v4835 = vsub.s32 1, %v4834
  %v4836 = vrot.slane %v4611, %v4835
  %v4837 = vlaneseq
  %v4838 = vshrl.u32 %v4837, 7
  %v4839 = vsub.s32 0, %v4838
  %v4840 = vrot.slane %v4625, %v4839
  %v4841 = vlaneseq
  %v4842 = vshrl.u32 %v4841, 7
  %v4843 = vsub.s32 1, %v4842
  %v4844 = vrot.slane %v4625, %v4843
  %v4845 = vlaneseq
  %v4846 = vshrl.u32 %v4845, 7
  %v4847 = vsub.s32 0, %v4846
  %v4848 = vrot.slane %v4633, %v4847
  %v4849 = vlaneseq
  %v4850 = vshrl.u32 %v4849, 7
  %v4851 = vsub.s32 1, %v4850
  %v4852 = vrot.slane %v4633, %v4851
  %v4853 = vlaneseq
  %v4854 = vshrl.u32 %v4853, 7
  %v4855 = vsub.s32 0, %v4854
  %v4856 = vrot.slane %v4635, %v4855
  %v4857 = vlaneseq
  %v4858 = vshrl.u32 %v4857, 7
  %v4859 = vsub.s32 1, %v4858
  %v4860 = vrot.slane %v4635, %v4859
  %v4861 = vlaneseq
  %v4862 = vshrl.u32 %v4861, 7
  %v4863 = vsub.s32 0, %v4862
  %v4864 = vrot.slane %v4618, %v4863
  %v4865 = vlaneseq
  %v4866 = vshrl.u32 %v4865, 7
  %v4867 = vsub.s32 1, %v4866
  %v4868 = vrot.slane %v4618, %v4867
  %v4869 = vlaneseq
  %v4870 = vshrl.u32 %v4869, 7
  %v4871 = vsub.s32 0, %v4870
  %v4872 = vrot.slane %v4632, %v4871
  %v4873 = vlaneseq
  %v4874 = vshrl.u32 %v4873, 7
  %v4875 = vsub.s32 1, %v4874
  %v4876 = vrot.slane %v4632, %v4875
  %v4877 = vlaneseq
  %v4878 = vshrl.u32 %v4877, 7
  %v4879 = vsub.s32 0, %v4878
  %v4880 = vrot.slane %v4634, %v4879
  %v4881 = vlaneseq
  %v4882 = vshrl.u32 %v4881, 7
  %v4883 = vsub.s32 1, %v4882
  %v4884 = vrot.slane %v4634, %v4883
  %v4885 = vlaneseq
  %v4886 = vshrl.u32 %v4885, 7
  %v4887 = vsub.s32 0, %v4886
  %v4888 = vrot.slane %v4636, %v4887
  %v4889 = vlaneseq
  %v4890 = vshrl.u32 %v4889, 7
  %v4891 = vsub.s32 1, %v4890
  %v4892 = vrot.slane %v4636, %v4891
  %v4957 = vmul.f32 %v4640, %v1179
  %v4958 = vmul.f32 %v4644, %v1181
  %v4959 = vmul.f32 %v4640, %v1185
  %v4960 = vmul.f32 %v4644, %v1187
  %v4961 = vmul.f32 %v4648, %v1191
  %v4962 = vmul.f32 %v4652, %v1193
  %v4963 = vmul.f32 %v4648, %v1197
  %v4964 = vmul.f32 %v4652, %v1199
  %v4965 = vmul.f32 %v4656, %v1203
  %v4966 = vmul.f32 %v4660, %v1205
  %v4967 = vmul.f32 %v4656, %v1209
  %v4968 = vmul.f32 %v4660, %v1211
  %v4969 = vmul.f32 %v4664, %v1215
  %v4970 = vmul.f32 %v4668, %v1217
  %v4971 = vmul.f32 %v4664, %v1221
  %v4972 = vmul.f32 %v4668, %v1223
  %v4973 = vmul.f32 %v4672, %v1227
  %v4974 = vmul.f32 %v4676, %v1229
  %v4975 = vmul.f32 %v4672, %v1233
  %v4976 = vmul.f32 %v4676, %v1235
  %v4977 = vmul.f32 %v4680, %v1239
  %v4978 = vmul.f32 %v4684, %v1241
  %v4979 = vmul.f32 %v4680, %v1245
  %v4980 = vmul.f32 %v4684, %v1247
  %v4981 = vmul.f32 %v4688, %v1251
  %v4982 = vmul.f32 %v4692, %v1253
  %v4983 = vmul.f32 %v4688, %v1257
  %v4984 = vmul.f32 %v4692, %v1259
  %v4985 = vmul.f32 %v4696, %v1263
  %v4986 = vmul.f32 %v4700, %v1265
  %v4987 = vmul.f32 %v4696, %v1269
  %v4988 = vmul.f32 %v4700, %v1271
  %v4989 = vmul.f32 %v4704, %v1275
  %v4990 = vmul.f32 %v4708, %v1277
  %v4991 = vmul.f32 %v4704, %v1281
  %v4992 = vmul.f32 %v4708, %v1283
  %v4993 = vmul.f32 %v4712, %v1287
  %v4994 = vmul.f32 %v4716, %v1289
  %v4995 = vmul.f32 %v4712, %v1293
  %v4996 = vmul.f32 %v4716, %v1295
  %v4997 = vmul.f32 %v4720, %v1299
  %v4998 = vmul.f32 %v4724, %v1301
  %v4999 = vmul.f32 %v4720, %v1305
  %v5000 = vmul.f32 %v4724, %v1307
  %v5001 = vmul.f32 %v4728, %v1311
  %v5002 = vmul.f32 %v4732, %v1313
  %v5003 = vmul.f32 %v4728, %v1317
  %v5004 = vmul.f32 %v4732, %v1319
  %v5005 = vmul.f32 %v4736, %v1323
  %v5006 = vmul.f32 %v4740, %v1325
  %v5007 = vmul.f32 %v4736, %v1329
  %v5008 = vmul.f32 %v4740, %v1331
  %v5009 = vmul.f32 %v4744, %v1335
  %v5010 = vmul.f32 %v4748, %v1337
  %v5011 = vmul.f32 %v4744, %v1341
  %v5012 = vmul.f32 %v4748, %v1343
  %v5013 = vmul.f32 %v4752, %v1347
  %v5014 = vmul.f32 %v4756, %v1349
  %v5015 = vmul.f32 %v4752, %v1353
  %v5016 = vmul.f32 %v4756, %v1355
  %v5017 = vmul.f32 %v4760, %v1359
  %v5018 = vmul.f32 %v4764, %v1361
  %v5019 = vmul.f32 %v4760, %v1365
  %v5020 = vmul.f32 %v4764, %v1367
  %v5021 = vmul.f32 %v4768, %v1371
  %v5022 = vmul.f32 %v4772, %v1373
  %v5023 = vmul.f32 %v4768, %v1377
  %v5024 = vmul.f32 %v4772, %v1379
  %v5025 = vmul.f32 %v4776, %v1383
  %v5026 = vmul.f32 %v4780, %v1385
  %v5027 = vmul.f32 %v4776, %v1389
  %v5028 = vmul.f32 %v4780, %v1391
  %v5029 = vmul.f32 %v4784, %v1395
  %v5030 = vmul.f32 %v4788, %v1397
  %v5031 = vmul.f32 %v4784, %v1401
  %v5032 = vmul.f32 %v4788, %v1403
  %v5033 = vmul.f32 %v4792, %v1407
  %v5034 = vmul.f32 %v4796, %v1409
  %v5035 = vmul.f32 %v4792, %v1413
  %v5036 = vmul.f32 %v4796, %v1415
  %v5037 = vmul.f32 %v4800, %v1419
  %v5038 = vmul.f32 %v4804, %v1421
  %v5039 = vmul.f32 %v4800, %v1425
  %v5040 = vmul.f32 %v4804, %v1427
  %v5041 = vmul.f32 %v4808, %v1431
  %v5042 = vmul.f32 %v4812, %v1433
  %v5043 = vmul.f32 %v4808, %v1437
  %v5044 = vmul.f32 %v4812, %v1439
  %v5045 = vmul.f32 %v4816, %v1443
  %v5046 = vmul.f32 %v4820, %v1445
  %v5047 = vmul.f32 %v4816, %v1449
  %v5048 = vmul.f32 %v4820, %v1451
  %v5049 = vmul.f32 %v4824, %v1455
  %v5050 = vmul.f32 %v4828, %v1457
  %v5051 = vmul.f32 %v4824, %v1461
  %v5052 = vmul.f32 %v4828, %v1463
  %v5053 = vmul.f32 %v4832, %v1467
  %v5054 = vmul.f32 %v4836, %v1469
  %v5055 = vmul.f32 %v4832, %v1473
  %v5056 = vmul.f32 %v4836, %v1475
  %v5057 = vmul.f32 %v4840, %v1479
  %v5058 = vmul.f32 %v4844, %v1481
  %v5059 = vmul.f32 %v4840, %v1485
  %v5060 = vmul.f32 %v4844, %v1487
  %v5061 = vmul.f32 %v4848, %v1491
  %v5062 = vmul.f32 %v4852, %v1493
  %v5063 = vmul.f32 %v4848, %v1497
  %v5064 = vmul.f32 %v4852, %v1499
  %v5065 = vmul.f32 %v4856, %v1503
  %v5066 = vmul.f32 %v4860, %v1505
  %v5067 = vmul.f32 %v4856, %v1509
  %v5068 = vmul.f32 %v4860, %v1511
  %v5069 = vmul.f32 %v4864, %v1515
  %v5070 = vmul.f32 %v4868, %v1517
  %v5071 = vmul.f32 %v4864, %v1521
  %v5072 = vmul.f32 %v4868, %v1523
  %v5073 = vmul.f32 %v4872, %v1527
  %v5074 = vmul.f32 %v4876, %v1529
  %v5075 = vmul.f32 %v4872, %v1533
  %v5076 = vmul.f32 %v4876, %v1535
  %v5077 = vmul.f32 %v4880, %v1539
  %v5078 = vmul.f32 %v4884, %v1541
  %v5079 = vmul.f32 %v4880, %v1545
  %v5080 = vmul.f32 %v4884, %v1547
  %v5081 = vmul.f32 %v4888, %v1551
  %v5082 = vmul.f32 %v4892, %v1553
  %v5083 = vmul.f32 %v4888, %v1557
  %v5084 = vmul.f32 %v4892, %v1559
  %v5085 = vmul.f32 %v4957, %v4047
  %v5086 = vmul.f32 %v4958, %v4049
  %v5087 = vmul.f32 %v4959, %v4053
  %v5088 = vmul.f32 %v4960, %v4055
  %v5089 = vmul.f32 %v4961, %v4059
  %v5090 = vmul.f32 %v4962, %v4061
  %v5091 = vmul.f32 %v4963, %v4065
  %v5092 = vmul.f32 %v4964, %v4067
  %v5093 = vmul.f32 %v4965, %v4071
  %v5094 = vmul.f32 %v4966, %v4073
  %v5095 = vmul.f32 %v4967, %v4077
  %v5096 = vmul.f32 %v4968, %v4079
  %v5097 = vmul.f32 %v4969, %v4083
  %v5098 = vmul.f32 %v4970, %v4085
  %v5099 = vmul.f32 %v4971, %v4089
  %v5100 = vmul.f32 %v4972, %v4091
  %v5101 = vmul.f32 %v4973, %v4095
  %v5102 = vmul.f32 %v4974, %v4097
  %v5103 = vmul.f32 %v4975, %v4101
  %v5104 = vmul.f32 %v4976, %v4103
  %v5105 = vmul.f32 %v4977, %v4107
  %v5106 = vmul.f32 %v4978, %v4109
  %v5107 = vmul.f32 %v4979, %v4113
  %v5108 = vmul.f32 %v4980, %v4115
  %v5109 = vmul.f32 %v4981, %v4119
  %v5110 = vmul.f32 %v4982, %v4121
  %v5111 = vmul.f32 %v4983, %v4125
  %v5112 = vmul.f32 %v4984, %v4127
  %v5113 = vmul.f32 %v4985, %v4131
  %v5114 = vmul.f32 %v4986, %v4133
  %v5115 = vmul.f32 %v4987, %v4137
  %v5116 = vmul.f32 %v4988, %v4139
  %v5117 = vmul.f32 %v4989, %v4143
  %v5118 = vmul.f32 %v4990, %v4145
  %v5119 = vmul.f32 %v4991, %v4149
  %v5120 = vmul.f32 %v4992, %v4151
  %v5121 = vmul.f32 %v4993, %v4155
  %v5122 = vmul.f32 %v4994, %v4157
  %v5123 = vmul.f32 %v4995, %v4161
  %v5124 = vmul.f32 %v4996, %v4163
  %v5125 = vmul.f32 %v4997, %v4167
  %v5126 = vmul.f32 %v4998, %v4169
  %v5127 = vmul.f32 %v4999, %v4173
  %v5128 = vmul.f32 %v5000, %v4175
  %v5129 = vmul.f32 %v5001, %v4179
  %v5130 = vmul.f32 %v5002, %v4181
  %v5131 = vmul.f32 %v5003, %v4185
  %v5132 = vmul.f32 %v5004, %v4187
  %v5133 = vmul.f32 %v5005, %v4191
  %v5134 = vmul.f32 %v5006, %v4193
  %v5135 = vmul.f32 %v5007, %v4197
  %v5136 = vmul.f32 %v5008, %v4199
  %v5137 = vmul.f32 %v5009, %v4203
  %v5138 = vmul.f32 %v5010, %v4205
  %v5139 = vmul.f32 %v5011, %v4209
  %v5140 = vmul.f32 %v5012, %v4211
  %v5141 = vmul.f32 %v5013, %v4215
  %v5142 = vmul.f32 %v5014, %v4217
  %v5143 = vmul.f32 %v5015, %v4221
  %v5144 = vmul.f32 %v5016, %v4223
  %v5145 = vmul.f32 %v5017, %v4227
  %v5146 = vmul.f32 %v5018, %v4229
  %v5147 = vmul.f32 %v5019, %v4233
  %v5148 = vmul.f32 %v5020, %v4235
  %v5149 = vmul.f32 %v5021, %v4239
  %v5150 = vmul.f32 %v5022, %v4241
  %v5151 = vmul.f32 %v5023, %v4245
  %v5152 = vmul.f32 %v5024, %v4247
  %v5153 = vmul.f32 %v5025, %v4251
  %v5154 = vmul.f32 %v5026, %v4253
  %v5155 = vmul.f32 %v5027, %v4257
  %v5156 = vmul.f32 %v5028, %v4259
  %v5157 = vmul.f32 %v5029, %v4263
  %v5158 = vmul.f32 %v5030, %v4265
  %v5159 = vmul.f32 %v5031, %v4269
  %v5160 = vmul.f32 %v5032, %v4271
  %v5161 = vmul.f32 %v5033, %v4275
  %v5162 = vmul.f32 %v5034, %v4277
  %v5163 = vmul.f32 %v5035, %v4281
  %v5164 = vmul.f32 %v5036, %v4283
  %v5165 = vmul.f32 %v5037, %v4287
  %v5166 = vmul.f32 %v5038, %v4289
  %v5167 = vmul.f32 %v5039, %v4293
  %v5168 = vmul.f32 %v5040, %v4295
  %v5169 = vmul.f32 %v5041, %v4299
  %v5170 = vmul.f32 %v5042, %v4301
  %v5171 = vmul.f32 %v5043, %v4305
  %v5172 = vmul.f32 %v5044, %v4307
  %v5173 = vmul.f32 %v5045, %v4311
  %v5174 = vmul.f32 %v5046, %v4313
  %v5175 = vmul.f32 %v5047, %v4317
  %v5176 = vmul.f32 %v5048, %v4319
  %v5177 = vmul.f32 %v5049, %v4323
  %v5178 = vmul.f32 %v5050, %v4325
  %v5179 = vmul.f32 %v5051, %v4329
  %v5180 = vmul.f32 %v5052, %v4331
  %v5181 = vmul.f32 %v5053, %v4335
  %v5182 = vmul.f32 %v5054, %v4337
  %v5183 = vmul.f32 %v5055, %v4341
  %v5184 = vmul.f32 %v5056, %v4343
  %v5185 = vmul.f32 %v5057, %v4347
  %v5186 = vmul.f32 %v5058, %v4349
  %v5187 = vmul.f32 %v5059, %v4353
  %v5188 = vmul.f32 %v5060, %v4355
  %v5189 = vmul.f32 %v5061, %v4359
  %v5190 = vmul.f32 %v5062, %v4361
  %v5191 = vmul.f32 %v5063, %v4365
  %v5192 = vmul.f32 %v5064, %v4367
  %v5193 = vmul.f32 %v5065, %v4371
  %v5194 = vmul.f32 %v5066, %v4373
  %v5195 = vmul.f32 %v5067, %v4377
  %v5196 = vmul.f32 %v5068, %v4379
  %v5197 = vmul.f32 %v5069, %v4383
  %v5198 = vmul.f32 %v5070, %v4385
  %v5199 = vmul.f32 %v5071, %v4389
  %v5200 = vmul.f32 %v5072, %v4391
  %v5201 = vmul.f32 %v5073, %v4395
  %v5202 = vmul.f32 %v5074, %v4397
  %v5203 = vmul.f32 %v5075, %v4401
  %v5204 = vmul.f32 %v5076, %v4403
  %v5205 = vmul.f32 %v5077, %v4407
  %v5206 = vmul.f32 %v5078, %v4409
  %v5207 = vmul.f32 %v5079, %v4413
  %v5208 = vmul.f32 %v5080, %v4415
  %v5209 = vmul.f32 %v5081, %v4419
  %v5210 = vmul.f32 %v5082, %v4421
  %v5211 = vmul.f32 %v5083, %v4425
  %v5212 = vmul.f32 %v5084, %v4427
  %v5213 = vadd.f32 %v5085, %v5089
  %v5214 = vadd.f32 %v5213, %v5093
  %v5215 = vadd.f32 %v5214, %v5097
  %v5216 = vadd.f32 %v5215, %v5101
  %v5217 = vadd.f32 %v5216, %v5105
  %v5218 = vadd.f32 %v5217, %v5109
  %v5219 = vadd.f32 %v5218, %v5113
  %v5220 = vadd.f32 %v5219, %v5117
  %v5221 = vadd.f32 %v5220, %v5121
  %v5222 = vadd.f32 %v5221, %v5125
  %v5223 = vadd.f32 %v5222, %v5129
  %v5224 = vadd.f32 %v5223, %v5133
  %v5225 = vadd.f32 %v5224, %v5137
  %v5226 = vadd.f32 %v5225, %v5141
  %v5227 = vadd.f32 %v5226, %v5145
  %v5228 = vadd.f32 %v5086, %v5090
  %v5229 = vadd.f32 %v5228, %v5094
  %v5230 = vadd.f32 %v5229, %v5098
  %v5231 = vadd.f32 %v5230, %v5102
  %v5232 = vadd.f32 %v5231, %v5106
  %v5233 = vadd.f32 %v5232, %v5110
  %v5234 = vadd.f32 %v5233, %v5114
  %v5235 = vadd.f32 %v5234, %v5118
  %v5236 = vadd.f32 %v5235, %v5122
  %v5237 = vadd.f32 %v5236, %v5126
  %v5238 = vadd.f32 %v5237, %v5130
  %v5239 = vadd.f32 %v5238, %v5134
  %v5240 = vadd.f32 %v5239, %v5138
  %v5241 = vadd.f32 %v5240, %v5142
  %v5242 = vadd.f32 %v5241, %v5146
  %v5243 = vadd.f32 %v5087, %v5091
  %v5244 = vadd.f32 %v5243, %v5095
  %v5245 = vadd.f32 %v5244, %v5099
  %v5246 = vadd.f32 %v5245, %v5103
  %v5247 = vadd.f32 %v5246, %v5107
  %v5248 = vadd.f32 %v5247, %v5111
  %v5249 = vadd.f32 %v5248, %v5115
  %v5250 = vadd.f32 %v5249, %v5119
  %v5251 = vadd.f32 %v5250, %v5123
  %v5252 = vadd.f32 %v5251, %v5127
  %v5253 = vadd.f32 %v5252, %v5131
  %v5254 = vadd.f32 %v5253, %v5135
  %v5255 = vadd.f32 %v5254, %v5139
  %v5256 = vadd.f32 %v5255, %v5143
  %v5257 = vadd.f32 %v5256, %v5147
  %v5258 = vadd.f32 %v5088, %v5092
  %v5259 = vadd.f32 %v5258, %v5096
  %v5260 = vadd.f32 %v5259, %v5100
  %v5261 = vadd.f32 %v5260, %v5104
  %v5262 = vadd.f32 %v5261, %v5108
  %v5263 = vadd.f32 %v5262, %v5112
  %v5264 = vadd.f32 %v5263, %v5116
  %v5265 = vadd.f32 %v5264, %v5120
  %v5266 = vadd.f32 %v5265, %v5124
  %v5267 = vadd.f32 %v5266, %v5128
  %v5268 = vadd.f32 %v5267, %v5132
  %v5269 = vadd.f32 %v5268, %v5136
  %v5270 = vadd.f32 %v5269, %v5140
  %v5271 = vadd.f32 %v5270, %v5144
  %v5272 = vadd.f32 %v5271, %v5148
  %v5273 = vadd.f32 %v5149, %v5153
  %v5274 = vadd.f32 %v5273, %v5157
  %v5275 = vadd.f32 %v5274, %v5161
  %v5276 = vadd.f32 %v5275, %v5165
  %v5277 = vadd.f32 %v5276, %v5169
  %v5278 = vadd.f32 %v5277, %v5173
  %v5279 = vadd.f32 %v5278, %v5177
  %v5280 = vadd.f32 %v5279, %v5181
  %v5281 = vadd.f32 %v5280, %v5185
  %v5282 = vadd.f32 %v5281, %v5189
  %v5283 = vadd.f32 %v5282, %v5193
  %v5284 = vadd.f32 %v5283, %v5197
  %v5285 = vadd.f32 %v5284, %v5201
  %v5286 = vadd.f32 %v5285, %v5205
  %v5287 = vadd.f32 %v5286, %v5209
  %v5288 = vadd.f32 %v5150, %v5154
  %v5289 = vadd.f32 %v5288, %v5158
  %v5290 = vadd.f32 %v5289, %v5162
  %v5291 = vadd.f32 %v5290, %v5166
  %v5292 = vadd.f32 %v5291, %v5170
  %v5293 = vadd.f32 %v5292, %v5174
  %v5294 = vadd.f32 %v5293, %v5178
  %v5295 = vadd.f32 %v5294, %v5182
  %v5296 = vadd.f32 %v5295, %v5186
  %v5297 = vadd.f32 %v5296, %v5190
  %v5298 = vadd.f32 %v5297, %v5194
  %v5299 = vadd.f32 %v5298, %v5198
  %v5300 = vadd.f32 %v5299, %v5202
  %v5301 = vadd.f32 %v5300, %v5206
  %v5302 = vadd.f32 %v5301, %v5210
  %v5303 = vadd.f32 %v5151, %v5155
  %v5304 = vadd.f32 %v5303, %v5159
  %v5305 = vadd.f32 %v5304, %v5163
  %v5306 = vadd.f32 %v5305, %v5167
  %v5307 = vadd.f32 %v5306, %v5171
  %v5308 = vadd.f32 %v5307, %v5175
  %v5309 = vadd.f32 %v5308, %v5179
  %v5310 = vadd.f32 %v5309, %v5183
  %v5311 = vadd.f32 %v5310, %v5187
  %v5312 = vadd.f32 %v5311, %v5191
  %v5313 = vadd.f32 %v5312, %v5195
  %v5314 = vadd.f32 %v5313, %v5199
  %v5315 = vadd.f32 %v5314, %v5203
  %v5316 = vadd.f32 %v5315, %v5207
  %v5317 = vadd.f32 %v5316, %v5211
  %v5318 = vadd.f32 %v5152, %v5156
  %v5319 = vadd.f32 %v5318, %v5160
  %v5320 = vadd.f32 %v5319, %v5164
  %v5321 = vadd.f32 %v5320, %v5168
  %v5322 = vadd.f32 %v5321, %v5172
  %v5323 = vadd.f32 %v5322, %v5176
  %v5324 = vadd.f32 %v5323, %v5180
  %v5325 = vadd.f32 %v5324, %v5184
  %v5326 = vadd.f32 %v5325, %v5188
  %v5327 = vadd.f32 %v5326, %v5192
  %v5328 = vadd.f32 %v5327, %v5196
  %v5329 = vadd.f32 %v5328, %v5200
  %v5330 = vadd.f32 %v5329, %v5204
  %v5331 = vadd.f32 %v5330, %v5208
  %v5332 = vadd.f32 %v5331, %v5212
  %v5333 = vld [vmem:[%s7] sm:$0x3]
  %v5335 = vlaneseq
  %v5336 = vshrl.u32 %v5335, 7
  %v5337 = vsub.s32 0, %v5336
  %v5338 = vrot.slane %v5333, %v5337
  %v5339 = vlaneseq
  %v5340 = vshrl.u32 %v5339, 7
  %v5341 = vsub.s32 1, %v5340
  %v5342 = vrot.slane %v5333, %v5341
  %v5345 = vadd.f32 %v5227, %v5338
  %v5346 = vadd.f32 %v5242, %v5342
  %v5347 = vadd.f32 %v5257, %v5338
  %v5348 = vadd.f32 %v5272, %v5342
  %v5349 = vadd.f32 %v5287, %v5338
  %v5350 = vadd.f32 %v5302, %v5342
  %v5351 = vadd.f32 %v5317, %v5338
  %v5352 = vadd.f32 %v5332, %v5342
  %5353 = vst [vmem:[%s10] sm:$0xff] %v5345
  %5354 = vst [vmem:[%s10 + $0x8] sm:$0xff] %v5346
  %5355 = vst [vmem:[%s10 + $0x10] sm:$0xff] %v5347
  %5356 = vst [vmem:[%s10 + $0x18] sm:$0xff] %v5348
  %5357 = vst [vmem:[%s10 + $0x20] sm:$0xff] %v5349
  %5358 = vst [vmem:[%s10 + $0x28] sm:$0xff] %v5350
  %5359 = vst [vmem:[%s10 + $0x30] sm:$0xff] %v5351
  %5360 = vst [vmem:[%s10 + $0x38] sm:$0xff] %v5352
  // Predicated region
  $region42: #{gnn_forward.3} parent=0 // pred_check
    _
  $region43: #{gnn_forward.3} parent=0 // pred_check_branch
    %5362 = sbr.rel (0) target = $region45
  $region44: #{gnn_forward.3} parent=0 // pred_region
    _
  $region45: #{gnn_forward.3} parent=0 // pred_fallthru
    _
  // Predicated region
  $region46: #{gnn_forward.3} parent=0 // pred_check
    _
  $region47: #{gnn_forward.3} parent=0 // pred_check_branch
    %5364 = sbr.rel (0) target = $region49
  $region48: #{gnn_forward.3} parent=0 // pred_region
    _
  $region49: #{gnn_forward.3} parent=0 // pred_fallthru
    _

// kernel: gnn_forward.5
$region0: #{gnn_forward.5}
  #allocation0 [shape = 'u32[]', space=smem, size = 0x4, offset = 0x4, fixed_abs, tag = 'smem constant byte address 0x4 - core index']
  #allocation1 [shape = 'u32[144,128]{1,0:T(1,128)}', space=vmem, size = 0x12000, scoped, tag = 'internal scratch']
  #allocation2 [shape = 'f32[1]{0:T(128)S(6)}', space=smem, size = 0x200, scoped, tag = 'scoped memory for gnn_forward.5']
  %s0 = inlined_call_operand.<no memory space> [shape: f32[1], index: 0, kind: input, shape index: {}]
  %s1 = inlined_call_operand.vmem [shape: f32[2,16,256], index: 1, kind: input, shape index: {}]
  %s2 = inlined_call_operand.vmem [shape: f32[2,16,16], index: 2, kind: input, shape index: {}]
  %s3 = inlined_call_operand.vmem [shape: f32[2,16,16], index: 3, kind: input, shape index: {}]
  %s4 = inlined_call_operand.vmem [shape: f32[256,256], index: 4, kind: input, shape index: {}]
  %s5 = inlined_call_operand.vmem [shape: f32[1,256], index: 5, kind: input, shape index: {}]
  %s6 = inlined_call_operand.vmem [shape: f32[256,1], index: 6, kind: input, shape index: {}]
  %s7 = inlined_call_operand.vmem [shape: f32[256,256], index: 7, kind: input, shape index: {}]
  %s8 = inlined_call_operand.vmem [shape: f32[1,256], index: 8, kind: input, shape index: {}]
  %s9 = inlined_call_operand.vmem [shape: f32[1536,32], index: 9, kind: input, shape index: {}]
  %s10 = inlined_call_operand.vmem [shape: f32[1,32], index: 10, kind: input, shape index: {}]
  %s11 = inlined_call_operand.hbm [shape: f32[1,2,32], index: 11, kind: output, shape index: {}]
  %s12 = sld [smem:[#allocation0]]
  $region54: #{gnn_forward.5} parent=0
    _
  %s14 = ssub.s32 1, %s12
  %s15 = scalar_select 0, %s14, %s12
  %16 = sst [smem:[#allocation2]] %s0
  $region1: #{gnn_forward.5} parent=0
    #allocation3 [shape = 'u8[1024]{0}', space=vmem, size = 0x400, scoped, tag = 'output window, operand 0, single buffered']
    #allocation4 [shape = 's32[1]{0}', space=sflag, size = 0x4, scoped, tag = 'scoped memory for gnn_forward.5']
    %17 = vsyncpa [#allocation4], 0
    // Predicated region
    $region2: #{gnn_forward.5} parent=1 // pred_check
      _
    $region3: #{gnn_forward.5} parent=1 // pred_check_branch
      %19 = sbr.rel (0) target = $region5
    $region4: #{gnn_forward.5} parent=1 // pred_region
      _
    $region5: #{gnn_forward.5} parent=1 // pred_fallthru
      _
    // Predicated region
    $region6: #{gnn_forward.5} parent=1 // pred_check
      _
    $region7: #{gnn_forward.5} parent=1 // pred_check_branch
      %21 = sbr.rel (0) target = $region9
    $region8: #{gnn_forward.5} parent=1 // pred_region
      _
    $region9: #{gnn_forward.5} parent=1 // pred_fallthru
      _
    // Predicated region
    $region10: #{gnn_forward.5} parent=1 // pred_check
      _
    $region11: #{gnn_forward.5} parent=1 // pred_check_branch
      %23 = sbr.rel (0) target = $region13
    $region12: #{gnn_forward.5} parent=1 // pred_region
      _
    $region13: #{gnn_forward.5} parent=1 // pred_fallthru
      _
    // Predicated region
    $region14: #{gnn_forward.5} parent=1 // pred_check
      _
    $region15: #{gnn_forward.5} parent=1 // pred_check_branch
      %25 = sbr.rel (0) target = $region17
    $region16: #{gnn_forward.5} parent=1 // pred_region
      _
    $region17: #{gnn_forward.5} parent=1 // pred_fallthru
      _
    // Predicated region
    $region18: #{gnn_forward.5} parent=1 // pred_check
      _
    $region19: #{gnn_forward.5} parent=1 // pred_check_branch
      %27 = sbr.rel (0) target = $region21
    $region20: #{gnn_forward.5} parent=1 // pred_region
      _
    $region21: #{gnn_forward.5} parent=1 // pred_fallthru
      _
    // Predicated region
    $region22: #{gnn_forward.5} parent=1 // pred_check
      _
    $region23: #{gnn_forward.5} parent=1 // pred_check_branch
      %29 = sbr.rel (0) target = $region25
    $region24: #{gnn_forward.5} parent=1 // pred_region
      _
    $region25: #{gnn_forward.5} parent=1 // pred_fallthru
      _
    // Predicated region
    $region26: #{gnn_forward.5} parent=1 // pred_check
      _
    $region27: #{gnn_forward.5} parent=1 // pred_check_branch
      %31 = sbr.rel (0) target = $region29
    $region28: #{gnn_forward.5} parent=1 // pred_region
      _
    $region29: #{gnn_forward.5} parent=1 // pred_fallthru
      _
    // Predicated region
    $region30: #{gnn_forward.5} parent=1 // pred_check
      _
    $region31: #{gnn_forward.5} parent=1 // pred_check_branch
      %33 = sbr.rel (0) target = $region33
    $region32: #{gnn_forward.5} parent=1 // pred_region
      _
    $region33: #{gnn_forward.5} parent=1 // pred_fallthru
      _
    // Predicated region
    $region34: #{gnn_forward.5} parent=1 // pred_check
      _
    $region35: #{gnn_forward.5} parent=1 // pred_check_branch
      %35 = sbr.rel (0) target = $region37
    $region36: #{gnn_forward.5} parent=1 // pred_region
      _
    $region37: #{gnn_forward.5} parent=1 // pred_fallthru
      _
    // Predicated region
    $region38: #{gnn_forward.5} parent=1 // pred_check
      _
    $region39: #{gnn_forward.5} parent=1 // pred_check_branch
      %37 = sbr.rel (0) target = $region41
    $region40: #{gnn_forward.5} parent=1 // pred_region
      _
    $region41: #{gnn_forward.5} parent=1 // pred_fallthru
      _
    // Predicated region
    $region42: #{gnn_forward.5} parent=1 // pred_check
      _
    $region43: #{gnn_forward.5} parent=1 // pred_check_branch
      %39 = sbr.rel (0) target = $region45
    $region44: #{gnn_forward.5} parent=1 // pred_region
      _
    $region45: #{gnn_forward.5} parent=1 // pred_fallthru
      _
    %v40 = vld [vmem:[%s1] sm:$0xff]
    %v41 = vld [vmem:[%s1 + $0x8] sm:$0xff]
    %v42 = vld [vmem:[%s1 + $0x10] sm:$0xff]
    %v43 = vld [vmem:[%s1 + $0x18] sm:$0xff]
    %v44 = vld [vmem:[%s1 + $0x20] sm:$0xff]
    %v45 = vld [vmem:[%s1 + $0x28] sm:$0xff]
    %v46 = vld [vmem:[%s1 + $0x30] sm:$0xff]
    %v47 = vld [vmem:[%s1 + $0x38] sm:$0xff]
    %v48 = vld [vmem:[%s4] sm:$0xff]
    %v49 = vld [vmem:[%s4 + $0x8] sm:$0xff]
    %v50 = vld [vmem:[%s4 + $0x10] sm:$0xff]
    %v51 = vld [vmem:[%s4 + $0x18] sm:$0xff]
    %v52 = vld [vmem:[%s4 + $0x20] sm:$0xff]
    %v53 = vld [vmem:[%s4 + $0x28] sm:$0xff]
    %v54 = vld [vmem:[%s4 + $0x30] sm:$0xff]
    %v55 = vld [vmem:[%s4 + $0x38] sm:$0xff]
    %v56 = vld [vmem:[%s4 + $0x40] sm:$0xff]
    %v57 = vld [vmem:[%s4 + $0x48] sm:$0xff]
    %v58 = vld [vmem:[%s4 + $0x50] sm:$0xff]
    %v59 = vld [vmem:[%s4 + $0x58] sm:$0xff]
    %v60 = vld [vmem:[%s4 + $0x60] sm:$0xff]
    %v61 = vld [vmem:[%s4 + $0x68] sm:$0xff]
    %v62 = vld [vmem:[%s4 + $0x70] sm:$0xff]
    %v63 = vld [vmem:[%s4 + $0x78] sm:$0xff]
    %v64 = vld [vmem:[%s4 + $0x80] sm:$0xff]
    %v65 = vld [vmem:[%s4 + $0x88] sm:$0xff]
    %v66 = vld [vmem:[%s4 + $0x90] sm:$0xff]
    %v67 = vld [vmem:[%s4 + $0x98] sm:$0xff]
    %v68 = vld [vmem:[%s4 + $0xa0] sm:$0xff]
    %v69 = vld [vmem:[%s4 + $0xa8] sm:$0xff]
    %v70 = vld [vmem:[%s4 + $0xb0] sm:$0xff]
    %v71 = vld [vmem:[%s4 + $0xb8] sm:$0xff]
    %v72 = vld [vmem:[%s4 + $0xc0] sm:$0xff]
    %v73 = vld [vmem:[%s4 + $0xc8] sm:$0xff]
    %v74 = vld [vmem:[%s4 + $0xd0] sm:$0xff]
    %v75 = vld [vmem:[%s4 + $0xd8] sm:$0xff]
    %v76 = vld [vmem:[%s4 + $0xe0] sm:$0xff]
    %v77 = vld [vmem:[%s4 + $0xe8] sm:$0xff]
    %v78 = vld [vmem:[%s4 + $0xf0] sm:$0xff]
    %v79 = vld [vmem:[%s4 + $0xf8] sm:$0xff]
    %v80 = vld [vmem:[%s4 + $0x100] sm:$0xff]
    %v81 = vld [vmem:[%s4 + $0x108] sm:$0xff]
    %v82 = vld [vmem:[%s4 + $0x110] sm:$0xff]
    %v83 = vld [vmem:[%s4 + $0x118] sm:$0xff]
    %v84 = vld [vmem:[%s4 + $0x120] sm:$0xff]
    %v85 = vld [vmem:[%s4 + $0x128] sm:$0xff]
    %v86 = vld [vmem:[%s4 + $0x130] sm:$0xff]
    %v87 = vld [vmem:[%s4 + $0x138] sm:$0xff]
    %v88 = vld [vmem:[%s4 + $0x140] sm:$0xff]
    %v89 = vld [vmem:[%s4 + $0x148] sm:$0xff]
    %v90 = vld [vmem:[%s4 + $0x150] sm:$0xff]
    %v91 = vld [vmem:[%s4 + $0x158] sm:$0xff]
    %v92 = vld [vmem:[%s4 + $0x160] sm:$0xff]
    %v93 = vld [vmem:[%s4 + $0x168] sm:$0xff]
    %v94 = vld [vmem:[%s4 + $0x170] sm:$0xff]
    %v95 = vld [vmem:[%s4 + $0x178] sm:$0xff]
    %v96 = vld [vmem:[%s4 + $0x180] sm:$0xff]
    %v97 = vld [vmem:[%s4 + $0x188] sm:$0xff]
    %v98 = vld [vmem:[%s4 + $0x190] sm:$0xff]
    %v99 = vld [vmem:[%s4 + $0x198] sm:$0xff]
    %v100 = vld [vmem:[%s4 + $0x1a0] sm:$0xff]
    %v101 = vld [vmem:[%s4 + $0x1a8] sm:$0xff]
    %v102 = vld [vmem:[%s4 + $0x1b0] sm:$0xff]
    %v103 = vld [vmem:[%s4 + $0x1b8] sm:$0xff]
    %v104 = vld [vmem:[%s4 + $0x1c0] sm:$0xff]
    %v105 = vld [vmem:[%s4 + $0x1c8] sm:$0xff]
    %v106 = vld [vmem:[%s4 + $0x1d0] sm:$0xff]
    %v107 = vld [vmem:[%s4 + $0x1d8] sm:$0xff]
    %v108 = vld [vmem:[%s4 + $0x1e0] sm:$0xff]
    %v109 = vld [vmem:[%s4 + $0x1e8] sm:$0xff]
    %v110 = vld [vmem:[%s4 + $0x1f0] sm:$0xff]
    %v111 = vld [vmem:[%s4 + $0x1f8] sm:$0xff]
    %v112 = vld [vmem:[%s5] sm:$0x3]
    %v114 = vlaneseq
    %v115 = vshrl.u32 %v114, 7
    %v116 = vsub.s32 0, %v115
    %v117 = vrot.slane %v112, %v116
    %v118 = vlaneseq
    %v119 = vshrl.u32 %v118, 7
    %v120 = vsub.s32 1, %v119
    %v121 = vrot.slane %v112, %v120
    %124 = vmatprep.subr.mxu0 %v79
    %125 = vmatpush1.msra.mxu0 %v78
    %126 = vmatprep.subr.mxu0 %v77
    %127 = vmatpush1.msra.mxu0 %v76
    %128 = vmatprep.subr.mxu0 %v75
    %129 = vmatpush1.msra.mxu0 %v74
    %130 = vmatprep.subr.mxu0 %v73
    %131 = vmatpush1.msra.mxu0 %v72
    %132 = vmatprep.subr.mxu0 %v71
    %133 = vmatpush1.msra.mxu0 %v70
    %134 = vmatprep.subr.mxu0 %v69
    %135 = vmatpush1.msra.mxu0 %v68
    %136 = vmatprep.subr.mxu0 %v67
    %137 = vmatpush1.msra.mxu0 %v66
    %138 = vmatprep.subr.mxu0 %v65
    %139 = vmatpush1.msra.mxu0 %v64
    %140 = vmatprep.subr.mxu0 %v63
    %141 = vmatpush1.msra.mxu0 %v62
    %142 = vmatprep.subr.mxu0 %v61
    %143 = vmatpush1.msra.mxu0 %v60
    %144 = vmatprep.subr.mxu0 %v59
    %145 = vmatpush1.msra.mxu0 %v58
    %146 = vmatprep.subr.mxu0 %v57
    %147 = vmatpush1.msra.mxu0 %v56
    %148 = vmatprep.subr.mxu0 %v55
    %149 = vmatpush1.msra.mxu0 %v54
    %150 = vmatprep.subr.mxu0 %v53
    %151 = vmatpush1.msra.mxu0 %v52
    %152 = vmatprep.subr.mxu0 %v51
    %153 = vmatpush1.msra.mxu0 %v50
    %154 = vmatprep.subr.mxu0 %v49
    %155 = vmatpush1.msra.mxu0 %v48
    %156 = vmatprep.subr.mxu0 %v111
    %157 = vmatpush2.msra.mxu0 %v110
    %158 = vmatprep.subr.mxu0 %v109
    %159 = vmatpush2.msra.mxu0 %v108
    %160 = vmatprep.subr.mxu0 %v107
    %161 = vmatpush2.msra.mxu0 %v106
    %162 = vmatprep.subr.mxu0 %v105
    %163 = vmatpush2.msra.mxu0 %v104
    %164 = vmatprep.subr.mxu0 %v103
    %165 = vmatpush2.msra.mxu0 %v102
    %166 = vmatprep.subr.mxu0 %v101
    %167 = vmatpush2.msra.mxu0 %v100
    %168 = vmatprep.subr.mxu0 %v99
    %169 = vmatpush2.msra.mxu0 %v98
    %170 = vmatprep.subr.mxu0 %v97
    %171 = vmatpush2.msra.mxu0 %v96
    %172 = vmatprep.subr.mxu0 %v95
    %173 = vmatpush2.msra.mxu0 %v94
    %174 = vmatprep.subr.mxu0 %v93
    %175 = vmatpush2.msra.mxu0 %v92
    %176 = vmatprep.subr.mxu0 %v91
    %177 = vmatpush2.msra.mxu0 %v90
    %178 = vmatprep.subr.mxu0 %v89
    %179 = vmatpush2.msra.mxu0 %v88
    %180 = vmatprep.subr.mxu0 %v87
    %181 = vmatpush2.msra.mxu0 %v86
    %182 = vmatprep.subr.mxu0 %v85
    %183 = vmatpush2.msra.mxu0 %v84
    %184 = vmatprep.subr.mxu0 %v83
    %185 = vmatpush2.msra.mxu0 %v82
    %186 = vmatprep.subr.mxu0 %v81
    %187 = vmatpush2.msra.mxu0 %v80
    %188 = vmatprep.mubr.f32.mxu0 %v41
    %189 = vmatmul.mubr.f32.gmra.mxu0 %v40
    %v190 = vpop.f32.mrf.mxu0
    %v191 = vadd.f32 %v117, %v190
    %v192 = vpop.f32.mrf.mxu0
    %v193 = vadd.f32 %v121, %v192
    %194 = vmatprep.mubr.f32.mxu0 %v43
    %195 = vmatmul.mubr.f32.gmra.mxu0 %v42
    %v196 = vpop.f32.mrf.mxu0
    %v197 = vadd.f32 %v117, %v196
    %v198 = vpop.f32.mrf.mxu0
    %v199 = vadd.f32 %v121, %v198
    %200 = vmatprep.mubr.f32.mxu0 %v45
    %201 = vmatmul.mubr.f32.gmra.mxu0 %v44
    %v202 = vpop.f32.mrf.mxu0
    %v203 = vadd.f32 %v117, %v202
    %v204 = vpop.f32.mrf.mxu0
    %v205 = vadd.f32 %v121, %v204
    %206 = vmatprep.mubr.f32.mxu0 %v47
    %207 = vmatmul.mubr.f32.gmra.mxu0 %v46
    %v208 = vpop.f32.mrf.mxu0
    %v209 = vadd.f32 %v117, %v208
    %v210 = vpop.f32.mrf.mxu0
    %v211 = vadd.f32 %v121, %v210
    %212 = vdwg.mxu0
    %vm213 = vcmp.gt.f32.partialorder %v191, 0.0
    %vm214 = vcmp.gt.f32.partialorder %v193, 0.0
    %vm215 = vcmp.gt.f32.partialorder %v197, 0.0
    %vm216 = vcmp.gt.f32.partialorder %v199, 0.0
    %vm217 = vcmp.gt.f32.partialorder %v203, 0.0
    %vm218 = vcmp.gt.f32.partialorder %v205, 0.0
    %vm219 = vcmp.gt.f32.partialorder %v209, 0.0
    %vm220 = vcmp.gt.f32.partialorder %v211, 0.0
    %v221 = vmul.f32 %v191, 0.2
    %v222 = vmul.f32 %v193, 0.2
    %v223 = vmul.f32 %v197, 0.2
    %v224 = vmul.f32 %v199, 0.2
    %v225 = vmul.f32 %v203, 0.2
    %v226 = vmul.f32 %v205, 0.2
    %v227 = vmul.f32 %v209, 0.2
    %v228 = vmul.f32 %v211, 0.2
    %v229 = vsel %vm213, %v191, %v221
    %v230 = vsel %vm214, %v193, %v222
    %v231 = vsel %vm215, %v197, %v223
    %v232 = vsel %vm216, %v199, %v224
    %v233 = vsel %vm217, %v203, %v225
    %v234 = vsel %vm218, %v205, %v226
    %v235 = vsel %vm219, %v209, %v227
    %v236 = vsel %vm220, %v211, %v228
    %v237 = vld [vmem:[%s6] sm:$0xff]
    %v238 = vld [vmem:[%s6 + $0x8] sm:$0xff]
    %v239 = vld [vmem:[%s6 + $0x10] sm:$0xff]
    %v240 = vld [vmem:[%s6 + $0x18] sm:$0xff]
    %v241 = vld [vmem:[%s6 + $0x20] sm:$0xff]
    %v242 = vld [vmem:[%s6 + $0x28] sm:$0xff]
    %v243 = vld [vmem:[%s6 + $0x30] sm:$0xff]
    %v244 = vld [vmem:[%s6 + $0x38] sm:$0xff]
    %v245 = vld [vmem:[%s6 + $0x40] sm:$0xff]
    %v246 = vld [vmem:[%s6 + $0x48] sm:$0xff]
    %v247 = vld [vmem:[%s6 + $0x50] sm:$0xff]
    %v248 = vld [vmem:[%s6 + $0x58] sm:$0xff]
    %v249 = vld [vmem:[%s6 + $0x60] sm:$0xff]
    %v250 = vld [vmem:[%s6 + $0x68] sm:$0xff]
    %v251 = vld [vmem:[%s6 + $0x70] sm:$0xff]
    %v252 = vld [vmem:[%s6 + $0x78] sm:$0xff]
    %v253 = vld [vmem:[%s6 + $0x80] sm:$0xff]
    %v254 = vld [vmem:[%s6 + $0x88] sm:$0xff]
    %v255 = vld [vmem:[%s6 + $0x90] sm:$0xff]
    %v256 = vld [vmem:[%s6 + $0x98] sm:$0xff]
    %v257 = vld [vmem:[%s6 + $0xa0] sm:$0xff]
    %v258 = vld [vmem:[%s6 + $0xa8] sm:$0xff]
    %v259 = vld [vmem:[%s6 + $0xb0] sm:$0xff]
    %v260 = vld [vmem:[%s6 + $0xb8] sm:$0xff]
    %v261 = vld [vmem:[%s6 + $0xc0] sm:$0xff]
    %v262 = vld [vmem:[%s6 + $0xc8] sm:$0xff]
    %v263 = vld [vmem:[%s6 + $0xd0] sm:$0xff]
    %v264 = vld [vmem:[%s6 + $0xd8] sm:$0xff]
    %v265 = vld [vmem:[%s6 + $0xe0] sm:$0xff]
    %v266 = vld [vmem:[%s6 + $0xe8] sm:$0xff]
    %v267 = vld [vmem:[%s6 + $0xf0] sm:$0xff]
    %v268 = vld [vmem:[%s6 + $0xf8] sm:$0xff]
    %269 = vmatprep.subr.mxu0 0.0
    %270 = vmatpush1.msra.mxu0 %v252
    %271 = vmatprep.subr.mxu0 0.0
    %272 = vmatpush1.msra.mxu0 %v251
    %273 = vmatprep.subr.mxu0 0.0
    %274 = vmatpush1.msra.mxu0 %v250
    %275 = vmatprep.subr.mxu0 0.0
    %276 = vmatpush1.msra.mxu0 %v249
    %277 = vmatprep.subr.mxu0 0.0
    %278 = vmatpush1.msra.mxu0 %v248
    %279 = vmatprep.subr.mxu0 0.0
    %280 = vmatpush1.msra.mxu0 %v247
    %281 = vmatprep.subr.mxu0 0.0
    %282 = vmatpush1.msra.mxu0 %v246
    %283 = vmatprep.subr.mxu0 0.0
    %284 = vmatpush1.msra.mxu0 %v245
    %285 = vmatprep.subr.mxu0 0.0
    %286 = vmatpush1.msra.mxu0 %v244
    %287 = vmatprep.subr.mxu0 0.0
    %288 = vmatpush1.msra.mxu0 %v243
    %289 = vmatprep.subr.mxu0 0.0
    %290 = vmatpush1.msra.mxu0 %v242
    %291 = vmatprep.subr.mxu0 0.0
    %292 = vmatpush1.msra.mxu0 %v241
    %293 = vmatprep.subr.mxu0 0.0
    %294 = vmatpush1.msra.mxu0 %v240
    %295 = vmatprep.subr.mxu0 0.0
    %296 = vmatpush1.msra.mxu0 %v239
    %297 = vmatprep.subr.mxu0 0.0
    %298 = vmatpush1.msra.mxu0 %v238
    %299 = vmatprep.subr.mxu0 0.0
    %300 = vmatpush1.msra.mxu0 %v237
    %301 = vmatprep.subr.mxu0 0.0
    %302 = vmatpush2.msra.mxu0 %v268
    %303 = vmatprep.subr.mxu0 0.0
    %304 = vmatpush2.msra.mxu0 %v267
    %305 = vmatprep.subr.mxu0 0.0
    %306 = vmatpush2.msra.mxu0 %v266
    %307 = vmatprep.subr.mxu0 0.0
    %308 = vmatpush2.msra.mxu0 %v265
    %309 = vmatprep.subr.mxu0 0.0
    %310 = vmatpush2.msra.mxu0 %v264
    %311 = vmatprep.subr.mxu0 0.0
    %312 = vmatpush2.msra.mxu0 %v263
    %313 = vmatprep.subr.mxu0 0.0
    %314 = vmatpush2.msra.mxu0 %v262
    %315 = vmatprep.subr.mxu0 0.0
    %316 = vmatpush2.msra.mxu0 %v261
    %317 = vmatprep.subr.mxu0 0.0
    %318 = vmatpush2.msra.mxu0 %v260
    %319 = vmatprep.subr.mxu0 0.0
    %320 = vmatpush2.msra.mxu0 %v259
    %321 = vmatprep.subr.mxu0 0.0
    %322 = vmatpush2.msra.mxu0 %v258
    %323 = vmatprep.subr.mxu0 0.0
    %324 = vmatpush2.msra.mxu0 %v257
    %325 = vmatprep.subr.mxu0 0.0
    %326 = vmatpush2.msra.mxu0 %v256
    %327 = vmatprep.subr.mxu0 0.0
    %328 = vmatpush2.msra.mxu0 %v255
    %329 = vmatprep.subr.mxu0 0.0
    %330 = vmatpush2.msra.mxu0 %v254
    %331 = vmatprep.subr.mxu0 0.0
    %332 = vmatpush2.msra.mxu0 %v253
    %333 = vmatprep.mubr.f32.mxu0 %v41
    %334 = vmatmul.mubr.f32.gmra.mxu0 %v40
    %v335 = vpop.f32.mrf.mxu0
    %v336 = vadd.f32 0.0, %v335
    %v337 = vpop.f32.mrf.mxu0
    %338 = vmatprep.mubr.f32.mxu0 %v43
    %339 = vmatmul.mubr.f32.gmra.mxu0 %v42
    %v340 = vpop.f32.mrf.mxu0
    %v341 = vadd.f32 0.0, %v340
    %v342 = vpop.f32.mrf.mxu0
    %343 = vmatprep.mubr.f32.mxu0 %v45
    %344 = vmatmul.mubr.f32.gmra.mxu0 %v44
    %v345 = vpop.f32.mrf.mxu0
    %v346 = vadd.f32 0.0, %v345
    %v347 = vpop.f32.mrf.mxu0
    %348 = vmatprep.mubr.f32.mxu0 %v47
    %349 = vmatmul.mubr.f32.gmra.mxu0 %v46
    %v350 = vpop.f32.mrf.mxu0
    %v351 = vadd.f32 0.0, %v350
    %v352 = vpop.f32.mrf.mxu0
    %353 = vdwg.mxu0
    %v354 = vld [vmem:[%s2] sm:$0xff]
    %v355 = vld [vmem:[%s2 + $0x8] sm:$0xff]
    %v356 = vld [vmem:[%s2 + $0x10] sm:$0xff]
    %v357 = vld [vmem:[%s2 + $0x18] sm:$0xff]
    %v358 = vld [vmem:[%s3] sm:$0xff]
    %v359 = vld [vmem:[%s3 + $0x8] sm:$0xff]
    %v360 = vld [vmem:[%s3 + $0x10] sm:$0xff]
    %v361 = vld [vmem:[%s3 + $0x18] sm:$0xff]
    %vm362 = vcmp.gt.f32.partialorder %v358, 0.0
    %vm363 = vcmp.gt.f32.partialorder %v359, 0.0
    %vm364 = vcmp.gt.f32.partialorder %v360, 0.0
    %vm365 = vcmp.gt.f32.partialorder %v361, 0.0
    %s366 = sld [smem:[#allocation2]]
    %v367 = vsel %vm362, %v354, 1.0
    %v368 = vsel %vm363, %v355, 1.0
    %v369 = vsel %vm364, %v356, 1.0
    %v370 = vsel %vm365, %v357, 1.0
    %v371 = vrcp.pop %v367
    %v372 = vrcp.pop %v368
    %v373 = vrcp.pop %v369
    %v374 = vrcp.pop %v370
    %v375 = vstv %s366
    %v376 = vmul.f32 %v375, %v371
    %v377 = vmul.f32 %v375, %v372
    %v378 = vmul.f32 %v375, %v373
    %v379 = vmul.f32 %v375, %v374
    %v380 = vsel %vm362, %v376, 0.0
    %v381 = vsel %vm363, %v377, 0.0
    %v382 = vsel %vm364, %v378, 0.0
    %v383 = vsel %vm365, %v379, 0.0
    %385 = vset.pattern.permute.xlu0 0
    %386 = vperm.xlu0 %385, %v336
    %v387 = vpop.permute.xlu0 %386
    %390 = vset.pattern.permute.xlu0 0
    %391 = vperm.xlu0 %390, %v341
    %v392 = vpop.permute.xlu0 %391
    %395 = vset.pattern.permute.xlu0 0
    %396 = vperm.xlu0 %395, %v346
    %v397 = vpop.permute.xlu0 %396
    %400 = vset.pattern.permute.xlu0 0
    %401 = vperm.xlu0 %400, %v351
    %v402 = vpop.permute.xlu0 %401
    %v404 = vmul.f32 %v387, %v40
    %v405 = vmul.f32 %v387, %v41
    %v406 = vmul.f32 %v392, %v42
    %v407 = vmul.f32 %v392, %v43
    %v408 = vmul.f32 %v397, %v44
    %v409 = vmul.f32 %v397, %v45
    %v410 = vmul.f32 %v402, %v46
    %v411 = vmul.f32 %v402, %v47
    %vm412 = vcmask 130048
    %v414 = vsel %vm412, %v380, 0
    %v417 = vsel %vm412, %v381, 0
    %419 = vmatprep.subr.mxu0 0.0
    %420 = vmatpush1.msra.mxu0 0.0
    %421 = vmatprep.subr.mxu0 0.0
    %422 = vmatpush1.msra.mxu0 0.0
    %423 = vmatprep.subr.mxu0 0.0
    %424 = vmatpush1.msra.mxu0 0.0
    %425 = vmatprep.subr.mxu0 0.0
    %426 = vmatpush1.msra.mxu0 0.0
    %427 = vmatprep.subr.mxu0 0.0
    %428 = vmatpush1.msra.mxu0 0.0
    %429 = vmatprep.subr.mxu0 0.0
    %430 = vmatpush1.msra.mxu0 0.0
    %431 = vmatprep.subr.mxu0 0.0
    %432 = vmatpush1.msra.mxu0 0.0
    %433 = vmatprep.subr.mxu0 0.0
    %434 = vmatpush1.msra.mxu0 0.0
    %435 = vmatprep.subr.mxu0 0.0
    %436 = vmatpush1.msra.mxu0 0.0
    %437 = vmatprep.subr.mxu0 0.0
    %438 = vmatpush1.msra.mxu0 0.0
    %439 = vmatprep.subr.mxu0 0.0
    %440 = vmatpush1.msra.mxu0 0.0
    %441 = vmatprep.subr.mxu0 0.0
    %442 = vmatpush1.msra.mxu0 0.0
    %443 = vmatprep.subr.mxu0 0.0
    %444 = vmatpush1.msra.mxu0 0.0
    %445 = vmatprep.subr.mxu0 0.0
    %446 = vmatpush1.msra.mxu0 0.0
    %447 = vmatprep.subr.mxu0 %v232
    %448 = vmatpush1.msra.mxu0 %v231
    %449 = vmatprep.subr.mxu0 %v230
    %450 = vmatpush1.msra.mxu0 %v229
    %451 = vmatprep.subr.mxu0 0.0
    %452 = vmatpush2.msra.mxu0 0.0
    %453 = vmatprep.subr.mxu0 0.0
    %454 = vmatpush2.msra.mxu0 0.0
    %455 = vmatprep.subr.mxu0 0.0
    %456 = vmatpush2.msra.mxu0 0.0
    %457 = vmatprep.subr.mxu0 0.0
    %458 = vmatpush2.msra.mxu0 0.0
    %459 = vmatprep.subr.mxu0 0.0
    %460 = vmatpush2.msra.mxu0 0.0
    %461 = vmatprep.subr.mxu0 0.0
    %462 = vmatpush2.msra.mxu0 0.0
    %463 = vmatprep.subr.mxu0 0.0
    %464 = vmatpush2.msra.mxu0 0.0
    %465 = vmatprep.subr.mxu0 0.0
    %466 = vmatpush2.msra.mxu0 0.0
    %467 = vmatprep.subr.mxu0 0.0
    %468 = vmatpush2.msra.mxu0 0.0
    %469 = vmatprep.subr.mxu0 0.0
    %470 = vmatpush2.msra.mxu0 0.0
    %471 = vmatprep.subr.mxu0 0.0
    %472 = vmatpush2.msra.mxu0 0.0
    %473 = vmatprep.subr.mxu0 0.0
    %474 = vmatpush2.msra.mxu0 0.0
    %475 = vmatprep.subr.mxu0 0.0
    %476 = vmatpush2.msra.mxu0 0.0
    %477 = vmatprep.subr.mxu0 0.0
    %478 = vmatpush2.msra.mxu0 0.0
    %479 = vmatprep.subr.mxu0 0.0
    %480 = vmatpush2.msra.mxu0 0.0
    %481 = vmatprep.subr.mxu0 0.0
    %482 = vmatpush2.msra.mxu0 0.0
    %483 = vmatprep.mubr.f32.mxu0 0.0
    %484 = vmatmul.mubr.f32.gmra.mxu0 %v414
    %v485 = vpop.f32.mrf.mxu0
    %v486 = vadd.f32 %v404, %v485
    %v487 = vpop.f32.mrf.mxu0
    %v488 = vadd.f32 %v405, %v487
    %489 = vmatprep.mubr.f32.mxu0 0.0
    %490 = vmatmul.mubr.f32.gmra.mxu0 %v417
    %v491 = vpop.f32.mrf.mxu0
    %v492 = vadd.f32 %v406, %v491
    %v493 = vpop.f32.mrf.mxu0
    %v494 = vadd.f32 %v407, %v493
    %495 = vdwg.mxu0
    %v497 = vsel %vm412, %v382, 0
    %v500 = vsel %vm412, %v383, 0
    %502 = vmatprep.subr.mxu0 0.0
    %503 = vmatpush1.msra.mxu0 0.0
    %504 = vmatprep.subr.mxu0 0.0
    %505 = vmatpush1.msra.mxu0 0.0
    %506 = vmatprep.subr.mxu0 0.0
    %507 = vmatpush1.msra.mxu0 0.0
    %508 = vmatprep.subr.mxu0 0.0
    %509 = vmatpush1.msra.mxu0 0.0
    %510 = vmatprep.subr.mxu0 0.0
    %511 = vmatpush1.msra.mxu0 0.0
    %512 = vmatprep.subr.mxu0 0.0
    %513 = vmatpush1.msra.mxu0 0.0
    %514 = vmatprep.subr.mxu0 0.0
    %515 = vmatpush1.msra.mxu0 0.0
    %516 = vmatprep.subr.mxu0 0.0
    %517 = vmatpush1.msra.mxu0 0.0
    %518 = vmatprep.subr.mxu0 0.0
    %519 = vmatpush1.msra.mxu0 0.0
    %520 = vmatprep.subr.mxu0 0.0
    %521 = vmatpush1.msra.mxu0 0.0
    %522 = vmatprep.subr.mxu0 0.0
    %523 = vmatpush1.msra.mxu0 0.0
    %524 = vmatprep.subr.mxu0 0.0
    %525 = vmatpush1.msra.mxu0 0.0
    %526 = vmatprep.subr.mxu0 0.0
    %527 = vmatpush1.msra.mxu0 0.0
    %528 = vmatprep.subr.mxu0 0.0
    %529 = vmatpush1.msra.mxu0 0.0
    %530 = vmatprep.subr.mxu0 %v236
    %531 = vmatpush1.msra.mxu0 %v235
    %532 = vmatprep.subr.mxu0 %v234
    %533 = vmatpush1.msra.mxu0 %v233
    %534 = vmatprep.subr.mxu0 0.0
    %535 = vmatpush2.msra.mxu0 0.0
    %536 = vmatprep.subr.mxu0 0.0
    %537 = vmatpush2.msra.mxu0 0.0
    %538 = vmatprep.subr.mxu0 0.0
    %539 = vmatpush2.msra.mxu0 0.0
    %540 = vmatprep.subr.mxu0 0.0
    %541 = vmatpush2.msra.mxu0 0.0
    %542 = vmatprep.subr.mxu0 0.0
    %543 = vmatpush2.msra.mxu0 0.0
    %544 = vmatprep.subr.mxu0 0.0
    %545 = vmatpush2.msra.mxu0 0.0
    %546 = vmatprep.subr.mxu0 0.0
    %547 = vmatpush2.msra.mxu0 0.0
    %548 = vmatprep.subr.mxu0 0.0
    %549 = vmatpush2.msra.mxu0 0.0
    %550 = vmatprep.subr.mxu0 0.0
    %551 = vmatpush2.msra.mxu0 0.0
    %552 = vmatprep.subr.mxu0 0.0
    %553 = vmatpush2.msra.mxu0 0.0
    %554 = vmatprep.subr.mxu0 0.0
    %555 = vmatpush2.msra.mxu0 0.0
    %556 = vmatprep.subr.mxu0 0.0
    %557 = vmatpush2.msra.mxu0 0.0
    %558 = vmatprep.subr.mxu0 0.0
    %559 = vmatpush2.msra.mxu0 0.0
    %560 = vmatprep.subr.mxu0 0.0
    %561 = vmatpush2.msra.mxu0 0.0
    %562 = vmatprep.subr.mxu0 0.0
    %563 = vmatpush2.msra.mxu0 0.0
    %564 = vmatprep.subr.mxu0 0.0
    %565 = vmatpush2.msra.mxu0 0.0
    %566 = vmatprep.mubr.f32.mxu0 0.0
    %567 = vmatmul.mubr.f32.gmra.mxu0 %v497
    %v568 = vpop.f32.mrf.mxu0
    %v569 = vadd.f32 %v408, %v568
    %v570 = vpop.f32.mrf.mxu0
    %v571 = vadd.f32 %v409, %v570
    %572 = vmatprep.mubr.f32.mxu0 0.0
    %573 = vmatmul.mubr.f32.gmra.mxu0 %v500
    %v574 = vpop.f32.mrf.mxu0
    %v575 = vadd.f32 %v410, %v574
    %v576 = vpop.f32.mrf.mxu0
    %v577 = vadd.f32 %v411, %v576
    %578 = vdwg.mxu0
    %v579 = vld [vmem:[%s7] sm:$0xff]
    %v580 = vld [vmem:[%s7 + $0x8] sm:$0xff]
    %v581 = vld [vmem:[%s7 + $0x10] sm:$0xff]
    %v582 = vld [vmem:[%s7 + $0x18] sm:$0xff]
    %v583 = vld [vmem:[%s7 + $0x20] sm:$0xff]
    %v584 = vld [vmem:[%s7 + $0x28] sm:$0xff]
    %v585 = vld [vmem:[%s7 + $0x30] sm:$0xff]
    %v586 = vld [vmem:[%s7 + $0x38] sm:$0xff]
    %v587 = vld [vmem:[%s7 + $0x40] sm:$0xff]
    %v588 = vld [vmem:[%s7 + $0x48] sm:$0xff]
    %v589 = vld [vmem:[%s7 + $0x50] sm:$0xff]
    %v590 = vld [vmem:[%s7 + $0x58] sm:$0xff]
    %v591 = vld [vmem:[%s7 + $0x60] sm:$0xff]
    %v592 = vld [vmem:[%s7 + $0x68] sm:$0xff]
    %v593 = vld [vmem:[%s7 + $0x70] sm:$0xff]
    %v594 = vld [vmem:[%s7 + $0x78] sm:$0xff]
    %v595 = vld [vmem:[%s7 + $0x80] sm:$0xff]
    %v596 = vld [vmem:[%s7 + $0x88] sm:$0xff]
    %v597 = vld [vmem:[%s7 + $0x90] sm:$0xff]
    %v598 = vld [vmem:[%s7 + $0x98] sm:$0xff]
    %v599 = vld [vmem:[%s7 + $0xa0] sm:$0xff]
    %v600 = vld [vmem:[%s7 + $0xa8] sm:$0xff]
    %v601 = vld [vmem:[%s7 + $0xb0] sm:$0xff]
    %v602 = vld [vmem:[%s7 + $0xb8] sm:$0xff]
    %v603 = vld [vmem:[%s7 + $0xc0] sm:$0xff]
    %v604 = vld [vmem:[%s7 + $0xc8] sm:$0xff]
    %v605 = vld [vmem:[%s7 + $0xd0] sm:$0xff]
    %v606 = vld [vmem:[%s7 + $0xd8] sm:$0xff]
    %v607 = vld [vmem:[%s7 + $0xe0] sm:$0xff]
    %v608 = vld [vmem:[%s7 + $0xe8] sm:$0xff]
    %v609 = vld [vmem:[%s7 + $0xf0] sm:$0xff]
    %v610 = vld [vmem:[%s7 + $0xf8] sm:$0xff]
    %v611 = vld [vmem:[%s7 + $0x100] sm:$0xff]
    %v612 = vld [vmem:[%s7 + $0x108] sm:$0xff]
    %v613 = vld [vmem:[%s7 + $0x110] sm:$0xff]
    %v614 = vld [vmem:[%s7 + $0x118] sm:$0xff]
    %v615 = vld [vmem:[%s7 + $0x120] sm:$0xff]
    %v616 = vld [vmem:[%s7 + $0x128] sm:$0xff]
    %v617 = vld [vmem:[%s7 + $0x130] sm:$0xff]
    %v618 = vld [vmem:[%s7 + $0x138] sm:$0xff]
    %v619 = vld [vmem:[%s7 + $0x140] sm:$0xff]
    %v620 = vld [vmem:[%s7 + $0x148] sm:$0xff]
    %v621 = vld [vmem:[%s7 + $0x150] sm:$0xff]
    %v622 = vld [vmem:[%s7 + $0x158] sm:$0xff]
    %v623 = vld [vmem:[%s7 + $0x160] sm:$0xff]
    %v624 = vld [vmem:[%s7 + $0x168] sm:$0xff]
    %v625 = vld [vmem:[%s7 + $0x170] sm:$0xff]
    %v626 = vld [vmem:[%s7 + $0x178] sm:$0xff]
    %v627 = vld [vmem:[%s7 + $0x180] sm:$0xff]
    %v628 = vld [vmem:[%s7 + $0x188] sm:$0xff]
    %v629 = vld [vmem:[%s7 + $0x190] sm:$0xff]
    %v630 = vld [vmem:[%s7 + $0x198] sm:$0xff]
    %v631 = vld [vmem:[%s7 + $0x1a0] sm:$0xff]
    %v632 = vld [vmem:[%s7 + $0x1a8] sm:$0xff]
    %v633 = vld [vmem:[%s7 + $0x1b0] sm:$0xff]
    %v634 = vld [vmem:[%s7 + $0x1b8] sm:$0xff]
    %v635 = vld [vmem:[%s7 + $0x1c0] sm:$0xff]
    %v636 = vld [vmem:[%s7 + $0x1c8] sm:$0xff]
    %v637 = vld [vmem:[%s7 + $0x1d0] sm:$0xff]
    %v638 = vld [vmem:[%s7 + $0x1d8] sm:$0xff]
    %v639 = vld [vmem:[%s7 + $0x1e0] sm:$0xff]
    %v640 = vld [vmem:[%s7 + $0x1e8] sm:$0xff]
    %v641 = vld [vmem:[%s7 + $0x1f0] sm:$0xff]
    %v642 = vld [vmem:[%s7 + $0x1f8] sm:$0xff]
    %v643 = vld [vmem:[%s8] sm:$0x3]
    %v645 = vlaneseq
    %v646 = vshrl.u32 %v645, 7
    %v647 = vsub.s32 0, %v646
    %v648 = vrot.slane %v643, %v647
    %v649 = vlaneseq
    %v650 = vshrl.u32 %v649, 7
    %v651 = vsub.s32 1, %v650
    %v652 = vrot.slane %v643, %v651
    %655 = vmatprep.subr.mxu0 %v610
    %656 = vmatpush1.msra.mxu0 %v609
    %657 = vmatprep.subr.mxu0 %v608
    %658 = vmatpush1.msra.mxu0 %v607
    %659 = vmatprep.subr.mxu0 %v606
    %660 = vmatpush1.msra.mxu0 %v605
    %661 = vmatprep.subr.mxu0 %v604
    %662 = vmatpush1.msra.mxu0 %v603
    %663 = vmatprep.subr.mxu0 %v602
    %664 = vmatpush1.msra.mxu0 %v601
    %665 = vmatprep.subr.mxu0 %v600
    %666 = vmatpush1.msra.mxu0 %v599
    %667 = vmatprep.subr.mxu0 %v598
    %668 = vmatpush1.msra.mxu0 %v597
    %669 = vmatprep.subr.mxu0 %v596
    %670 = vmatpush1.msra.mxu0 %v595
    %671 = vmatprep.subr.mxu0 %v594
    %672 = vmatpush1.msra.mxu0 %v593
    %673 = vmatprep.subr.mxu0 %v592
    %674 = vmatpush1.msra.mxu0 %v591
    %675 = vmatprep.subr.mxu0 %v590
    %676 = vmatpush1.msra.mxu0 %v589
    %677 = vmatprep.subr.mxu0 %v588
    %678 = vmatpush1.msra.mxu0 %v587
    %679 = vmatprep.subr.mxu0 %v586
    %680 = vmatpush1.msra.mxu0 %v585
    %681 = vmatprep.subr.mxu0 %v584
    %682 = vmatpush1.msra.mxu0 %v583
    %683 = vmatprep.subr.mxu0 %v582
    %684 = vmatpush1.msra.mxu0 %v581
    %685 = vmatprep.subr.mxu0 %v580
    %686 = vmatpush1.msra.mxu0 %v579
    %687 = vmatprep.subr.mxu0 %v642
    %688 = vmatpush2.msra.mxu0 %v641
    %689 = vmatprep.subr.mxu0 %v640
    %690 = vmatpush2.msra.mxu0 %v639
    %691 = vmatprep.subr.mxu0 %v638
    %692 = vmatpush2.msra.mxu0 %v637
    %693 = vmatprep.subr.mxu0 %v636
    %694 = vmatpush2.msra.mxu0 %v635
    %695 = vmatprep.subr.mxu0 %v634
    %696 = vmatpush2.msra.mxu0 %v633
    %697 = vmatprep.subr.mxu0 %v632
    %698 = vmatpush2.msra.mxu0 %v631
    %699 = vmatprep.subr.mxu0 %v630
    %700 = vmatpush2.msra.mxu0 %v629
    %701 = vmatprep.subr.mxu0 %v628
    %702 = vmatpush2.msra.mxu0 %v627
    %703 = vmatprep.subr.mxu0 %v626
    %704 = vmatpush2.msra.mxu0 %v625
    %705 = vmatprep.subr.mxu0 %v624
    %706 = vmatpush2.msra.mxu0 %v623
    %707 = vmatprep.subr.mxu0 %v622
    %708 = vmatpush2.msra.mxu0 %v621
    %709 = vmatprep.subr.mxu0 %v620
    %710 = vmatpush2.msra.mxu0 %v619
    %711 = vmatprep.subr.mxu0 %v618
    %712 = vmatpush2.msra.mxu0 %v617
    %713 = vmatprep.subr.mxu0 %v616
    %714 = vmatpush2.msra.mxu0 %v615
    %715 = vmatprep.subr.mxu0 %v614
    %716 = vmatpush2.msra.mxu0 %v613
    %717 = vmatprep.subr.mxu0 %v612
    %718 = vmatpush2.msra.mxu0 %v611
    %719 = vmatprep.mubr.f32.mxu0 %v488
    %720 = vmatmul.mubr.f32.gmra.mxu0 %v486
    %v721 = vpop.f32.mrf.mxu0
    %v722 = vadd.f32 %v648, %v721
    %v723 = vpop.f32.mrf.mxu0
    %v724 = vadd.f32 %v652, %v723
    %725 = vmatprep.mubr.f32.mxu0 %v494
    %726 = vmatmul.mubr.f32.gmra.mxu0 %v492
    %v727 = vpop.f32.mrf.mxu0
    %v728 = vadd.f32 %v648, %v727
    %v729 = vpop.f32.mrf.mxu0
    %v730 = vadd.f32 %v652, %v729
    %731 = vmatprep.mubr.f32.mxu0 %v571
    %732 = vmatmul.mubr.f32.gmra.mxu0 %v569
    %v733 = vpop.f32.mrf.mxu0
    %v734 = vadd.f32 %v648, %v733
    %v735 = vpop.f32.mrf.mxu0
    %v736 = vadd.f32 %v652, %v735
    %737 = vmatprep.mubr.f32.mxu0 %v577
    %738 = vmatmul.mubr.f32.gmra.mxu0 %v575
    %v739 = vpop.f32.mrf.mxu0
    %v740 = vadd.f32 %v648, %v739
    %v741 = vpop.f32.mrf.mxu0
    %v742 = vadd.f32 %v652, %v741
    %743 = vdwg.mxu0
    %vm744 = vcmp.gt.f32.partialorder %v722, 0.0
    %vm745 = vcmp.gt.f32.partialorder %v724, 0.0
    %vm746 = vcmp.gt.f32.partialorder %v728, 0.0
    %vm747 = vcmp.gt.f32.partialorder %v730, 0.0
    %vm748 = vcmp.gt.f32.partialorder %v734, 0.0
    %vm749 = vcmp.gt.f32.partialorder %v736, 0.0
    %vm750 = vcmp.gt.f32.partialorder %v740, 0.0
    %vm751 = vcmp.gt.f32.partialorder %v742, 0.0
    %v752 = vmul.f32 %v722, 0.2
    %v753 = vmul.f32 %v724, 0.2
    %v754 = vmul.f32 %v728, 0.2
    %v755 = vmul.f32 %v730, 0.2
    %v756 = vmul.f32 %v734, 0.2
    %v757 = vmul.f32 %v736, 0.2
    %v758 = vmul.f32 %v740, 0.2
    %v759 = vmul.f32 %v742, 0.2
    %v760 = vsel %vm744, %v722, %v752
    %v761 = vsel %vm745, %v724, %v753
    %v762 = vsel %vm746, %v728, %v754
    %v763 = vsel %vm747, %v730, %v755
    %v764 = vsel %vm748, %v734, %v756
    %v765 = vsel %vm749, %v736, %v757
    %v766 = vsel %vm750, %v740, %v758
    %v767 = vsel %vm751, %v742, %v759
    %v768 = vadd.f32 %v40, %v42
    %v769 = vrot.slane %v768, 4
    %v770 = vadd.f32 %v768, %v769
    %v771 = vrot.slane %v770, 2
    %v772 = vadd.f32 %v770, %v771
    %v773 = vrot.slane %v772, 1
    %v774 = vadd.f32 %v772, %v773
    %v775 = vadd.f32 %v41, %v43
    %v776 = vrot.slane %v775, 4
    %v777 = vadd.f32 %v775, %v776
    %v778 = vrot.slane %v777, 2
    %v779 = vadd.f32 %v777, %v778
    %v780 = vrot.slane %v779, 1
    %v781 = vadd.f32 %v779, %v780
    %v782 = vadd.f32 %v44, %v46
    %v783 = vrot.slane %v782, 4
    %v784 = vadd.f32 %v782, %v783
    %v785 = vrot.slane %v784, 2
    %v786 = vadd.f32 %v784, %v785
    %v787 = vrot.slane %v786, 1
    %v788 = vadd.f32 %v786, %v787
    %v789 = vadd.f32 %v45, %v47
    %v790 = vrot.slane %v789, 4
    %v791 = vadd.f32 %v789, %v790
    %v792 = vrot.slane %v791, 2
    %v793 = vadd.f32 %v791, %v792
    %v794 = vrot.slane %v793, 1
    %v795 = vadd.f32 %v793, %v794
    %v796 = vmax.f32 %v40, %v42
    %v797 = vrot.slane %v796, 4
    %v798 = vmax.f32 %v796, %v797
    %v799 = vrot.slane %v798, 2
    %v800 = vmax.f32 %v798, %v799
    %v801 = vrot.slane %v800, 1
    %v802 = vmax.f32 %v800, %v801
    %v803 = vmax.f32 %v41, %v43
    %v804 = vrot.slane %v803, 4
    %v805 = vmax.f32 %v803, %v804
    %v806 = vrot.slane %v805, 2
    %v807 = vmax.f32 %v805, %v806
    %v808 = vrot.slane %v807, 1
    %v809 = vmax.f32 %v807, %v808
    %v810 = vmax.f32 %v44, %v46
    %v811 = vrot.slane %v810, 4
    %v812 = vmax.f32 %v810, %v811
    %v813 = vrot.slane %v812, 2
    %v814 = vmax.f32 %v812, %v813
    %v815 = vrot.slane %v814, 1
    %v816 = vmax.f32 %v814, %v815
    %v817 = vmax.f32 %v45, %v47
    %v818 = vrot.slane %v817, 4
    %v819 = vmax.f32 %v817, %v818
    %v820 = vrot.slane %v819, 2
    %v821 = vmax.f32 %v819, %v820
    %v822 = vrot.slane %v821, 1
    %v823 = vmax.f32 %v821, %v822
    %v824 = vadd.f32 %v760, %v762
    %v825 = vrot.slane %v824, 4
    %v826 = vadd.f32 %v824, %v825
    %v827 = vrot.slane %v826, 2
    %v828 = vadd.f32 %v826, %v827
    %v829 = vrot.slane %v828, 1
    %v830 = vadd.f32 %v828, %v829
    %v831 = vadd.f32 %v761, %v763
    %v832 = vrot.slane %v831, 4
    %v833 = vadd.f32 %v831, %v832
    %v834 = vrot.slane %v833, 2
    %v835 = vadd.f32 %v833, %v834
    %v836 = vrot.slane %v835, 1
    %v837 = vadd.f32 %v835, %v836
    %v838 = vadd.f32 %v764, %v766
    %v839 = vrot.slane %v838, 4
    %v840 = vadd.f32 %v838, %v839
    %v841 = vrot.slane %v840, 2
    %v842 = vadd.f32 %v840, %v841
    %v843 = vrot.slane %v842, 1
    %v844 = vadd.f32 %v842, %v843
    %v845 = vadd.f32 %v765, %v767
    %v846 = vrot.slane %v845, 4
    %v847 = vadd.f32 %v845, %v846
    %v848 = vrot.slane %v847, 2
    %v849 = vadd.f32 %v847, %v848
    %v850 = vrot.slane %v849, 1
    %v851 = vadd.f32 %v849, %v850
    %v852 = vmax.f32 %v760, %v762
    %v853 = vrot.slane %v852, 4
    %v854 = vmax.f32 %v852, %v853
    %v855 = vrot.slane %v854, 2
    %v856 = vmax.f32 %v854, %v855
    %v857 = vrot.slane %v856, 1
    %v858 = vmax.f32 %v856, %v857
    %v859 = vmax.f32 %v761, %v763
    %v860 = vrot.slane %v859, 4
    %v861 = vmax.f32 %v859, %v860
    %v862 = vrot.slane %v861, 2
    %v863 = vmax.f32 %v861, %v862
    %v864 = vrot.slane %v863, 1
    %v865 = vmax.f32 %v863, %v864
    %v866 = vmax.f32 %v764, %v766
    %v867 = vrot.slane %v866, 4
    %v868 = vmax.f32 %v866, %v867
    %v869 = vrot.slane %v868, 2
    %v870 = vmax.f32 %v868, %v869
    %v871 = vrot.slane %v870, 1
    %v872 = vmax.f32 %v870, %v871
    %v873 = vmax.f32 %v765, %v767
    %v874 = vrot.slane %v873, 4
    %v875 = vmax.f32 %v873, %v874
    %v876 = vrot.slane %v875, 2
    %v877 = vmax.f32 %v875, %v876
    %v878 = vrot.slane %v877, 1
    %v879 = vmax.f32 %v877, %v878
    %v880 = vmul.f32 %v830, 0.0625
    %v881 = vmul.f32 %v837, 0.0625
    %v882 = vmul.f32 %v844, 0.0625
    %v883 = vmul.f32 %v851, 0.0625
    %v884 = vmul.f32 %v774, 0.0625
    %v885 = vmul.f32 %v781, 0.0625
    %v886 = vmul.f32 %v788, 0.0625
    %v887 = vmul.f32 %v795, 0.0625
    %vm892 = vcmask 1041409
    %v893 = vsel %vm892, %v788, %v774
    %v894 = vsel %vm892, %v795, %v781
    %v901 = vsel %vm892, %v816, %v802
    %v902 = vsel %vm892, %v823, %v809
    %v909 = vsel %vm892, %v844, %v830
    %v910 = vsel %vm892, %v851, %v837
    %v917 = vsel %vm892, %v872, %v858
    %v918 = vsel %vm892, %v879, %v865
    %v925 = vsel %vm892, %v882, %v880
    %v926 = vsel %vm892, %v883, %v881
    %v933 = vsel %vm892, %v886, %v884
    %v934 = vsel %vm892, %v887, %v885
    %v937 = vld [vmem:[%s9] sm:$0xff]
    %v938 = vld [vmem:[%s9 + $0x8] sm:$0xff]
    %v939 = vld [vmem:[%s9 + $0x10] sm:$0xff]
    %v940 = vld [vmem:[%s9 + $0x18] sm:$0xff]
    %v941 = vld [vmem:[%s9 + $0x20] sm:$0xff]
    %v942 = vld [vmem:[%s9 + $0x28] sm:$0xff]
    %v943 = vld [vmem:[%s9 + $0x30] sm:$0xff]
    %v944 = vld [vmem:[%s9 + $0x38] sm:$0xff]
    %v945 = vld [vmem:[%s9 + $0x40] sm:$0xff]
    %v946 = vld [vmem:[%s9 + $0x48] sm:$0xff]
    %v947 = vld [vmem:[%s9 + $0x50] sm:$0xff]
    %v948 = vld [vmem:[%s9 + $0x58] sm:$0xff]
    %v949 = vld [vmem:[%s9 + $0x60] sm:$0xff]
    %v950 = vld [vmem:[%s9 + $0x68] sm:$0xff]
    %v951 = vld [vmem:[%s9 + $0x70] sm:$0xff]
    %v952 = vld [vmem:[%s9 + $0x78] sm:$0xff]
    %v953 = vld [vmem:[%s9 + $0x80] sm:$0xff]
    %v954 = vld [vmem:[%s9 + $0x88] sm:$0xff]
    %v955 = vld [vmem:[%s9 + $0x90] sm:$0xff]
    %v956 = vld [vmem:[%s9 + $0x98] sm:$0xff]
    %v957 = vld [vmem:[%s9 + $0xa0] sm:$0xff]
    %v958 = vld [vmem:[%s9 + $0xa8] sm:$0xff]
    %v959 = vld [vmem:[%s9 + $0xb0] sm:$0xff]
    %v960 = vld [vmem:[%s9 + $0xb8] sm:$0xff]
    %v961 = vld [vmem:[%s9 + $0xc0] sm:$0xff]
    %v962 = vld [vmem:[%s9 + $0xc8] sm:$0xff]
    %v963 = vld [vmem:[%s9 + $0xd0] sm:$0xff]
    %v964 = vld [vmem:[%s9 + $0xd8] sm:$0xff]
    %v965 = vld [vmem:[%s9 + $0xe0] sm:$0xff]
    %v966 = vld [vmem:[%s9 + $0xe8] sm:$0xff]
    %v967 = vld [vmem:[%s9 + $0xf0] sm:$0xff]
    %v968 = vld [vmem:[%s9 + $0xf8] sm:$0xff]
    %v969 = vld [vmem:[%s9 + $0x100] sm:$0xff]
    %v970 = vld [vmem:[%s9 + $0x108] sm:$0xff]
    %v971 = vld [vmem:[%s9 + $0x110] sm:$0xff]
    %v972 = vld [vmem:[%s9 + $0x118] sm:$0xff]
    %v973 = vld [vmem:[%s9 + $0x120] sm:$0xff]
    %v974 = vld [vmem:[%s9 + $0x128] sm:$0xff]
    %v975 = vld [vmem:[%s9 + $0x130] sm:$0xff]
    %v976 = vld [vmem:[%s9 + $0x138] sm:$0xff]
    %v977 = vld [vmem:[%s9 + $0x140] sm:$0xff]
    %v978 = vld [vmem:[%s9 + $0x148] sm:$0xff]
    %v979 = vld [vmem:[%s9 + $0x150] sm:$0xff]
    %v980 = vld [vmem:[%s9 + $0x158] sm:$0xff]
    %v981 = vld [vmem:[%s9 + $0x160] sm:$0xff]
    %v982 = vld [vmem:[%s9 + $0x168] sm:$0xff]
    %v983 = vld [vmem:[%s9 + $0x170] sm:$0xff]
    %v984 = vld [vmem:[%s9 + $0x178] sm:$0xff]
    %v985 = vld [vmem:[%s9 + $0x180] sm:$0xff]
    %v986 = vld [vmem:[%s9 + $0x188] sm:$0xff]
    %v987 = vld [vmem:[%s9 + $0x190] sm:$0xff]
    %v988 = vld [vmem:[%s9 + $0x198] sm:$0xff]
    %v989 = vld [vmem:[%s9 + $0x1a0] sm:$0xff]
    %v990 = vld [vmem:[%s9 + $0x1a8] sm:$0xff]
    %v991 = vld [vmem:[%s9 + $0x1b0] sm:$0xff]
    %v992 = vld [vmem:[%s9 + $0x1b8] sm:$0xff]
    %v993 = vld [vmem:[%s9 + $0x1c0] sm:$0xff]
    %v994 = vld [vmem:[%s9 + $0x1c8] sm:$0xff]
    %v995 = vld [vmem:[%s9 + $0x1d0] sm:$0xff]
    %v996 = vld [vmem:[%s9 + $0x1d8] sm:$0xff]
    %v997 = vld [vmem:[%s9 + $0x1e0] sm:$0xff]
    %v998 = vld [vmem:[%s9 + $0x1e8] sm:$0xff]
    %v999 = vld [vmem:[%s9 + $0x1f0] sm:$0xff]
    %v1000 = vld [vmem:[%s9 + $0x1f8] sm:$0xff]
    %v1001 = vld [vmem:[%s9 + $0x200] sm:$0xff]
    %v1002 = vld [vmem:[%s9 + $0x208] sm:$0xff]
    %v1003 = vld [vmem:[%s9 + $0x210] sm:$0xff]
    %v1004 = vld [vmem:[%s9 + $0x218] sm:$0xff]
    %v1005 = vld [vmem:[%s9 + $0x220] sm:$0xff]
    %v1006 = vld [vmem:[%s9 + $0x228] sm:$0xff]
    %v1007 = vld [vmem:[%s9 + $0x230] sm:$0xff]
    %v1008 = vld [vmem:[%s9 + $0x238] sm:$0xff]
    %v1009 = vld [vmem:[%s9 + $0x240] sm:$0xff]
    %v1010 = vld [vmem:[%s9 + $0x248] sm:$0xff]
    %v1011 = vld [vmem:[%s9 + $0x250] sm:$0xff]
    %v1012 = vld [vmem:[%s9 + $0x258] sm:$0xff]
    %v1013 = vld [vmem:[%s9 + $0x260] sm:$0xff]
    %v1014 = vld [vmem:[%s9 + $0x268] sm:$0xff]
    %v1015 = vld [vmem:[%s9 + $0x270] sm:$0xff]
    %v1016 = vld [vmem:[%s9 + $0x278] sm:$0xff]
    %v1017 = vld [vmem:[%s9 + $0x280] sm:$0xff]
    %v1018 = vld [vmem:[%s9 + $0x288] sm:$0xff]
    %v1019 = vld [vmem:[%s9 + $0x290] sm:$0xff]
    %v1020 = vld [vmem:[%s9 + $0x298] sm:$0xff]
    %v1021 = vld [vmem:[%s9 + $0x2a0] sm:$0xff]
    %v1022 = vld [vmem:[%s9 + $0x2a8] sm:$0xff]
    %v1023 = vld [vmem:[%s9 + $0x2b0] sm:$0xff]
    %v1024 = vld [vmem:[%s9 + $0x2b8] sm:$0xff]
    %v1025 = vld [vmem:[%s9 + $0x2c0] sm:$0xff]
    %v1026 = vld [vmem:[%s9 + $0x2c8] sm:$0xff]
    %v1027 = vld [vmem:[%s9 + $0x2d0] sm:$0xff]
    %v1028 = vld [vmem:[%s9 + $0x2d8] sm:$0xff]
    %v1029 = vld [vmem:[%s9 + $0x2e0] sm:$0xff]
    %v1030 = vld [vmem:[%s9 + $0x2e8] sm:$0xff]
    %v1031 = vld [vmem:[%s9 + $0x2f0] sm:$0xff]
    %v1032 = vld [vmem:[%s9 + $0x2f8] sm:$0xff]
    %v1033 = vld [vmem:[%s9 + $0x300] sm:$0xff]
    %v1034 = vld [vmem:[%s9 + $0x308] sm:$0xff]
    %v1035 = vld [vmem:[%s9 + $0x310] sm:$0xff]
    %v1036 = vld [vmem:[%s9 + $0x318] sm:$0xff]
    %v1037 = vld [vmem:[%s9 + $0x320] sm:$0xff]
    %v1038 = vld [vmem:[%s9 + $0x328] sm:$0xff]
    %v1039 = vld [vmem:[%s9 + $0x330] sm:$0xff]
    %v1040 = vld [vmem:[%s9 + $0x338] sm:$0xff]
    %v1041 = vld [vmem:[%s9 + $0x340] sm:$0xff]
    %v1042 = vld [vmem:[%s9 + $0x348] sm:$0xff]
    %v1043 = vld [vmem:[%s9 + $0x350] sm:$0xff]
    %v1044 = vld [vmem:[%s9 + $0x358] sm:$0xff]
    %v1045 = vld [vmem:[%s9 + $0x360] sm:$0xff]
    %v1046 = vld [vmem:[%s9 + $0x368] sm:$0xff]
    %v1047 = vld [vmem:[%s9 + $0x370] sm:$0xff]
    %v1048 = vld [vmem:[%s9 + $0x378] sm:$0xff]
    %v1049 = vld [vmem:[%s9 + $0x380] sm:$0xff]
    %v1050 = vld [vmem:[%s9 + $0x388] sm:$0xff]
    %v1051 = vld [vmem:[%s9 + $0x390] sm:$0xff]
    %v1052 = vld [vmem:[%s9 + $0x398] sm:$0xff]
    %v1053 = vld [vmem:[%s9 + $0x3a0] sm:$0xff]
    %v1054 = vld [vmem:[%s9 + $0x3a8] sm:$0xff]
    %v1055 = vld [vmem:[%s9 + $0x3b0] sm:$0xff]
    %v1056 = vld [vmem:[%s9 + $0x3b8] sm:$0xff]
    %v1057 = vld [vmem:[%s9 + $0x3c0] sm:$0xff]
    %v1058 = vld [vmem:[%s9 + $0x3c8] sm:$0xff]
    %v1059 = vld [vmem:[%s9 + $0x3d0] sm:$0xff]
    %v1060 = vld [vmem:[%s9 + $0x3d8] sm:$0xff]
    %v1061 = vld [vmem:[%s9 + $0x3e0] sm:$0xff]
    %v1062 = vld [vmem:[%s9 + $0x3e8] sm:$0xff]
    %v1063 = vld [vmem:[%s9 + $0x3f0] sm:$0xff]
    %v1064 = vld [vmem:[%s9 + $0x3f8] sm:$0xff]
    %v1065 = vld [vmem:[%s9 + $0x400] sm:$0xff]
    %v1066 = vld [vmem:[%s9 + $0x408] sm:$0xff]
    %v1067 = vld [vmem:[%s9 + $0x410] sm:$0xff]
    %v1068 = vld [vmem:[%s9 + $0x418] sm:$0xff]
    %v1069 = vld [vmem:[%s9 + $0x420] sm:$0xff]
    %v1070 = vld [vmem:[%s9 + $0x428] sm:$0xff]
    %v1071 = vld [vmem:[%s9 + $0x430] sm:$0xff]
    %v1072 = vld [vmem:[%s9 + $0x438] sm:$0xff]
    %v1073 = vld [vmem:[%s9 + $0x440] sm:$0xff]
    %v1074 = vld [vmem:[%s9 + $0x448] sm:$0xff]
    %v1075 = vld [vmem:[%s9 + $0x450] sm:$0xff]
    %v1076 = vld [vmem:[%s9 + $0x458] sm:$0xff]
    %v1077 = vld [vmem:[%s9 + $0x460] sm:$0xff]
    %v1078 = vld [vmem:[%s9 + $0x468] sm:$0xff]
    %v1079 = vld [vmem:[%s9 + $0x470] sm:$0xff]
    %v1080 = vld [vmem:[%s9 + $0x478] sm:$0xff]
    %v1081 = vld [vmem:[%s9 + $0x480] sm:$0xff]
    %v1082 = vld [vmem:[%s9 + $0x488] sm:$0xff]
    %v1083 = vld [vmem:[%s9 + $0x490] sm:$0xff]
    %v1084 = vld [vmem:[%s9 + $0x498] sm:$0xff]
    %v1085 = vld [vmem:[%s9 + $0x4a0] sm:$0xff]
    %v1086 = vld [vmem:[%s9 + $0x4a8] sm:$0xff]
    %v1087 = vld [vmem:[%s9 + $0x4b0] sm:$0xff]
    %v1088 = vld [vmem:[%s9 + $0x4b8] sm:$0xff]
    %v1089 = vld [vmem:[%s9 + $0x4c0] sm:$0xff]
    %v1090 = vld [vmem:[%s9 + $0x4c8] sm:$0xff]
    %v1091 = vld [vmem:[%s9 + $0x4d0] sm:$0xff]
    %v1092 = vld [vmem:[%s9 + $0x4d8] sm:$0xff]
    %v1093 = vld [vmem:[%s9 + $0x4e0] sm:$0xff]
    %v1094 = vld [vmem:[%s9 + $0x4e8] sm:$0xff]
    %v1095 = vld [vmem:[%s9 + $0x4f0] sm:$0xff]
    %v1096 = vld [vmem:[%s9 + $0x4f8] sm:$0xff]
    %v1097 = vld [vmem:[%s9 + $0x500] sm:$0xff]
    %v1098 = vld [vmem:[%s9 + $0x508] sm:$0xff]
    %v1099 = vld [vmem:[%s9 + $0x510] sm:$0xff]
    %v1100 = vld [vmem:[%s9 + $0x518] sm:$0xff]
    %v1101 = vld [vmem:[%s9 + $0x520] sm:$0xff]
    %v1102 = vld [vmem:[%s9 + $0x528] sm:$0xff]
    %v1103 = vld [vmem:[%s9 + $0x530] sm:$0xff]
    %v1104 = vld [vmem:[%s9 + $0x538] sm:$0xff]
    %v1105 = vld [vmem:[%s9 + $0x540] sm:$0xff]
    %v1106 = vld [vmem:[%s9 + $0x548] sm:$0xff]
    %v1107 = vld [vmem:[%s9 + $0x550] sm:$0xff]
    %v1108 = vld [vmem:[%s9 + $0x558] sm:$0xff]
    %v1109 = vld [vmem:[%s9 + $0x560] sm:$0xff]
    %v1110 = vld [vmem:[%s9 + $0x568] sm:$0xff]
    %v1111 = vld [vmem:[%s9 + $0x570] sm:$0xff]
    %v1112 = vld [vmem:[%s9 + $0x578] sm:$0xff]
    %v1113 = vld [vmem:[%s9 + $0x580] sm:$0xff]
    %v1114 = vld [vmem:[%s9 + $0x588] sm:$0xff]
    %v1115 = vld [vmem:[%s9 + $0x590] sm:$0xff]
    %v1116 = vld [vmem:[%s9 + $0x598] sm:$0xff]
    %v1117 = vld [vmem:[%s9 + $0x5a0] sm:$0xff]
    %v1118 = vld [vmem:[%s9 + $0x5a8] sm:$0xff]
    %v1119 = vld [vmem:[%s9 + $0x5b0] sm:$0xff]
    %v1120 = vld [vmem:[%s9 + $0x5b8] sm:$0xff]
    %v1121 = vld [vmem:[%s9 + $0x5c0] sm:$0xff]
    %v1122 = vld [vmem:[%s9 + $0x5c8] sm:$0xff]
    %v1123 = vld [vmem:[%s9 + $0x5d0] sm:$0xff]
    %v1124 = vld [vmem:[%s9 + $0x5d8] sm:$0xff]
    %v1125 = vld [vmem:[%s9 + $0x5e0] sm:$0xff]
    %v1126 = vld [vmem:[%s9 + $0x5e8] sm:$0xff]
    %v1127 = vld [vmem:[%s9 + $0x5f0] sm:$0xff]
    %v1128 = vld [vmem:[%s9 + $0x5f8] sm:$0xff]
    %v1129 = vld [vmem:[%s10] sm:$0x1]
    %v1131 = vlaneseq
    %v1132 = vshrl.u32 %v1131, 7
    %v1133 = vsub.s32 0, %v1132
    %v1134 = vrot.slane %v1129, %v1133
    %1136 = vmatprep.subr.mxu0 0.0
    %1137 = vmatpush1.msra.mxu0 %v952
    %1138 = vmatprep.subr.mxu0 0.0
    %1139 = vmatpush1.msra.mxu0 %v951
    %1140 = vmatprep.subr.mxu0 0.0
    %1141 = vmatpush1.msra.mxu0 %v950
    %1142 = vmatprep.subr.mxu0 0.0
    %1143 = vmatpush1.msra.mxu0 %v949
    %1144 = vmatprep.subr.mxu0 0.0
    %1145 = vmatpush1.msra.mxu0 %v948
    %1146 = vmatprep.subr.mxu0 0.0
    %1147 = vmatpush1.msra.mxu0 %v947
    %1148 = vmatprep.subr.mxu0 0.0
    %1149 = vmatpush1.msra.mxu0 %v946
    %1150 = vmatprep.subr.mxu0 0.0
    %1151 = vmatpush1.msra.mxu0 %v945
    %1152 = vmatprep.subr.mxu0 0.0
    %1153 = vmatpush1.msra.mxu0 %v944
    %1154 = vmatprep.subr.mxu0 0.0
    %1155 = vmatpush1.msra.mxu0 %v943
    %1156 = vmatprep.subr.mxu0 0.0
    %1157 = vmatpush1.msra.mxu0 %v942
    %1158 = vmatprep.subr.mxu0 0.0
    %1159 = vmatpush1.msra.mxu0 %v941
    %1160 = vmatprep.subr.mxu0 0.0
    %1161 = vmatpush1.msra.mxu0 %v940
    %1162 = vmatprep.subr.mxu0 0.0
    %1163 = vmatpush1.msra.mxu0 %v939
    %1164 = vmatprep.subr.mxu0 0.0
    %1165 = vmatpush1.msra.mxu0 %v938
    %1166 = vmatprep.subr.mxu0 0.0
    %1167 = vmatpush1.msra.mxu0 %v937
    %1168 = vmatprep.subr.mxu0 0.0
    %1169 = vmatpush2.msra.mxu0 %v968
    %1170 = vmatprep.subr.mxu0 0.0
    %1171 = vmatpush2.msra.mxu0 %v967
    %1172 = vmatprep.subr.mxu0 0.0
    %1173 = vmatpush2.msra.mxu0 %v966
    %1174 = vmatprep.subr.mxu0 0.0
    %1175 = vmatpush2.msra.mxu0 %v965
    %1176 = vmatprep.subr.mxu0 0.0
    %1177 = vmatpush2.msra.mxu0 %v964
    %1178 = vmatprep.subr.mxu0 0.0
    %1179 = vmatpush2.msra.mxu0 %v963
    %1180 = vmatprep.subr.mxu0 0.0
    %1181 = vmatpush2.msra.mxu0 %v962
    %1182 = vmatprep.subr.mxu0 0.0
    %1183 = vmatpush2.msra.mxu0 %v961
    %1184 = vmatprep.subr.mxu0 0.0
    %1185 = vmatpush2.msra.mxu0 %v960
    %1186 = vmatprep.subr.mxu0 0.0
    %1187 = vmatpush2.msra.mxu0 %v959
    %1188 = vmatprep.subr.mxu0 0.0
    %1189 = vmatpush2.msra.mxu0 %v958
    %1190 = vmatprep.subr.mxu0 0.0
    %1191 = vmatpush2.msra.mxu0 %v957
    %1192 = vmatprep.subr.mxu0 0.0
    %1193 = vmatpush2.msra.mxu0 %v956
    %1194 = vmatprep.subr.mxu0 0.0
    %1195 = vmatpush2.msra.mxu0 %v955
    %1196 = vmatprep.subr.mxu0 0.0
    %1197 = vmatpush2.msra.mxu0 %v954
    %1198 = vmatprep.subr.mxu0 0.0
    %1199 = vmatpush2.msra.mxu0 %v953
    %1200 = vmatprep.mubr.f32.mxu0 %v894
    %1201 = vmatmul.mubr.f32.gmra.mxu0 %v893
    %v1202 = vpop.f32.mrf.mxu0
    %v1203 = vadd.f32 %v1134, %v1202
    %v1204 = vpop.f32.mrf.mxu0
    %1205 = vdwg.mxu0
    %1206 = vmatprep.subr.mxu0 0.0
    %1207 = vmatpush1.msra.mxu0 %v984
    %1208 = vmatprep.subr.mxu0 0.0
    %1209 = vmatpush1.msra.mxu0 %v983
    %1210 = vmatprep.subr.mxu0 0.0
    %1211 = vmatpush1.msra.mxu0 %v982
    %1212 = vmatprep.subr.mxu0 0.0
    %1213 = vmatpush1.msra.mxu0 %v981
    %1214 = vmatprep.subr.mxu0 0.0
    %1215 = vmatpush1.msra.mxu0 %v980
    %1216 = vmatprep.subr.mxu0 0.0
    %1217 = vmatpush1.msra.mxu0 %v979
    %1218 = vmatprep.subr.mxu0 0.0
    %1219 = vmatpush1.msra.mxu0 %v978
    %1220 = vmatprep.subr.mxu0 0.0
    %1221 = vmatpush1.msra.mxu0 %v977
    %1222 = vmatprep.subr.mxu0 0.0
    %1223 = vmatpush1.msra.mxu0 %v976
    %1224 = vmatprep.subr.mxu0 0.0
    %1225 = vmatpush1.msra.mxu0 %v975
    %1226 = vmatprep.subr.mxu0 0.0
    %1227 = vmatpush1.msra.mxu0 %v974
    %1228 = vmatprep.subr.mxu0 0.0
    %1229 = vmatpush1.msra.mxu0 %v973
    %1230 = vmatprep.subr.mxu0 0.0
    %1231 = vmatpush1.msra.mxu0 %v972
    %1232 = vmatprep.subr.mxu0 0.0
    %1233 = vmatpush1.msra.mxu0 %v971
    %1234 = vmatprep.subr.mxu0 0.0
    %1235 = vmatpush1.msra.mxu0 %v970
    %1236 = vmatprep.subr.mxu0 0.0
    %1237 = vmatpush1.msra.mxu0 %v969
    %1238 = vmatprep.subr.mxu0 0.0
    %1239 = vmatpush2.msra.mxu0 %v1000
    %1240 = vmatprep.subr.mxu0 0.0
    %1241 = vmatpush2.msra.mxu0 %v999
    %1242 = vmatprep.subr.mxu0 0.0
    %1243 = vmatpush2.msra.mxu0 %v998
    %1244 = vmatprep.subr.mxu0 0.0
    %1245 = vmatpush2.msra.mxu0 %v997
    %1246 = vmatprep.subr.mxu0 0.0
    %1247 = vmatpush2.msra.mxu0 %v996
    %1248 = vmatprep.subr.mxu0 0.0
    %1249 = vmatpush2.msra.mxu0 %v995
    %1250 = vmatprep.subr.mxu0 0.0
    %1251 = vmatpush2.msra.mxu0 %v994
    %1252 = vmatprep.subr.mxu0 0.0
    %1253 = vmatpush2.msra.mxu0 %v993
    %1254 = vmatprep.subr.mxu0 0.0
    %1255 = vmatpush2.msra.mxu0 %v992
    %1256 = vmatprep.subr.mxu0 0.0
    %1257 = vmatpush2.msra.mxu0 %v991
    %1258 = vmatprep.subr.mxu0 0.0
    %1259 = vmatpush2.msra.mxu0 %v990
    %1260 = vmatprep.subr.mxu0 0.0
    %1261 = vmatpush2.msra.mxu0 %v989
    %1262 = vmatprep.subr.mxu0 0.0
    %1263 = vmatpush2.msra.mxu0 %v988
    %1264 = vmatprep.subr.mxu0 0.0
    %1265 = vmatpush2.msra.mxu0 %v987
    %1266 = vmatprep.subr.mxu0 0.0
    %1267 = vmatpush2.msra.mxu0 %v986
    %1268 = vmatprep.subr.mxu0 0.0
    %1269 = vmatpush2.msra.mxu0 %v985
    %1270 = vmatprep.mubr.f32.mxu0 %v902
    %1271 = vmatmul.mubr.f32.gmra.mxu0 %v901
    %v1272 = vpop.f32.mrf.mxu0
    %v1273 = vadd.f32 %v1203, %v1272
    %v1274 = vpop.f32.mrf.mxu0
    %1275 = vdwg.mxu0
    %1276 = vmatprep.subr.mxu0 0.0
    %1277 = vmatpush1.msra.mxu0 %v1016
    %1278 = vmatprep.subr.mxu0 0.0
    %1279 = vmatpush1.msra.mxu0 %v1015
    %1280 = vmatprep.subr.mxu0 0.0
    %1281 = vmatpush1.msra.mxu0 %v1014
    %1282 = vmatprep.subr.mxu0 0.0
    %1283 = vmatpush1.msra.mxu0 %v1013
    %1284 = vmatprep.subr.mxu0 0.0
    %1285 = vmatpush1.msra.mxu0 %v1012
    %1286 = vmatprep.subr.mxu0 0.0
    %1287 = vmatpush1.msra.mxu0 %v1011
    %1288 = vmatprep.subr.mxu0 0.0
    %1289 = vmatpush1.msra.mxu0 %v1010
    %1290 = vmatprep.subr.mxu0 0.0
    %1291 = vmatpush1.msra.mxu0 %v1009
    %1292 = vmatprep.subr.mxu0 0.0
    %1293 = vmatpush1.msra.mxu0 %v1008
    %1294 = vmatprep.subr.mxu0 0.0
    %1295 = vmatpush1.msra.mxu0 %v1007
    %1296 = vmatprep.subr.mxu0 0.0
    %1297 = vmatpush1.msra.mxu0 %v1006
    %1298 = vmatprep.subr.mxu0 0.0
    %1299 = vmatpush1.msra.mxu0 %v1005
    %1300 = vmatprep.subr.mxu0 0.0
    %1301 = vmatpush1.msra.mxu0 %v1004
    %1302 = vmatprep.subr.mxu0 0.0
    %1303 = vmatpush1.msra.mxu0 %v1003
    %1304 = vmatprep.subr.mxu0 0.0
    %1305 = vmatpush1.msra.mxu0 %v1002
    %1306 = vmatprep.subr.mxu0 0.0
    %1307 = vmatpush1.msra.mxu0 %v1001
    %1308 = vmatprep.subr.mxu0 0.0
    %1309 = vmatpush2.msra.mxu0 %v1032
    %1310 = vmatprep.subr.mxu0 0.0
    %1311 = vmatpush2.msra.mxu0 %v1031
    %1312 = vmatprep.subr.mxu0 0.0
    %1313 = vmatpush2.msra.mxu0 %v1030
    %1314 = vmatprep.subr.mxu0 0.0
    %1315 = vmatpush2.msra.mxu0 %v1029
    %1316 = vmatprep.subr.mxu0 0.0
    %1317 = vmatpush2.msra.mxu0 %v1028
    %1318 = vmatprep.subr.mxu0 0.0
    %1319 = vmatpush2.msra.mxu0 %v1027
    %1320 = vmatprep.subr.mxu0 0.0
    %1321 = vmatpush2.msra.mxu0 %v1026
    %1322 = vmatprep.subr.mxu0 0.0
    %1323 = vmatpush2.msra.mxu0 %v1025
    %1324 = vmatprep.subr.mxu0 0.0
    %1325 = vmatpush2.msra.mxu0 %v1024
    %1326 = vmatprep.subr.mxu0 0.0
    %1327 = vmatpush2.msra.mxu0 %v1023
    %1328 = vmatprep.subr.mxu0 0.0
    %1329 = vmatpush2.msra.mxu0 %v1022
    %1330 = vmatprep.subr.mxu0 0.0
    %1331 = vmatpush2.msra.mxu0 %v1021
    %1332 = vmatprep.subr.mxu0 0.0
    %1333 = vmatpush2.msra.mxu0 %v1020
    %1334 = vmatprep.subr.mxu0 0.0
    %1335 = vmatpush2.msra.mxu0 %v1019
    %1336 = vmatprep.subr.mxu0 0.0
    %1337 = vmatpush2.msra.mxu0 %v1018
    %1338 = vmatprep.subr.mxu0 0.0
    %1339 = vmatpush2.msra.mxu0 %v1017
    %1340 = vmatprep.mubr.f32.mxu0 %v910
    %1341 = vmatmul.mubr.f32.gmra.mxu0 %v909
    %v1342 = vpop.f32.mrf.mxu0
    %v1343 = vadd.f32 %v1273, %v1342
    %v1344 = vpop.f32.mrf.mxu0
    %1345 = vdwg.mxu0
    %1346 = vmatprep.subr.mxu0 0.0
    %1347 = vmatpush1.msra.mxu0 %v1048
    %1348 = vmatprep.subr.mxu0 0.0
    %1349 = vmatpush1.msra.mxu0 %v1047
    %1350 = vmatprep.subr.mxu0 0.0
    %1351 = vmatpush1.msra.mxu0 %v1046
    %1352 = vmatprep.subr.mxu0 0.0
    %1353 = vmatpush1.msra.mxu0 %v1045
    %1354 = vmatprep.subr.mxu0 0.0
    %1355 = vmatpush1.msra.mxu0 %v1044
    %1356 = vmatprep.subr.mxu0 0.0
    %1357 = vmatpush1.msra.mxu0 %v1043
    %1358 = vmatprep.subr.mxu0 0.0
    %1359 = vmatpush1.msra.mxu0 %v1042
    %1360 = vmatprep.subr.mxu0 0.0
    %1361 = vmatpush1.msra.mxu0 %v1041
    %1362 = vmatprep.subr.mxu0 0.0
    %1363 = vmatpush1.msra.mxu0 %v1040
    %1364 = vmatprep.subr.mxu0 0.0
    %1365 = vmatpush1.msra.mxu0 %v1039
    %1366 = vmatprep.subr.mxu0 0.0
    %1367 = vmatpush1.msra.mxu0 %v1038
    %1368 = vmatprep.subr.mxu0 0.0
    %1369 = vmatpush1.msra.mxu0 %v1037
    %1370 = vmatprep.subr.mxu0 0.0
    %1371 = vmatpush1.msra.mxu0 %v1036
    %1372 = vmatprep.subr.mxu0 0.0
    %1373 = vmatpush1.msra.mxu0 %v1035
    %1374 = vmatprep.subr.mxu0 0.0
    %1375 = vmatpush1.msra.mxu0 %v1034
    %1376 = vmatprep.subr.mxu0 0.0
    %1377 = vmatpush1.msra.mxu0 %v1033
    %1378 = vmatprep.subr.mxu0 0.0
    %1379 = vmatpush2.msra.mxu0 %v1064
    %1380 = vmatprep.subr.mxu0 0.0
    %1381 = vmatpush2.msra.mxu0 %v1063
    %1382 = vmatprep.subr.mxu0 0.0
    %1383 = vmatpush2.msra.mxu0 %v1062
    %1384 = vmatprep.subr.mxu0 0.0
    %1385 = vmatpush2.msra.mxu0 %v1061
    %1386 = vmatprep.subr.mxu0 0.0
    %1387 = vmatpush2.msra.mxu0 %v1060
    %1388 = vmatprep.subr.mxu0 0.0
    %1389 = vmatpush2.msra.mxu0 %v1059
    %1390 = vmatprep.subr.mxu0 0.0
    %1391 = vmatpush2.msra.mxu0 %v1058
    %1392 = vmatprep.subr.mxu0 0.0
    %1393 = vmatpush2.msra.mxu0 %v1057
    %1394 = vmatprep.subr.mxu0 0.0
    %1395 = vmatpush2.msra.mxu0 %v1056
    %1396 = vmatprep.subr.mxu0 0.0
    %1397 = vmatpush2.msra.mxu0 %v1055
    %1398 = vmatprep.subr.mxu0 0.0
    %1399 = vmatpush2.msra.mxu0 %v1054
    %1400 = vmatprep.subr.mxu0 0.0
    %1401 = vmatpush2.msra.mxu0 %v1053
    %1402 = vmatprep.subr.mxu0 0.0
    %1403 = vmatpush2.msra.mxu0 %v1052
    %1404 = vmatprep.subr.mxu0 0.0
    %1405 = vmatpush2.msra.mxu0 %v1051
    %1406 = vmatprep.subr.mxu0 0.0
    %1407 = vmatpush2.msra.mxu0 %v1050
    %1408 = vmatprep.subr.mxu0 0.0
    %1409 = vmatpush2.msra.mxu0 %v1049
    %1410 = vmatprep.mubr.f32.mxu0 %v918
    %1411 = vmatmul.mubr.f32.gmra.mxu0 %v917
    %v1412 = vpop.f32.mrf.mxu0
    %v1413 = vadd.f32 %v1343, %v1412
    %v1414 = vpop.f32.mrf.mxu0
    %1415 = vdwg.mxu0
    %1416 = vmatprep.subr.mxu0 0.0
    %1417 = vmatpush1.msra.mxu0 %v1080
    %1418 = vmatprep.subr.mxu0 0.0
    %1419 = vmatpush1.msra.mxu0 %v1079
    %1420 = vmatprep.subr.mxu0 0.0
    %1421 = vmatpush1.msra.mxu0 %v1078
    %1422 = vmatprep.subr.mxu0 0.0
    %1423 = vmatpush1.msra.mxu0 %v1077
    %1424 = vmatprep.subr.mxu0 0.0
    %1425 = vmatpush1.msra.mxu0 %v1076
    %1426 = vmatprep.subr.mxu0 0.0
    %1427 = vmatpush1.msra.mxu0 %v1075
    %1428 = vmatprep.subr.mxu0 0.0
    %1429 = vmatpush1.msra.mxu0 %v1074
    %1430 = vmatprep.subr.mxu0 0.0
    %1431 = vmatpush1.msra.mxu0 %v1073
    %1432 = vmatprep.subr.mxu0 0.0
    %1433 = vmatpush1.msra.mxu0 %v1072
    %1434 = vmatprep.subr.mxu0 0.0
    %1435 = vmatpush1.msra.mxu0 %v1071
    %1436 = vmatprep.subr.mxu0 0.0
    %1437 = vmatpush1.msra.mxu0 %v1070
    %1438 = vmatprep.subr.mxu0 0.0
    %1439 = vmatpush1.msra.mxu0 %v1069
    %1440 = vmatprep.subr.mxu0 0.0
    %1441 = vmatpush1.msra.mxu0 %v1068
    %1442 = vmatprep.subr.mxu0 0.0
    %1443 = vmatpush1.msra.mxu0 %v1067
    %1444 = vmatprep.subr.mxu0 0.0
    %1445 = vmatpush1.msra.mxu0 %v1066
    %1446 = vmatprep.subr.mxu0 0.0
    %1447 = vmatpush1.msra.mxu0 %v1065
    %1448 = vmatprep.subr.mxu0 0.0
    %1449 = vmatpush2.msra.mxu0 %v1096
    %1450 = vmatprep.subr.mxu0 0.0
    %1451 = vmatpush2.msra.mxu0 %v1095
    %1452 = vmatprep.subr.mxu0 0.0
    %1453 = vmatpush2.msra.mxu0 %v1094
    %1454 = vmatprep.subr.mxu0 0.0
    %1455 = vmatpush2.msra.mxu0 %v1093
    %1456 = vmatprep.subr.mxu0 0.0
    %1457 = vmatpush2.msra.mxu0 %v1092
    %1458 = vmatprep.subr.mxu0 0.0
    %1459 = vmatpush2.msra.mxu0 %v1091
    %1460 = vmatprep.subr.mxu0 0.0
    %1461 = vmatpush2.msra.mxu0 %v1090
    %1462 = vmatprep.subr.mxu0 0.0
    %1463 = vmatpush2.msra.mxu0 %v1089
    %1464 = vmatprep.subr.mxu0 0.0
    %1465 = vmatpush2.msra.mxu0 %v1088
    %1466 = vmatprep.subr.mxu0 0.0
    %1467 = vmatpush2.msra.mxu0 %v1087
    %1468 = vmatprep.subr.mxu0 0.0
    %1469 = vmatpush2.msra.mxu0 %v1086
    %1470 = vmatprep.subr.mxu0 0.0
    %1471 = vmatpush2.msra.mxu0 %v1085
    %1472 = vmatprep.subr.mxu0 0.0
    %1473 = vmatpush2.msra.mxu0 %v1084
    %1474 = vmatprep.subr.mxu0 0.0
    %1475 = vmatpush2.msra.mxu0 %v1083
    %1476 = vmatprep.subr.mxu0 0.0
    %1477 = vmatpush2.msra.mxu0 %v1082
    %1478 = vmatprep.subr.mxu0 0.0
    %1479 = vmatpush2.msra.mxu0 %v1081
    %1480 = vmatprep.mubr.f32.mxu0 %v926
    %1481 = vmatmul.mubr.f32.gmra.mxu0 %v925
    %v1482 = vpop.f32.mrf.mxu0
    %v1483 = vadd.f32 %v1413, %v1482
    %v1484 = vpop.f32.mrf.mxu0
    %1485 = vdwg.mxu0
    %1486 = vmatprep.subr.mxu0 0.0
    %1487 = vmatpush1.msra.mxu0 %v1112
    %1488 = vmatprep.subr.mxu0 0.0
    %1489 = vmatpush1.msra.mxu0 %v1111
    %1490 = vmatprep.subr.mxu0 0.0
    %1491 = vmatpush1.msra.mxu0 %v1110
    %1492 = vmatprep.subr.mxu0 0.0
    %1493 = vmatpush1.msra.mxu0 %v1109
    %1494 = vmatprep.subr.mxu0 0.0
    %1495 = vmatpush1.msra.mxu0 %v1108
    %1496 = vmatprep.subr.mxu0 0.0
    %1497 = vmatpush1.msra.mxu0 %v1107
    %1498 = vmatprep.subr.mxu0 0.0
    %1499 = vmatpush1.msra.mxu0 %v1106
    %1500 = vmatprep.subr.mxu0 0.0
    %1501 = vmatpush1.msra.mxu0 %v1105
    %1502 = vmatprep.subr.mxu0 0.0
    %1503 = vmatpush1.msra.mxu0 %v1104
    %1504 = vmatprep.subr.mxu0 0.0
    %1505 = vmatpush1.msra.mxu0 %v1103
    %1506 = vmatprep.subr.mxu0 0.0
    %1507 = vmatpush1.msra.mxu0 %v1102
    %1508 = vmatprep.subr.mxu0 0.0
    %1509 = vmatpush1.msra.mxu0 %v1101
    %1510 = vmatprep.subr.mxu0 0.0
    %1511 = vmatpush1.msra.mxu0 %v1100
    %1512 = vmatprep.subr.mxu0 0.0
    %1513 = vmatpush1.msra.mxu0 %v1099
    %1514 = vmatprep.subr.mxu0 0.0
    %1515 = vmatpush1.msra.mxu0 %v1098
    %1516 = vmatprep.subr.mxu0 0.0
    %1517 = vmatpush1.msra.mxu0 %v1097
    %1518 = vmatprep.subr.mxu0 0.0
    %1519 = vmatpush2.msra.mxu0 %v1128
    %1520 = vmatprep.subr.mxu0 0.0
    %1521 = vmatpush2.msra.mxu0 %v1127
    %1522 = vmatprep.subr.mxu0 0.0
    %1523 = vmatpush2.msra.mxu0 %v1126
    %1524 = vmatprep.subr.mxu0 0.0
    %1525 = vmatpush2.msra.mxu0 %v1125
    %1526 = vmatprep.subr.mxu0 0.0
    %1527 = vmatpush2.msra.mxu0 %v1124
    %1528 = vmatprep.subr.mxu0 0.0
    %1529 = vmatpush2.msra.mxu0 %v1123
    %1530 = vmatprep.subr.mxu0 0.0
    %1531 = vmatpush2.msra.mxu0 %v1122
    %1532 = vmatprep.subr.mxu0 0.0
    %1533 = vmatpush2.msra.mxu0 %v1121
    %1534 = vmatprep.subr.mxu0 0.0
    %1535 = vmatpush2.msra.mxu0 %v1120
    %1536 = vmatprep.subr.mxu0 0.0
    %1537 = vmatpush2.msra.mxu0 %v1119
    %1538 = vmatprep.subr.mxu0 0.0
    %1539 = vmatpush2.msra.mxu0 %v1118
    %1540 = vmatprep.subr.mxu0 0.0
    %1541 = vmatpush2.msra.mxu0 %v1117
    %1542 = vmatprep.subr.mxu0 0.0
    %1543 = vmatpush2.msra.mxu0 %v1116
    %1544 = vmatprep.subr.mxu0 0.0
    %1545 = vmatpush2.msra.mxu0 %v1115
    %1546 = vmatprep.subr.mxu0 0.0
    %1547 = vmatpush2.msra.mxu0 %v1114
    %1548 = vmatprep.subr.mxu0 0.0
    %1549 = vmatpush2.msra.mxu0 %v1113
    %1550 = vmatprep.mubr.f32.mxu0 %v934
    %1551 = vmatmul.mubr.f32.gmra.mxu0 %v933
    %v1552 = vpop.f32.mrf.mxu0
    %v1553 = vadd.f32 %v1483, %v1552
    %v1554 = vpop.f32.mrf.mxu0
    %1555 = vdwg.mxu0
    %vm1556 = vcmask 254976
    %1557 = vst.msk [vmem:[#allocation3] sm:$0x3] %vm1556, %v1553
    // Predicated region
    $region46: #{gnn_forward.5} parent=1 // pred_check
      _
    $region47: #{gnn_forward.5} parent=1 // pred_check_branch
      %1559 = sbr.rel (0) target = $region49
    $region48: #{gnn_forward.5} parent=1 // pred_region
      %s1561 = ssub.s32 32, 32
      %1562 = vsyncadd [#allocation4], %s1561
      %s1564 = sshll.u32 [#allocation3], 4
      %s1565 = int_to_ptr.vmem [resolvable:$true] %s1564
      %1567 = dma.vmem_to_hbm [thread:$0]  %s1565, 32, %s11, [#allocation4]
    $region49: #{gnn_forward.5} parent=1 // pred_fallthru
      _
    // Predicated region
    $region50: #{gnn_forward.5} parent=1 // pred_check
      _
    $region51: #{gnn_forward.5} parent=1 // pred_check_branch
      %1569 = sbr.rel (0) target = $region53
    $region52: #{gnn_forward.5} parent=1 // pred_region
      %1570 = dma.done [#allocation4], 32
    $region53: #{gnn_forward.5} parent=1 // pred_fallthru
      _
    %1571 = vsyncpa [#allocation4], 1

// kernel: gnn_forward.4
$region0: #{gnn_forward.4}
  #allocation0 [shape = 'u32[]', space=smem, size = 0x4, offset = 0x4, fixed_abs, tag = 'smem constant byte address 0x4 - core index']
  #allocation1 [shape = 'u32[144,128]{1,0:T(1,128)}', space=vmem, size = 0x12000, scoped, tag = 'internal scratch']
  %s0 = inlined_call_operand.vmem [shape: f32[2,16,256], index: 0, kind: input, shape index: {}]
  %s1 = inlined_call_operand.vmem [shape: f32[2,16,16,8], index: 1, kind: input, shape index: {}]
  %s2 = inlined_call_operand.vmem [shape: f32[256,256], index: 2, kind: input, shape index: {}]
  %s3 = inlined_call_operand.vmem [shape: f32[256,32], index: 3, kind: input, shape index: {}]
  %s4 = inlined_call_operand.vmem [shape: f32[256,32], index: 4, kind: input, shape index: {}]
  %s5 = inlined_call_operand.vmem [shape: f32[8,32], index: 5, kind: input, shape index: {}]
  %s6 = inlined_call_operand.vmem [shape: f32[8,256], index: 6, kind: input, shape index: {}]
  %s7 = inlined_call_operand.vmem [shape: f32[1,256], index: 7, kind: input, shape index: {}]
  %s8 = inlined_call_operand.vmem [shape: f32[32,1], index: 8, kind: input, shape index: {}]
  %s9 = inlined_call_operand.vmem [shape: f32[1,256], index: 9, kind: input, shape index: {}]
  %s10 = inlined_call_operand.vmem [shape: f32[2,16,256], index: 10, kind: output, shape index: {}]
  %s11 = sld [smem:[#allocation0]]
  $region50: #{gnn_forward.4} parent=0
    _
  %s13 = ssub.s32 1, %s11
  %s14 = scalar_select 0, %s13, %s11
  // Predicated region
  $region2: #{gnn_forward.4} parent=0 // pred_check
    _
  $region3: #{gnn_forward.4} parent=0 // pred_check_branch
    %16 = sbr.rel (0) target = $region5
  $region4: #{gnn_forward.4} parent=0 // pred_region
    _
  $region5: #{gnn_forward.4} parent=0 // pred_fallthru
    _
  // Predicated region
  $region6: #{gnn_forward.4} parent=0 // pred_check
    _
  $region7: #{gnn_forward.4} parent=0 // pred_check_branch
    %18 = sbr.rel (0) target = $region9
  $region8: #{gnn_forward.4} parent=0 // pred_region
    _
  $region9: #{gnn_forward.4} parent=0 // pred_fallthru
    _
  // Predicated region
  $region10: #{gnn_forward.4} parent=0 // pred_check
    _
  $region11: #{gnn_forward.4} parent=0 // pred_check_branch
    %20 = sbr.rel (0) target = $region13
  $region12: #{gnn_forward.4} parent=0 // pred_region
    _
  $region13: #{gnn_forward.4} parent=0 // pred_fallthru
    _
  // Predicated region
  $region14: #{gnn_forward.4} parent=0 // pred_check
    _
  $region15: #{gnn_forward.4} parent=0 // pred_check_branch
    %22 = sbr.rel (0) target = $region17
  $region16: #{gnn_forward.4} parent=0 // pred_region
    _
  $region17: #{gnn_forward.4} parent=0 // pred_fallthru
    _
  // Predicated region
  $region18: #{gnn_forward.4} parent=0 // pred_check
    _
  $region19: #{gnn_forward.4} parent=0 // pred_check_branch
    %24 = sbr.rel (0) target = $region21
  $region20: #{gnn_forward.4} parent=0 // pred_region
    _
  $region21: #{gnn_forward.4} parent=0 // pred_fallthru
    _
  // Predicated region
  $region22: #{gnn_forward.4} parent=0 // pred_check
    _
  $region23: #{gnn_forward.4} parent=0 // pred_check_branch
    %26 = sbr.rel (0) target = $region25
  $region24: #{gnn_forward.4} parent=0 // pred_region
    _
  $region25: #{gnn_forward.4} parent=0 // pred_fallthru
    _
  // Predicated region
  $region26: #{gnn_forward.4} parent=0 // pred_check
    _
  $region27: #{gnn_forward.4} parent=0 // pred_check_branch
    %28 = sbr.rel (0) target = $region29
  $region28: #{gnn_forward.4} parent=0 // pred_region
    _
  $region29: #{gnn_forward.4} parent=0 // pred_fallthru
    _
  // Predicated region
  $region30: #{gnn_forward.4} parent=0 // pred_check
    _
  $region31: #{gnn_forward.4} parent=0 // pred_check_branch
    %30 = sbr.rel (0) target = $region33
  $region32: #{gnn_forward.4} parent=0 // pred_region
    _
  $region33: #{gnn_forward.4} parent=0 // pred_fallthru
    _
  // Predicated region
  $region34: #{gnn_forward.4} parent=0 // pred_check
    _
  $region35: #{gnn_forward.4} parent=0 // pred_check_branch
    %32 = sbr.rel (0) target = $region37
  $region36: #{gnn_forward.4} parent=0 // pred_region
    _
  $region37: #{gnn_forward.4} parent=0 // pred_fallthru
    _
  // Predicated region
  $region38: #{gnn_forward.4} parent=0 // pred_check
    _
  $region39: #{gnn_forward.4} parent=0 // pred_check_branch
    %34 = sbr.rel (0) target = $region41
  $region40: #{gnn_forward.4} parent=0 // pred_region
    _
  $region41: #{gnn_forward.4} parent=0 // pred_fallthru
    _
  %v35 = vld [vmem:[%s0] sm:$0xff]
  %v36 = vld [vmem:[%s0 + $0x8] sm:$0xff]
  %v37 = vld [vmem:[%s0 + $0x10] sm:$0xff]
  %v38 = vld [vmem:[%s0 + $0x18] sm:$0xff]
  %v39 = vld [vmem:[%s0 + $0x20] sm:$0xff]
  %v40 = vld [vmem:[%s0 + $0x28] sm:$0xff]
  %v41 = vld [vmem:[%s0 + $0x30] sm:$0xff]
  %v42 = vld [vmem:[%s0 + $0x38] sm:$0xff]
  %v43 = vld [vmem:[%s1] sm:$0xff]
  %v44 = vld [vmem:[%s1 + $0x8] sm:$0xff]
  %v45 = vld [vmem:[%s1 + $0x10] sm:$0xff]
  %v46 = vld [vmem:[%s1 + $0x18] sm:$0xff]
  %v47 = vld [vmem:[%s1 + $0x20] sm:$0xff]
  %v48 = vld [vmem:[%s1 + $0x28] sm:$0xff]
  %v49 = vld [vmem:[%s1 + $0x30] sm:$0xff]
  %v50 = vld [vmem:[%s1 + $0x38] sm:$0xff]
  %v51 = vld [vmem:[%s1 + $0x40] sm:$0xff]
  %v52 = vld [vmem:[%s1 + $0x48] sm:$0xff]
  %v53 = vld [vmem:[%s1 + $0x50] sm:$0xff]
  %v54 = vld [vmem:[%s1 + $0x58] sm:$0xff]
  %v55 = vld [vmem:[%s1 + $0x60] sm:$0xff]
  %v56 = vld [vmem:[%s1 + $0x68] sm:$0xff]
  %v57 = vld [vmem:[%s1 + $0x70] sm:$0xff]
  %v58 = vld [vmem:[%s1 + $0x78] sm:$0xff]
  %v59 = vld [vmem:[%s1 + $0x80] sm:$0xff]
  %v60 = vld [vmem:[%s1 + $0x88] sm:$0xff]
  %v61 = vld [vmem:[%s1 + $0x90] sm:$0xff]
  %v62 = vld [vmem:[%s1 + $0x98] sm:$0xff]
  %v63 = vld [vmem:[%s1 + $0xa0] sm:$0xff]
  %v64 = vld [vmem:[%s1 + $0xa8] sm:$0xff]
  %v65 = vld [vmem:[%s1 + $0xb0] sm:$0xff]
  %v66 = vld [vmem:[%s1 + $0xb8] sm:$0xff]
  %v67 = vld [vmem:[%s1 + $0xc0] sm:$0xff]
  %v68 = vld [vmem:[%s1 + $0xc8] sm:$0xff]
  %v69 = vld [vmem:[%s1 + $0xd0] sm:$0xff]
  %v70 = vld [vmem:[%s1 + $0xd8] sm:$0xff]
  %v71 = vld [vmem:[%s1 + $0xe0] sm:$0xff]
  %v72 = vld [vmem:[%s1 + $0xe8] sm:$0xff]
  %v73 = vld [vmem:[%s1 + $0xf0] sm:$0xff]
  %v74 = vld [vmem:[%s1 + $0xf8] sm:$0xff]
  %v75 = vld [vmem:[%s1 + $0x100] sm:$0xff]
  %v76 = vld [vmem:[%s1 + $0x108] sm:$0xff]
  %v77 = vld [vmem:[%s1 + $0x110] sm:$0xff]
  %v78 = vld [vmem:[%s1 + $0x118] sm:$0xff]
  %v79 = vld [vmem:[%s1 + $0x120] sm:$0xff]
  %v80 = vld [vmem:[%s1 + $0x128] sm:$0xff]
  %v81 = vld [vmem:[%s1 + $0x130] sm:$0xff]
  %v82 = vld [vmem:[%s1 + $0x138] sm:$0xff]
  %v83 = vld [vmem:[%s1 + $0x140] sm:$0xff]
  %v84 = vld [vmem:[%s1 + $0x148] sm:$0xff]
  %v85 = vld [vmem:[%s1 + $0x150] sm:$0xff]
  %v86 = vld [vmem:[%s1 + $0x158] sm:$0xff]
  %v87 = vld [vmem:[%s1 + $0x160] sm:$0xff]
  %v88 = vld [vmem:[%s1 + $0x168] sm:$0xff]
  %v89 = vld [vmem:[%s1 + $0x170] sm:$0xff]
  %v90 = vld [vmem:[%s1 + $0x178] sm:$0xff]
  %v91 = vld [vmem:[%s1 + $0x180] sm:$0xff]
  %v92 = vld [vmem:[%s1 + $0x188] sm:$0xff]
  %v93 = vld [vmem:[%s1 + $0x190] sm:$0xff]
  %v94 = vld [vmem:[%s1 + $0x198] sm:$0xff]
  %v95 = vld [vmem:[%s1 + $0x1a0] sm:$0xff]
  %v96 = vld [vmem:[%s1 + $0x1a8] sm:$0xff]
  %v97 = vld [vmem:[%s1 + $0x1b0] sm:$0xff]
  %v98 = vld [vmem:[%s1 + $0x1b8] sm:$0xff]
  %v99 = vld [vmem:[%s1 + $0x1c0] sm:$0xff]
  %v100 = vld [vmem:[%s1 + $0x1c8] sm:$0xff]
  %v101 = vld [vmem:[%s1 + $0x1d0] sm:$0xff]
  %v102 = vld [vmem:[%s1 + $0x1d8] sm:$0xff]
  %v103 = vld [vmem:[%s1 + $0x1e0] sm:$0xff]
  %v104 = vld [vmem:[%s1 + $0x1e8] sm:$0xff]
  %v105 = vld [vmem:[%s1 + $0x1f0] sm:$0xff]
  %v106 = vld [vmem:[%s1 + $0x1f8] sm:$0xff]
  %v107 = vld [vmem:[%s2] sm:$0xff]
  %v108 = vld [vmem:[%s2 + $0x8] sm:$0xff]
  %v109 = vld [vmem:[%s2 + $0x10] sm:$0xff]
  %v110 = vld [vmem:[%s2 + $0x18] sm:$0xff]
  %v111 = vld [vmem:[%s2 + $0x20] sm:$0xff]
  %v112 = vld [vmem:[%s2 + $0x28] sm:$0xff]
  %v113 = vld [vmem:[%s2 + $0x30] sm:$0xff]
  %v114 = vld [vmem:[%s2 + $0x38] sm:$0xff]
  %v115 = vld [vmem:[%s2 + $0x40] sm:$0xff]
  %v116 = vld [vmem:[%s2 + $0x48] sm:$0xff]
  %v117 = vld [vmem:[%s2 + $0x50] sm:$0xff]
  %v118 = vld [vmem:[%s2 + $0x58] sm:$0xff]
  %v119 = vld [vmem:[%s2 + $0x60] sm:$0xff]
  %v120 = vld [vmem:[%s2 + $0x68] sm:$0xff]
  %v121 = vld [vmem:[%s2 + $0x70] sm:$0xff]
  %v122 = vld [vmem:[%s2 + $0x78] sm:$0xff]
  %v123 = vld [vmem:[%s2 + $0x80] sm:$0xff]
  %v124 = vld [vmem:[%s2 + $0x88] sm:$0xff]
  %v125 = vld [vmem:[%s2 + $0x90] sm:$0xff]
  %v126 = vld [vmem:[%s2 + $0x98] sm:$0xff]
  %v127 = vld [vmem:[%s2 + $0xa0] sm:$0xff]
  %v128 = vld [vmem:[%s2 + $0xa8] sm:$0xff]
  %v129 = vld [vmem:[%s2 + $0xb0] sm:$0xff]
  %v130 = vld [vmem:[%s2 + $0xb8] sm:$0xff]
  %v131 = vld [vmem:[%s2 + $0xc0] sm:$0xff]
  %v132 = vld [vmem:[%s2 + $0xc8] sm:$0xff]
  %v133 = vld [vmem:[%s2 + $0xd0] sm:$0xff]
  %v134 = vld [vmem:[%s2 + $0xd8] sm:$0xff]
  %v135 = vld [vmem:[%s2 + $0xe0] sm:$0xff]
  %v136 = vld [vmem:[%s2 + $0xe8] sm:$0xff]
  %v137 = vld [vmem:[%s2 + $0xf0] sm:$0xff]
  %v138 = vld [vmem:[%s2 + $0xf8] sm:$0xff]
  %v139 = vld [vmem:[%s2 + $0x100] sm:$0xff]
  %v140 = vld [vmem:[%s2 + $0x108] sm:$0xff]
  %v141 = vld [vmem:[%s2 + $0x110] sm:$0xff]
  %v142 = vld [vmem:[%s2 + $0x118] sm:$0xff]
  %v143 = vld [vmem:[%s2 + $0x120] sm:$0xff]
  %v144 = vld [vmem:[%s2 + $0x128] sm:$0xff]
  %v145 = vld [vmem:[%s2 + $0x130] sm:$0xff]
  %v146 = vld [vmem:[%s2 + $0x138] sm:$0xff]
  %v147 = vld [vmem:[%s2 + $0x140] sm:$0xff]
  %v148 = vld [vmem:[%s2 + $0x148] sm:$0xff]
  %v149 = vld [vmem:[%s2 + $0x150] sm:$0xff]
  %v150 = vld [vmem:[%s2 + $0x158] sm:$0xff]
  %v151 = vld [vmem:[%s2 + $0x160] sm:$0xff]
  %v152 = vld [vmem:[%s2 + $0x168] sm:$0xff]
  %v153 = vld [vmem:[%s2 + $0x170] sm:$0xff]
  %v154 = vld [vmem:[%s2 + $0x178] sm:$0xff]
  %v155 = vld [vmem:[%s2 + $0x180] sm:$0xff]
  %v156 = vld [vmem:[%s2 + $0x188] sm:$0xff]
  %v157 = vld [vmem:[%s2 + $0x190] sm:$0xff]
  %v158 = vld [vmem:[%s2 + $0x198] sm:$0xff]
  %v159 = vld [vmem:[%s2 + $0x1a0] sm:$0xff]
  %v160 = vld [vmem:[%s2 + $0x1a8] sm:$0xff]
  %v161 = vld [vmem:[%s2 + $0x1b0] sm:$0xff]
  %v162 = vld [vmem:[%s2 + $0x1b8] sm:$0xff]
  %v163 = vld [vmem:[%s2 + $0x1c0] sm:$0xff]
  %v164 = vld [vmem:[%s2 + $0x1c8] sm:$0xff]
  %v165 = vld [vmem:[%s2 + $0x1d0] sm:$0xff]
  %v166 = vld [vmem:[%s2 + $0x1d8] sm:$0xff]
  %v167 = vld [vmem:[%s2 + $0x1e0] sm:$0xff]
  %v168 = vld [vmem:[%s2 + $0x1e8] sm:$0xff]
  %v169 = vld [vmem:[%s2 + $0x1f0] sm:$0xff]
  %v170 = vld [vmem:[%s2 + $0x1f8] sm:$0xff]
  %171 = vmatprep.subr.mxu0 %v138
  %172 = vmatpush1.msra.mxu0 %v137
  %173 = vmatprep.subr.mxu0 %v136
  %174 = vmatpush1.msra.mxu0 %v135
  %175 = vmatprep.subr.mxu0 %v134
  %176 = vmatpush1.msra.mxu0 %v133
  %177 = vmatprep.subr.mxu0 %v132
  %178 = vmatpush1.msra.mxu0 %v131
  %179 = vmatprep.subr.mxu0 %v130
  %180 = vmatpush1.msra.mxu0 %v129
  %181 = vmatprep.subr.mxu0 %v128
  %182 = vmatpush1.msra.mxu0 %v127
  %183 = vmatprep.subr.mxu0 %v126
  %184 = vmatpush1.msra.mxu0 %v125
  %185 = vmatprep.subr.mxu0 %v124
  %186 = vmatpush1.msra.mxu0 %v123
  %187 = vmatprep.subr.mxu0 %v122
  %188 = vmatpush1.msra.mxu0 %v121
  %189 = vmatprep.subr.mxu0 %v120
  %190 = vmatpush1.msra.mxu0 %v119
  %191 = vmatprep.subr.mxu0 %v118
  %192 = vmatpush1.msra.mxu0 %v117
  %193 = vmatprep.subr.mxu0 %v116
  %194 = vmatpush1.msra.mxu0 %v115
  %195 = vmatprep.subr.mxu0 %v114
  %196 = vmatpush1.msra.mxu0 %v113
  %197 = vmatprep.subr.mxu0 %v112
  %198 = vmatpush1.msra.mxu0 %v111
  %199 = vmatprep.subr.mxu0 %v110
  %200 = vmatpush1.msra.mxu0 %v109
  %201 = vmatprep.subr.mxu0 %v108
  %202 = vmatpush1.msra.mxu0 %v107
  %203 = vmatprep.subr.mxu0 %v170
  %204 = vmatpush2.msra.mxu0 %v169
  %205 = vmatprep.subr.mxu0 %v168
  %206 = vmatpush2.msra.mxu0 %v167
  %207 = vmatprep.subr.mxu0 %v166
  %208 = vmatpush2.msra.mxu0 %v165
  %209 = vmatprep.subr.mxu0 %v164
  %210 = vmatpush2.msra.mxu0 %v163
  %211 = vmatprep.subr.mxu0 %v162
  %212 = vmatpush2.msra.mxu0 %v161
  %213 = vmatprep.subr.mxu0 %v160
  %214 = vmatpush2.msra.mxu0 %v159
  %215 = vmatprep.subr.mxu0 %v158
  %216 = vmatpush2.msra.mxu0 %v157
  %217 = vmatprep.subr.mxu0 %v156
  %218 = vmatpush2.msra.mxu0 %v155
  %219 = vmatprep.subr.mxu0 %v154
  %220 = vmatpush2.msra.mxu0 %v153
  %221 = vmatprep.subr.mxu0 %v152
  %222 = vmatpush2.msra.mxu0 %v151
  %223 = vmatprep.subr.mxu0 %v150
  %224 = vmatpush2.msra.mxu0 %v149
  %225 = vmatprep.subr.mxu0 %v148
  %226 = vmatpush2.msra.mxu0 %v147
  %227 = vmatprep.subr.mxu0 %v146
  %228 = vmatpush2.msra.mxu0 %v145
  %229 = vmatprep.subr.mxu0 %v144
  %230 = vmatpush2.msra.mxu0 %v143
  %231 = vmatprep.subr.mxu0 %v142
  %232 = vmatpush2.msra.mxu0 %v141
  %233 = vmatprep.subr.mxu0 %v140
  %234 = vmatpush2.msra.mxu0 %v139
  %235 = vmatprep.mubr.f32.mxu0 %v36
  %236 = vmatmul.mubr.f32.gmra.mxu0 %v35
  %v237 = vpop.f32.mrf.mxu0
  %v238 = vadd.f32 0.0, %v237
  %v239 = vpop.f32.mrf.mxu0
  %v240 = vadd.f32 0.0, %v239
  %241 = vmatprep.mubr.f32.mxu0 %v38
  %242 = vmatmul.mubr.f32.gmra.mxu0 %v37
  %v243 = vpop.f32.mrf.mxu0
  %v244 = vadd.f32 0.0, %v243
  %v245 = vpop.f32.mrf.mxu0
  %v246 = vadd.f32 0.0, %v245
  %247 = vmatprep.mubr.f32.mxu0 %v40
  %248 = vmatmul.mubr.f32.gmra.mxu0 %v39
  %v249 = vpop.f32.mrf.mxu0
  %v250 = vadd.f32 0.0, %v249
  %v251 = vpop.f32.mrf.mxu0
  %v252 = vadd.f32 0.0, %v251
  %253 = vmatprep.mubr.f32.mxu0 %v42
  %254 = vmatmul.mubr.f32.gmra.mxu0 %v41
  %v255 = vpop.f32.mrf.mxu0
  %v256 = vadd.f32 0.0, %v255
  %v257 = vpop.f32.mrf.mxu0
  %v258 = vadd.f32 0.0, %v257
  %259 = vdwg.mxu0
  %v260 = vld [vmem:[%s3] sm:$0xff]
  %v261 = vld [vmem:[%s3 + $0x8] sm:$0xff]
  %v262 = vld [vmem:[%s3 + $0x10] sm:$0xff]
  %v263 = vld [vmem:[%s3 + $0x18] sm:$0xff]
  %v264 = vld [vmem:[%s3 + $0x20] sm:$0xff]
  %v265 = vld [vmem:[%s3 + $0x28] sm:$0xff]
  %v266 = vld [vmem:[%s3 + $0x30] sm:$0xff]
  %v267 = vld [vmem:[%s3 + $0x38] sm:$0xff]
  %v268 = vld [vmem:[%s3 + $0x40] sm:$0xff]
  %v269 = vld [vmem:[%s3 + $0x48] sm:$0xff]
  %v270 = vld [vmem:[%s3 + $0x50] sm:$0xff]
  %v271 = vld [vmem:[%s3 + $0x58] sm:$0xff]
  %v272 = vld [vmem:[%s3 + $0x60] sm:$0xff]
  %v273 = vld [vmem:[%s3 + $0x68] sm:$0xff]
  %v274 = vld [vmem:[%s3 + $0x70] sm:$0xff]
  %v275 = vld [vmem:[%s3 + $0x78] sm:$0xff]
  %v276 = vld [vmem:[%s3 + $0x80] sm:$0xff]
  %v277 = vld [vmem:[%s3 + $0x88] sm:$0xff]
  %v278 = vld [vmem:[%s3 + $0x90] sm:$0xff]
  %v279 = vld [vmem:[%s3 + $0x98] sm:$0xff]
  %v280 = vld [vmem:[%s3 + $0xa0] sm:$0xff]
  %v281 = vld [vmem:[%s3 + $0xa8] sm:$0xff]
  %v282 = vld [vmem:[%s3 + $0xb0] sm:$0xff]
  %v283 = vld [vmem:[%s3 + $0xb8] sm:$0xff]
  %v284 = vld [vmem:[%s3 + $0xc0] sm:$0xff]
  %v285 = vld [vmem:[%s3 + $0xc8] sm:$0xff]
  %v286 = vld [vmem:[%s3 + $0xd0] sm:$0xff]
  %v287 = vld [vmem:[%s3 + $0xd8] sm:$0xff]
  %v288 = vld [vmem:[%s3 + $0xe0] sm:$0xff]
  %v289 = vld [vmem:[%s3 + $0xe8] sm:$0xff]
  %v290 = vld [vmem:[%s3 + $0xf0] sm:$0xff]
  %v291 = vld [vmem:[%s3 + $0xf8] sm:$0xff]
  %292 = vmatprep.subr.mxu0 0.0
  %293 = vmatpush1.msra.mxu0 %v275
  %294 = vmatprep.subr.mxu0 0.0
  %295 = vmatpush1.msra.mxu0 %v274
  %296 = vmatprep.subr.mxu0 0.0
  %297 = vmatpush1.msra.mxu0 %v273
  %298 = vmatprep.subr.mxu0 0.0
  %299 = vmatpush1.msra.mxu0 %v272
  %300 = vmatprep.subr.mxu0 0.0
  %301 = vmatpush1.msra.mxu0 %v271
  %302 = vmatprep.subr.mxu0 0.0
  %303 = vmatpush1.msra.mxu0 %v270
  %304 = vmatprep.subr.mxu0 0.0
  %305 = vmatpush1.msra.mxu0 %v269
  %306 = vmatprep.subr.mxu0 0.0
  %307 = vmatpush1.msra.mxu0 %v268
  %308 = vmatprep.subr.mxu0 0.0
  %309 = vmatpush1.msra.mxu0 %v267
  %310 = vmatprep.subr.mxu0 0.0
  %311 = vmatpush1.msra.mxu0 %v266
  %312 = vmatprep.subr.mxu0 0.0
  %313 = vmatpush1.msra.mxu0 %v265
  %314 = vmatprep.subr.mxu0 0.0
  %315 = vmatpush1.msra.mxu0 %v264
  %316 = vmatprep.subr.mxu0 0.0
  %317 = vmatpush1.msra.mxu0 %v263
  %318 = vmatprep.subr.mxu0 0.0
  %319 = vmatpush1.msra.mxu0 %v262
  %320 = vmatprep.subr.mxu0 0.0
  %321 = vmatpush1.msra.mxu0 %v261
  %322 = vmatprep.subr.mxu0 0.0
  %323 = vmatpush1.msra.mxu0 %v260
  %324 = vmatprep.subr.mxu0 0.0
  %325 = vmatpush2.msra.mxu0 %v291
  %326 = vmatprep.subr.mxu0 0.0
  %327 = vmatpush2.msra.mxu0 %v290
  %328 = vmatprep.subr.mxu0 0.0
  %329 = vmatpush2.msra.mxu0 %v289
  %330 = vmatprep.subr.mxu0 0.0
  %331 = vmatpush2.msra.mxu0 %v288
  %332 = vmatprep.subr.mxu0 0.0
  %333 = vmatpush2.msra.mxu0 %v287
  %334 = vmatprep.subr.mxu0 0.0
  %335 = vmatpush2.msra.mxu0 %v286
  %336 = vmatprep.subr.mxu0 0.0
  %337 = vmatpush2.msra.mxu0 %v285
  %338 = vmatprep.subr.mxu0 0.0
  %339 = vmatpush2.msra.mxu0 %v284
  %340 = vmatprep.subr.mxu0 0.0
  %341 = vmatpush2.msra.mxu0 %v283
  %342 = vmatprep.subr.mxu0 0.0
  %343 = vmatpush2.msra.mxu0 %v282
  %344 = vmatprep.subr.mxu0 0.0
  %345 = vmatpush2.msra.mxu0 %v281
  %346 = vmatprep.subr.mxu0 0.0
  %347 = vmatpush2.msra.mxu0 %v280
  %348 = vmatprep.subr.mxu0 0.0
  %349 = vmatpush2.msra.mxu0 %v279
  %350 = vmatprep.subr.mxu0 0.0
  %351 = vmatpush2.msra.mxu0 %v278
  %352 = vmatprep.subr.mxu0 0.0
  %353 = vmatpush2.msra.mxu0 %v277
  %354 = vmatprep.subr.mxu0 0.0
  %355 = vmatpush2.msra.mxu0 %v276
  %356 = vmatprep.mubr.f32.mxu0 %v36
  %357 = vmatmul.mubr.f32.gmra.mxu0 %v35
  %v358 = vpop.f32.mrf.mxu0
  %v359 = vadd.f32 0.0, %v358
  %v360 = vpop.f32.mrf.mxu0
  %361 = vmatprep.mubr.f32.mxu0 %v38
  %362 = vmatmul.mubr.f32.gmra.mxu0 %v37
  %v363 = vpop.f32.mrf.mxu0
  %v364 = vadd.f32 0.0, %v363
  %v365 = vpop.f32.mrf.mxu0
  %366 = vmatprep.mubr.f32.mxu0 %v40
  %367 = vmatmul.mubr.f32.gmra.mxu0 %v39
  %v368 = vpop.f32.mrf.mxu0
  %v369 = vadd.f32 0.0, %v368
  %v370 = vpop.f32.mrf.mxu0
  %371 = vmatprep.mubr.f32.mxu0 %v42
  %372 = vmatmul.mubr.f32.gmra.mxu0 %v41
  %v373 = vpop.f32.mrf.mxu0
  %v374 = vadd.f32 0.0, %v373
  %v375 = vpop.f32.mrf.mxu0
  %376 = vdwg.mxu0
  %v377 = vld [vmem:[%s4] sm:$0xff]
  %v378 = vld [vmem:[%s4 + $0x8] sm:$0xff]
  %v379 = vld [vmem:[%s4 + $0x10] sm:$0xff]
  %v380 = vld [vmem:[%s4 + $0x18] sm:$0xff]
  %v381 = vld [vmem:[%s4 + $0x20] sm:$0xff]
  %v382 = vld [vmem:[%s4 + $0x28] sm:$0xff]
  %v383 = vld [vmem:[%s4 + $0x30] sm:$0xff]
  %v384 = vld [vmem:[%s4 + $0x38] sm:$0xff]
  %v385 = vld [vmem:[%s4 + $0x40] sm:$0xff]
  %v386 = vld [vmem:[%s4 + $0x48] sm:$0xff]
  %v387 = vld [vmem:[%s4 + $0x50] sm:$0xff]
  %v388 = vld [vmem:[%s4 + $0x58] sm:$0xff]
  %v389 = vld [vmem:[%s4 + $0x60] sm:$0xff]
  %v390 = vld [vmem:[%s4 + $0x68] sm:$0xff]
  %v391 = vld [vmem:[%s4 + $0x70] sm:$0xff]
  %v392 = vld [vmem:[%s4 + $0x78] sm:$0xff]
  %v393 = vld [vmem:[%s4 + $0x80] sm:$0xff]
  %v394 = vld [vmem:[%s4 + $0x88] sm:$0xff]
  %v395 = vld [vmem:[%s4 + $0x90] sm:$0xff]
  %v396 = vld [vmem:[%s4 + $0x98] sm:$0xff]
  %v397 = vld [vmem:[%s4 + $0xa0] sm:$0xff]
  %v398 = vld [vmem:[%s4 + $0xa8] sm:$0xff]
  %v399 = vld [vmem:[%s4 + $0xb0] sm:$0xff]
  %v400 = vld [vmem:[%s4 + $0xb8] sm:$0xff]
  %v401 = vld [vmem:[%s4 + $0xc0] sm:$0xff]
  %v402 = vld [vmem:[%s4 + $0xc8] sm:$0xff]
  %v403 = vld [vmem:[%s4 + $0xd0] sm:$0xff]
  %v404 = vld [vmem:[%s4 + $0xd8] sm:$0xff]
  %v405 = vld [vmem:[%s4 + $0xe0] sm:$0xff]
  %v406 = vld [vmem:[%s4 + $0xe8] sm:$0xff]
  %v407 = vld [vmem:[%s4 + $0xf0] sm:$0xff]
  %v408 = vld [vmem:[%s4 + $0xf8] sm:$0xff]
  %409 = vmatprep.subr.mxu0 0.0
  %410 = vmatpush1.msra.mxu0 %v392
  %411 = vmatprep.subr.mxu0 0.0
  %412 = vmatpush1.msra.mxu0 %v391
  %413 = vmatprep.subr.mxu0 0.0
  %414 = vmatpush1.msra.mxu0 %v390
  %415 = vmatprep.subr.mxu0 0.0
  %416 = vmatpush1.msra.mxu0 %v389
  %417 = vmatprep.subr.mxu0 0.0
  %418 = vmatpush1.msra.mxu0 %v388
  %419 = vmatprep.subr.mxu0 0.0
  %420 = vmatpush1.msra.mxu0 %v387
  %421 = vmatprep.subr.mxu0 0.0
  %422 = vmatpush1.msra.mxu0 %v386
  %423 = vmatprep.subr.mxu0 0.0
  %424 = vmatpush1.msra.mxu0 %v385
  %425 = vmatprep.subr.mxu0 0.0
  %426 = vmatpush1.msra.mxu0 %v384
  %427 = vmatprep.subr.mxu0 0.0
  %428 = vmatpush1.msra.mxu0 %v383
  %429 = vmatprep.subr.mxu0 0.0
  %430 = vmatpush1.msra.mxu0 %v382
  %431 = vmatprep.subr.mxu0 0.0
  %432 = vmatpush1.msra.mxu0 %v381
  %433 = vmatprep.subr.mxu0 0.0
  %434 = vmatpush1.msra.mxu0 %v380
  %435 = vmatprep.subr.mxu0 0.0
  %436 = vmatpush1.msra.mxu0 %v379
  %437 = vmatprep.subr.mxu0 0.0
  %438 = vmatpush1.msra.mxu0 %v378
  %439 = vmatprep.subr.mxu0 0.0
  %440 = vmatpush1.msra.mxu0 %v377
  %441 = vmatprep.subr.mxu0 0.0
  %442 = vmatpush2.msra.mxu0 %v408
  %443 = vmatprep.subr.mxu0 0.0
  %444 = vmatpush2.msra.mxu0 %v407
  %445 = vmatprep.subr.mxu0 0.0
  %446 = vmatpush2.msra.mxu0 %v406
  %447 = vmatprep.subr.mxu0 0.0
  %448 = vmatpush2.msra.mxu0 %v405
  %449 = vmatprep.subr.mxu0 0.0
  %450 = vmatpush2.msra.mxu0 %v404
  %451 = vmatprep.subr.mxu0 0.0
  %452 = vmatpush2.msra.mxu0 %v403
  %453 = vmatprep.subr.mxu0 0.0
  %454 = vmatpush2.msra.mxu0 %v402
  %455 = vmatprep.subr.mxu0 0.0
  %456 = vmatpush2.msra.mxu0 %v401
  %457 = vmatprep.subr.mxu0 0.0
  %458 = vmatpush2.msra.mxu0 %v400
  %459 = vmatprep.subr.mxu0 0.0
  %460 = vmatpush2.msra.mxu0 %v399
  %461 = vmatprep.subr.mxu0 0.0
  %462 = vmatpush2.msra.mxu0 %v398
  %463 = vmatprep.subr.mxu0 0.0
  %464 = vmatpush2.msra.mxu0 %v397
  %465 = vmatprep.subr.mxu0 0.0
  %466 = vmatpush2.msra.mxu0 %v396
  %467 = vmatprep.subr.mxu0 0.0
  %468 = vmatpush2.msra.mxu0 %v395
  %469 = vmatprep.subr.mxu0 0.0
  %470 = vmatpush2.msra.mxu0 %v394
  %471 = vmatprep.subr.mxu0 0.0
  %472 = vmatpush2.msra.mxu0 %v393
  %473 = vmatprep.mubr.f32.mxu0 %v36
  %474 = vmatmul.mubr.f32.gmra.mxu0 %v35
  %v475 = vpop.f32.mrf.mxu0
  %v476 = vadd.f32 0.0, %v475
  %v477 = vpop.f32.mrf.mxu0
  %478 = vmatprep.mubr.f32.mxu0 %v38
  %479 = vmatmul.mubr.f32.gmra.mxu0 %v37
  %v480 = vpop.f32.mrf.mxu0
  %v481 = vadd.f32 0.0, %v480
  %v482 = vpop.f32.mrf.mxu0
  %483 = vmatprep.mubr.f32.mxu0 %v40
  %484 = vmatmul.mubr.f32.gmra.mxu0 %v39
  %v485 = vpop.f32.mrf.mxu0
  %v486 = vadd.f32 0.0, %v485
  %v487 = vpop.f32.mrf.mxu0
  %488 = vmatprep.mubr.f32.mxu0 %v42
  %489 = vmatmul.mubr.f32.gmra.mxu0 %v41
  %v490 = vpop.f32.mrf.mxu0
  %v491 = vadd.f32 0.0, %v490
  %v492 = vpop.f32.mrf.mxu0
  %493 = vdwg.mxu0
  %v494 = vld [vmem:[%s5] sm:$0xff]
  %vm495 = vcmask 64512
  %v497 = vsel %vm495, %v43, 0
  %v500 = vsel %vm495, %v44, 0
  %v503 = vsel %vm495, %v45, 0
  %v506 = vsel %vm495, %v46, 0
  %v509 = vsel %vm495, %v47, 0
  %v512 = vsel %vm495, %v48, 0
  %v515 = vsel %vm495, %v49, 0
  %v518 = vsel %vm495, %v50, 0
  %v521 = vsel %vm495, %v51, 0
  %v524 = vsel %vm495, %v52, 0
  %v527 = vsel %vm495, %v53, 0
  %v530 = vsel %vm495, %v54, 0
  %v533 = vsel %vm495, %v55, 0
  %v536 = vsel %vm495, %v56, 0
  %v539 = vsel %vm495, %v57, 0
  %v542 = vsel %vm495, %v58, 0
  %v545 = vsel %vm495, %v59, 0
  %v548 = vsel %vm495, %v60, 0
  %v551 = vsel %vm495, %v61, 0
  %v554 = vsel %vm495, %v62, 0
  %v557 = vsel %vm495, %v63, 0
  %v560 = vsel %vm495, %v64, 0
  %v563 = vsel %vm495, %v65, 0
  %v566 = vsel %vm495, %v66, 0
  %v569 = vsel %vm495, %v67, 0
  %v572 = vsel %vm495, %v68, 0
  %v575 = vsel %vm495, %v69, 0
  %v578 = vsel %vm495, %v70, 0
  %v581 = vsel %vm495, %v71, 0
  %v584 = vsel %vm495, %v72, 0
  %v587 = vsel %vm495, %v73, 0
  %v590 = vsel %vm495, %v74, 0
  %v593 = vsel %vm495, %v75, 0
  %v596 = vsel %vm495, %v76, 0
  %v599 = vsel %vm495, %v77, 0
  %v602 = vsel %vm495, %v78, 0
  %v605 = vsel %vm495, %v79, 0
  %v608 = vsel %vm495, %v80, 0
  %v611 = vsel %vm495, %v81, 0
  %v614 = vsel %vm495, %v82, 0
  %v617 = vsel %vm495, %v83, 0
  %v620 = vsel %vm495, %v84, 0
  %v623 = vsel %vm495, %v85, 0
  %v626 = vsel %vm495, %v86, 0
  %v629 = vsel %vm495, %v87, 0
  %v632 = vsel %vm495, %v88, 0
  %v635 = vsel %vm495, %v89, 0
  %v638 = vsel %vm495, %v90, 0
  %v641 = vsel %vm495, %v91, 0
  %v644 = vsel %vm495, %v92, 0
  %v647 = vsel %vm495, %v93, 0
  %v650 = vsel %vm495, %v94, 0
  %v653 = vsel %vm495, %v95, 0
  %v656 = vsel %vm495, %v96, 0
  %v659 = vsel %vm495, %v97, 0
  %v662 = vsel %vm495, %v98, 0
  %v665 = vsel %vm495, %v99, 0
  %v668 = vsel %vm495, %v100, 0
  %v671 = vsel %vm495, %v101, 0
  %v674 = vsel %vm495, %v102, 0
  %v677 = vsel %vm495, %v103, 0
  %v680 = vsel %vm495, %v104, 0
  %v683 = vsel %vm495, %v105, 0
  %v686 = vsel %vm495, %v106, 0
  %688 = vmatprep.subr.mxu0 0.0
  %689 = vmatpush1.msra.mxu0 0.0
  %690 = vmatprep.subr.mxu0 0.0
  %691 = vmatpush1.msra.mxu0 0.0
  %692 = vmatprep.subr.mxu0 0.0
  %693 = vmatpush1.msra.mxu0 0.0
  %694 = vmatprep.subr.mxu0 0.0
  %695 = vmatpush1.msra.mxu0 0.0
  %696 = vmatprep.subr.mxu0 0.0
  %697 = vmatpush1.msra.mxu0 0.0
  %698 = vmatprep.subr.mxu0 0.0
  %699 = vmatpush1.msra.mxu0 0.0
  %700 = vmatprep.subr.mxu0 0.0
  %701 = vmatpush1.msra.mxu0 0.0
  %702 = vmatprep.subr.mxu0 0.0
  %703 = vmatpush1.msra.mxu0 0.0
  %704 = vmatprep.subr.mxu0 0.0
  %705 = vmatpush1.msra.mxu0 0.0
  %706 = vmatprep.subr.mxu0 0.0
  %707 = vmatpush1.msra.mxu0 0.0
  %708 = vmatprep.subr.mxu0 0.0
  %709 = vmatpush1.msra.mxu0 0.0
  %710 = vmatprep.subr.mxu0 0.0
  %711 = vmatpush1.msra.mxu0 0.0
  %712 = vmatprep.subr.mxu0 0.0
  %713 = vmatpush1.msra.mxu0 0.0
  %714 = vmatprep.subr.mxu0 0.0
  %715 = vmatpush1.msra.mxu0 0.0
  %716 = vmatprep.subr.mxu0 0.0
  %717 = vmatpush1.msra.mxu0 0.0
  %718 = vmatprep.subr.mxu0 0.0
  %719 = vmatpush1.msra.mxu0 %v494
  %720 = vmatprep.subr.mxu0 0.0
  %721 = vmatpush2.msra.mxu0 0.0
  %722 = vmatprep.subr.mxu0 0.0
  %723 = vmatpush2.msra.mxu0 0.0
  %724 = vmatprep.subr.mxu0 0.0
  %725 = vmatpush2.msra.mxu0 0.0
  %726 = vmatprep.subr.mxu0 0.0
  %727 = vmatpush2.msra.mxu0 0.0
  %728 = vmatprep.subr.mxu0 0.0
  %729 = vmatpush2.msra.mxu0 0.0
  %730 = vmatprep.subr.mxu0 0.0
  %731 = vmatpush2.msra.mxu0 0.0
  %732 = vmatprep.subr.mxu0 0.0
  %733 = vmatpush2.msra.mxu0 0.0
  %734 = vmatprep.subr.mxu0 0.0
  %735 = vmatpush2.msra.mxu0 0.0
  %736 = vmatprep.subr.mxu0 0.0
  %737 = vmatpush2.msra.mxu0 0.0
  %738 = vmatprep.subr.mxu0 0.0
  %739 = vmatpush2.msra.mxu0 0.0
  %740 = vmatprep.subr.mxu0 0.0
  %741 = vmatpush2.msra.mxu0 0.0
  %742 = vmatprep.subr.mxu0 0.0
  %743 = vmatpush2.msra.mxu0 0.0
  %744 = vmatprep.subr.mxu0 0.0
  %745 = vmatpush2.msra.mxu0 0.0
  %746 = vmatprep.subr.mxu0 0.0
  %747 = vmatpush2.msra.mxu0 0.0
  %748 = vmatprep.subr.mxu0 0.0
  %749 = vmatpush2.msra.mxu0 0.0
  %750 = vmatprep.subr.mxu0 0.0
  %751 = vmatpush2.msra.mxu0 0.0
  %752 = vmatprep.mubr.f32.mxu0 0.0
  %753 = vmatmul.mubr.f32.gmra.mxu0 %v497
  %v754 = vpop.f32.mrf.mxu0
  %v755 = vadd.f32 0.0, %v754
  %v756 = vpop.f32.mrf.mxu0
  %757 = vmatprep.mubr.f32.mxu0 0.0
  %758 = vmatmul.mubr.f32.gmra.mxu0 %v500
  %v759 = vpop.f32.mrf.mxu0
  %v760 = vadd.f32 0.0, %v759
  %v761 = vpop.f32.mrf.mxu0
  %762 = vmatprep.mubr.f32.mxu0 0.0
  %763 = vmatmul.mubr.f32.gmra.mxu0 %v503
  %v764 = vpop.f32.mrf.mxu0
  %v765 = vadd.f32 0.0, %v764
  %v766 = vpop.f32.mrf.mxu0
  %767 = vmatprep.mubr.f32.mxu0 0.0
  %768 = vmatmul.mubr.f32.gmra.mxu0 %v506
  %v769 = vpop.f32.mrf.mxu0
  %v770 = vadd.f32 0.0, %v769
  %v771 = vpop.f32.mrf.mxu0
  %772 = vmatprep.mubr.f32.mxu0 0.0
  %773 = vmatmul.mubr.f32.gmra.mxu0 %v509
  %v774 = vpop.f32.mrf.mxu0
  %v775 = vadd.f32 0.0, %v774
  %v776 = vpop.f32.mrf.mxu0
  %777 = vmatprep.mubr.f32.mxu0 0.0
  %778 = vmatmul.mubr.f32.gmra.mxu0 %v512
  %v779 = vpop.f32.mrf.mxu0
  %v780 = vadd.f32 0.0, %v779
  %v781 = vpop.f32.mrf.mxu0
  %782 = vmatprep.mubr.f32.mxu0 0.0
  %783 = vmatmul.mubr.f32.gmra.mxu0 %v515
  %v784 = vpop.f32.mrf.mxu0
  %v785 = vadd.f32 0.0, %v784
  %v786 = vpop.f32.mrf.mxu0
  %787 = vmatprep.mubr.f32.mxu0 0.0
  %788 = vmatmul.mubr.f32.gmra.mxu0 %v518
  %v789 = vpop.f32.mrf.mxu0
  %v790 = vadd.f32 0.0, %v789
  %v791 = vpop.f32.mrf.mxu0
  %792 = vmatprep.mubr.f32.mxu0 0.0
  %793 = vmatmul.mubr.f32.gmra.mxu0 %v521
  %v794 = vpop.f32.mrf.mxu0
  %v795 = vadd.f32 0.0, %v794
  %v796 = vpop.f32.mrf.mxu0
  %797 = vmatprep.mubr.f32.mxu0 0.0
  %798 = vmatmul.mubr.f32.gmra.mxu0 %v524
  %v799 = vpop.f32.mrf.mxu0
  %v800 = vadd.f32 0.0, %v799
  %v801 = vpop.f32.mrf.mxu0
  %802 = vmatprep.mubr.f32.mxu0 0.0
  %803 = vmatmul.mubr.f32.gmra.mxu0 %v527
  %v804 = vpop.f32.mrf.mxu0
  %v805 = vadd.f32 0.0, %v804
  %v806 = vpop.f32.mrf.mxu0
  %807 = vmatprep.mubr.f32.mxu0 0.0
  %808 = vmatmul.mubr.f32.gmra.mxu0 %v530
  %v809 = vpop.f32.mrf.mxu0
  %v810 = vadd.f32 0.0, %v809
  %v811 = vpop.f32.mrf.mxu0
  %812 = vmatprep.mubr.f32.mxu0 0.0
  %813 = vmatmul.mubr.f32.gmra.mxu0 %v533
  %v814 = vpop.f32.mrf.mxu0
  %v815 = vadd.f32 0.0, %v814
  %v816 = vpop.f32.mrf.mxu0
  %817 = vmatprep.mubr.f32.mxu0 0.0
  %818 = vmatmul.mubr.f32.gmra.mxu0 %v536
  %v819 = vpop.f32.mrf.mxu0
  %v820 = vadd.f32 0.0, %v819
  %v821 = vpop.f32.mrf.mxu0
  %822 = vmatprep.mubr.f32.mxu0 0.0
  %823 = vmatmul.mubr.f32.gmra.mxu0 %v539
  %v824 = vpop.f32.mrf.mxu0
  %v825 = vadd.f32 0.0, %v824
  %v826 = vpop.f32.mrf.mxu0
  %827 = vmatprep.mubr.f32.mxu0 0.0
  %828 = vmatmul.mubr.f32.gmra.mxu0 %v542
  %v829 = vpop.f32.mrf.mxu0
  %v830 = vadd.f32 0.0, %v829
  %v831 = vpop.f32.mrf.mxu0
  %832 = vmatprep.mubr.f32.mxu0 0.0
  %833 = vmatmul.mubr.f32.gmra.mxu0 %v545
  %v834 = vpop.f32.mrf.mxu0
  %v835 = vadd.f32 0.0, %v834
  %v836 = vpop.f32.mrf.mxu0
  %837 = vmatprep.mubr.f32.mxu0 0.0
  %838 = vmatmul.mubr.f32.gmra.mxu0 %v548
  %v839 = vpop.f32.mrf.mxu0
  %v840 = vadd.f32 0.0, %v839
  %v841 = vpop.f32.mrf.mxu0
  %842 = vmatprep.mubr.f32.mxu0 0.0
  %843 = vmatmul.mubr.f32.gmra.mxu0 %v551
  %v844 = vpop.f32.mrf.mxu0
  %v845 = vadd.f32 0.0, %v844
  %v846 = vpop.f32.mrf.mxu0
  %847 = vmatprep.mubr.f32.mxu0 0.0
  %848 = vmatmul.mubr.f32.gmra.mxu0 %v554
  %v849 = vpop.f32.mrf.mxu0
  %v850 = vadd.f32 0.0, %v849
  %v851 = vpop.f32.mrf.mxu0
  %852 = vmatprep.mubr.f32.mxu0 0.0
  %853 = vmatmul.mubr.f32.gmra.mxu0 %v557
  %v854 = vpop.f32.mrf.mxu0
  %v855 = vadd.f32 0.0, %v854
  %v856 = vpop.f32.mrf.mxu0
  %857 = vmatprep.mubr.f32.mxu0 0.0
  %858 = vmatmul.mubr.f32.gmra.mxu0 %v560
  %v859 = vpop.f32.mrf.mxu0
  %v860 = vadd.f32 0.0, %v859
  %v861 = vpop.f32.mrf.mxu0
  %862 = vmatprep.mubr.f32.mxu0 0.0
  %863 = vmatmul.mubr.f32.gmra.mxu0 %v563
  %v864 = vpop.f32.mrf.mxu0
  %v865 = vadd.f32 0.0, %v864
  %v866 = vpop.f32.mrf.mxu0
  %867 = vmatprep.mubr.f32.mxu0 0.0
  %868 = vmatmul.mubr.f32.gmra.mxu0 %v566
  %v869 = vpop.f32.mrf.mxu0
  %v870 = vadd.f32 0.0, %v869
  %v871 = vpop.f32.mrf.mxu0
  %872 = vmatprep.mubr.f32.mxu0 0.0
  %873 = vmatmul.mubr.f32.gmra.mxu0 %v569
  %v874 = vpop.f32.mrf.mxu0
  %v875 = vadd.f32 0.0, %v874
  %v876 = vpop.f32.mrf.mxu0
  %877 = vmatprep.mubr.f32.mxu0 0.0
  %878 = vmatmul.mubr.f32.gmra.mxu0 %v572
  %v879 = vpop.f32.mrf.mxu0
  %v880 = vadd.f32 0.0, %v879
  %v881 = vpop.f32.mrf.mxu0
  %882 = vmatprep.mubr.f32.mxu0 0.0
  %883 = vmatmul.mubr.f32.gmra.mxu0 %v575
  %v884 = vpop.f32.mrf.mxu0
  %v885 = vadd.f32 0.0, %v884
  %v886 = vpop.f32.mrf.mxu0
  %887 = vmatprep.mubr.f32.mxu0 0.0
  %888 = vmatmul.mubr.f32.gmra.mxu0 %v578
  %v889 = vpop.f32.mrf.mxu0
  %v890 = vadd.f32 0.0, %v889
  %v891 = vpop.f32.mrf.mxu0
  %892 = vmatprep.mubr.f32.mxu0 0.0
  %893 = vmatmul.mubr.f32.gmra.mxu0 %v581
  %v894 = vpop.f32.mrf.mxu0
  %v895 = vadd.f32 0.0, %v894
  %v896 = vpop.f32.mrf.mxu0
  %897 = vmatprep.mubr.f32.mxu0 0.0
  %898 = vmatmul.mubr.f32.gmra.mxu0 %v584
  %v899 = vpop.f32.mrf.mxu0
  %v900 = vadd.f32 0.0, %v899
  %v901 = vpop.f32.mrf.mxu0
  %902 = vmatprep.mubr.f32.mxu0 0.0
  %903 = vmatmul.mubr.f32.gmra.mxu0 %v587
  %v904 = vpop.f32.mrf.mxu0
  %v905 = vadd.f32 0.0, %v904
  %v906 = vpop.f32.mrf.mxu0
  %907 = vmatprep.mubr.f32.mxu0 0.0
  %908 = vmatmul.mubr.f32.gmra.mxu0 %v590
  %v909 = vpop.f32.mrf.mxu0
  %v910 = vadd.f32 0.0, %v909
  %v911 = vpop.f32.mrf.mxu0
  %912 = vmatprep.mubr.f32.mxu0 0.0
  %913 = vmatmul.mubr.f32.gmra.mxu0 %v593
  %v914 = vpop.f32.mrf.mxu0
  %v915 = vadd.f32 0.0, %v914
  %v916 = vpop.f32.mrf.mxu0
  %917 = vmatprep.mubr.f32.mxu0 0.0
  %918 = vmatmul.mubr.f32.gmra.mxu0 %v596
  %v919 = vpop.f32.mrf.mxu0
  %v920 = vadd.f32 0.0, %v919
  %v921 = vpop.f32.mrf.mxu0
  %922 = vmatprep.mubr.f32.mxu0 0.0
  %923 = vmatmul.mubr.f32.gmra.mxu0 %v599
  %v924 = vpop.f32.mrf.mxu0
  %v925 = vadd.f32 0.0, %v924
  %v926 = vpop.f32.mrf.mxu0
  %927 = vmatprep.mubr.f32.mxu0 0.0
  %928 = vmatmul.mubr.f32.gmra.mxu0 %v602
  %v929 = vpop.f32.mrf.mxu0
  %v930 = vadd.f32 0.0, %v929
  %v931 = vpop.f32.mrf.mxu0
  %932 = vmatprep.mubr.f32.mxu0 0.0
  %933 = vmatmul.mubr.f32.gmra.mxu0 %v605
  %v934 = vpop.f32.mrf.mxu0
  %v935 = vadd.f32 0.0, %v934
  %v936 = vpop.f32.mrf.mxu0
  %937 = vmatprep.mubr.f32.mxu0 0.0
  %938 = vmatmul.mubr.f32.gmra.mxu0 %v608
  %v939 = vpop.f32.mrf.mxu0
  %v940 = vadd.f32 0.0, %v939
  %v941 = vpop.f32.mrf.mxu0
  %942 = vmatprep.mubr.f32.mxu0 0.0
  %943 = vmatmul.mubr.f32.gmra.mxu0 %v611
  %v944 = vpop.f32.mrf.mxu0
  %v945 = vadd.f32 0.0, %v944
  %v946 = vpop.f32.mrf.mxu0
  %947 = vmatprep.mubr.f32.mxu0 0.0
  %948 = vmatmul.mubr.f32.gmra.mxu0 %v614
  %v949 = vpop.f32.mrf.mxu0
  %v950 = vadd.f32 0.0, %v949
  %v951 = vpop.f32.mrf.mxu0
  %952 = vmatprep.mubr.f32.mxu0 0.0
  %953 = vmatmul.mubr.f32.gmra.mxu0 %v617
  %v954 = vpop.f32.mrf.mxu0
  %v955 = vadd.f32 0.0, %v954
  %v956 = vpop.f32.mrf.mxu0
  %957 = vmatprep.mubr.f32.mxu0 0.0
  %958 = vmatmul.mubr.f32.gmra.mxu0 %v620
  %v959 = vpop.f32.mrf.mxu0
  %v960 = vadd.f32 0.0, %v959
  %v961 = vpop.f32.mrf.mxu0
  %962 = vmatprep.mubr.f32.mxu0 0.0
  %963 = vmatmul.mubr.f32.gmra.mxu0 %v623
  %v964 = vpop.f32.mrf.mxu0
  %v965 = vadd.f32 0.0, %v964
  %v966 = vpop.f32.mrf.mxu0
  %967 = vmatprep.mubr.f32.mxu0 0.0
  %968 = vmatmul.mubr.f32.gmra.mxu0 %v626
  %v969 = vpop.f32.mrf.mxu0
  %v970 = vadd.f32 0.0, %v969
  %v971 = vpop.f32.mrf.mxu0
  %972 = vmatprep.mubr.f32.mxu0 0.0
  %973 = vmatmul.mubr.f32.gmra.mxu0 %v629
  %v974 = vpop.f32.mrf.mxu0
  %v975 = vadd.f32 0.0, %v974
  %v976 = vpop.f32.mrf.mxu0
  %977 = vmatprep.mubr.f32.mxu0 0.0
  %978 = vmatmul.mubr.f32.gmra.mxu0 %v632
  %v979 = vpop.f32.mrf.mxu0
  %v980 = vadd.f32 0.0, %v979
  %v981 = vpop.f32.mrf.mxu0
  %982 = vmatprep.mubr.f32.mxu0 0.0
  %983 = vmatmul.mubr.f32.gmra.mxu0 %v635
  %v984 = vpop.f32.mrf.mxu0
  %v985 = vadd.f32 0.0, %v984
  %v986 = vpop.f32.mrf.mxu0
  %987 = vmatprep.mubr.f32.mxu0 0.0
  %988 = vmatmul.mubr.f32.gmra.mxu0 %v638
  %v989 = vpop.f32.mrf.mxu0
  %v990 = vadd.f32 0.0, %v989
  %v991 = vpop.f32.mrf.mxu0
  %992 = vmatprep.mubr.f32.mxu0 0.0
  %993 = vmatmul.mubr.f32.gmra.mxu0 %v641
  %v994 = vpop.f32.mrf.mxu0
  %v995 = vadd.f32 0.0, %v994
  %v996 = vpop.f32.mrf.mxu0
  %997 = vmatprep.mubr.f32.mxu0 0.0
  %998 = vmatmul.mubr.f32.gmra.mxu0 %v644
  %v999 = vpop.f32.mrf.mxu0
  %v1000 = vadd.f32 0.0, %v999
  %v1001 = vpop.f32.mrf.mxu0
  %1002 = vmatprep.mubr.f32.mxu0 0.0
  %1003 = vmatmul.mubr.f32.gmra.mxu0 %v647
  %v1004 = vpop.f32.mrf.mxu0
  %v1005 = vadd.f32 0.0, %v1004
  %v1006 = vpop.f32.mrf.mxu0
  %1007 = vmatprep.mubr.f32.mxu0 0.0
  %1008 = vmatmul.mubr.f32.gmra.mxu0 %v650
  %v1009 = vpop.f32.mrf.mxu0
  %v1010 = vadd.f32 0.0, %v1009
  %v1011 = vpop.f32.mrf.mxu0
  %1012 = vmatprep.mubr.f32.mxu0 0.0
  %1013 = vmatmul.mubr.f32.gmra.mxu0 %v653
  %v1014 = vpop.f32.mrf.mxu0
  %v1015 = vadd.f32 0.0, %v1014
  %v1016 = vpop.f32.mrf.mxu0
  %1017 = vmatprep.mubr.f32.mxu0 0.0
  %1018 = vmatmul.mubr.f32.gmra.mxu0 %v656
  %v1019 = vpop.f32.mrf.mxu0
  %v1020 = vadd.f32 0.0, %v1019
  %v1021 = vpop.f32.mrf.mxu0
  %1022 = vmatprep.mubr.f32.mxu0 0.0
  %1023 = vmatmul.mubr.f32.gmra.mxu0 %v659
  %v1024 = vpop.f32.mrf.mxu0
  %v1025 = vadd.f32 0.0, %v1024
  %v1026 = vpop.f32.mrf.mxu0
  %1027 = vmatprep.mubr.f32.mxu0 0.0
  %1028 = vmatmul.mubr.f32.gmra.mxu0 %v662
  %v1029 = vpop.f32.mrf.mxu0
  %v1030 = vadd.f32 0.0, %v1029
  %v1031 = vpop.f32.mrf.mxu0
  %1032 = vmatprep.mubr.f32.mxu0 0.0
  %1033 = vmatmul.mubr.f32.gmra.mxu0 %v665
  %v1034 = vpop.f32.mrf.mxu0
  %v1035 = vadd.f32 0.0, %v1034
  %v1036 = vpop.f32.mrf.mxu0
  %1037 = vmatprep.mubr.f32.mxu0 0.0
  %1038 = vmatmul.mubr.f32.gmra.mxu0 %v668
  %v1039 = vpop.f32.mrf.mxu0
  %v1040 = vadd.f32 0.0, %v1039
  %v1041 = vpop.f32.mrf.mxu0
  %1042 = vmatprep.mubr.f32.mxu0 0.0
  %1043 = vmatmul.mubr.f32.gmra.mxu0 %v671
  %v1044 = vpop.f32.mrf.mxu0
  %v1045 = vadd.f32 0.0, %v1044
  %v1046 = vpop.f32.mrf.mxu0
  %1047 = vmatprep.mubr.f32.mxu0 0.0
  %1048 = vmatmul.mubr.f32.gmra.mxu0 %v674
  %v1049 = vpop.f32.mrf.mxu0
  %v1050 = vadd.f32 0.0, %v1049
  %v1051 = vpop.f32.mrf.mxu0
  %1052 = vmatprep.mubr.f32.mxu0 0.0
  %1053 = vmatmul.mubr.f32.gmra.mxu0 %v677
  %v1054 = vpop.f32.mrf.mxu0
  %v1055 = vadd.f32 0.0, %v1054
  %v1056 = vpop.f32.mrf.mxu0
  %1057 = vmatprep.mubr.f32.mxu0 0.0
  %1058 = vmatmul.mubr.f32.gmra.mxu0 %v680
  %v1059 = vpop.f32.mrf.mxu0
  %v1060 = vadd.f32 0.0, %v1059
  %v1061 = vpop.f32.mrf.mxu0
  %1062 = vmatprep.mubr.f32.mxu0 0.0
  %1063 = vmatmul.mubr.f32.gmra.mxu0 %v683
  %v1064 = vpop.f32.mrf.mxu0
  %v1065 = vadd.f32 0.0, %v1064
  %v1066 = vpop.f32.mrf.mxu0
  %1067 = vmatprep.mubr.f32.mxu0 0.0
  %1068 = vmatmul.mubr.f32.gmra.mxu0 %v686
  %v1069 = vpop.f32.mrf.mxu0
  %v1070 = vadd.f32 0.0, %v1069
  %v1071 = vpop.f32.mrf.mxu0
  %1072 = vdwg.mxu0
  %v1073 = vld [vmem:[%s6] sm:$0xff]
  %v1074 = vld [vmem:[%s6 + $0x8] sm:$0xff]
  %1075 = vmatprep.subr.mxu0 0.0
  %1076 = vmatpush1.msra.mxu0 0.0
  %1077 = vmatprep.subr.mxu0 0.0
  %1078 = vmatpush1.msra.mxu0 0.0
  %1079 = vmatprep.subr.mxu0 0.0
  %1080 = vmatpush1.msra.mxu0 0.0
  %1081 = vmatprep.subr.mxu0 0.0
  %1082 = vmatpush1.msra.mxu0 0.0
  %1083 = vmatprep.subr.mxu0 0.0
  %1084 = vmatpush1.msra.mxu0 0.0
  %1085 = vmatprep.subr.mxu0 0.0
  %1086 = vmatpush1.msra.mxu0 0.0
  %1087 = vmatprep.subr.mxu0 0.0
  %1088 = vmatpush1.msra.mxu0 0.0
  %1089 = vmatprep.subr.mxu0 0.0
  %1090 = vmatpush1.msra.mxu0 0.0
  %1091 = vmatprep.subr.mxu0 0.0
  %1092 = vmatpush1.msra.mxu0 0.0
  %1093 = vmatprep.subr.mxu0 0.0
  %1094 = vmatpush1.msra.mxu0 0.0
  %1095 = vmatprep.subr.mxu0 0.0
  %1096 = vmatpush1.msra.mxu0 0.0
  %1097 = vmatprep.subr.mxu0 0.0
  %1098 = vmatpush1.msra.mxu0 0.0
  %1099 = vmatprep.subr.mxu0 0.0
  %1100 = vmatpush1.msra.mxu0 0.0
  %1101 = vmatprep.subr.mxu0 0.0
  %1102 = vmatpush1.msra.mxu0 0.0
  %1103 = vmatprep.subr.mxu0 0.0
  %1104 = vmatpush1.msra.mxu0 0.0
  %1105 = vmatprep.subr.mxu0 %v1074
  %1106 = vmatpush1.msra.mxu0 %v1073
  %1107 = vmatprep.subr.mxu0 0.0
  %1108 = vmatpush2.msra.mxu0 0.0
  %1109 = vmatprep.subr.mxu0 0.0
  %1110 = vmatpush2.msra.mxu0 0.0
  %1111 = vmatprep.subr.mxu0 0.0
  %1112 = vmatpush2.msra.mxu0 0.0
  %1113 = vmatprep.subr.mxu0 0.0
  %1114 = vmatpush2.msra.mxu0 0.0
  %1115 = vmatprep.subr.mxu0 0.0
  %1116 = vmatpush2.msra.mxu0 0.0
  %1117 = vmatprep.subr.mxu0 0.0
  %1118 = vmatpush2.msra.mxu0 0.0
  %1119 = vmatprep.subr.mxu0 0.0
  %1120 = vmatpush2.msra.mxu0 0.0
  %1121 = vmatprep.subr.mxu0 0.0
  %1122 = vmatpush2.msra.mxu0 0.0
  %1123 = vmatprep.subr.mxu0 0.0
  %1124 = vmatpush2.msra.mxu0 0.0
  %1125 = vmatprep.subr.mxu0 0.0
  %1126 = vmatpush2.msra.mxu0 0.0
  %1127 = vmatprep.subr.mxu0 0.0
  %1128 = vmatpush2.msra.mxu0 0.0
  %1129 = vmatprep.subr.mxu0 0.0
  %1130 = vmatpush2.msra.mxu0 0.0
  %1131 = vmatprep.subr.mxu0 0.0
  %1132 = vmatpush2.msra.mxu0 0.0
  %1133 = vmatprep.subr.mxu0 0.0
  %1134 = vmatpush2.msra.mxu0 0.0
  %1135 = vmatprep.subr.mxu0 0.0
  %1136 = vmatpush2.msra.mxu0 0.0
  %1137 = vmatprep.subr.mxu0 0.0
  %1138 = vmatpush2.msra.mxu0 0.0
  %1139 = vmatprep.mubr.f32.mxu0 0.0
  %1140 = vmatmul.mubr.f32.gmra.mxu0 %v497
  %v1141 = vpop.f32.mrf.mxu0
  %v1142 = vadd.f32 0.0, %v1141
  %v1143 = vpop.f32.mrf.mxu0
  %v1144 = vadd.f32 0.0, %v1143
  %1145 = vmatprep.mubr.f32.mxu0 0.0
  %1146 = vmatmul.mubr.f32.gmra.mxu0 %v500
  %v1147 = vpop.f32.mrf.mxu0
  %v1148 = vadd.f32 0.0, %v1147
  %v1149 = vpop.f32.mrf.mxu0
  %v1150 = vadd.f32 0.0, %v1149
  %1151 = vmatprep.mubr.f32.mxu0 0.0
  %1152 = vmatmul.mubr.f32.gmra.mxu0 %v503
  %v1153 = vpop.f32.mrf.mxu0
  %v1154 = vadd.f32 0.0, %v1153
  %v1155 = vpop.f32.mrf.mxu0
  %v1156 = vadd.f32 0.0, %v1155
  %1157 = vmatprep.mubr.f32.mxu0 0.0
  %1158 = vmatmul.mubr.f32.gmra.mxu0 %v506
  %v1159 = vpop.f32.mrf.mxu0
  %v1160 = vadd.f32 0.0, %v1159
  %v1161 = vpop.f32.mrf.mxu0
  %v1162 = vadd.f32 0.0, %v1161
  %1163 = vmatprep.mubr.f32.mxu0 0.0
  %1164 = vmatmul.mubr.f32.gmra.mxu0 %v509
  %v1165 = vpop.f32.mrf.mxu0
  %v1166 = vadd.f32 0.0, %v1165
  %v1167 = vpop.f32.mrf.mxu0
  %v1168 = vadd.f32 0.0, %v1167
  %1169 = vmatprep.mubr.f32.mxu0 0.0
  %1170 = vmatmul.mubr.f32.gmra.mxu0 %v512
  %v1171 = vpop.f32.mrf.mxu0
  %v1172 = vadd.f32 0.0, %v1171
  %v1173 = vpop.f32.mrf.mxu0
  %v1174 = vadd.f32 0.0, %v1173
  %1175 = vmatprep.mubr.f32.mxu0 0.0
  %1176 = vmatmul.mubr.f32.gmra.mxu0 %v515
  %v1177 = vpop.f32.mrf.mxu0
  %v1178 = vadd.f32 0.0, %v1177
  %v1179 = vpop.f32.mrf.mxu0
  %v1180 = vadd.f32 0.0, %v1179
  %1181 = vmatprep.mubr.f32.mxu0 0.0
  %1182 = vmatmul.mubr.f32.gmra.mxu0 %v518
  %v1183 = vpop.f32.mrf.mxu0
  %v1184 = vadd.f32 0.0, %v1183
  %v1185 = vpop.f32.mrf.mxu0
  %v1186 = vadd.f32 0.0, %v1185
  %1187 = vmatprep.mubr.f32.mxu0 0.0
  %1188 = vmatmul.mubr.f32.gmra.mxu0 %v521
  %v1189 = vpop.f32.mrf.mxu0
  %v1190 = vadd.f32 0.0, %v1189
  %v1191 = vpop.f32.mrf.mxu0
  %v1192 = vadd.f32 0.0, %v1191
  %1193 = vmatprep.mubr.f32.mxu0 0.0
  %1194 = vmatmul.mubr.f32.gmra.mxu0 %v524
  %v1195 = vpop.f32.mrf.mxu0
  %v1196 = vadd.f32 0.0, %v1195
  %v1197 = vpop.f32.mrf.mxu0
  %v1198 = vadd.f32 0.0, %v1197
  %1199 = vmatprep.mubr.f32.mxu0 0.0
  %1200 = vmatmul.mubr.f32.gmra.mxu0 %v527
  %v1201 = vpop.f32.mrf.mxu0
  %v1202 = vadd.f32 0.0, %v1201
  %v1203 = vpop.f32.mrf.mxu0
  %v1204 = vadd.f32 0.0, %v1203
  %1205 = vmatprep.mubr.f32.mxu0 0.0
  %1206 = vmatmul.mubr.f32.gmra.mxu0 %v530
  %v1207 = vpop.f32.mrf.mxu0
  %v1208 = vadd.f32 0.0, %v1207
  %v1209 = vpop.f32.mrf.mxu0
  %v1210 = vadd.f32 0.0, %v1209
  %1211 = vmatprep.mubr.f32.mxu0 0.0
  %1212 = vmatmul.mubr.f32.gmra.mxu0 %v533
  %v1213 = vpop.f32.mrf.mxu0
  %v1214 = vadd.f32 0.0, %v1213
  %v1215 = vpop.f32.mrf.mxu0
  %v1216 = vadd.f32 0.0, %v1215
  %1217 = vmatprep.mubr.f32.mxu0 0.0
  %1218 = vmatmul.mubr.f32.gmra.mxu0 %v536
  %v1219 = vpop.f32.mrf.mxu0
  %v1220 = vadd.f32 0.0, %v1219
  %v1221 = vpop.f32.mrf.mxu0
  %v1222 = vadd.f32 0.0, %v1221
  %1223 = vmatprep.mubr.f32.mxu0 0.0
  %1224 = vmatmul.mubr.f32.gmra.mxu0 %v539
  %v1225 = vpop.f32.mrf.mxu0
  %v1226 = vadd.f32 0.0, %v1225
  %v1227 = vpop.f32.mrf.mxu0
  %v1228 = vadd.f32 0.0, %v1227
  %1229 = vmatprep.mubr.f32.mxu0 0.0
  %1230 = vmatmul.mubr.f32.gmra.mxu0 %v542
  %v1231 = vpop.f32.mrf.mxu0
  %v1232 = vadd.f32 0.0, %v1231
  %v1233 = vpop.f32.mrf.mxu0
  %v1234 = vadd.f32 0.0, %v1233
  %1235 = vmatprep.mubr.f32.mxu0 0.0
  %1236 = vmatmul.mubr.f32.gmra.mxu0 %v545
  %v1237 = vpop.f32.mrf.mxu0
  %v1238 = vadd.f32 0.0, %v1237
  %v1239 = vpop.f32.mrf.mxu0
  %v1240 = vadd.f32 0.0, %v1239
  %1241 = vmatprep.mubr.f32.mxu0 0.0
  %1242 = vmatmul.mubr.f32.gmra.mxu0 %v548
  %v1243 = vpop.f32.mrf.mxu0
  %v1244 = vadd.f32 0.0, %v1243
  %v1245 = vpop.f32.mrf.mxu0
  %v1246 = vadd.f32 0.0, %v1245
  %1247 = vmatprep.mubr.f32.mxu0 0.0
  %1248 = vmatmul.mubr.f32.gmra.mxu0 %v551
  %v1249 = vpop.f32.mrf.mxu0
  %v1250 = vadd.f32 0.0, %v1249
  %v1251 = vpop.f32.mrf.mxu0
  %v1252 = vadd.f32 0.0, %v1251
  %1253 = vmatprep.mubr.f32.mxu0 0.0
  %1254 = vmatmul.mubr.f32.gmra.mxu0 %v554
  %v1255 = vpop.f32.mrf.mxu0
  %v1256 = vadd.f32 0.0, %v1255
  %v1257 = vpop.f32.mrf.mxu0
  %v1258 = vadd.f32 0.0, %v1257
  %1259 = vmatprep.mubr.f32.mxu0 0.0
  %1260 = vmatmul.mubr.f32.gmra.mxu0 %v557
  %v1261 = vpop.f32.mrf.mxu0
  %v1262 = vadd.f32 0.0, %v1261
  %v1263 = vpop.f32.mrf.mxu0
  %v1264 = vadd.f32 0.0, %v1263
  %1265 = vmatprep.mubr.f32.mxu0 0.0
  %1266 = vmatmul.mubr.f32.gmra.mxu0 %v560
  %v1267 = vpop.f32.mrf.mxu0
  %v1268 = vadd.f32 0.0, %v1267
  %v1269 = vpop.f32.mrf.mxu0
  %v1270 = vadd.f32 0.0, %v1269
  %1271 = vmatprep.mubr.f32.mxu0 0.0
  %1272 = vmatmul.mubr.f32.gmra.mxu0 %v563
  %v1273 = vpop.f32.mrf.mxu0
  %v1274 = vadd.f32 0.0, %v1273
  %v1275 = vpop.f32.mrf.mxu0
  %v1276 = vadd.f32 0.0, %v1275
  %1277 = vmatprep.mubr.f32.mxu0 0.0
  %1278 = vmatmul.mubr.f32.gmra.mxu0 %v566
  %v1279 = vpop.f32.mrf.mxu0
  %v1280 = vadd.f32 0.0, %v1279
  %v1281 = vpop.f32.mrf.mxu0
  %v1282 = vadd.f32 0.0, %v1281
  %1283 = vmatprep.mubr.f32.mxu0 0.0
  %1284 = vmatmul.mubr.f32.gmra.mxu0 %v569
  %v1285 = vpop.f32.mrf.mxu0
  %v1286 = vadd.f32 0.0, %v1285
  %v1287 = vpop.f32.mrf.mxu0
  %v1288 = vadd.f32 0.0, %v1287
  %1289 = vmatprep.mubr.f32.mxu0 0.0
  %1290 = vmatmul.mubr.f32.gmra.mxu0 %v572
  %v1291 = vpop.f32.mrf.mxu0
  %v1292 = vadd.f32 0.0, %v1291
  %v1293 = vpop.f32.mrf.mxu0
  %v1294 = vadd.f32 0.0, %v1293
  %1295 = vmatprep.mubr.f32.mxu0 0.0
  %1296 = vmatmul.mubr.f32.gmra.mxu0 %v575
  %v1297 = vpop.f32.mrf.mxu0
  %v1298 = vadd.f32 0.0, %v1297
  %v1299 = vpop.f32.mrf.mxu0
  %v1300 = vadd.f32 0.0, %v1299
  %1301 = vmatprep.mubr.f32.mxu0 0.0
  %1302 = vmatmul.mubr.f32.gmra.mxu0 %v578
  %v1303 = vpop.f32.mrf.mxu0
  %v1304 = vadd.f32 0.0, %v1303
  %v1305 = vpop.f32.mrf.mxu0
  %v1306 = vadd.f32 0.0, %v1305
  %1307 = vmatprep.mubr.f32.mxu0 0.0
  %1308 = vmatmul.mubr.f32.gmra.mxu0 %v581
  %v1309 = vpop.f32.mrf.mxu0
  %v1310 = vadd.f32 0.0, %v1309
  %v1311 = vpop.f32.mrf.mxu0
  %v1312 = vadd.f32 0.0, %v1311
  %1313 = vmatprep.mubr.f32.mxu0 0.0
  %1314 = vmatmul.mubr.f32.gmra.mxu0 %v584
  %v1315 = vpop.f32.mrf.mxu0
  %v1316 = vadd.f32 0.0, %v1315
  %v1317 = vpop.f32.mrf.mxu0
  %v1318 = vadd.f32 0.0, %v1317
  %1319 = vmatprep.mubr.f32.mxu0 0.0
  %1320 = vmatmul.mubr.f32.gmra.mxu0 %v587
  %v1321 = vpop.f32.mrf.mxu0
  %v1322 = vadd.f32 0.0, %v1321
  %v1323 = vpop.f32.mrf.mxu0
  %v1324 = vadd.f32 0.0, %v1323
  %1325 = vmatprep.mubr.f32.mxu0 0.0
  %1326 = vmatmul.mubr.f32.gmra.mxu0 %v590
  %v1327 = vpop.f32.mrf.mxu0
  %v1328 = vadd.f32 0.0, %v1327
  %v1329 = vpop.f32.mrf.mxu0
  %v1330 = vadd.f32 0.0, %v1329
  %1331 = vmatprep.mubr.f32.mxu0 0.0
  %1332 = vmatmul.mubr.f32.gmra.mxu0 %v593
  %v1333 = vpop.f32.mrf.mxu0
  %v1334 = vadd.f32 0.0, %v1333
  %v1335 = vpop.f32.mrf.mxu0
  %v1336 = vadd.f32 0.0, %v1335
  %1337 = vmatprep.mubr.f32.mxu0 0.0
  %1338 = vmatmul.mubr.f32.gmra.mxu0 %v596
  %v1339 = vpop.f32.mrf.mxu0
  %v1340 = vadd.f32 0.0, %v1339
  %v1341 = vpop.f32.mrf.mxu0
  %v1342 = vadd.f32 0.0, %v1341
  %1343 = vmatprep.mubr.f32.mxu0 0.0
  %1344 = vmatmul.mubr.f32.gmra.mxu0 %v599
  %v1345 = vpop.f32.mrf.mxu0
  %v1346 = vadd.f32 0.0, %v1345
  %v1347 = vpop.f32.mrf.mxu0
  %v1348 = vadd.f32 0.0, %v1347
  %1349 = vmatprep.mubr.f32.mxu0 0.0
  %1350 = vmatmul.mubr.f32.gmra.mxu0 %v602
  %v1351 = vpop.f32.mrf.mxu0
  %v1352 = vadd.f32 0.0, %v1351
  %v1353 = vpop.f32.mrf.mxu0
  %v1354 = vadd.f32 0.0, %v1353
  %1355 = vmatprep.mubr.f32.mxu0 0.0
  %1356 = vmatmul.mubr.f32.gmra.mxu0 %v605
  %v1357 = vpop.f32.mrf.mxu0
  %v1358 = vadd.f32 0.0, %v1357
  %v1359 = vpop.f32.mrf.mxu0
  %v1360 = vadd.f32 0.0, %v1359
  %1361 = vmatprep.mubr.f32.mxu0 0.0
  %1362 = vmatmul.mubr.f32.gmra.mxu0 %v608
  %v1363 = vpop.f32.mrf.mxu0
  %v1364 = vadd.f32 0.0, %v1363
  %v1365 = vpop.f32.mrf.mxu0
  %v1366 = vadd.f32 0.0, %v1365
  %1367 = vmatprep.mubr.f32.mxu0 0.0
  %1368 = vmatmul.mubr.f32.gmra.mxu0 %v611
  %v1369 = vpop.f32.mrf.mxu0
  %v1370 = vadd.f32 0.0, %v1369
  %v1371 = vpop.f32.mrf.mxu0
  %v1372 = vadd.f32 0.0, %v1371
  %1373 = vmatprep.mubr.f32.mxu0 0.0
  %1374 = vmatmul.mubr.f32.gmra.mxu0 %v614
  %v1375 = vpop.f32.mrf.mxu0
  %v1376 = vadd.f32 0.0, %v1375
  %v1377 = vpop.f32.mrf.mxu0
  %v1378 = vadd.f32 0.0, %v1377
  %1379 = vmatprep.mubr.f32.mxu0 0.0
  %1380 = vmatmul.mubr.f32.gmra.mxu0 %v617
  %v1381 = vpop.f32.mrf.mxu0
  %v1382 = vadd.f32 0.0, %v1381
  %v1383 = vpop.f32.mrf.mxu0
  %v1384 = vadd.f32 0.0, %v1383
  %1385 = vmatprep.mubr.f32.mxu0 0.0
  %1386 = vmatmul.mubr.f32.gmra.mxu0 %v620
  %v1387 = vpop.f32.mrf.mxu0
  %v1388 = vadd.f32 0.0, %v1387
  %v1389 = vpop.f32.mrf.mxu0
  %v1390 = vadd.f32 0.0, %v1389
  %1391 = vmatprep.mubr.f32.mxu0 0.0
  %1392 = vmatmul.mubr.f32.gmra.mxu0 %v623
  %v1393 = vpop.f32.mrf.mxu0
  %v1394 = vadd.f32 0.0, %v1393
  %v1395 = vpop.f32.mrf.mxu0
  %v1396 = vadd.f32 0.0, %v1395
  %1397 = vmatprep.mubr.f32.mxu0 0.0
  %1398 = vmatmul.mubr.f32.gmra.mxu0 %v626
  %v1399 = vpop.f32.mrf.mxu0
  %v1400 = vadd.f32 0.0, %v1399
  %v1401 = vpop.f32.mrf.mxu0
  %v1402 = vadd.f32 0.0, %v1401
  %1403 = vmatprep.mubr.f32.mxu0 0.0
  %1404 = vmatmul.mubr.f32.gmra.mxu0 %v629
  %v1405 = vpop.f32.mrf.mxu0
  %v1406 = vadd.f32 0.0, %v1405
  %v1407 = vpop.f32.mrf.mxu0
  %v1408 = vadd.f32 0.0, %v1407
  %1409 = vmatprep.mubr.f32.mxu0 0.0
  %1410 = vmatmul.mubr.f32.gmra.mxu0 %v632
  %v1411 = vpop.f32.mrf.mxu0
  %v1412 = vadd.f32 0.0, %v1411
  %v1413 = vpop.f32.mrf.mxu0
  %v1414 = vadd.f32 0.0, %v1413
  %1415 = vmatprep.mubr.f32.mxu0 0.0
  %1416 = vmatmul.mubr.f32.gmra.mxu0 %v635
  %v1417 = vpop.f32.mrf.mxu0
  %v1418 = vadd.f32 0.0, %v1417
  %v1419 = vpop.f32.mrf.mxu0
  %v1420 = vadd.f32 0.0, %v1419
  %1421 = vmatprep.mubr.f32.mxu0 0.0
  %1422 = vmatmul.mubr.f32.gmra.mxu0 %v638
  %v1423 = vpop.f32.mrf.mxu0
  %v1424 = vadd.f32 0.0, %v1423
  %v1425 = vpop.f32.mrf.mxu0
  %v1426 = vadd.f32 0.0, %v1425
  %1427 = vmatprep.mubr.f32.mxu0 0.0
  %1428 = vmatmul.mubr.f32.gmra.mxu0 %v641
  %v1429 = vpop.f32.mrf.mxu0
  %v1430 = vadd.f32 0.0, %v1429
  %v1431 = vpop.f32.mrf.mxu0
  %v1432 = vadd.f32 0.0, %v1431
  %1433 = vmatprep.mubr.f32.mxu0 0.0
  %1434 = vmatmul.mubr.f32.gmra.mxu0 %v644
  %v1435 = vpop.f32.mrf.mxu0
  %v1436 = vadd.f32 0.0, %v1435
  %v1437 = vpop.f32.mrf.mxu0
  %v1438 = vadd.f32 0.0, %v1437
  %1439 = vmatprep.mubr.f32.mxu0 0.0
  %1440 = vmatmul.mubr.f32.gmra.mxu0 %v647
  %v1441 = vpop.f32.mrf.mxu0
  %v1442 = vadd.f32 0.0, %v1441
  %v1443 = vpop.f32.mrf.mxu0
  %v1444 = vadd.f32 0.0, %v1443
  %1445 = vmatprep.mubr.f32.mxu0 0.0
  %1446 = vmatmul.mubr.f32.gmra.mxu0 %v650
  %v1447 = vpop.f32.mrf.mxu0
  %v1448 = vadd.f32 0.0, %v1447
  %v1449 = vpop.f32.mrf.mxu0
  %v1450 = vadd.f32 0.0, %v1449
  %1451 = vmatprep.mubr.f32.mxu0 0.0
  %1452 = vmatmul.mubr.f32.gmra.mxu0 %v653
  %v1453 = vpop.f32.mrf.mxu0
  %v1454 = vadd.f32 0.0, %v1453
  %v1455 = vpop.f32.mrf.mxu0
  %v1456 = vadd.f32 0.0, %v1455
  %1457 = vmatprep.mubr.f32.mxu0 0.0
  %1458 = vmatmul.mubr.f32.gmra.mxu0 %v656
  %v1459 = vpop.f32.mrf.mxu0
  %v1460 = vadd.f32 0.0, %v1459
  %v1461 = vpop.f32.mrf.mxu0
  %v1462 = vadd.f32 0.0, %v1461
  %1463 = vmatprep.mubr.f32.mxu0 0.0
  %1464 = vmatmul.mubr.f32.gmra.mxu0 %v659
  %v1465 = vpop.f32.mrf.mxu0
  %v1466 = vadd.f32 0.0, %v1465
  %v1467 = vpop.f32.mrf.mxu0
  %v1468 = vadd.f32 0.0, %v1467
  %1469 = vmatprep.mubr.f32.mxu0 0.0
  %1470 = vmatmul.mubr.f32.gmra.mxu0 %v662
  %v1471 = vpop.f32.mrf.mxu0
  %v1472 = vadd.f32 0.0, %v1471
  %v1473 = vpop.f32.mrf.mxu0
  %v1474 = vadd.f32 0.0, %v1473
  %1475 = vmatprep.mubr.f32.mxu0 0.0
  %1476 = vmatmul.mubr.f32.gmra.mxu0 %v665
  %v1477 = vpop.f32.mrf.mxu0
  %v1478 = vadd.f32 0.0, %v1477
  %v1479 = vpop.f32.mrf.mxu0
  %v1480 = vadd.f32 0.0, %v1479
  %1481 = vmatprep.mubr.f32.mxu0 0.0
  %1482 = vmatmul.mubr.f32.gmra.mxu0 %v668
  %v1483 = vpop.f32.mrf.mxu0
  %v1484 = vadd.f32 0.0, %v1483
  %v1485 = vpop.f32.mrf.mxu0
  %v1486 = vadd.f32 0.0, %v1485
  %1487 = vmatprep.mubr.f32.mxu0 0.0
  %1488 = vmatmul.mubr.f32.gmra.mxu0 %v671
  %v1489 = vpop.f32.mrf.mxu0
  %v1490 = vadd.f32 0.0, %v1489
  %v1491 = vpop.f32.mrf.mxu0
  %v1492 = vadd.f32 0.0, %v1491
  %1493 = vmatprep.mubr.f32.mxu0 0.0
  %1494 = vmatmul.mubr.f32.gmra.mxu0 %v674
  %v1495 = vpop.f32.mrf.mxu0
  %v1496 = vadd.f32 0.0, %v1495
  %v1497 = vpop.f32.mrf.mxu0
  %v1498 = vadd.f32 0.0, %v1497
  %1499 = vmatprep.mubr.f32.mxu0 0.0
  %1500 = vmatmul.mubr.f32.gmra.mxu0 %v677
  %v1501 = vpop.f32.mrf.mxu0
  %v1502 = vadd.f32 0.0, %v1501
  %v1503 = vpop.f32.mrf.mxu0
  %v1504 = vadd.f32 0.0, %v1503
  %1505 = vmatprep.mubr.f32.mxu0 0.0
  %1506 = vmatmul.mubr.f32.gmra.mxu0 %v680
  %v1507 = vpop.f32.mrf.mxu0
  %v1508 = vadd.f32 0.0, %v1507
  %v1509 = vpop.f32.mrf.mxu0
  %v1510 = vadd.f32 0.0, %v1509
  %1511 = vmatprep.mubr.f32.mxu0 0.0
  %1512 = vmatmul.mubr.f32.gmra.mxu0 %v683
  %v1513 = vpop.f32.mrf.mxu0
  %v1514 = vadd.f32 0.0, %v1513
  %v1515 = vpop.f32.mrf.mxu0
  %v1516 = vadd.f32 0.0, %v1515
  %1517 = vmatprep.mubr.f32.mxu0 0.0
  %1518 = vmatmul.mubr.f32.gmra.mxu0 %v686
  %v1519 = vpop.f32.mrf.mxu0
  %v1520 = vadd.f32 0.0, %v1519
  %v1521 = vpop.f32.mrf.mxu0
  %v1522 = vadd.f32 0.0, %v1521
  %1523 = vdwg.mxu0
  %vm1524 = vcmp.gt.f32.partialorder %v43, 0.0
  %vm1525 = vcmp.gt.f32.partialorder %v44, 0.0
  %vm1526 = vcmp.gt.f32.partialorder %v45, 0.0
  %vm1527 = vcmp.gt.f32.partialorder %v46, 0.0
  %vm1528 = vcmp.gt.f32.partialorder %v47, 0.0
  %vm1529 = vcmp.gt.f32.partialorder %v48, 0.0
  %vm1530 = vcmp.gt.f32.partialorder %v49, 0.0
  %vm1531 = vcmp.gt.f32.partialorder %v50, 0.0
  %vm1532 = vcmp.gt.f32.partialorder %v51, 0.0
  %vm1533 = vcmp.gt.f32.partialorder %v52, 0.0
  %vm1534 = vcmp.gt.f32.partialorder %v53, 0.0
  %vm1535 = vcmp.gt.f32.partialorder %v54, 0.0
  %vm1536 = vcmp.gt.f32.partialorder %v55, 0.0
  %vm1537 = vcmp.gt.f32.partialorder %v56, 0.0
  %vm1538 = vcmp.gt.f32.partialorder %v57, 0.0
  %vm1539 = vcmp.gt.f32.partialorder %v58, 0.0
  %vm1540 = vcmp.gt.f32.partialorder %v59, 0.0
  %vm1541 = vcmp.gt.f32.partialorder %v60, 0.0
  %vm1542 = vcmp.gt.f32.partialorder %v61, 0.0
  %vm1543 = vcmp.gt.f32.partialorder %v62, 0.0
  %vm1544 = vcmp.gt.f32.partialorder %v63, 0.0
  %vm1545 = vcmp.gt.f32.partialorder %v64, 0.0
  %vm1546 = vcmp.gt.f32.partialorder %v65, 0.0
  %vm1547 = vcmp.gt.f32.partialorder %v66, 0.0
  %vm1548 = vcmp.gt.f32.partialorder %v67, 0.0
  %vm1549 = vcmp.gt.f32.partialorder %v68, 0.0
  %vm1550 = vcmp.gt.f32.partialorder %v69, 0.0
  %vm1551 = vcmp.gt.f32.partialorder %v70, 0.0
  %vm1552 = vcmp.gt.f32.partialorder %v71, 0.0
  %vm1553 = vcmp.gt.f32.partialorder %v72, 0.0
  %vm1554 = vcmp.gt.f32.partialorder %v73, 0.0
  %vm1555 = vcmp.gt.f32.partialorder %v74, 0.0
  %vm1556 = vcmp.gt.f32.partialorder %v75, 0.0
  %vm1557 = vcmp.gt.f32.partialorder %v76, 0.0
  %vm1558 = vcmp.gt.f32.partialorder %v77, 0.0
  %vm1559 = vcmp.gt.f32.partialorder %v78, 0.0
  %vm1560 = vcmp.gt.f32.partialorder %v79, 0.0
  %vm1561 = vcmp.gt.f32.partialorder %v80, 0.0
  %vm1562 = vcmp.gt.f32.partialorder %v81, 0.0
  %vm1563 = vcmp.gt.f32.partialorder %v82, 0.0
  %vm1564 = vcmp.gt.f32.partialorder %v83, 0.0
  %vm1565 = vcmp.gt.f32.partialorder %v84, 0.0
  %vm1566 = vcmp.gt.f32.partialorder %v85, 0.0
  %vm1567 = vcmp.gt.f32.partialorder %v86, 0.0
  %vm1568 = vcmp.gt.f32.partialorder %v87, 0.0
  %vm1569 = vcmp.gt.f32.partialorder %v88, 0.0
  %vm1570 = vcmp.gt.f32.partialorder %v89, 0.0
  %vm1571 = vcmp.gt.f32.partialorder %v90, 0.0
  %vm1572 = vcmp.gt.f32.partialorder %v91, 0.0
  %vm1573 = vcmp.gt.f32.partialorder %v92, 0.0
  %vm1574 = vcmp.gt.f32.partialorder %v93, 0.0
  %vm1575 = vcmp.gt.f32.partialorder %v94, 0.0
  %vm1576 = vcmp.gt.f32.partialorder %v95, 0.0
  %vm1577 = vcmp.gt.f32.partialorder %v96, 0.0
  %vm1578 = vcmp.gt.f32.partialorder %v97, 0.0
  %vm1579 = vcmp.gt.f32.partialorder %v98, 0.0
  %vm1580 = vcmp.gt.f32.partialorder %v99, 0.0
  %vm1581 = vcmp.gt.f32.partialorder %v100, 0.0
  %vm1582 = vcmp.gt.f32.partialorder %v101, 0.0
  %vm1583 = vcmp.gt.f32.partialorder %v102, 0.0
  %vm1584 = vcmp.gt.f32.partialorder %v103, 0.0
  %vm1585 = vcmp.gt.f32.partialorder %v104, 0.0
  %vm1586 = vcmp.gt.f32.partialorder %v105, 0.0
  %vm1587 = vcmp.gt.f32.partialorder %v106, 0.0
  %v1592 = vcombine.high %v359, %v359
  %v1594 = vunpack.c.l.s4 1966171168
  %v1595 = vunpack.c.0.s8 %v1594
  %v1596 = vlaneseq
  %v1597 = vshrl.u32 %v1596, 7
  %v1598 = vsub.s32 %v1595, %v1597
  %v1599 = vrot.slane %v359, %v1598
  %v1601 = vunpack.c.l.s4 1966171168
  %v1602 = vunpack.c.0.s8 %v1601
  %v1603 = vlaneseq
  %v1604 = vshrl.u32 %v1603, 7
  %v1605 = vsub.s32 %v1602, %v1604
  %v1606 = vrot.slane %v1592, %v1605
  %v1607 = vcombine.high %v1599, %v1599
  %v1608 = vcombine.high %v1606, %v1606
  %v1610 = vunpack.c.l.s4 1966171168
  %v1611 = vunpack.c.0.s8 %v1610
  %v1612 = vlaneseq
  %v1613 = vshrl.u32 %v1612, 7
  %v1614 = vsub.s32 %v1611, %v1613
  %v1615 = vrot.slane %v1599, %v1614
  %v1617 = vunpack.c.l.s4 1966171168
  %v1618 = vunpack.c.0.s8 %v1617
  %v1619 = vlaneseq
  %v1620 = vshrl.u32 %v1619, 7
  %v1621 = vsub.s32 %v1618, %v1620
  %v1622 = vrot.slane %v1606, %v1621
  %v1624 = vunpack.c.l.s4 1966171168
  %v1625 = vunpack.c.0.s8 %v1624
  %v1626 = vlaneseq
  %v1627 = vshrl.u32 %v1626, 7
  %v1628 = vsub.s32 %v1625, %v1627
  %v1629 = vrot.slane %v1607, %v1628
  %v1631 = vunpack.c.l.s4 1966171168
  %v1632 = vunpack.c.0.s8 %v1631
  %v1633 = vlaneseq
  %v1634 = vshrl.u32 %v1633, 7
  %v1635 = vsub.s32 %v1632, %v1634
  %v1636 = vrot.slane %v1608, %v1635
  %v1637 = vcombine.high %v1615, %v1615
  %v1638 = vcombine.high %v1622, %v1622
  %v1639 = vcombine.high %v1629, %v1629
  %v1640 = vcombine.high %v1636, %v1636
  %v1641 = vcombine.high %v364, %v364
  %v1643 = vunpack.c.l.s4 1966171168
  %v1644 = vunpack.c.0.s8 %v1643
  %v1645 = vlaneseq
  %v1646 = vshrl.u32 %v1645, 7
  %v1647 = vsub.s32 %v1644, %v1646
  %v1648 = vrot.slane %v364, %v1647
  %v1650 = vunpack.c.l.s4 1966171168
  %v1651 = vunpack.c.0.s8 %v1650
  %v1652 = vlaneseq
  %v1653 = vshrl.u32 %v1652, 7
  %v1654 = vsub.s32 %v1651, %v1653
  %v1655 = vrot.slane %v1641, %v1654
  %v1656 = vcombine.high %v1648, %v1648
  %v1657 = vcombine.high %v1655, %v1655
  %v1659 = vunpack.c.l.s4 1966171168
  %v1660 = vunpack.c.0.s8 %v1659
  %v1661 = vlaneseq
  %v1662 = vshrl.u32 %v1661, 7
  %v1663 = vsub.s32 %v1660, %v1662
  %v1664 = vrot.slane %v1648, %v1663
  %v1666 = vunpack.c.l.s4 1966171168
  %v1667 = vunpack.c.0.s8 %v1666
  %v1668 = vlaneseq
  %v1669 = vshrl.u32 %v1668, 7
  %v1670 = vsub.s32 %v1667, %v1669
  %v1671 = vrot.slane %v1655, %v1670
  %v1673 = vunpack.c.l.s4 1966171168
  %v1674 = vunpack.c.0.s8 %v1673
  %v1675 = vlaneseq
  %v1676 = vshrl.u32 %v1675, 7
  %v1677 = vsub.s32 %v1674, %v1676
  %v1678 = vrot.slane %v1656, %v1677
  %v1680 = vunpack.c.l.s4 1966171168
  %v1681 = vunpack.c.0.s8 %v1680
  %v1682 = vlaneseq
  %v1683 = vshrl.u32 %v1682, 7
  %v1684 = vsub.s32 %v1681, %v1683
  %v1685 = vrot.slane %v1657, %v1684
  %v1686 = vcombine.high %v1664, %v1664
  %v1687 = vcombine.high %v1671, %v1671
  %v1688 = vcombine.high %v1678, %v1678
  %v1689 = vcombine.high %v1685, %v1685
  %v1690 = vcombine.high %v369, %v369
  %v1692 = vunpack.c.l.s4 1966171168
  %v1693 = vunpack.c.0.s8 %v1692
  %v1694 = vlaneseq
  %v1695 = vshrl.u32 %v1694, 7
  %v1696 = vsub.s32 %v1693, %v1695
  %v1697 = vrot.slane %v369, %v1696
  %v1699 = vunpack.c.l.s4 1966171168
  %v1700 = vunpack.c.0.s8 %v1699
  %v1701 = vlaneseq
  %v1702 = vshrl.u32 %v1701, 7
  %v1703 = vsub.s32 %v1700, %v1702
  %v1704 = vrot.slane %v1690, %v1703
  %v1705 = vcombine.high %v1697, %v1697
  %v1706 = vcombine.high %v1704, %v1704
  %v1708 = vunpack.c.l.s4 1966171168
  %v1709 = vunpack.c.0.s8 %v1708
  %v1710 = vlaneseq
  %v1711 = vshrl.u32 %v1710, 7
  %v1712 = vsub.s32 %v1709, %v1711
  %v1713 = vrot.slane %v1697, %v1712
  %v1715 = vunpack.c.l.s4 1966171168
  %v1716 = vunpack.c.0.s8 %v1715
  %v1717 = vlaneseq
  %v1718 = vshrl.u32 %v1717, 7
  %v1719 = vsub.s32 %v1716, %v1718
  %v1720 = vrot.slane %v1704, %v1719
  %v1722 = vunpack.c.l.s4 1966171168
  %v1723 = vunpack.c.0.s8 %v1722
  %v1724 = vlaneseq
  %v1725 = vshrl.u32 %v1724, 7
  %v1726 = vsub.s32 %v1723, %v1725
  %v1727 = vrot.slane %v1705, %v1726
  %v1729 = vunpack.c.l.s4 1966171168
  %v1730 = vunpack.c.0.s8 %v1729
  %v1731 = vlaneseq
  %v1732 = vshrl.u32 %v1731, 7
  %v1733 = vsub.s32 %v1730, %v1732
  %v1734 = vrot.slane %v1706, %v1733
  %v1735 = vcombine.high %v1713, %v1713
  %v1736 = vcombine.high %v1720, %v1720
  %v1737 = vcombine.high %v1727, %v1727
  %v1738 = vcombine.high %v1734, %v1734
  %v1739 = vcombine.high %v374, %v374
  %v1741 = vunpack.c.l.s4 1966171168
  %v1742 = vunpack.c.0.s8 %v1741
  %v1743 = vlaneseq
  %v1744 = vshrl.u32 %v1743, 7
  %v1745 = vsub.s32 %v1742, %v1744
  %v1746 = vrot.slane %v374, %v1745
  %v1748 = vunpack.c.l.s4 1966171168
  %v1749 = vunpack.c.0.s8 %v1748
  %v1750 = vlaneseq
  %v1751 = vshrl.u32 %v1750, 7
  %v1752 = vsub.s32 %v1749, %v1751
  %v1753 = vrot.slane %v1739, %v1752
  %v1754 = vcombine.high %v1746, %v1746
  %v1755 = vcombine.high %v1753, %v1753
  %v1757 = vunpack.c.l.s4 1966171168
  %v1758 = vunpack.c.0.s8 %v1757
  %v1759 = vlaneseq
  %v1760 = vshrl.u32 %v1759, 7
  %v1761 = vsub.s32 %v1758, %v1760
  %v1762 = vrot.slane %v1746, %v1761
  %v1764 = vunpack.c.l.s4 1966171168
  %v1765 = vunpack.c.0.s8 %v1764
  %v1766 = vlaneseq
  %v1767 = vshrl.u32 %v1766, 7
  %v1768 = vsub.s32 %v1765, %v1767
  %v1769 = vrot.slane %v1753, %v1768
  %v1771 = vunpack.c.l.s4 1966171168
  %v1772 = vunpack.c.0.s8 %v1771
  %v1773 = vlaneseq
  %v1774 = vshrl.u32 %v1773, 7
  %v1775 = vsub.s32 %v1772, %v1774
  %v1776 = vrot.slane %v1754, %v1775
  %v1778 = vunpack.c.l.s4 1966171168
  %v1779 = vunpack.c.0.s8 %v1778
  %v1780 = vlaneseq
  %v1781 = vshrl.u32 %v1780, 7
  %v1782 = vsub.s32 %v1779, %v1781
  %v1783 = vrot.slane %v1755, %v1782
  %v1784 = vcombine.high %v1762, %v1762
  %v1785 = vcombine.high %v1769, %v1769
  %v1786 = vcombine.high %v1776, %v1776
  %v1787 = vcombine.high %v1783, %v1783
  %v1788 = vlaneseq
  %v1789 = vshrl.u32 %v1788, 7
  %v1790 = vsub.s32 0, %v1789
  %v1791 = vrot.slane %v1615, %v1790
  %v1792 = vlaneseq
  %v1793 = vshrl.u32 %v1792, 7
  %v1794 = vsub.s32 0, %v1793
  %v1795 = vrot.slane %v1629, %v1794
  %v1796 = vlaneseq
  %v1797 = vshrl.u32 %v1796, 7
  %v1798 = vsub.s32 0, %v1797
  %v1799 = vrot.slane %v1637, %v1798
  %v1800 = vlaneseq
  %v1801 = vshrl.u32 %v1800, 7
  %v1802 = vsub.s32 0, %v1801
  %v1803 = vrot.slane %v1639, %v1802
  %v1804 = vlaneseq
  %v1805 = vshrl.u32 %v1804, 7
  %v1806 = vsub.s32 0, %v1805
  %v1807 = vrot.slane %v1622, %v1806
  %v1808 = vlaneseq
  %v1809 = vshrl.u32 %v1808, 7
  %v1810 = vsub.s32 0, %v1809
  %v1811 = vrot.slane %v1636, %v1810
  %v1812 = vlaneseq
  %v1813 = vshrl.u32 %v1812, 7
  %v1814 = vsub.s32 0, %v1813
  %v1815 = vrot.slane %v1638, %v1814
  %v1816 = vlaneseq
  %v1817 = vshrl.u32 %v1816, 7
  %v1818 = vsub.s32 0, %v1817
  %v1819 = vrot.slane %v1640, %v1818
  %v1820 = vlaneseq
  %v1821 = vshrl.u32 %v1820, 7
  %v1822 = vsub.s32 0, %v1821
  %v1823 = vrot.slane %v1664, %v1822
  %v1824 = vlaneseq
  %v1825 = vshrl.u32 %v1824, 7
  %v1826 = vsub.s32 0, %v1825
  %v1827 = vrot.slane %v1678, %v1826
  %v1828 = vlaneseq
  %v1829 = vshrl.u32 %v1828, 7
  %v1830 = vsub.s32 0, %v1829
  %v1831 = vrot.slane %v1686, %v1830
  %v1832 = vlaneseq
  %v1833 = vshrl.u32 %v1832, 7
  %v1834 = vsub.s32 0, %v1833
  %v1835 = vrot.slane %v1688, %v1834
  %v1836 = vlaneseq
  %v1837 = vshrl.u32 %v1836, 7
  %v1838 = vsub.s32 0, %v1837
  %v1839 = vrot.slane %v1671, %v1838
  %v1840 = vlaneseq
  %v1841 = vshrl.u32 %v1840, 7
  %v1842 = vsub.s32 0, %v1841
  %v1843 = vrot.slane %v1685, %v1842
  %v1844 = vlaneseq
  %v1845 = vshrl.u32 %v1844, 7
  %v1846 = vsub.s32 0, %v1845
  %v1847 = vrot.slane %v1687, %v1846
  %v1848 = vlaneseq
  %v1849 = vshrl.u32 %v1848, 7
  %v1850 = vsub.s32 0, %v1849
  %v1851 = vrot.slane %v1689, %v1850
  %v1852 = vlaneseq
  %v1853 = vshrl.u32 %v1852, 7
  %v1854 = vsub.s32 0, %v1853
  %v1855 = vrot.slane %v1713, %v1854
  %v1856 = vlaneseq
  %v1857 = vshrl.u32 %v1856, 7
  %v1858 = vsub.s32 0, %v1857
  %v1859 = vrot.slane %v1727, %v1858
  %v1860 = vlaneseq
  %v1861 = vshrl.u32 %v1860, 7
  %v1862 = vsub.s32 0, %v1861
  %v1863 = vrot.slane %v1735, %v1862
  %v1864 = vlaneseq
  %v1865 = vshrl.u32 %v1864, 7
  %v1866 = vsub.s32 0, %v1865
  %v1867 = vrot.slane %v1737, %v1866
  %v1868 = vlaneseq
  %v1869 = vshrl.u32 %v1868, 7
  %v1870 = vsub.s32 0, %v1869
  %v1871 = vrot.slane %v1720, %v1870
  %v1872 = vlaneseq
  %v1873 = vshrl.u32 %v1872, 7
  %v1874 = vsub.s32 0, %v1873
  %v1875 = vrot.slane %v1734, %v1874
  %v1876 = vlaneseq
  %v1877 = vshrl.u32 %v1876, 7
  %v1878 = vsub.s32 0, %v1877
  %v1879 = vrot.slane %v1736, %v1878
  %v1880 = vlaneseq
  %v1881 = vshrl.u32 %v1880, 7
  %v1882 = vsub.s32 0, %v1881
  %v1883 = vrot.slane %v1738, %v1882
  %v1884 = vlaneseq
  %v1885 = vshrl.u32 %v1884, 7
  %v1886 = vsub.s32 0, %v1885
  %v1887 = vrot.slane %v1762, %v1886
  %v1888 = vlaneseq
  %v1889 = vshrl.u32 %v1888, 7
  %v1890 = vsub.s32 0, %v1889
  %v1891 = vrot.slane %v1776, %v1890
  %v1892 = vlaneseq
  %v1893 = vshrl.u32 %v1892, 7
  %v1894 = vsub.s32 0, %v1893
  %v1895 = vrot.slane %v1784, %v1894
  %v1896 = vlaneseq
  %v1897 = vshrl.u32 %v1896, 7
  %v1898 = vsub.s32 0, %v1897
  %v1899 = vrot.slane %v1786, %v1898
  %v1900 = vlaneseq
  %v1901 = vshrl.u32 %v1900, 7
  %v1902 = vsub.s32 0, %v1901
  %v1903 = vrot.slane %v1769, %v1902
  %v1904 = vlaneseq
  %v1905 = vshrl.u32 %v1904, 7
  %v1906 = vsub.s32 0, %v1905
  %v1907 = vrot.slane %v1783, %v1906
  %v1908 = vlaneseq
  %v1909 = vshrl.u32 %v1908, 7
  %v1910 = vsub.s32 0, %v1909
  %v1911 = vrot.slane %v1785, %v1910
  %v1912 = vlaneseq
  %v1913 = vshrl.u32 %v1912, 7
  %v1914 = vsub.s32 0, %v1913
  %v1915 = vrot.slane %v1787, %v1914
  %v1948 = vadd.f32 %v1791, %v476
  %v1949 = vadd.f32 %v1791, %v481
  %v1950 = vadd.f32 %v1795, %v476
  %v1951 = vadd.f32 %v1795, %v481
  %v1952 = vadd.f32 %v1799, %v476
  %v1953 = vadd.f32 %v1799, %v481
  %v1954 = vadd.f32 %v1803, %v476
  %v1955 = vadd.f32 %v1803, %v481
  %v1956 = vadd.f32 %v1807, %v476
  %v1957 = vadd.f32 %v1807, %v481
  %v1958 = vadd.f32 %v1811, %v476
  %v1959 = vadd.f32 %v1811, %v481
  %v1960 = vadd.f32 %v1815, %v476
  %v1961 = vadd.f32 %v1815, %v481
  %v1962 = vadd.f32 %v1819, %v476
  %v1963 = vadd.f32 %v1819, %v481
  %v1964 = vadd.f32 %v1823, %v476
  %v1965 = vadd.f32 %v1823, %v481
  %v1966 = vadd.f32 %v1827, %v476
  %v1967 = vadd.f32 %v1827, %v481
  %v1968 = vadd.f32 %v1831, %v476
  %v1969 = vadd.f32 %v1831, %v481
  %v1970 = vadd.f32 %v1835, %v476
  %v1971 = vadd.f32 %v1835, %v481
  %v1972 = vadd.f32 %v1839, %v476
  %v1973 = vadd.f32 %v1839, %v481
  %v1974 = vadd.f32 %v1843, %v476
  %v1975 = vadd.f32 %v1843, %v481
  %v1976 = vadd.f32 %v1847, %v476
  %v1977 = vadd.f32 %v1847, %v481
  %v1978 = vadd.f32 %v1851, %v476
  %v1979 = vadd.f32 %v1851, %v481
  %v1980 = vadd.f32 %v1855, %v486
  %v1981 = vadd.f32 %v1855, %v491
  %v1982 = vadd.f32 %v1859, %v486
  %v1983 = vadd.f32 %v1859, %v491
  %v1984 = vadd.f32 %v1863, %v486
  %v1985 = vadd.f32 %v1863, %v491
  %v1986 = vadd.f32 %v1867, %v486
  %v1987 = vadd.f32 %v1867, %v491
  %v1988 = vadd.f32 %v1871, %v486
  %v1989 = vadd.f32 %v1871, %v491
  %v1990 = vadd.f32 %v1875, %v486
  %v1991 = vadd.f32 %v1875, %v491
  %v1992 = vadd.f32 %v1879, %v486
  %v1993 = vadd.f32 %v1879, %v491
  %v1994 = vadd.f32 %v1883, %v486
  %v1995 = vadd.f32 %v1883, %v491
  %v1996 = vadd.f32 %v1887, %v486
  %v1997 = vadd.f32 %v1887, %v491
  %v1998 = vadd.f32 %v1891, %v486
  %v1999 = vadd.f32 %v1891, %v491
  %v2000 = vadd.f32 %v1895, %v486
  %v2001 = vadd.f32 %v1895, %v491
  %v2002 = vadd.f32 %v1899, %v486
  %v2003 = vadd.f32 %v1899, %v491
  %v2004 = vadd.f32 %v1903, %v486
  %v2005 = vadd.f32 %v1903, %v491
  %v2006 = vadd.f32 %v1907, %v486
  %v2007 = vadd.f32 %v1907, %v491
  %v2008 = vadd.f32 %v1911, %v486
  %v2009 = vadd.f32 %v1911, %v491
  %v2010 = vadd.f32 %v1915, %v486
  %v2011 = vadd.f32 %v1915, %v491
  %v2012 = vmul.f32 %v1948, %v755
  %v2013 = vmul.f32 %v1949, %v760
  %v2014 = vmul.f32 %v1950, %v765
  %v2015 = vmul.f32 %v1951, %v770
  %v2016 = vmul.f32 %v1952, %v775
  %v2017 = vmul.f32 %v1953, %v780
  %v2018 = vmul.f32 %v1954, %v785
  %v2019 = vmul.f32 %v1955, %v790
  %v2020 = vmul.f32 %v1956, %v795
  %v2021 = vmul.f32 %v1957, %v800
  %v2022 = vmul.f32 %v1958, %v805
  %v2023 = vmul.f32 %v1959, %v810
  %v2024 = vmul.f32 %v1960, %v815
  %v2025 = vmul.f32 %v1961, %v820
  %v2026 = vmul.f32 %v1962, %v825
  %v2027 = vmul.f32 %v1963, %v830
  %v2028 = vmul.f32 %v1964, %v835
  %v2029 = vmul.f32 %v1965, %v840
  %v2030 = vmul.f32 %v1966, %v845
  %v2031 = vmul.f32 %v1967, %v850
  %v2032 = vmul.f32 %v1968, %v855
  %v2033 = vmul.f32 %v1969, %v860
  %v2034 = vmul.f32 %v1970, %v865
  %v2035 = vmul.f32 %v1971, %v870
  %v2036 = vmul.f32 %v1972, %v875
  %v2037 = vmul.f32 %v1973, %v880
  %v2038 = vmul.f32 %v1974, %v885
  %v2039 = vmul.f32 %v1975, %v890
  %v2040 = vmul.f32 %v1976, %v895
  %v2041 = vmul.f32 %v1977, %v900
  %v2042 = vmul.f32 %v1978, %v905
  %v2043 = vmul.f32 %v1979, %v910
  %v2044 = vmul.f32 %v1980, %v915
  %v2045 = vmul.f32 %v1981, %v920
  %v2046 = vmul.f32 %v1982, %v925
  %v2047 = vmul.f32 %v1983, %v930
  %v2048 = vmul.f32 %v1984, %v935
  %v2049 = vmul.f32 %v1985, %v940
  %v2050 = vmul.f32 %v1986, %v945
  %v2051 = vmul.f32 %v1987, %v950
  %v2052 = vmul.f32 %v1988, %v955
  %v2053 = vmul.f32 %v1989, %v960
  %v2054 = vmul.f32 %v1990, %v965
  %v2055 = vmul.f32 %v1991, %v970
  %v2056 = vmul.f32 %v1992, %v975
  %v2057 = vmul.f32 %v1993, %v980
  %v2058 = vmul.f32 %v1994, %v985
  %v2059 = vmul.f32 %v1995, %v990
  %v2060 = vmul.f32 %v1996, %v995
  %v2061 = vmul.f32 %v1997, %v1000
  %v2062 = vmul.f32 %v1998, %v1005
  %v2063 = vmul.f32 %v1999, %v1010
  %v2064 = vmul.f32 %v2000, %v1015
  %v2065 = vmul.f32 %v2001, %v1020
  %v2066 = vmul.f32 %v2002, %v1025
  %v2067 = vmul.f32 %v2003, %v1030
  %v2068 = vmul.f32 %v2004, %v1035
  %v2069 = vmul.f32 %v2005, %v1040
  %v2070 = vmul.f32 %v2006, %v1045
  %v2071 = vmul.f32 %v2007, %v1050
  %v2072 = vmul.f32 %v2008, %v1055
  %v2073 = vmul.f32 %v2009, %v1060
  %v2074 = vmul.f32 %v2010, %v1065
  %v2075 = vmul.f32 %v2011, %v1070
  %v2076 = vld [vmem:[%s8] sm:$0xff]
  %v2077 = vld [vmem:[%s8 + $0x8] sm:$0xff]
  %v2078 = vld [vmem:[%s8 + $0x10] sm:$0xff]
  %v2079 = vld [vmem:[%s8 + $0x18] sm:$0xff]
  %vm2080 = vcmask 261120
  %v2082 = vsel %vm2080, %v2012, 0
  %v2085 = vsel %vm2080, %v2013, 0
  %v2088 = vsel %vm2080, %v2014, 0
  %v2091 = vsel %vm2080, %v2015, 0
  %v2094 = vsel %vm2080, %v2016, 0
  %v2097 = vsel %vm2080, %v2017, 0
  %v2100 = vsel %vm2080, %v2018, 0
  %v2103 = vsel %vm2080, %v2019, 0
  %v2106 = vsel %vm2080, %v2020, 0
  %v2109 = vsel %vm2080, %v2021, 0
  %v2112 = vsel %vm2080, %v2022, 0
  %v2115 = vsel %vm2080, %v2023, 0
  %v2118 = vsel %vm2080, %v2024, 0
  %v2121 = vsel %vm2080, %v2025, 0
  %v2124 = vsel %vm2080, %v2026, 0
  %v2127 = vsel %vm2080, %v2027, 0
  %v2130 = vsel %vm2080, %v2028, 0
  %v2133 = vsel %vm2080, %v2029, 0
  %v2136 = vsel %vm2080, %v2030, 0
  %v2139 = vsel %vm2080, %v2031, 0
  %v2142 = vsel %vm2080, %v2032, 0
  %v2145 = vsel %vm2080, %v2033, 0
  %v2148 = vsel %vm2080, %v2034, 0
  %v2151 = vsel %vm2080, %v2035, 0
  %v2154 = vsel %vm2080, %v2036, 0
  %v2157 = vsel %vm2080, %v2037, 0
  %v2160 = vsel %vm2080, %v2038, 0
  %v2163 = vsel %vm2080, %v2039, 0
  %v2166 = vsel %vm2080, %v2040, 0
  %v2169 = vsel %vm2080, %v2041, 0
  %v2172 = vsel %vm2080, %v2042, 0
  %v2175 = vsel %vm2080, %v2043, 0
  %v2178 = vsel %vm2080, %v2044, 0
  %v2181 = vsel %vm2080, %v2045, 0
  %v2184 = vsel %vm2080, %v2046, 0
  %v2187 = vsel %vm2080, %v2047, 0
  %v2190 = vsel %vm2080, %v2048, 0
  %v2193 = vsel %vm2080, %v2049, 0
  %v2196 = vsel %vm2080, %v2050, 0
  %v2199 = vsel %vm2080, %v2051, 0
  %v2202 = vsel %vm2080, %v2052, 0
  %v2205 = vsel %vm2080, %v2053, 0
  %v2208 = vsel %vm2080, %v2054, 0
  %v2211 = vsel %vm2080, %v2055, 0
  %v2214 = vsel %vm2080, %v2056, 0
  %v2217 = vsel %vm2080, %v2057, 0
  %v2220 = vsel %vm2080, %v2058, 0
  %v2223 = vsel %vm2080, %v2059, 0
  %v2226 = vsel %vm2080, %v2060, 0
  %v2229 = vsel %vm2080, %v2061, 0
  %v2232 = vsel %vm2080, %v2062, 0
  %v2235 = vsel %vm2080, %v2063, 0
  %v2238 = vsel %vm2080, %v2064, 0
  %v2241 = vsel %vm2080, %v2065, 0
  %v2244 = vsel %vm2080, %v2066, 0
  %v2247 = vsel %vm2080, %v2067, 0
  %v2250 = vsel %vm2080, %v2068, 0
  %v2253 = vsel %vm2080, %v2069, 0
  %v2256 = vsel %vm2080, %v2070, 0
  %v2259 = vsel %vm2080, %v2071, 0
  %v2262 = vsel %vm2080, %v2072, 0
  %v2265 = vsel %vm2080, %v2073, 0
  %v2268 = vsel %vm2080, %v2074, 0
  %v2271 = vsel %vm2080, %v2075, 0
  %2273 = vmatprep.subr.mxu0 0.0
  %2274 = vmatpush1.msra.mxu0 0.0
  %2275 = vmatprep.subr.mxu0 0.0
  %2276 = vmatpush1.msra.mxu0 0.0
  %2277 = vmatprep.subr.mxu0 0.0
  %2278 = vmatpush1.msra.mxu0 0.0
  %2279 = vmatprep.subr.mxu0 0.0
  %2280 = vmatpush1.msra.mxu0 0.0
  %2281 = vmatprep.subr.mxu0 0.0
  %2282 = vmatpush1.msra.mxu0 0.0
  %2283 = vmatprep.subr.mxu0 0.0
  %2284 = vmatpush1.msra.mxu0 0.0
  %2285 = vmatprep.subr.mxu0 0.0
  %2286 = vmatpush1.msra.mxu0 0.0
  %2287 = vmatprep.subr.mxu0 0.0
  %2288 = vmatpush1.msra.mxu0 0.0
  %2289 = vmatprep.subr.mxu0 0.0
  %2290 = vmatpush1.msra.mxu0 0.0
  %2291 = vmatprep.subr.mxu0 0.0
  %2292 = vmatpush1.msra.mxu0 0.0
  %2293 = vmatprep.subr.mxu0 0.0
  %2294 = vmatpush1.msra.mxu0 0.0
  %2295 = vmatprep.subr.mxu0 0.0
  %2296 = vmatpush1.msra.mxu0 0.0
  %2297 = vmatprep.subr.mxu0 0.0
  %2298 = vmatpush1.msra.mxu0 %v2079
  %2299 = vmatprep.subr.mxu0 0.0
  %2300 = vmatpush1.msra.mxu0 %v2078
  %2301 = vmatprep.subr.mxu0 0.0
  %2302 = vmatpush1.msra.mxu0 %v2077
  %2303 = vmatprep.subr.mxu0 0.0
  %2304 = vmatpush1.msra.mxu0 %v2076
  %2305 = vmatprep.subr.mxu0 0.0
  %2306 = vmatpush2.msra.mxu0 0.0
  %2307 = vmatprep.subr.mxu0 0.0
  %2308 = vmatpush2.msra.mxu0 0.0
  %2309 = vmatprep.subr.mxu0 0.0
  %2310 = vmatpush2.msra.mxu0 0.0
  %2311 = vmatprep.subr.mxu0 0.0
  %2312 = vmatpush2.msra.mxu0 0.0
  %2313 = vmatprep.subr.mxu0 0.0
  %2314 = vmatpush2.msra.mxu0 0.0
  %2315 = vmatprep.subr.mxu0 0.0
  %2316 = vmatpush2.msra.mxu0 0.0
  %2317 = vmatprep.subr.mxu0 0.0
  %2318 = vmatpush2.msra.mxu0 0.0
  %2319 = vmatprep.subr.mxu0 0.0
  %2320 = vmatpush2.msra.mxu0 0.0
  %2321 = vmatprep.subr.mxu0 0.0
  %2322 = vmatpush2.msra.mxu0 0.0
  %2323 = vmatprep.subr.mxu0 0.0
  %2324 = vmatpush2.msra.mxu0 0.0
  %2325 = vmatprep.subr.mxu0 0.0
  %2326 = vmatpush2.msra.mxu0 0.0
  %2327 = vmatprep.subr.mxu0 0.0
  %2328 = vmatpush2.msra.mxu0 0.0
  %2329 = vmatprep.subr.mxu0 0.0
  %2330 = vmatpush2.msra.mxu0 0.0
  %2331 = vmatprep.subr.mxu0 0.0
  %2332 = vmatpush2.msra.mxu0 0.0
  %2333 = vmatprep.subr.mxu0 0.0
  %2334 = vmatpush2.msra.mxu0 0.0
  %2335 = vmatprep.subr.mxu0 0.0
  %2336 = vmatpush2.msra.mxu0 0.0
  %2337 = vmatprep.mubr.f32.mxu0 0.0
  %2338 = vmatmul.mubr.f32.gmra.mxu0 %v2082
  %v2339 = vpop.f32.mrf.mxu0
  %v2340 = vadd.f32 0.0, %v2339
  %v2341 = vpop.f32.mrf.mxu0
  %2342 = vmatprep.mubr.f32.mxu0 0.0
  %2343 = vmatmul.mubr.f32.gmra.mxu0 %v2085
  %v2344 = vpop.f32.mrf.mxu0
  %v2345 = vadd.f32 0.0, %v2344
  %v2346 = vpop.f32.mrf.mxu0
  %2347 = vmatprep.mubr.f32.mxu0 0.0
  %2348 = vmatmul.mubr.f32.gmra.mxu0 %v2088
  %v2349 = vpop.f32.mrf.mxu0
  %v2350 = vadd.f32 0.0, %v2349
  %v2351 = vpop.f32.mrf.mxu0
  %2352 = vmatprep.mubr.f32.mxu0 0.0
  %2353 = vmatmul.mubr.f32.gmra.mxu0 %v2091
  %v2354 = vpop.f32.mrf.mxu0
  %v2355 = vadd.f32 0.0, %v2354
  %v2356 = vpop.f32.mrf.mxu0
  %2357 = vmatprep.mubr.f32.mxu0 0.0
  %2358 = vmatmul.mubr.f32.gmra.mxu0 %v2094
  %v2359 = vpop.f32.mrf.mxu0
  %v2360 = vadd.f32 0.0, %v2359
  %v2361 = vpop.f32.mrf.mxu0
  %2362 = vmatprep.mubr.f32.mxu0 0.0
  %2363 = vmatmul.mubr.f32.gmra.mxu0 %v2097
  %v2364 = vpop.f32.mrf.mxu0
  %v2365 = vadd.f32 0.0, %v2364
  %v2366 = vpop.f32.mrf.mxu0
  %2367 = vmatprep.mubr.f32.mxu0 0.0
  %2368 = vmatmul.mubr.f32.gmra.mxu0 %v2100
  %v2369 = vpop.f32.mrf.mxu0
  %v2370 = vadd.f32 0.0, %v2369
  %v2371 = vpop.f32.mrf.mxu0
  %2372 = vmatprep.mubr.f32.mxu0 0.0
  %2373 = vmatmul.mubr.f32.gmra.mxu0 %v2103
  %v2374 = vpop.f32.mrf.mxu0
  %v2375 = vadd.f32 0.0, %v2374
  %v2376 = vpop.f32.mrf.mxu0
  %2377 = vmatprep.mubr.f32.mxu0 0.0
  %2378 = vmatmul.mubr.f32.gmra.mxu0 %v2106
  %v2379 = vpop.f32.mrf.mxu0
  %v2380 = vadd.f32 0.0, %v2379
  %v2381 = vpop.f32.mrf.mxu0
  %2382 = vmatprep.mubr.f32.mxu0 0.0
  %2383 = vmatmul.mubr.f32.gmra.mxu0 %v2109
  %v2384 = vpop.f32.mrf.mxu0
  %v2385 = vadd.f32 0.0, %v2384
  %v2386 = vpop.f32.mrf.mxu0
  %2387 = vmatprep.mubr.f32.mxu0 0.0
  %2388 = vmatmul.mubr.f32.gmra.mxu0 %v2112
  %v2389 = vpop.f32.mrf.mxu0
  %v2390 = vadd.f32 0.0, %v2389
  %v2391 = vpop.f32.mrf.mxu0
  %2392 = vmatprep.mubr.f32.mxu0 0.0
  %2393 = vmatmul.mubr.f32.gmra.mxu0 %v2115
  %v2394 = vpop.f32.mrf.mxu0
  %v2395 = vadd.f32 0.0, %v2394
  %v2396 = vpop.f32.mrf.mxu0
  %2397 = vmatprep.mubr.f32.mxu0 0.0
  %2398 = vmatmul.mubr.f32.gmra.mxu0 %v2118
  %v2399 = vpop.f32.mrf.mxu0
  %v2400 = vadd.f32 0.0, %v2399
  %v2401 = vpop.f32.mrf.mxu0
  %2402 = vmatprep.mubr.f32.mxu0 0.0
  %2403 = vmatmul.mubr.f32.gmra.mxu0 %v2121
  %v2404 = vpop.f32.mrf.mxu0
  %v2405 = vadd.f32 0.0, %v2404
  %v2406 = vpop.f32.mrf.mxu0
  %2407 = vmatprep.mubr.f32.mxu0 0.0
  %2408 = vmatmul.mubr.f32.gmra.mxu0 %v2124
  %v2409 = vpop.f32.mrf.mxu0
  %v2410 = vadd.f32 0.0, %v2409
  %v2411 = vpop.f32.mrf.mxu0
  %2412 = vmatprep.mubr.f32.mxu0 0.0
  %2413 = vmatmul.mubr.f32.gmra.mxu0 %v2127
  %v2414 = vpop.f32.mrf.mxu0
  %v2415 = vadd.f32 0.0, %v2414
  %v2416 = vpop.f32.mrf.mxu0
  %2417 = vmatprep.mubr.f32.mxu0 0.0
  %2418 = vmatmul.mubr.f32.gmra.mxu0 %v2130
  %v2419 = vpop.f32.mrf.mxu0
  %v2420 = vadd.f32 0.0, %v2419
  %v2421 = vpop.f32.mrf.mxu0
  %2422 = vmatprep.mubr.f32.mxu0 0.0
  %2423 = vmatmul.mubr.f32.gmra.mxu0 %v2133
  %v2424 = vpop.f32.mrf.mxu0
  %v2425 = vadd.f32 0.0, %v2424
  %v2426 = vpop.f32.mrf.mxu0
  %2427 = vmatprep.mubr.f32.mxu0 0.0
  %2428 = vmatmul.mubr.f32.gmra.mxu0 %v2136
  %v2429 = vpop.f32.mrf.mxu0
  %v2430 = vadd.f32 0.0, %v2429
  %v2431 = vpop.f32.mrf.mxu0
  %2432 = vmatprep.mubr.f32.mxu0 0.0
  %2433 = vmatmul.mubr.f32.gmra.mxu0 %v2139
  %v2434 = vpop.f32.mrf.mxu0
  %v2435 = vadd.f32 0.0, %v2434
  %v2436 = vpop.f32.mrf.mxu0
  %2437 = vmatprep.mubr.f32.mxu0 0.0
  %2438 = vmatmul.mubr.f32.gmra.mxu0 %v2142
  %v2439 = vpop.f32.mrf.mxu0
  %v2440 = vadd.f32 0.0, %v2439
  %v2441 = vpop.f32.mrf.mxu0
  %2442 = vmatprep.mubr.f32.mxu0 0.0
  %2443 = vmatmul.mubr.f32.gmra.mxu0 %v2145
  %v2444 = vpop.f32.mrf.mxu0
  %v2445 = vadd.f32 0.0, %v2444
  %v2446 = vpop.f32.mrf.mxu0
  %2447 = vmatprep.mubr.f32.mxu0 0.0
  %2448 = vmatmul.mubr.f32.gmra.mxu0 %v2148
  %v2449 = vpop.f32.mrf.mxu0
  %v2450 = vadd.f32 0.0, %v2449
  %v2451 = vpop.f32.mrf.mxu0
  %2452 = vmatprep.mubr.f32.mxu0 0.0
  %2453 = vmatmul.mubr.f32.gmra.mxu0 %v2151
  %v2454 = vpop.f32.mrf.mxu0
  %v2455 = vadd.f32 0.0, %v2454
  %v2456 = vpop.f32.mrf.mxu0
  %2457 = vmatprep.mubr.f32.mxu0 0.0
  %2458 = vmatmul.mubr.f32.gmra.mxu0 %v2154
  %v2459 = vpop.f32.mrf.mxu0
  %v2460 = vadd.f32 0.0, %v2459
  %v2461 = vpop.f32.mrf.mxu0
  %2462 = vmatprep.mubr.f32.mxu0 0.0
  %2463 = vmatmul.mubr.f32.gmra.mxu0 %v2157
  %v2464 = vpop.f32.mrf.mxu0
  %v2465 = vadd.f32 0.0, %v2464
  %v2466 = vpop.f32.mrf.mxu0
  %2467 = vmatprep.mubr.f32.mxu0 0.0
  %2468 = vmatmul.mubr.f32.gmra.mxu0 %v2160
  %v2469 = vpop.f32.mrf.mxu0
  %v2470 = vadd.f32 0.0, %v2469
  %v2471 = vpop.f32.mrf.mxu0
  %2472 = vmatprep.mubr.f32.mxu0 0.0
  %2473 = vmatmul.mubr.f32.gmra.mxu0 %v2163
  %v2474 = vpop.f32.mrf.mxu0
  %v2475 = vadd.f32 0.0, %v2474
  %v2476 = vpop.f32.mrf.mxu0
  %2477 = vmatprep.mubr.f32.mxu0 0.0
  %2478 = vmatmul.mubr.f32.gmra.mxu0 %v2166
  %v2479 = vpop.f32.mrf.mxu0
  %v2480 = vadd.f32 0.0, %v2479
  %v2481 = vpop.f32.mrf.mxu0
  %2482 = vmatprep.mubr.f32.mxu0 0.0
  %2483 = vmatmul.mubr.f32.gmra.mxu0 %v2169
  %v2484 = vpop.f32.mrf.mxu0
  %v2485 = vadd.f32 0.0, %v2484
  %v2486 = vpop.f32.mrf.mxu0
  %2487 = vmatprep.mubr.f32.mxu0 0.0
  %2488 = vmatmul.mubr.f32.gmra.mxu0 %v2172
  %v2489 = vpop.f32.mrf.mxu0
  %v2490 = vadd.f32 0.0, %v2489
  %v2491 = vpop.f32.mrf.mxu0
  %2492 = vmatprep.mubr.f32.mxu0 0.0
  %2493 = vmatmul.mubr.f32.gmra.mxu0 %v2175
  %v2494 = vpop.f32.mrf.mxu0
  %v2495 = vadd.f32 0.0, %v2494
  %v2496 = vpop.f32.mrf.mxu0
  %2497 = vmatprep.mubr.f32.mxu0 0.0
  %2498 = vmatmul.mubr.f32.gmra.mxu0 %v2178
  %v2499 = vpop.f32.mrf.mxu0
  %v2500 = vadd.f32 0.0, %v2499
  %v2501 = vpop.f32.mrf.mxu0
  %2502 = vmatprep.mubr.f32.mxu0 0.0
  %2503 = vmatmul.mubr.f32.gmra.mxu0 %v2181
  %v2504 = vpop.f32.mrf.mxu0
  %v2505 = vadd.f32 0.0, %v2504
  %v2506 = vpop.f32.mrf.mxu0
  %2507 = vmatprep.mubr.f32.mxu0 0.0
  %2508 = vmatmul.mubr.f32.gmra.mxu0 %v2184
  %v2509 = vpop.f32.mrf.mxu0
  %v2510 = vadd.f32 0.0, %v2509
  %v2511 = vpop.f32.mrf.mxu0
  %2512 = vmatprep.mubr.f32.mxu0 0.0
  %2513 = vmatmul.mubr.f32.gmra.mxu0 %v2187
  %v2514 = vpop.f32.mrf.mxu0
  %v2515 = vadd.f32 0.0, %v2514
  %v2516 = vpop.f32.mrf.mxu0
  %2517 = vmatprep.mubr.f32.mxu0 0.0
  %2518 = vmatmul.mubr.f32.gmra.mxu0 %v2190
  %v2519 = vpop.f32.mrf.mxu0
  %v2520 = vadd.f32 0.0, %v2519
  %v2521 = vpop.f32.mrf.mxu0
  %2522 = vmatprep.mubr.f32.mxu0 0.0
  %2523 = vmatmul.mubr.f32.gmra.mxu0 %v2193
  %v2524 = vpop.f32.mrf.mxu0
  %v2525 = vadd.f32 0.0, %v2524
  %v2526 = vpop.f32.mrf.mxu0
  %2527 = vmatprep.mubr.f32.mxu0 0.0
  %2528 = vmatmul.mubr.f32.gmra.mxu0 %v2196
  %v2529 = vpop.f32.mrf.mxu0
  %v2530 = vadd.f32 0.0, %v2529
  %v2531 = vpop.f32.mrf.mxu0
  %2532 = vmatprep.mubr.f32.mxu0 0.0
  %2533 = vmatmul.mubr.f32.gmra.mxu0 %v2199
  %v2534 = vpop.f32.mrf.mxu0
  %v2535 = vadd.f32 0.0, %v2534
  %v2536 = vpop.f32.mrf.mxu0
  %2537 = vmatprep.mubr.f32.mxu0 0.0
  %2538 = vmatmul.mubr.f32.gmra.mxu0 %v2202
  %v2539 = vpop.f32.mrf.mxu0
  %v2540 = vadd.f32 0.0, %v2539
  %v2541 = vpop.f32.mrf.mxu0
  %2542 = vmatprep.mubr.f32.mxu0 0.0
  %2543 = vmatmul.mubr.f32.gmra.mxu0 %v2205
  %v2544 = vpop.f32.mrf.mxu0
  %v2545 = vadd.f32 0.0, %v2544
  %v2546 = vpop.f32.mrf.mxu0
  %2547 = vmatprep.mubr.f32.mxu0 0.0
  %2548 = vmatmul.mubr.f32.gmra.mxu0 %v2208
  %v2549 = vpop.f32.mrf.mxu0
  %v2550 = vadd.f32 0.0, %v2549
  %v2551 = vpop.f32.mrf.mxu0
  %2552 = vmatprep.mubr.f32.mxu0 0.0
  %2553 = vmatmul.mubr.f32.gmra.mxu0 %v2211
  %v2554 = vpop.f32.mrf.mxu0
  %v2555 = vadd.f32 0.0, %v2554
  %v2556 = vpop.f32.mrf.mxu0
  %2557 = vmatprep.mubr.f32.mxu0 0.0
  %2558 = vmatmul.mubr.f32.gmra.mxu0 %v2214
  %v2559 = vpop.f32.mrf.mxu0
  %v2560 = vadd.f32 0.0, %v2559
  %v2561 = vpop.f32.mrf.mxu0
  %2562 = vmatprep.mubr.f32.mxu0 0.0
  %2563 = vmatmul.mubr.f32.gmra.mxu0 %v2217
  %v2564 = vpop.f32.mrf.mxu0
  %v2565 = vadd.f32 0.0, %v2564
  %v2566 = vpop.f32.mrf.mxu0
  %2567 = vmatprep.mubr.f32.mxu0 0.0
  %2568 = vmatmul.mubr.f32.gmra.mxu0 %v2220
  %v2569 = vpop.f32.mrf.mxu0
  %v2570 = vadd.f32 0.0, %v2569
  %v2571 = vpop.f32.mrf.mxu0
  %2572 = vmatprep.mubr.f32.mxu0 0.0
  %2573 = vmatmul.mubr.f32.gmra.mxu0 %v2223
  %v2574 = vpop.f32.mrf.mxu0
  %v2575 = vadd.f32 0.0, %v2574
  %v2576 = vpop.f32.mrf.mxu0
  %2577 = vmatprep.mubr.f32.mxu0 0.0
  %2578 = vmatmul.mubr.f32.gmra.mxu0 %v2226
  %v2579 = vpop.f32.mrf.mxu0
  %v2580 = vadd.f32 0.0, %v2579
  %v2581 = vpop.f32.mrf.mxu0
  %2582 = vmatprep.mubr.f32.mxu0 0.0
  %2583 = vmatmul.mubr.f32.gmra.mxu0 %v2229
  %v2584 = vpop.f32.mrf.mxu0
  %v2585 = vadd.f32 0.0, %v2584
  %v2586 = vpop.f32.mrf.mxu0
  %2587 = vmatprep.mubr.f32.mxu0 0.0
  %2588 = vmatmul.mubr.f32.gmra.mxu0 %v2232
  %v2589 = vpop.f32.mrf.mxu0
  %v2590 = vadd.f32 0.0, %v2589
  %v2591 = vpop.f32.mrf.mxu0
  %2592 = vmatprep.mubr.f32.mxu0 0.0
  %2593 = vmatmul.mubr.f32.gmra.mxu0 %v2235
  %v2594 = vpop.f32.mrf.mxu0
  %v2595 = vadd.f32 0.0, %v2594
  %v2596 = vpop.f32.mrf.mxu0
  %2597 = vmatprep.mubr.f32.mxu0 0.0
  %2598 = vmatmul.mubr.f32.gmra.mxu0 %v2238
  %v2599 = vpop.f32.mrf.mxu0
  %v2600 = vadd.f32 0.0, %v2599
  %v2601 = vpop.f32.mrf.mxu0
  %2602 = vmatprep.mubr.f32.mxu0 0.0
  %2603 = vmatmul.mubr.f32.gmra.mxu0 %v2241
  %v2604 = vpop.f32.mrf.mxu0
  %v2605 = vadd.f32 0.0, %v2604
  %v2606 = vpop.f32.mrf.mxu0
  %2607 = vmatprep.mubr.f32.mxu0 0.0
  %2608 = vmatmul.mubr.f32.gmra.mxu0 %v2244
  %v2609 = vpop.f32.mrf.mxu0
  %v2610 = vadd.f32 0.0, %v2609
  %v2611 = vpop.f32.mrf.mxu0
  %2612 = vmatprep.mubr.f32.mxu0 0.0
  %2613 = vmatmul.mubr.f32.gmra.mxu0 %v2247
  %v2614 = vpop.f32.mrf.mxu0
  %v2615 = vadd.f32 0.0, %v2614
  %v2616 = vpop.f32.mrf.mxu0
  %2617 = vmatprep.mubr.f32.mxu0 0.0
  %2618 = vmatmul.mubr.f32.gmra.mxu0 %v2250
  %v2619 = vpop.f32.mrf.mxu0
  %v2620 = vadd.f32 0.0, %v2619
  %v2621 = vpop.f32.mrf.mxu0
  %2622 = vmatprep.mubr.f32.mxu0 0.0
  %2623 = vmatmul.mubr.f32.gmra.mxu0 %v2253
  %v2624 = vpop.f32.mrf.mxu0
  %v2625 = vadd.f32 0.0, %v2624
  %v2626 = vpop.f32.mrf.mxu0
  %2627 = vmatprep.mubr.f32.mxu0 0.0
  %2628 = vmatmul.mubr.f32.gmra.mxu0 %v2256
  %v2629 = vpop.f32.mrf.mxu0
  %v2630 = vadd.f32 0.0, %v2629
  %v2631 = vpop.f32.mrf.mxu0
  %2632 = vmatprep.mubr.f32.mxu0 0.0
  %2633 = vmatmul.mubr.f32.gmra.mxu0 %v2259
  %v2634 = vpop.f32.mrf.mxu0
  %v2635 = vadd.f32 0.0, %v2634
  %v2636 = vpop.f32.mrf.mxu0
  %2637 = vmatprep.mubr.f32.mxu0 0.0
  %2638 = vmatmul.mubr.f32.gmra.mxu0 %v2262
  %v2639 = vpop.f32.mrf.mxu0
  %v2640 = vadd.f32 0.0, %v2639
  %v2641 = vpop.f32.mrf.mxu0
  %2642 = vmatprep.mubr.f32.mxu0 0.0
  %2643 = vmatmul.mubr.f32.gmra.mxu0 %v2265
  %v2644 = vpop.f32.mrf.mxu0
  %v2645 = vadd.f32 0.0, %v2644
  %v2646 = vpop.f32.mrf.mxu0
  %2647 = vmatprep.mubr.f32.mxu0 0.0
  %2648 = vmatmul.mubr.f32.gmra.mxu0 %v2268
  %v2649 = vpop.f32.mrf.mxu0
  %v2650 = vadd.f32 0.0, %v2649
  %v2651 = vpop.f32.mrf.mxu0
  %2652 = vmatprep.mubr.f32.mxu0 0.0
  %2653 = vmatmul.mubr.f32.gmra.mxu0 %v2271
  %v2654 = vpop.f32.mrf.mxu0
  %v2655 = vadd.f32 0.0, %v2654
  %v2656 = vpop.f32.mrf.mxu0
  %2657 = vdwg.mxu0
  %2722 = vrot.lane.b32.xlu0 %v2340, 7
  %v2723 = vpop.permute.xlu0 %2722
  %2724 = vrot.lane.b32.xlu0 %v2345, 7
  %v2725 = vpop.permute.xlu0 %2724
  %2726 = vrot.lane.b32.xlu0 %v2350, 7
  %v2727 = vpop.permute.xlu0 %2726
  %2728 = vrot.lane.b32.xlu0 %v2355, 7
  %v2729 = vpop.permute.xlu0 %2728
  %2730 = vrot.lane.b32.xlu0 %v2360, 7
  %v2731 = vpop.permute.xlu0 %2730
  %2732 = vrot.lane.b32.xlu0 %v2365, 7
  %v2733 = vpop.permute.xlu0 %2732
  %2734 = vrot.lane.b32.xlu0 %v2370, 7
  %v2735 = vpop.permute.xlu0 %2734
  %2736 = vrot.lane.b32.xlu0 %v2375, 7
  %v2737 = vpop.permute.xlu0 %2736
  %2738 = vrot.lane.b32.xlu0 %v2380, 7
  %v2739 = vpop.permute.xlu0 %2738
  %2740 = vrot.lane.b32.xlu0 %v2385, 7
  %v2741 = vpop.permute.xlu0 %2740
  %2742 = vrot.lane.b32.xlu0 %v2390, 7
  %v2743 = vpop.permute.xlu0 %2742
  %2744 = vrot.lane.b32.xlu0 %v2395, 7
  %v2745 = vpop.permute.xlu0 %2744
  %2746 = vrot.lane.b32.xlu0 %v2400, 7
  %v2747 = vpop.permute.xlu0 %2746
  %2748 = vrot.lane.b32.xlu0 %v2405, 7
  %v2749 = vpop.permute.xlu0 %2748
  %2750 = vrot.lane.b32.xlu0 %v2410, 7
  %v2751 = vpop.permute.xlu0 %2750
  %2752 = vrot.lane.b32.xlu0 %v2415, 7
  %v2753 = vpop.permute.xlu0 %2752
  %2754 = vrot.lane.b32.xlu0 %v2420, 7
  %v2755 = vpop.permute.xlu0 %2754
  %2756 = vrot.lane.b32.xlu0 %v2425, 7
  %v2757 = vpop.permute.xlu0 %2756
  %2758 = vrot.lane.b32.xlu0 %v2430, 7
  %v2759 = vpop.permute.xlu0 %2758
  %2760 = vrot.lane.b32.xlu0 %v2435, 7
  %v2761 = vpop.permute.xlu0 %2760
  %2762 = vrot.lane.b32.xlu0 %v2440, 7
  %v2763 = vpop.permute.xlu0 %2762
  %2764 = vrot.lane.b32.xlu0 %v2445, 7
  %v2765 = vpop.permute.xlu0 %2764
  %2766 = vrot.lane.b32.xlu0 %v2450, 7
  %v2767 = vpop.permute.xlu0 %2766
  %2768 = vrot.lane.b32.xlu0 %v2455, 7
  %v2769 = vpop.permute.xlu0 %2768
  %2770 = vrot.lane.b32.xlu0 %v2460, 7
  %v2771 = vpop.permute.xlu0 %2770
  %2772 = vrot.lane.b32.xlu0 %v2465, 7
  %v2773 = vpop.permute.xlu0 %2772
  %2774 = vrot.lane.b32.xlu0 %v2470, 7
  %v2775 = vpop.permute.xlu0 %2774
  %2776 = vrot.lane.b32.xlu0 %v2475, 7
  %v2777 = vpop.permute.xlu0 %2776
  %2778 = vrot.lane.b32.xlu0 %v2480, 7
  %v2779 = vpop.permute.xlu0 %2778
  %2780 = vrot.lane.b32.xlu0 %v2485, 7
  %v2781 = vpop.permute.xlu0 %2780
  %2782 = vrot.lane.b32.xlu0 %v2490, 7
  %v2783 = vpop.permute.xlu0 %2782
  %2784 = vrot.lane.b32.xlu0 %v2495, 7
  %v2785 = vpop.permute.xlu0 %2784
  %2786 = vrot.lane.b32.xlu0 %v2500, 7
  %v2787 = vpop.permute.xlu0 %2786
  %2788 = vrot.lane.b32.xlu0 %v2505, 7
  %v2789 = vpop.permute.xlu0 %2788
  %2790 = vrot.lane.b32.xlu0 %v2510, 7
  %v2791 = vpop.permute.xlu0 %2790
  %2792 = vrot.lane.b32.xlu0 %v2515, 7
  %v2793 = vpop.permute.xlu0 %2792
  %2794 = vrot.lane.b32.xlu0 %v2520, 7
  %v2795 = vpop.permute.xlu0 %2794
  %2796 = vrot.lane.b32.xlu0 %v2525, 7
  %v2797 = vpop.permute.xlu0 %2796
  %2798 = vrot.lane.b32.xlu0 %v2530, 7
  %v2799 = vpop.permute.xlu0 %2798
  %2800 = vrot.lane.b32.xlu0 %v2535, 7
  %v2801 = vpop.permute.xlu0 %2800
  %2802 = vrot.lane.b32.xlu0 %v2540, 7
  %v2803 = vpop.permute.xlu0 %2802
  %2804 = vrot.lane.b32.xlu0 %v2545, 7
  %v2805 = vpop.permute.xlu0 %2804
  %2806 = vrot.lane.b32.xlu0 %v2550, 7
  %v2807 = vpop.permute.xlu0 %2806
  %2808 = vrot.lane.b32.xlu0 %v2555, 7
  %v2809 = vpop.permute.xlu0 %2808
  %2810 = vrot.lane.b32.xlu0 %v2560, 7
  %v2811 = vpop.permute.xlu0 %2810
  %2812 = vrot.lane.b32.xlu0 %v2565, 7
  %v2813 = vpop.permute.xlu0 %2812
  %2814 = vrot.lane.b32.xlu0 %v2570, 7
  %v2815 = vpop.permute.xlu0 %2814
  %2816 = vrot.lane.b32.xlu0 %v2575, 7
  %v2817 = vpop.permute.xlu0 %2816
  %2818 = vrot.lane.b32.xlu0 %v2580, 7
  %v2819 = vpop.permute.xlu0 %2818
  %2820 = vrot.lane.b32.xlu0 %v2585, 7
  %v2821 = vpop.permute.xlu0 %2820
  %2822 = vrot.lane.b32.xlu0 %v2590, 7
  %v2823 = vpop.permute.xlu0 %2822
  %2824 = vrot.lane.b32.xlu0 %v2595, 7
  %v2825 = vpop.permute.xlu0 %2824
  %2826 = vrot.lane.b32.xlu0 %v2600, 7
  %v2827 = vpop.permute.xlu0 %2826
  %2828 = vrot.lane.b32.xlu0 %v2605, 7
  %v2829 = vpop.permute.xlu0 %2828
  %2830 = vrot.lane.b32.xlu0 %v2610, 7
  %v2831 = vpop.permute.xlu0 %2830
  %2832 = vrot.lane.b32.xlu0 %v2615, 7
  %v2833 = vpop.permute.xlu0 %2832
  %2834 = vrot.lane.b32.xlu0 %v2620, 7
  %v2835 = vpop.permute.xlu0 %2834
  %2836 = vrot.lane.b32.xlu0 %v2625, 7
  %v2837 = vpop.permute.xlu0 %2836
  %2838 = vrot.lane.b32.xlu0 %v2630, 7
  %v2839 = vpop.permute.xlu0 %2838
  %2840 = vrot.lane.b32.xlu0 %v2635, 7
  %v2841 = vpop.permute.xlu0 %2840
  %2842 = vrot.lane.b32.xlu0 %v2640, 7
  %v2843 = vpop.permute.xlu0 %2842
  %2844 = vrot.lane.b32.xlu0 %v2645, 7
  %v2845 = vpop.permute.xlu0 %2844
  %2846 = vrot.lane.b32.xlu0 %v2650, 7
  %v2847 = vpop.permute.xlu0 %2846
  %2848 = vrot.lane.b32.xlu0 %v2655, 7
  %v2849 = vpop.permute.xlu0 %2848
  %v2914 = vsel %vm1524, %v2723, -1e+30
  %v2915 = vsel %vm1525, %v2725, -1e+30
  %v2916 = vsel %vm1526, %v2727, -1e+30
  %v2917 = vsel %vm1527, %v2729, -1e+30
  %v2918 = vsel %vm1528, %v2731, -1e+30
  %v2919 = vsel %vm1529, %v2733, -1e+30
  %v2920 = vsel %vm1530, %v2735, -1e+30
  %v2921 = vsel %vm1531, %v2737, -1e+30
  %v2922 = vsel %vm1532, %v2739, -1e+30
  %v2923 = vsel %vm1533, %v2741, -1e+30
  %v2924 = vsel %vm1534, %v2743, -1e+30
  %v2925 = vsel %vm1535, %v2745, -1e+30
  %v2926 = vsel %vm1536, %v2747, -1e+30
  %v2927 = vsel %vm1537, %v2749, -1e+30
  %v2928 = vsel %vm1538, %v2751, -1e+30
  %v2929 = vsel %vm1539, %v2753, -1e+30
  %v2930 = vsel %vm1540, %v2755, -1e+30
  %v2931 = vsel %vm1541, %v2757, -1e+30
  %v2932 = vsel %vm1542, %v2759, -1e+30
  %v2933 = vsel %vm1543, %v2761, -1e+30
  %v2934 = vsel %vm1544, %v2763, -1e+30
  %v2935 = vsel %vm1545, %v2765, -1e+30
  %v2936 = vsel %vm1546, %v2767, -1e+30
  %v2937 = vsel %vm1547, %v2769, -1e+30
  %v2938 = vsel %vm1548, %v2771, -1e+30
  %v2939 = vsel %vm1549, %v2773, -1e+30
  %v2940 = vsel %vm1550, %v2775, -1e+30
  %v2941 = vsel %vm1551, %v2777, -1e+30
  %v2942 = vsel %vm1552, %v2779, -1e+30
  %v2943 = vsel %vm1553, %v2781, -1e+30
  %v2944 = vsel %vm1554, %v2783, -1e+30
  %v2945 = vsel %vm1555, %v2785, -1e+30
  %v2946 = vsel %vm1556, %v2787, -1e+30
  %v2947 = vsel %vm1557, %v2789, -1e+30
  %v2948 = vsel %vm1558, %v2791, -1e+30
  %v2949 = vsel %vm1559, %v2793, -1e+30
  %v2950 = vsel %vm1560, %v2795, -1e+30
  %v2951 = vsel %vm1561, %v2797, -1e+30
  %v2952 = vsel %vm1562, %v2799, -1e+30
  %v2953 = vsel %vm1563, %v2801, -1e+30
  %v2954 = vsel %vm1564, %v2803, -1e+30
  %v2955 = vsel %vm1565, %v2805, -1e+30
  %v2956 = vsel %vm1566, %v2807, -1e+30
  %v2957 = vsel %vm1567, %v2809, -1e+30
  %v2958 = vsel %vm1568, %v2811, -1e+30
  %v2959 = vsel %vm1569, %v2813, -1e+30
  %v2960 = vsel %vm1570, %v2815, -1e+30
  %v2961 = vsel %vm1571, %v2817, -1e+30
  %v2962 = vsel %vm1572, %v2819, -1e+30
  %v2963 = vsel %vm1573, %v2821, -1e+30
  %v2964 = vsel %vm1574, %v2823, -1e+30
  %v2965 = vsel %vm1575, %v2825, -1e+30
  %v2966 = vsel %vm1576, %v2827, -1e+30
  %v2967 = vsel %vm1577, %v2829, -1e+30
  %v2968 = vsel %vm1578, %v2831, -1e+30
  %v2969 = vsel %vm1579, %v2833, -1e+30
  %v2970 = vsel %vm1580, %v2835, -1e+30
  %v2971 = vsel %vm1581, %v2837, -1e+30
  %v2972 = vsel %vm1582, %v2839, -1e+30
  %v2973 = vsel %vm1583, %v2841, -1e+30
  %v2974 = vsel %vm1584, %v2843, -1e+30
  %v2975 = vsel %vm1585, %v2845, -1e+30
  %v2976 = vsel %vm1586, %v2847, -1e+30
  %v2977 = vsel %vm1587, %v2849, -1e+30
  %vm2978 = vcmask 64568
  %v2979 = vsel %vm2978, %v2914, -inf
  %v2980 = vsel %vm2978, %v2916, -inf
  %v2981 = vmax.f32 %v2979, %v2980
  %v2982 = vsel %vm2978, %v2918, -inf
  %v2983 = vmax.f32 %v2981, %v2982
  %v2984 = vsel %vm2978, %v2920, -inf
  %v2985 = vmax.f32 %v2983, %v2984
  %v2986 = vsel %vm2978, %v2922, -inf
  %v2987 = vmax.f32 %v2985, %v2986
  %v2988 = vsel %vm2978, %v2924, -inf
  %v2989 = vmax.f32 %v2987, %v2988
  %v2990 = vsel %vm2978, %v2926, -inf
  %v2991 = vmax.f32 %v2989, %v2990
  %v2992 = vsel %vm2978, %v2928, -inf
  %v2993 = vmax.f32 %v2991, %v2992
  %v2994 = vsel %vm2978, %v2930, -inf
  %v2995 = vmax.f32 %v2993, %v2994
  %v2996 = vsel %vm2978, %v2932, -inf
  %v2997 = vmax.f32 %v2995, %v2996
  %v2998 = vsel %vm2978, %v2934, -inf
  %v2999 = vmax.f32 %v2997, %v2998
  %v3000 = vsel %vm2978, %v2936, -inf
  %v3001 = vmax.f32 %v2999, %v3000
  %v3002 = vsel %vm2978, %v2938, -inf
  %v3003 = vmax.f32 %v3001, %v3002
  %v3004 = vsel %vm2978, %v2940, -inf
  %v3005 = vmax.f32 %v3003, %v3004
  %v3006 = vsel %vm2978, %v2942, -inf
  %v3007 = vmax.f32 %v3005, %v3006
  %v3008 = vsel %vm2978, %v2944, -inf
  %v3009 = vmax.f32 %v3007, %v3008
  %v3010 = vsel %vm2978, %v2915, -inf
  %v3011 = vsel %vm2978, %v2917, -inf
  %v3012 = vmax.f32 %v3010, %v3011
  %v3013 = vsel %vm2978, %v2919, -inf
  %v3014 = vmax.f32 %v3012, %v3013
  %v3015 = vsel %vm2978, %v2921, -inf
  %v3016 = vmax.f32 %v3014, %v3015
  %v3017 = vsel %vm2978, %v2923, -inf
  %v3018 = vmax.f32 %v3016, %v3017
  %v3019 = vsel %vm2978, %v2925, -inf
  %v3020 = vmax.f32 %v3018, %v3019
  %v3021 = vsel %vm2978, %v2927, -inf
  %v3022 = vmax.f32 %v3020, %v3021
  %v3023 = vsel %vm2978, %v2929, -inf
  %v3024 = vmax.f32 %v3022, %v3023
  %v3025 = vsel %vm2978, %v2931, -inf
  %v3026 = vmax.f32 %v3024, %v3025
  %v3027 = vsel %vm2978, %v2933, -inf
  %v3028 = vmax.f32 %v3026, %v3027
  %v3029 = vsel %vm2978, %v2935, -inf
  %v3030 = vmax.f32 %v3028, %v3029
  %v3031 = vsel %vm2978, %v2937, -inf
  %v3032 = vmax.f32 %v3030, %v3031
  %v3033 = vsel %vm2978, %v2939, -inf
  %v3034 = vmax.f32 %v3032, %v3033
  %v3035 = vsel %vm2978, %v2941, -inf
  %v3036 = vmax.f32 %v3034, %v3035
  %v3037 = vsel %vm2978, %v2943, -inf
  %v3038 = vmax.f32 %v3036, %v3037
  %v3039 = vsel %vm2978, %v2945, -inf
  %v3040 = vmax.f32 %v3038, %v3039
  %v3041 = vsel %vm2978, %v2946, -inf
  %v3042 = vsel %vm2978, %v2948, -inf
  %v3043 = vmax.f32 %v3041, %v3042
  %v3044 = vsel %vm2978, %v2950, -inf
  %v3045 = vmax.f32 %v3043, %v3044
  %v3046 = vsel %vm2978, %v2952, -inf
  %v3047 = vmax.f32 %v3045, %v3046
  %v3048 = vsel %vm2978, %v2954, -inf
  %v3049 = vmax.f32 %v3047, %v3048
  %v3050 = vsel %vm2978, %v2956, -inf
  %v3051 = vmax.f32 %v3049, %v3050
  %v3052 = vsel %vm2978, %v2958, -inf
  %v3053 = vmax.f32 %v3051, %v3052
  %v3054 = vsel %vm2978, %v2960, -inf
  %v3055 = vmax.f32 %v3053, %v3054
  %v3056 = vsel %vm2978, %v2962, -inf
  %v3057 = vmax.f32 %v3055, %v3056
  %v3058 = vsel %vm2978, %v2964, -inf
  %v3059 = vmax.f32 %v3057, %v3058
  %v3060 = vsel %vm2978, %v2966, -inf
  %v3061 = vmax.f32 %v3059, %v3060
  %v3062 = vsel %vm2978, %v2968, -inf
  %v3063 = vmax.f32 %v3061, %v3062
  %v3064 = vsel %vm2978, %v2970, -inf
  %v3065 = vmax.f32 %v3063, %v3064
  %v3066 = vsel %vm2978, %v2972, -inf
  %v3067 = vmax.f32 %v3065, %v3066
  %v3068 = vsel %vm2978, %v2974, -inf
  %v3069 = vmax.f32 %v3067, %v3068
  %v3070 = vsel %vm2978, %v2976, -inf
  %v3071 = vmax.f32 %v3069, %v3070
  %v3072 = vsel %vm2978, %v2947, -inf
  %v3073 = vsel %vm2978, %v2949, -inf
  %v3074 = vmax.f32 %v3072, %v3073
  %v3075 = vsel %vm2978, %v2951, -inf
  %v3076 = vmax.f32 %v3074, %v3075
  %v3077 = vsel %vm2978, %v2953, -inf
  %v3078 = vmax.f32 %v3076, %v3077
  %v3079 = vsel %vm2978, %v2955, -inf
  %v3080 = vmax.f32 %v3078, %v3079
  %v3081 = vsel %vm2978, %v2957, -inf
  %v3082 = vmax.f32 %v3080, %v3081
  %v3083 = vsel %vm2978, %v2959, -inf
  %v3084 = vmax.f32 %v3082, %v3083
  %v3085 = vsel %vm2978, %v2961, -inf
  %v3086 = vmax.f32 %v3084, %v3085
  %v3087 = vsel %vm2978, %v2963, -inf
  %v3088 = vmax.f32 %v3086, %v3087
  %v3089 = vsel %vm2978, %v2965, -inf
  %v3090 = vmax.f32 %v3088, %v3089
  %v3091 = vsel %vm2978, %v2967, -inf
  %v3092 = vmax.f32 %v3090, %v3091
  %v3093 = vsel %vm2978, %v2969, -inf
  %v3094 = vmax.f32 %v3092, %v3093
  %v3095 = vsel %vm2978, %v2971, -inf
  %v3096 = vmax.f32 %v3094, %v3095
  %v3097 = vsel %vm2978, %v2973, -inf
  %v3098 = vmax.f32 %v3096, %v3097
  %v3099 = vsel %vm2978, %v2975, -inf
  %v3100 = vmax.f32 %v3098, %v3099
  %v3101 = vsel %vm2978, %v2977, -inf
  %v3102 = vmax.f32 %v3100, %v3101
  %v3103 = vsub.f32 %v2914, %v3009
  %v3104 = vsub.f32 %v2915, %v3040
  %v3105 = vsub.f32 %v2916, %v3009
  %v3106 = vsub.f32 %v2917, %v3040
  %v3107 = vsub.f32 %v2918, %v3009
  %v3108 = vsub.f32 %v2919, %v3040
  %v3109 = vsub.f32 %v2920, %v3009
  %v3110 = vsub.f32 %v2921, %v3040
  %v3111 = vsub.f32 %v2922, %v3009
  %v3112 = vsub.f32 %v2923, %v3040
  %v3113 = vsub.f32 %v2924, %v3009
  %v3114 = vsub.f32 %v2925, %v3040
  %v3115 = vsub.f32 %v2926, %v3009
  %v3116 = vsub.f32 %v2927, %v3040
  %v3117 = vsub.f32 %v2928, %v3009
  %v3118 = vsub.f32 %v2929, %v3040
  %v3119 = vsub.f32 %v2930, %v3009
  %v3120 = vsub.f32 %v2931, %v3040
  %v3121 = vsub.f32 %v2932, %v3009
  %v3122 = vsub.f32 %v2933, %v3040
  %v3123 = vsub.f32 %v2934, %v3009
  %v3124 = vsub.f32 %v2935, %v3040
  %v3125 = vsub.f32 %v2936, %v3009
  %v3126 = vsub.f32 %v2937, %v3040
  %v3127 = vsub.f32 %v2938, %v3009
  %v3128 = vsub.f32 %v2939, %v3040
  %v3129 = vsub.f32 %v2940, %v3009
  %v3130 = vsub.f32 %v2941, %v3040
  %v3131 = vsub.f32 %v2942, %v3009
  %v3132 = vsub.f32 %v2943, %v3040
  %v3133 = vsub.f32 %v2944, %v3009
  %v3134 = vsub.f32 %v2945, %v3040
  %v3135 = vsub.f32 %v2946, %v3071
  %v3136 = vsub.f32 %v2947, %v3102
  %v3137 = vsub.f32 %v2948, %v3071
  %v3138 = vsub.f32 %v2949, %v3102
  %v3139 = vsub.f32 %v2950, %v3071
  %v3140 = vsub.f32 %v2951, %v3102
  %v3141 = vsub.f32 %v2952, %v3071
  %v3142 = vsub.f32 %v2953, %v3102
  %v3143 = vsub.f32 %v2954, %v3071
  %v3144 = vsub.f32 %v2955, %v3102
  %v3145 = vsub.f32 %v2956, %v3071
  %v3146 = vsub.f32 %v2957, %v3102
  %v3147 = vsub.f32 %v2958, %v3071
  %v3148 = vsub.f32 %v2959, %v3102
  %v3149 = vsub.f32 %v2960, %v3071
  %v3150 = vsub.f32 %v2961, %v3102
  %v3151 = vsub.f32 %v2962, %v3071
  %v3152 = vsub.f32 %v2963, %v3102
  %v3153 = vsub.f32 %v2964, %v3071
  %v3154 = vsub.f32 %v2965, %v3102
  %v3155 = vsub.f32 %v2966, %v3071
  %v3156 = vsub.f32 %v2967, %v3102
  %v3157 = vsub.f32 %v2968, %v3071
  %v3158 = vsub.f32 %v2969, %v3102
  %v3159 = vsub.f32 %v2970, %v3071
  %v3160 = vsub.f32 %v2971, %v3102
  %v3161 = vsub.f32 %v2972, %v3071
  %v3162 = vsub.f32 %v2973, %v3102
  %v3163 = vsub.f32 %v2974, %v3071
  %v3164 = vsub.f32 %v2975, %v3102
  %v3165 = vsub.f32 %v2976, %v3071
  %v3166 = vsub.f32 %v2977, %v3102
  %v3167 = vmul.f32 %v3103, 1.442695
  %v3168 = vpow.pop %v3167
  %v3169 = vmul.f32 %v3104, 1.442695
  %v3170 = vpow.pop %v3169
  %v3171 = vmul.f32 %v3105, 1.442695
  %v3172 = vpow.pop %v3171
  %v3173 = vmul.f32 %v3106, 1.442695
  %v3174 = vpow.pop %v3173
  %v3175 = vmul.f32 %v3107, 1.442695
  %v3176 = vpow.pop %v3175
  %v3177 = vmul.f32 %v3108, 1.442695
  %v3178 = vpow.pop %v3177
  %v3179 = vmul.f32 %v3109, 1.442695
  %v3180 = vpow.pop %v3179
  %v3181 = vmul.f32 %v3110, 1.442695
  %v3182 = vpow.pop %v3181
  %v3183 = vmul.f32 %v3111, 1.442695
  %v3184 = vpow.pop %v3183
  %v3185 = vmul.f32 %v3112, 1.442695
  %v3186 = vpow.pop %v3185
  %v3187 = vmul.f32 %v3113, 1.442695
  %v3188 = vpow.pop %v3187
  %v3189 = vmul.f32 %v3114, 1.442695
  %v3190 = vpow.pop %v3189
  %v3191 = vmul.f32 %v3115, 1.442695
  %v3192 = vpow.pop %v3191
  %v3193 = vmul.f32 %v3116, 1.442695
  %v3194 = vpow.pop %v3193
  %v3195 = vmul.f32 %v3117, 1.442695
  %v3196 = vpow.pop %v3195
  %v3197 = vmul.f32 %v3118, 1.442695
  %v3198 = vpow.pop %v3197
  %v3199 = vmul.f32 %v3119, 1.442695
  %v3200 = vpow.pop %v3199
  %v3201 = vmul.f32 %v3120, 1.442695
  %v3202 = vpow.pop %v3201
  %v3203 = vmul.f32 %v3121, 1.442695
  %v3204 = vpow.pop %v3203
  %v3205 = vmul.f32 %v3122, 1.442695
  %v3206 = vpow.pop %v3205
  %v3207 = vmul.f32 %v3123, 1.442695
  %v3208 = vpow.pop %v3207
  %v3209 = vmul.f32 %v3124, 1.442695
  %v3210 = vpow.pop %v3209
  %v3211 = vmul.f32 %v3125, 1.442695
  %v3212 = vpow.pop %v3211
  %v3213 = vmul.f32 %v3126, 1.442695
  %v3214 = vpow.pop %v3213
  %v3215 = vmul.f32 %v3127, 1.442695
  %v3216 = vpow.pop %v3215
  %v3217 = vmul.f32 %v3128, 1.442695
  %v3218 = vpow.pop %v3217
  %v3219 = vmul.f32 %v3129, 1.442695
  %v3220 = vpow.pop %v3219
  %v3221 = vmul.f32 %v3130, 1.442695
  %v3222 = vpow.pop %v3221
  %v3223 = vmul.f32 %v3131, 1.442695
  %v3224 = vpow.pop %v3223
  %v3225 = vmul.f32 %v3132, 1.442695
  %v3226 = vpow.pop %v3225
  %v3227 = vmul.f32 %v3133, 1.442695
  %v3228 = vpow.pop %v3227
  %v3229 = vmul.f32 %v3134, 1.442695
  %v3230 = vpow.pop %v3229
  %v3231 = vmul.f32 %v3135, 1.442695
  %v3232 = vpow.pop %v3231
  %v3233 = vmul.f32 %v3136, 1.442695
  %v3234 = vpow.pop %v3233
  %v3235 = vmul.f32 %v3137, 1.442695
  %v3236 = vpow.pop %v3235
  %v3237 = vmul.f32 %v3138, 1.442695
  %v3238 = vpow.pop %v3237
  %v3239 = vmul.f32 %v3139, 1.442695
  %v3240 = vpow.pop %v3239
  %v3241 = vmul.f32 %v3140, 1.442695
  %v3242 = vpow.pop %v3241
  %v3243 = vmul.f32 %v3141, 1.442695
  %v3244 = vpow.pop %v3243
  %v3245 = vmul.f32 %v3142, 1.442695
  %v3246 = vpow.pop %v3245
  %v3247 = vmul.f32 %v3143, 1.442695
  %v3248 = vpow.pop %v3247
  %v3249 = vmul.f32 %v3144, 1.442695
  %v3250 = vpow.pop %v3249
  %v3251 = vmul.f32 %v3145, 1.442695
  %v3252 = vpow.pop %v3251
  %v3253 = vmul.f32 %v3146, 1.442695
  %v3254 = vpow.pop %v3253
  %v3255 = vmul.f32 %v3147, 1.442695
  %v3256 = vpow.pop %v3255
  %v3257 = vmul.f32 %v3148, 1.442695
  %v3258 = vpow.pop %v3257
  %v3259 = vmul.f32 %v3149, 1.442695
  %v3260 = vpow.pop %v3259
  %v3261 = vmul.f32 %v3150, 1.442695
  %v3262 = vpow.pop %v3261
  %v3263 = vmul.f32 %v3151, 1.442695
  %v3264 = vpow.pop %v3263
  %v3265 = vmul.f32 %v3152, 1.442695
  %v3266 = vpow.pop %v3265
  %v3267 = vmul.f32 %v3153, 1.442695
  %v3268 = vpow.pop %v3267
  %v3269 = vmul.f32 %v3154, 1.442695
  %v3270 = vpow.pop %v3269
  %v3271 = vmul.f32 %v3155, 1.442695
  %v3272 = vpow.pop %v3271
  %v3273 = vmul.f32 %v3156, 1.442695
  %v3274 = vpow.pop %v3273
  %v3275 = vmul.f32 %v3157, 1.442695
  %v3276 = vpow.pop %v3275
  %v3277 = vmul.f32 %v3158, 1.442695
  %v3278 = vpow.pop %v3277
  %v3279 = vmul.f32 %v3159, 1.442695
  %v3280 = vpow.pop %v3279
  %v3281 = vmul.f32 %v3160, 1.442695
  %v3282 = vpow.pop %v3281
  %v3283 = vmul.f32 %v3161, 1.442695
  %v3284 = vpow.pop %v3283
  %v3285 = vmul.f32 %v3162, 1.442695
  %v3286 = vpow.pop %v3285
  %v3287 = vmul.f32 %v3163, 1.442695
  %v3288 = vpow.pop %v3287
  %v3289 = vmul.f32 %v3164, 1.442695
  %v3290 = vpow.pop %v3289
  %v3291 = vmul.f32 %v3165, 1.442695
  %v3292 = vpow.pop %v3291
  %v3293 = vmul.f32 %v3166, 1.442695
  %v3294 = vpow.pop %v3293
  %v3295 = vsel %vm1524, %v3168, 0.0
  %v3296 = vsel %vm1525, %v3170, 0.0
  %v3297 = vsel %vm1526, %v3172, 0.0
  %v3298 = vsel %vm1527, %v3174, 0.0
  %v3299 = vsel %vm1528, %v3176, 0.0
  %v3300 = vsel %vm1529, %v3178, 0.0
  %v3301 = vsel %vm1530, %v3180, 0.0
  %v3302 = vsel %vm1531, %v3182, 0.0
  %v3303 = vsel %vm1532, %v3184, 0.0
  %v3304 = vsel %vm1533, %v3186, 0.0
  %v3305 = vsel %vm1534, %v3188, 0.0
  %v3306 = vsel %vm1535, %v3190, 0.0
  %v3307 = vsel %vm1536, %v3192, 0.0
  %v3308 = vsel %vm1537, %v3194, 0.0
  %v3309 = vsel %vm1538, %v3196, 0.0
  %v3310 = vsel %vm1539, %v3198, 0.0
  %v3311 = vsel %vm1540, %v3200, 0.0
  %v3312 = vsel %vm1541, %v3202, 0.0
  %v3313 = vsel %vm1542, %v3204, 0.0
  %v3314 = vsel %vm1543, %v3206, 0.0
  %v3315 = vsel %vm1544, %v3208, 0.0
  %v3316 = vsel %vm1545, %v3210, 0.0
  %v3317 = vsel %vm1546, %v3212, 0.0
  %v3318 = vsel %vm1547, %v3214, 0.0
  %v3319 = vsel %vm1548, %v3216, 0.0
  %v3320 = vsel %vm1549, %v3218, 0.0
  %v3321 = vsel %vm1550, %v3220, 0.0
  %v3322 = vsel %vm1551, %v3222, 0.0
  %v3323 = vsel %vm1552, %v3224, 0.0
  %v3324 = vsel %vm1553, %v3226, 0.0
  %v3325 = vsel %vm1554, %v3228, 0.0
  %v3326 = vsel %vm1555, %v3230, 0.0
  %v3327 = vsel %vm1556, %v3232, 0.0
  %v3328 = vsel %vm1557, %v3234, 0.0
  %v3329 = vsel %vm1558, %v3236, 0.0
  %v3330 = vsel %vm1559, %v3238, 0.0
  %v3331 = vsel %vm1560, %v3240, 0.0
  %v3332 = vsel %vm1561, %v3242, 0.0
  %v3333 = vsel %vm1562, %v3244, 0.0
  %v3334 = vsel %vm1563, %v3246, 0.0
  %v3335 = vsel %vm1564, %v3248, 0.0
  %v3336 = vsel %vm1565, %v3250, 0.0
  %v3337 = vsel %vm1566, %v3252, 0.0
  %v3338 = vsel %vm1567, %v3254, 0.0
  %v3339 = vsel %vm1568, %v3256, 0.0
  %v3340 = vsel %vm1569, %v3258, 0.0
  %v3341 = vsel %vm1570, %v3260, 0.0
  %v3342 = vsel %vm1571, %v3262, 0.0
  %v3343 = vsel %vm1572, %v3264, 0.0
  %v3344 = vsel %vm1573, %v3266, 0.0
  %v3345 = vsel %vm1574, %v3268, 0.0
  %v3346 = vsel %vm1575, %v3270, 0.0
  %v3347 = vsel %vm1576, %v3272, 0.0
  %v3348 = vsel %vm1577, %v3274, 0.0
  %v3349 = vsel %vm1578, %v3276, 0.0
  %v3350 = vsel %vm1579, %v3278, 0.0
  %v3351 = vsel %vm1580, %v3280, 0.0
  %v3352 = vsel %vm1581, %v3282, 0.0
  %v3353 = vsel %vm1582, %v3284, 0.0
  %v3354 = vsel %vm1583, %v3286, 0.0
  %v3355 = vsel %vm1584, %v3288, 0.0
  %v3356 = vsel %vm1585, %v3290, 0.0
  %v3357 = vsel %vm1586, %v3292, 0.0
  %v3358 = vsel %vm1587, %v3294, 0.0
  %v3359 = vsel %vm2978, %v3295, 0.0
  %v3360 = vsel %vm2978, %v3297, 0.0
  %v3361 = vadd.f32 %v3359, %v3360
  %v3362 = vsel %vm2978, %v3299, 0.0
  %v3363 = vadd.f32 %v3361, %v3362
  %v3364 = vsel %vm2978, %v3301, 0.0
  %v3365 = vadd.f32 %v3363, %v3364
  %v3366 = vsel %vm2978, %v3303, 0.0
  %v3367 = vadd.f32 %v3365, %v3366
  %v3368 = vsel %vm2978, %v3305, 0.0
  %v3369 = vadd.f32 %v3367, %v3368
  %v3370 = vsel %vm2978, %v3307, 0.0
  %v3371 = vadd.f32 %v3369, %v3370
  %v3372 = vsel %vm2978, %v3309, 0.0
  %v3373 = vadd.f32 %v3371, %v3372
  %v3374 = vsel %vm2978, %v3311, 0.0
  %v3375 = vadd.f32 %v3373, %v3374
  %v3376 = vsel %vm2978, %v3313, 0.0
  %v3377 = vadd.f32 %v3375, %v3376
  %v3378 = vsel %vm2978, %v3315, 0.0
  %v3379 = vadd.f32 %v3377, %v3378
  %v3380 = vsel %vm2978, %v3317, 0.0
  %v3381 = vadd.f32 %v3379, %v3380
  %v3382 = vsel %vm2978, %v3319, 0.0
  %v3383 = vadd.f32 %v3381, %v3382
  %v3384 = vsel %vm2978, %v3321, 0.0
  %v3385 = vadd.f32 %v3383, %v3384
  %v3386 = vsel %vm2978, %v3323, 0.0
  %v3387 = vadd.f32 %v3385, %v3386
  %v3388 = vsel %vm2978, %v3325, 0.0
  %v3389 = vadd.f32 %v3387, %v3388
  %v3390 = vsel %vm2978, %v3296, 0.0
  %v3391 = vsel %vm2978, %v3298, 0.0
  %v3392 = vadd.f32 %v3390, %v3391
  %v3393 = vsel %vm2978, %v3300, 0.0
  %v3394 = vadd.f32 %v3392, %v3393
  %v3395 = vsel %vm2978, %v3302, 0.0
  %v3396 = vadd.f32 %v3394, %v3395
  %v3397 = vsel %vm2978, %v3304, 0.0
  %v3398 = vadd.f32 %v3396, %v3397
  %v3399 = vsel %vm2978, %v3306, 0.0
  %v3400 = vadd.f32 %v3398, %v3399
  %v3401 = vsel %vm2978, %v3308, 0.0
  %v3402 = vadd.f32 %v3400, %v3401
  %v3403 = vsel %vm2978, %v3310, 0.0
  %v3404 = vadd.f32 %v3402, %v3403
  %v3405 = vsel %vm2978, %v3312, 0.0
  %v3406 = vadd.f32 %v3404, %v3405
  %v3407 = vsel %vm2978, %v3314, 0.0
  %v3408 = vadd.f32 %v3406, %v3407
  %v3409 = vsel %vm2978, %v3316, 0.0
  %v3410 = vadd.f32 %v3408, %v3409
  %v3411 = vsel %vm2978, %v3318, 0.0
  %v3412 = vadd.f32 %v3410, %v3411
  %v3413 = vsel %vm2978, %v3320, 0.0
  %v3414 = vadd.f32 %v3412, %v3413
  %v3415 = vsel %vm2978, %v3322, 0.0
  %v3416 = vadd.f32 %v3414, %v3415
  %v3417 = vsel %vm2978, %v3324, 0.0
  %v3418 = vadd.f32 %v3416, %v3417
  %v3419 = vsel %vm2978, %v3326, 0.0
  %v3420 = vadd.f32 %v3418, %v3419
  %v3421 = vsel %vm2978, %v3327, 0.0
  %v3422 = vsel %vm2978, %v3329, 0.0
  %v3423 = vadd.f32 %v3421, %v3422
  %v3424 = vsel %vm2978, %v3331, 0.0
  %v3425 = vadd.f32 %v3423, %v3424
  %v3426 = vsel %vm2978, %v3333, 0.0
  %v3427 = vadd.f32 %v3425, %v3426
  %v3428 = vsel %vm2978, %v3335, 0.0
  %v3429 = vadd.f32 %v3427, %v3428
  %v3430 = vsel %vm2978, %v3337, 0.0
  %v3431 = vadd.f32 %v3429, %v3430
  %v3432 = vsel %vm2978, %v3339, 0.0
  %v3433 = vadd.f32 %v3431, %v3432
  %v3434 = vsel %vm2978, %v3341, 0.0
  %v3435 = vadd.f32 %v3433, %v3434
  %v3436 = vsel %vm2978, %v3343, 0.0
  %v3437 = vadd.f32 %v3435, %v3436
  %v3438 = vsel %vm2978, %v3345, 0.0
  %v3439 = vadd.f32 %v3437, %v3438
  %v3440 = vsel %vm2978, %v3347, 0.0
  %v3441 = vadd.f32 %v3439, %v3440
  %v3442 = vsel %vm2978, %v3349, 0.0
  %v3443 = vadd.f32 %v3441, %v3442
  %v3444 = vsel %vm2978, %v3351, 0.0
  %v3445 = vadd.f32 %v3443, %v3444
  %v3446 = vsel %vm2978, %v3353, 0.0
  %v3447 = vadd.f32 %v3445, %v3446
  %v3448 = vsel %vm2978, %v3355, 0.0
  %v3449 = vadd.f32 %v3447, %v3448
  %v3450 = vsel %vm2978, %v3357, 0.0
  %v3451 = vadd.f32 %v3449, %v3450
  %v3452 = vsel %vm2978, %v3328, 0.0
  %v3453 = vsel %vm2978, %v3330, 0.0
  %v3454 = vadd.f32 %v3452, %v3453
  %v3455 = vsel %vm2978, %v3332, 0.0
  %v3456 = vadd.f32 %v3454, %v3455
  %v3457 = vsel %vm2978, %v3334, 0.0
  %v3458 = vadd.f32 %v3456, %v3457
  %v3459 = vsel %vm2978, %v3336, 0.0
  %v3460 = vadd.f32 %v3458, %v3459
  %v3461 = vsel %vm2978, %v3338, 0.0
  %v3462 = vadd.f32 %v3460, %v3461
  %v3463 = vsel %vm2978, %v3340, 0.0
  %v3464 = vadd.f32 %v3462, %v3463
  %v3465 = vsel %vm2978, %v3342, 0.0
  %v3466 = vadd.f32 %v3464, %v3465
  %v3467 = vsel %vm2978, %v3344, 0.0
  %v3468 = vadd.f32 %v3466, %v3467
  %v3469 = vsel %vm2978, %v3346, 0.0
  %v3470 = vadd.f32 %v3468, %v3469
  %v3471 = vsel %vm2978, %v3348, 0.0
  %v3472 = vadd.f32 %v3470, %v3471
  %v3473 = vsel %vm2978, %v3350, 0.0
  %v3474 = vadd.f32 %v3472, %v3473
  %v3475 = vsel %vm2978, %v3352, 0.0
  %v3476 = vadd.f32 %v3474, %v3475
  %v3477 = vsel %vm2978, %v3354, 0.0
  %v3478 = vadd.f32 %v3476, %v3477
  %v3479 = vsel %vm2978, %v3356, 0.0
  %v3480 = vadd.f32 %v3478, %v3479
  %v3481 = vsel %vm2978, %v3358, 0.0
  %v3482 = vadd.f32 %v3480, %v3481
  %v3483 = vmax.f32 %v3389, 1e-20
  %v3484 = vmax.f32 %v3420, 1e-20
  %v3485 = vmax.f32 %v3451, 1e-20
  %v3486 = vmax.f32 %v3482, 1e-20
  %v3487 = vrcp.pop %v3483
  %v3488 = vrcp.pop %v3484
  %v3489 = vrcp.pop %v3485
  %v3490 = vrcp.pop %v3486
  %v3491 = vmul.f32 %v3295, %v3487
  %v3492 = vmul.f32 %v3296, %v3488
  %v3493 = vmul.f32 %v3297, %v3487
  %v3494 = vmul.f32 %v3298, %v3488
  %v3495 = vmul.f32 %v3299, %v3487
  %v3496 = vmul.f32 %v3300, %v3488
  %v3497 = vmul.f32 %v3301, %v3487
  %v3498 = vmul.f32 %v3302, %v3488
  %v3499 = vmul.f32 %v3303, %v3487
  %v3500 = vmul.f32 %v3304, %v3488
  %v3501 = vmul.f32 %v3305, %v3487
  %v3502 = vmul.f32 %v3306, %v3488
  %v3503 = vmul.f32 %v3307, %v3487
  %v3504 = vmul.f32 %v3308, %v3488
  %v3505 = vmul.f32 %v3309, %v3487
  %v3506 = vmul.f32 %v3310, %v3488
  %v3507 = vmul.f32 %v3311, %v3487
  %v3508 = vmul.f32 %v3312, %v3488
  %v3509 = vmul.f32 %v3313, %v3487
  %v3510 = vmul.f32 %v3314, %v3488
  %v3511 = vmul.f32 %v3315, %v3487
  %v3512 = vmul.f32 %v3316, %v3488
  %v3513 = vmul.f32 %v3317, %v3487
  %v3514 = vmul.f32 %v3318, %v3488
  %v3515 = vmul.f32 %v3319, %v3487
  %v3516 = vmul.f32 %v3320, %v3488
  %v3517 = vmul.f32 %v3321, %v3487
  %v3518 = vmul.f32 %v3322, %v3488
  %v3519 = vmul.f32 %v3323, %v3487
  %v3520 = vmul.f32 %v3324, %v3488
  %v3521 = vmul.f32 %v3325, %v3487
  %v3522 = vmul.f32 %v3326, %v3488
  %v3523 = vmul.f32 %v3327, %v3489
  %v3524 = vmul.f32 %v3328, %v3490
  %v3525 = vmul.f32 %v3329, %v3489
  %v3526 = vmul.f32 %v3330, %v3490
  %v3527 = vmul.f32 %v3331, %v3489
  %v3528 = vmul.f32 %v3332, %v3490
  %v3529 = vmul.f32 %v3333, %v3489
  %v3530 = vmul.f32 %v3334, %v3490
  %v3531 = vmul.f32 %v3335, %v3489
  %v3532 = vmul.f32 %v3336, %v3490
  %v3533 = vmul.f32 %v3337, %v3489
  %v3534 = vmul.f32 %v3338, %v3490
  %v3535 = vmul.f32 %v3339, %v3489
  %v3536 = vmul.f32 %v3340, %v3490
  %v3537 = vmul.f32 %v3341, %v3489
  %v3538 = vmul.f32 %v3342, %v3490
  %v3539 = vmul.f32 %v3343, %v3489
  %v3540 = vmul.f32 %v3344, %v3490
  %v3541 = vmul.f32 %v3345, %v3489
  %v3542 = vmul.f32 %v3346, %v3490
  %v3543 = vmul.f32 %v3347, %v3489
  %v3544 = vmul.f32 %v3348, %v3490
  %v3545 = vmul.f32 %v3349, %v3489
  %v3546 = vmul.f32 %v3350, %v3490
  %v3547 = vmul.f32 %v3351, %v3489
  %v3548 = vmul.f32 %v3352, %v3490
  %v3549 = vmul.f32 %v3353, %v3489
  %v3550 = vmul.f32 %v3354, %v3490
  %v3551 = vmul.f32 %v3355, %v3489
  %v3552 = vmul.f32 %v3356, %v3490
  %v3553 = vmul.f32 %v3357, %v3489
  %v3554 = vmul.f32 %v3358, %v3490
  %v3555 = vld [vmem:[%s9] sm:$0x3]
  %3620 = vrot.lane.b32.xlu0 %v3491, 121
  %v3621 = vpop.permute.xlu0 %3620
  %3622 = vrot.lane.b32.xlu0 %v3492, 121
  %v3623 = vpop.permute.xlu0 %3622
  %3624 = vrot.lane.b32.xlu0 %v3493, 121
  %v3625 = vpop.permute.xlu0 %3624
  %3626 = vrot.lane.b32.xlu0 %v3494, 121
  %v3627 = vpop.permute.xlu0 %3626
  %3628 = vrot.lane.b32.xlu0 %v3495, 121
  %v3629 = vpop.permute.xlu0 %3628
  %3630 = vrot.lane.b32.xlu0 %v3496, 121
  %v3631 = vpop.permute.xlu0 %3630
  %3632 = vrot.lane.b32.xlu0 %v3497, 121
  %v3633 = vpop.permute.xlu0 %3632
  %3634 = vrot.lane.b32.xlu0 %v3498, 121
  %v3635 = vpop.permute.xlu0 %3634
  %3636 = vrot.lane.b32.xlu0 %v3499, 121
  %v3637 = vpop.permute.xlu0 %3636
  %3638 = vrot.lane.b32.xlu0 %v3500, 121
  %v3639 = vpop.permute.xlu0 %3638
  %3640 = vrot.lane.b32.xlu0 %v3501, 121
  %v3641 = vpop.permute.xlu0 %3640
  %3642 = vrot.lane.b32.xlu0 %v3502, 121
  %v3643 = vpop.permute.xlu0 %3642
  %3644 = vrot.lane.b32.xlu0 %v3503, 121
  %v3645 = vpop.permute.xlu0 %3644
  %3646 = vrot.lane.b32.xlu0 %v3504, 121
  %v3647 = vpop.permute.xlu0 %3646
  %3648 = vrot.lane.b32.xlu0 %v3505, 121
  %v3649 = vpop.permute.xlu0 %3648
  %3650 = vrot.lane.b32.xlu0 %v3506, 121
  %v3651 = vpop.permute.xlu0 %3650
  %3652 = vrot.lane.b32.xlu0 %v3507, 121
  %v3653 = vpop.permute.xlu0 %3652
  %3654 = vrot.lane.b32.xlu0 %v3508, 121
  %v3655 = vpop.permute.xlu0 %3654
  %3656 = vrot.lane.b32.xlu0 %v3509, 121
  %v3657 = vpop.permute.xlu0 %3656
  %3658 = vrot.lane.b32.xlu0 %v3510, 121
  %v3659 = vpop.permute.xlu0 %3658
  %3660 = vrot.lane.b32.xlu0 %v3511, 121
  %v3661 = vpop.permute.xlu0 %3660
  %3662 = vrot.lane.b32.xlu0 %v3512, 121
  %v3663 = vpop.permute.xlu0 %3662
  %3664 = vrot.lane.b32.xlu0 %v3513, 121
  %v3665 = vpop.permute.xlu0 %3664
  %3666 = vrot.lane.b32.xlu0 %v3514, 121
  %v3667 = vpop.permute.xlu0 %3666
  %3668 = vrot.lane.b32.xlu0 %v3515, 121
  %v3669 = vpop.permute.xlu0 %3668
  %3670 = vrot.lane.b32.xlu0 %v3516, 121
  %v3671 = vpop.permute.xlu0 %3670
  %3672 = vrot.lane.b32.xlu0 %v3517, 121
  %v3673 = vpop.permute.xlu0 %3672
  %3674 = vrot.lane.b32.xlu0 %v3518, 121
  %v3675 = vpop.permute.xlu0 %3674
  %3676 = vrot.lane.b32.xlu0 %v3519, 121
  %v3677 = vpop.permute.xlu0 %3676
  %3678 = vrot.lane.b32.xlu0 %v3520, 121
  %v3679 = vpop.permute.xlu0 %3678
  %3680 = vrot.lane.b32.xlu0 %v3521, 121
  %v3681 = vpop.permute.xlu0 %3680
  %3682 = vrot.lane.b32.xlu0 %v3522, 121
  %v3683 = vpop.permute.xlu0 %3682
  %3684 = vrot.lane.b32.xlu0 %v3523, 121
  %v3685 = vpop.permute.xlu0 %3684
  %3686 = vrot.lane.b32.xlu0 %v3524, 121
  %v3687 = vpop.permute.xlu0 %3686
  %3688 = vrot.lane.b32.xlu0 %v3525, 121
  %v3689 = vpop.permute.xlu0 %3688
  %3690 = vrot.lane.b32.xlu0 %v3526, 121
  %v3691 = vpop.permute.xlu0 %3690
  %3692 = vrot.lane.b32.xlu0 %v3527, 121
  %v3693 = vpop.permute.xlu0 %3692
  %3694 = vrot.lane.b32.xlu0 %v3528, 121
  %v3695 = vpop.permute.xlu0 %3694
  %3696 = vrot.lane.b32.xlu0 %v3529, 121
  %v3697 = vpop.permute.xlu0 %3696
  %3698 = vrot.lane.b32.xlu0 %v3530, 121
  %v3699 = vpop.permute.xlu0 %3698
  %3700 = vrot.lane.b32.xlu0 %v3531, 121
  %v3701 = vpop.permute.xlu0 %3700
  %3702 = vrot.lane.b32.xlu0 %v3532, 121
  %v3703 = vpop.permute.xlu0 %3702
  %3704 = vrot.lane.b32.xlu0 %v3533, 121
  %v3705 = vpop.permute.xlu0 %3704
  %3706 = vrot.lane.b32.xlu0 %v3534, 121
  %v3707 = vpop.permute.xlu0 %3706
  %3708 = vrot.lane.b32.xlu0 %v3535, 121
  %v3709 = vpop.permute.xlu0 %3708
  %3710 = vrot.lane.b32.xlu0 %v3536, 121
  %v3711 = vpop.permute.xlu0 %3710
  %3712 = vrot.lane.b32.xlu0 %v3537, 121
  %v3713 = vpop.permute.xlu0 %3712
  %3714 = vrot.lane.b32.xlu0 %v3538, 121
  %v3715 = vpop.permute.xlu0 %3714
  %3716 = vrot.lane.b32.xlu0 %v3539, 121
  %v3717 = vpop.permute.xlu0 %3716
  %3718 = vrot.lane.b32.xlu0 %v3540, 121
  %v3719 = vpop.permute.xlu0 %3718
  %3720 = vrot.lane.b32.xlu0 %v3541, 121
  %v3721 = vpop.permute.xlu0 %3720
  %3722 = vrot.lane.b32.xlu0 %v3542, 121
  %v3723 = vpop.permute.xlu0 %3722
  %3724 = vrot.lane.b32.xlu0 %v3543, 121
  %v3725 = vpop.permute.xlu0 %3724
  %3726 = vrot.lane.b32.xlu0 %v3544, 121
  %v3727 = vpop.permute.xlu0 %3726
  %3728 = vrot.lane.b32.xlu0 %v3545, 121
  %v3729 = vpop.permute.xlu0 %3728
  %3730 = vrot.lane.b32.xlu0 %v3546, 121
  %v3731 = vpop.permute.xlu0 %3730
  %3732 = vrot.lane.b32.xlu0 %v3547, 121
  %v3733 = vpop.permute.xlu0 %3732
  %3734 = vrot.lane.b32.xlu0 %v3548, 121
  %v3735 = vpop.permute.xlu0 %3734
  %3736 = vrot.lane.b32.xlu0 %v3549, 121
  %v3737 = vpop.permute.xlu0 %3736
  %3738 = vrot.lane.b32.xlu0 %v3550, 121
  %v3739 = vpop.permute.xlu0 %3738
  %3740 = vrot.lane.b32.xlu0 %v3551, 121
  %v3741 = vpop.permute.xlu0 %3740
  %3742 = vrot.lane.b32.xlu0 %v3552, 121
  %v3743 = vpop.permute.xlu0 %3742
  %3744 = vrot.lane.b32.xlu0 %v3553, 121
  %v3745 = vpop.permute.xlu0 %3744
  %3746 = vrot.lane.b32.xlu0 %v3554, 121
  %v3747 = vpop.permute.xlu0 %3746
  %v3749 = vlaneseq
  %v3750 = vshrl.u32 %v3749, 7
  %v3751 = vsub.s32 0, %v3750
  %v3752 = vrot.slane %v3555, %v3751
  %v3753 = vlaneseq
  %v3754 = vshrl.u32 %v3753, 7
  %v3755 = vsub.s32 1, %v3754
  %v3756 = vrot.slane %v3555, %v3755
  %vm3757 = vcmask 7168
  %v3758 = vsel %vm3757, %v3621, 0
  %v3760 = vsel %vm3757, %v3623, 0
  %v3762 = vsel %vm3757, %v3625, 0
  %v3764 = vsel %vm3757, %v3627, 0
  %v3766 = vsel %vm3757, %v3629, 0
  %v3768 = vsel %vm3757, %v3631, 0
  %v3770 = vsel %vm3757, %v3633, 0
  %v3772 = vsel %vm3757, %v3635, 0
  %v3774 = vsel %vm3757, %v3637, 0
  %v3776 = vsel %vm3757, %v3639, 0
  %v3778 = vsel %vm3757, %v3641, 0
  %v3780 = vsel %vm3757, %v3643, 0
  %v3782 = vsel %vm3757, %v3645, 0
  %v3784 = vsel %vm3757, %v3647, 0
  %v3786 = vsel %vm3757, %v3649, 0
  %v3788 = vsel %vm3757, %v3651, 0
  %v3790 = vsel %vm3757, %v3653, 0
  %v3792 = vsel %vm3757, %v3655, 0
  %v3794 = vsel %vm3757, %v3657, 0
  %v3796 = vsel %vm3757, %v3659, 0
  %v3798 = vsel %vm3757, %v3661, 0
  %v3800 = vsel %vm3757, %v3663, 0
  %v3802 = vsel %vm3757, %v3665, 0
  %v3804 = vsel %vm3757, %v3667, 0
  %v3806 = vsel %vm3757, %v3669, 0
  %v3808 = vsel %vm3757, %v3671, 0
  %v3810 = vsel %vm3757, %v3673, 0
  %v3812 = vsel %vm3757, %v3675, 0
  %v3814 = vsel %vm3757, %v3677, 0
  %v3816 = vsel %vm3757, %v3679, 0
  %v3818 = vsel %vm3757, %v3681, 0
  %v3820 = vsel %vm3757, %v3683, 0
  %v3822 = vsel %vm3757, %v3685, 0
  %v3824 = vsel %vm3757, %v3687, 0
  %v3826 = vsel %vm3757, %v3689, 0
  %v3828 = vsel %vm3757, %v3691, 0
  %v3830 = vsel %vm3757, %v3693, 0
  %v3832 = vsel %vm3757, %v3695, 0
  %v3834 = vsel %vm3757, %v3697, 0
  %v3836 = vsel %vm3757, %v3699, 0
  %v3838 = vsel %vm3757, %v3701, 0
  %v3840 = vsel %vm3757, %v3703, 0
  %v3842 = vsel %vm3757, %v3705, 0
  %v3844 = vsel %vm3757, %v3707, 0
  %v3846 = vsel %vm3757, %v3709, 0
  %v3848 = vsel %vm3757, %v3711, 0
  %v3850 = vsel %vm3757, %v3713, 0
  %v3852 = vsel %vm3757, %v3715, 0
  %v3854 = vsel %vm3757, %v3717, 0
  %v3856 = vsel %vm3757, %v3719, 0
  %v3858 = vsel %vm3757, %v3721, 0
  %v3860 = vsel %vm3757, %v3723, 0
  %v3862 = vsel %vm3757, %v3725, 0
  %v3864 = vsel %vm3757, %v3727, 0
  %v3866 = vsel %vm3757, %v3729, 0
  %v3868 = vsel %vm3757, %v3731, 0
  %v3870 = vsel %vm3757, %v3733, 0
  %v3872 = vsel %vm3757, %v3735, 0
  %v3874 = vsel %vm3757, %v3737, 0
  %v3876 = vsel %vm3757, %v3739, 0
  %v3878 = vsel %vm3757, %v3741, 0
  %v3880 = vsel %vm3757, %v3743, 0
  %v3882 = vsel %vm3757, %v3745, 0
  %v3884 = vsel %vm3757, %v3747, 0
  %vm3886 = vcmask 1040384
  %v3887 = vsel %vm3886, %v3752, 0
  %v3889 = vsel %vm3886, %v3756, 0
  %3891 = vmatprep.subr.mxu0 0.0
  %3892 = vmatpush1.msra.mxu0 0.0
  %3893 = vmatprep.subr.mxu0 0.0
  %3894 = vmatpush1.msra.mxu0 0.0
  %3895 = vmatprep.subr.mxu0 0.0
  %3896 = vmatpush1.msra.mxu0 0.0
  %3897 = vmatprep.subr.mxu0 0.0
  %3898 = vmatpush1.msra.mxu0 0.0
  %3899 = vmatprep.subr.mxu0 0.0
  %3900 = vmatpush1.msra.mxu0 0.0
  %3901 = vmatprep.subr.mxu0 0.0
  %3902 = vmatpush1.msra.mxu0 0.0
  %3903 = vmatprep.subr.mxu0 0.0
  %3904 = vmatpush1.msra.mxu0 0.0
  %3905 = vmatprep.subr.mxu0 0.0
  %3906 = vmatpush1.msra.mxu0 0.0
  %3907 = vmatprep.subr.mxu0 0.0
  %3908 = vmatpush1.msra.mxu0 0.0
  %3909 = vmatprep.subr.mxu0 0.0
  %3910 = vmatpush1.msra.mxu0 0.0
  %3911 = vmatprep.subr.mxu0 0.0
  %3912 = vmatpush1.msra.mxu0 0.0
  %3913 = vmatprep.subr.mxu0 0.0
  %3914 = vmatpush1.msra.mxu0 0.0
  %3915 = vmatprep.subr.mxu0 0.0
  %3916 = vmatpush1.msra.mxu0 0.0
  %3917 = vmatprep.subr.mxu0 0.0
  %3918 = vmatpush1.msra.mxu0 0.0
  %3919 = vmatprep.subr.mxu0 0.0
  %3920 = vmatpush1.msra.mxu0 0.0
  %3921 = vmatprep.subr.mxu0 %v3889
  %3922 = vmatpush1.msra.mxu0 %v3887
  %3923 = vmatprep.subr.mxu0 0.0
  %3924 = vmatpush2.msra.mxu0 0.0
  %3925 = vmatprep.subr.mxu0 0.0
  %3926 = vmatpush2.msra.mxu0 0.0
  %3927 = vmatprep.subr.mxu0 0.0
  %3928 = vmatpush2.msra.mxu0 0.0
  %3929 = vmatprep.subr.mxu0 0.0
  %3930 = vmatpush2.msra.mxu0 0.0
  %3931 = vmatprep.subr.mxu0 0.0
  %3932 = vmatpush2.msra.mxu0 0.0
  %3933 = vmatprep.subr.mxu0 0.0
  %3934 = vmatpush2.msra.mxu0 0.0
  %3935 = vmatprep.subr.mxu0 0.0
  %3936 = vmatpush2.msra.mxu0 0.0
  %3937 = vmatprep.subr.mxu0 0.0
  %3938 = vmatpush2.msra.mxu0 0.0
  %3939 = vmatprep.subr.mxu0 0.0
  %3940 = vmatpush2.msra.mxu0 0.0
  %3941 = vmatprep.subr.mxu0 0.0
  %3942 = vmatpush2.msra.mxu0 0.0
  %3943 = vmatprep.subr.mxu0 0.0
  %3944 = vmatpush2.msra.mxu0 0.0
  %3945 = vmatprep.subr.mxu0 0.0
  %3946 = vmatpush2.msra.mxu0 0.0
  %3947 = vmatprep.subr.mxu0 0.0
  %3948 = vmatpush2.msra.mxu0 0.0
  %3949 = vmatprep.subr.mxu0 0.0
  %3950 = vmatpush2.msra.mxu0 0.0
  %3951 = vmatprep.subr.mxu0 0.0
  %3952 = vmatpush2.msra.mxu0 0.0
  %3953 = vmatprep.subr.mxu0 0.0
  %3954 = vmatpush2.msra.mxu0 0.0
  %3955 = vmatprep.mubr.f32.mxu0 0.0
  %3956 = vmatmul.mubr.f32.gmra.mxu0 %v3758
  %v3957 = vpop.f32.mrf.mxu0
  %v3958 = vadd.f32 0.0, %v3957
  %v3959 = vpop.f32.mrf.mxu0
  %v3960 = vadd.f32 0.0, %v3959
  %3961 = vmatprep.mubr.f32.mxu0 0.0
  %3962 = vmatmul.mubr.f32.gmra.mxu0 %v3760
  %v3963 = vpop.f32.mrf.mxu0
  %v3964 = vadd.f32 0.0, %v3963
  %v3965 = vpop.f32.mrf.mxu0
  %v3966 = vadd.f32 0.0, %v3965
  %3967 = vmatprep.mubr.f32.mxu0 0.0
  %3968 = vmatmul.mubr.f32.gmra.mxu0 %v3762
  %v3969 = vpop.f32.mrf.mxu0
  %v3970 = vadd.f32 0.0, %v3969
  %v3971 = vpop.f32.mrf.mxu0
  %v3972 = vadd.f32 0.0, %v3971
  %3973 = vmatprep.mubr.f32.mxu0 0.0
  %3974 = vmatmul.mubr.f32.gmra.mxu0 %v3764
  %v3975 = vpop.f32.mrf.mxu0
  %v3976 = vadd.f32 0.0, %v3975
  %v3977 = vpop.f32.mrf.mxu0
  %v3978 = vadd.f32 0.0, %v3977
  %3979 = vmatprep.mubr.f32.mxu0 0.0
  %3980 = vmatmul.mubr.f32.gmra.mxu0 %v3766
  %v3981 = vpop.f32.mrf.mxu0
  %v3982 = vadd.f32 0.0, %v3981
  %v3983 = vpop.f32.mrf.mxu0
  %v3984 = vadd.f32 0.0, %v3983
  %3985 = vmatprep.mubr.f32.mxu0 0.0
  %3986 = vmatmul.mubr.f32.gmra.mxu0 %v3768
  %v3987 = vpop.f32.mrf.mxu0
  %v3988 = vadd.f32 0.0, %v3987
  %v3989 = vpop.f32.mrf.mxu0
  %v3990 = vadd.f32 0.0, %v3989
  %3991 = vmatprep.mubr.f32.mxu0 0.0
  %3992 = vmatmul.mubr.f32.gmra.mxu0 %v3770
  %v3993 = vpop.f32.mrf.mxu0
  %v3994 = vadd.f32 0.0, %v3993
  %v3995 = vpop.f32.mrf.mxu0
  %v3996 = vadd.f32 0.0, %v3995
  %3997 = vmatprep.mubr.f32.mxu0 0.0
  %3998 = vmatmul.mubr.f32.gmra.mxu0 %v3772
  %v3999 = vpop.f32.mrf.mxu0
  %v4000 = vadd.f32 0.0, %v3999
  %v4001 = vpop.f32.mrf.mxu0
  %v4002 = vadd.f32 0.0, %v4001
  %4003 = vmatprep.mubr.f32.mxu0 0.0
  %4004 = vmatmul.mubr.f32.gmra.mxu0 %v3774
  %v4005 = vpop.f32.mrf.mxu0
  %v4006 = vadd.f32 0.0, %v4005
  %v4007 = vpop.f32.mrf.mxu0
  %v4008 = vadd.f32 0.0, %v4007
  %4009 = vmatprep.mubr.f32.mxu0 0.0
  %4010 = vmatmul.mubr.f32.gmra.mxu0 %v3776
  %v4011 = vpop.f32.mrf.mxu0
  %v4012 = vadd.f32 0.0, %v4011
  %v4013 = vpop.f32.mrf.mxu0
  %v4014 = vadd.f32 0.0, %v4013
  %4015 = vmatprep.mubr.f32.mxu0 0.0
  %4016 = vmatmul.mubr.f32.gmra.mxu0 %v3778
  %v4017 = vpop.f32.mrf.mxu0
  %v4018 = vadd.f32 0.0, %v4017
  %v4019 = vpop.f32.mrf.mxu0
  %v4020 = vadd.f32 0.0, %v4019
  %4021 = vmatprep.mubr.f32.mxu0 0.0
  %4022 = vmatmul.mubr.f32.gmra.mxu0 %v3780
  %v4023 = vpop.f32.mrf.mxu0
  %v4024 = vadd.f32 0.0, %v4023
  %v4025 = vpop.f32.mrf.mxu0
  %v4026 = vadd.f32 0.0, %v4025
  %4027 = vmatprep.mubr.f32.mxu0 0.0
  %4028 = vmatmul.mubr.f32.gmra.mxu0 %v3782
  %v4029 = vpop.f32.mrf.mxu0
  %v4030 = vadd.f32 0.0, %v4029
  %v4031 = vpop.f32.mrf.mxu0
  %v4032 = vadd.f32 0.0, %v4031
  %4033 = vmatprep.mubr.f32.mxu0 0.0
  %4034 = vmatmul.mubr.f32.gmra.mxu0 %v3784
  %v4035 = vpop.f32.mrf.mxu0
  %v4036 = vadd.f32 0.0, %v4035
  %v4037 = vpop.f32.mrf.mxu0
  %v4038 = vadd.f32 0.0, %v4037
  %4039 = vmatprep.mubr.f32.mxu0 0.0
  %4040 = vmatmul.mubr.f32.gmra.mxu0 %v3786
  %v4041 = vpop.f32.mrf.mxu0
  %v4042 = vadd.f32 0.0, %v4041
  %v4043 = vpop.f32.mrf.mxu0
  %v4044 = vadd.f32 0.0, %v4043
  %4045 = vmatprep.mubr.f32.mxu0 0.0
  %4046 = vmatmul.mubr.f32.gmra.mxu0 %v3788
  %v4047 = vpop.f32.mrf.mxu0
  %v4048 = vadd.f32 0.0, %v4047
  %v4049 = vpop.f32.mrf.mxu0
  %v4050 = vadd.f32 0.0, %v4049
  %4051 = vmatprep.mubr.f32.mxu0 0.0
  %4052 = vmatmul.mubr.f32.gmra.mxu0 %v3790
  %v4053 = vpop.f32.mrf.mxu0
  %v4054 = vadd.f32 0.0, %v4053
  %v4055 = vpop.f32.mrf.mxu0
  %v4056 = vadd.f32 0.0, %v4055
  %4057 = vmatprep.mubr.f32.mxu0 0.0
  %4058 = vmatmul.mubr.f32.gmra.mxu0 %v3792
  %v4059 = vpop.f32.mrf.mxu0
  %v4060 = vadd.f32 0.0, %v4059
  %v4061 = vpop.f32.mrf.mxu0
  %v4062 = vadd.f32 0.0, %v4061
  %4063 = vmatprep.mubr.f32.mxu0 0.0
  %4064 = vmatmul.mubr.f32.gmra.mxu0 %v3794
  %v4065 = vpop.f32.mrf.mxu0
  %v4066 = vadd.f32 0.0, %v4065
  %v4067 = vpop.f32.mrf.mxu0
  %v4068 = vadd.f32 0.0, %v4067
  %4069 = vmatprep.mubr.f32.mxu0 0.0
  %4070 = vmatmul.mubr.f32.gmra.mxu0 %v3796
  %v4071 = vpop.f32.mrf.mxu0
  %v4072 = vadd.f32 0.0, %v4071
  %v4073 = vpop.f32.mrf.mxu0
  %v4074 = vadd.f32 0.0, %v4073
  %4075 = vmatprep.mubr.f32.mxu0 0.0
  %4076 = vmatmul.mubr.f32.gmra.mxu0 %v3798
  %v4077 = vpop.f32.mrf.mxu0
  %v4078 = vadd.f32 0.0, %v4077
  %v4079 = vpop.f32.mrf.mxu0
  %v4080 = vadd.f32 0.0, %v4079
  %4081 = vmatprep.mubr.f32.mxu0 0.0
  %4082 = vmatmul.mubr.f32.gmra.mxu0 %v3800
  %v4083 = vpop.f32.mrf.mxu0
  %v4084 = vadd.f32 0.0, %v4083
  %v4085 = vpop.f32.mrf.mxu0
  %v4086 = vadd.f32 0.0, %v4085
  %4087 = vmatprep.mubr.f32.mxu0 0.0
  %4088 = vmatmul.mubr.f32.gmra.mxu0 %v3802
  %v4089 = vpop.f32.mrf.mxu0
  %v4090 = vadd.f32 0.0, %v4089
  %v4091 = vpop.f32.mrf.mxu0
  %v4092 = vadd.f32 0.0, %v4091
  %4093 = vmatprep.mubr.f32.mxu0 0.0
  %4094 = vmatmul.mubr.f32.gmra.mxu0 %v3804
  %v4095 = vpop.f32.mrf.mxu0
  %v4096 = vadd.f32 0.0, %v4095
  %v4097 = vpop.f32.mrf.mxu0
  %v4098 = vadd.f32 0.0, %v4097
  %4099 = vmatprep.mubr.f32.mxu0 0.0
  %4100 = vmatmul.mubr.f32.gmra.mxu0 %v3806
  %v4101 = vpop.f32.mrf.mxu0
  %v4102 = vadd.f32 0.0, %v4101
  %v4103 = vpop.f32.mrf.mxu0
  %v4104 = vadd.f32 0.0, %v4103
  %4105 = vmatprep.mubr.f32.mxu0 0.0
  %4106 = vmatmul.mubr.f32.gmra.mxu0 %v3808
  %v4107 = vpop.f32.mrf.mxu0
  %v4108 = vadd.f32 0.0, %v4107
  %v4109 = vpop.f32.mrf.mxu0
  %v4110 = vadd.f32 0.0, %v4109
  %4111 = vmatprep.mubr.f32.mxu0 0.0
  %4112 = vmatmul.mubr.f32.gmra.mxu0 %v3810
  %v4113 = vpop.f32.mrf.mxu0
  %v4114 = vadd.f32 0.0, %v4113
  %v4115 = vpop.f32.mrf.mxu0
  %v4116 = vadd.f32 0.0, %v4115
  %4117 = vmatprep.mubr.f32.mxu0 0.0
  %4118 = vmatmul.mubr.f32.gmra.mxu0 %v3812
  %v4119 = vpop.f32.mrf.mxu0
  %v4120 = vadd.f32 0.0, %v4119
  %v4121 = vpop.f32.mrf.mxu0
  %v4122 = vadd.f32 0.0, %v4121
  %4123 = vmatprep.mubr.f32.mxu0 0.0
  %4124 = vmatmul.mubr.f32.gmra.mxu0 %v3814
  %v4125 = vpop.f32.mrf.mxu0
  %v4126 = vadd.f32 0.0, %v4125
  %v4127 = vpop.f32.mrf.mxu0
  %v4128 = vadd.f32 0.0, %v4127
  %4129 = vmatprep.mubr.f32.mxu0 0.0
  %4130 = vmatmul.mubr.f32.gmra.mxu0 %v3816
  %v4131 = vpop.f32.mrf.mxu0
  %v4132 = vadd.f32 0.0, %v4131
  %v4133 = vpop.f32.mrf.mxu0
  %v4134 = vadd.f32 0.0, %v4133
  %4135 = vmatprep.mubr.f32.mxu0 0.0
  %4136 = vmatmul.mubr.f32.gmra.mxu0 %v3818
  %v4137 = vpop.f32.mrf.mxu0
  %v4138 = vadd.f32 0.0, %v4137
  %v4139 = vpop.f32.mrf.mxu0
  %v4140 = vadd.f32 0.0, %v4139
  %4141 = vmatprep.mubr.f32.mxu0 0.0
  %4142 = vmatmul.mubr.f32.gmra.mxu0 %v3820
  %v4143 = vpop.f32.mrf.mxu0
  %v4144 = vadd.f32 0.0, %v4143
  %v4145 = vpop.f32.mrf.mxu0
  %v4146 = vadd.f32 0.0, %v4145
  %4147 = vmatprep.mubr.f32.mxu0 0.0
  %4148 = vmatmul.mubr.f32.gmra.mxu0 %v3822
  %v4149 = vpop.f32.mrf.mxu0
  %v4150 = vadd.f32 0.0, %v4149
  %v4151 = vpop.f32.mrf.mxu0
  %v4152 = vadd.f32 0.0, %v4151
  %4153 = vmatprep.mubr.f32.mxu0 0.0
  %4154 = vmatmul.mubr.f32.gmra.mxu0 %v3824
  %v4155 = vpop.f32.mrf.mxu0
  %v4156 = vadd.f32 0.0, %v4155
  %v4157 = vpop.f32.mrf.mxu0
  %v4158 = vadd.f32 0.0, %v4157
  %4159 = vmatprep.mubr.f32.mxu0 0.0
  %4160 = vmatmul.mubr.f32.gmra.mxu0 %v3826
  %v4161 = vpop.f32.mrf.mxu0
  %v4162 = vadd.f32 0.0, %v4161
  %v4163 = vpop.f32.mrf.mxu0
  %v4164 = vadd.f32 0.0, %v4163
  %4165 = vmatprep.mubr.f32.mxu0 0.0
  %4166 = vmatmul.mubr.f32.gmra.mxu0 %v3828
  %v4167 = vpop.f32.mrf.mxu0
  %v4168 = vadd.f32 0.0, %v4167
  %v4169 = vpop.f32.mrf.mxu0
  %v4170 = vadd.f32 0.0, %v4169
  %4171 = vmatprep.mubr.f32.mxu0 0.0
  %4172 = vmatmul.mubr.f32.gmra.mxu0 %v3830
  %v4173 = vpop.f32.mrf.mxu0
  %v4174 = vadd.f32 0.0, %v4173
  %v4175 = vpop.f32.mrf.mxu0
  %v4176 = vadd.f32 0.0, %v4175
  %4177 = vmatprep.mubr.f32.mxu0 0.0
  %4178 = vmatmul.mubr.f32.gmra.mxu0 %v3832
  %v4179 = vpop.f32.mrf.mxu0
  %v4180 = vadd.f32 0.0, %v4179
  %v4181 = vpop.f32.mrf.mxu0
  %v4182 = vadd.f32 0.0, %v4181
  %4183 = vmatprep.mubr.f32.mxu0 0.0
  %4184 = vmatmul.mubr.f32.gmra.mxu0 %v3834
  %v4185 = vpop.f32.mrf.mxu0
  %v4186 = vadd.f32 0.0, %v4185
  %v4187 = vpop.f32.mrf.mxu0
  %v4188 = vadd.f32 0.0, %v4187
  %4189 = vmatprep.mubr.f32.mxu0 0.0
  %4190 = vmatmul.mubr.f32.gmra.mxu0 %v3836
  %v4191 = vpop.f32.mrf.mxu0
  %v4192 = vadd.f32 0.0, %v4191
  %v4193 = vpop.f32.mrf.mxu0
  %v4194 = vadd.f32 0.0, %v4193
  %4195 = vmatprep.mubr.f32.mxu0 0.0
  %4196 = vmatmul.mubr.f32.gmra.mxu0 %v3838
  %v4197 = vpop.f32.mrf.mxu0
  %v4198 = vadd.f32 0.0, %v4197
  %v4199 = vpop.f32.mrf.mxu0
  %v4200 = vadd.f32 0.0, %v4199
  %4201 = vmatprep.mubr.f32.mxu0 0.0
  %4202 = vmatmul.mubr.f32.gmra.mxu0 %v3840
  %v4203 = vpop.f32.mrf.mxu0
  %v4204 = vadd.f32 0.0, %v4203
  %v4205 = vpop.f32.mrf.mxu0
  %v4206 = vadd.f32 0.0, %v4205
  %4207 = vmatprep.mubr.f32.mxu0 0.0
  %4208 = vmatmul.mubr.f32.gmra.mxu0 %v3842
  %v4209 = vpop.f32.mrf.mxu0
  %v4210 = vadd.f32 0.0, %v4209
  %v4211 = vpop.f32.mrf.mxu0
  %v4212 = vadd.f32 0.0, %v4211
  %4213 = vmatprep.mubr.f32.mxu0 0.0
  %4214 = vmatmul.mubr.f32.gmra.mxu0 %v3844
  %v4215 = vpop.f32.mrf.mxu0
  %v4216 = vadd.f32 0.0, %v4215
  %v4217 = vpop.f32.mrf.mxu0
  %v4218 = vadd.f32 0.0, %v4217
  %4219 = vmatprep.mubr.f32.mxu0 0.0
  %4220 = vmatmul.mubr.f32.gmra.mxu0 %v3846
  %v4221 = vpop.f32.mrf.mxu0
  %v4222 = vadd.f32 0.0, %v4221
  %v4223 = vpop.f32.mrf.mxu0
  %v4224 = vadd.f32 0.0, %v4223
  %4225 = vmatprep.mubr.f32.mxu0 0.0
  %4226 = vmatmul.mubr.f32.gmra.mxu0 %v3848
  %v4227 = vpop.f32.mrf.mxu0
  %v4228 = vadd.f32 0.0, %v4227
  %v4229 = vpop.f32.mrf.mxu0
  %v4230 = vadd.f32 0.0, %v4229
  %4231 = vmatprep.mubr.f32.mxu0 0.0
  %4232 = vmatmul.mubr.f32.gmra.mxu0 %v3850
  %v4233 = vpop.f32.mrf.mxu0
  %v4234 = vadd.f32 0.0, %v4233
  %v4235 = vpop.f32.mrf.mxu0
  %v4236 = vadd.f32 0.0, %v4235
  %4237 = vmatprep.mubr.f32.mxu0 0.0
  %4238 = vmatmul.mubr.f32.gmra.mxu0 %v3852
  %v4239 = vpop.f32.mrf.mxu0
  %v4240 = vadd.f32 0.0, %v4239
  %v4241 = vpop.f32.mrf.mxu0
  %v4242 = vadd.f32 0.0, %v4241
  %4243 = vmatprep.mubr.f32.mxu0 0.0
  %4244 = vmatmul.mubr.f32.gmra.mxu0 %v3854
  %v4245 = vpop.f32.mrf.mxu0
  %v4246 = vadd.f32 0.0, %v4245
  %v4247 = vpop.f32.mrf.mxu0
  %v4248 = vadd.f32 0.0, %v4247
  %4249 = vmatprep.mubr.f32.mxu0 0.0
  %4250 = vmatmul.mubr.f32.gmra.mxu0 %v3856
  %v4251 = vpop.f32.mrf.mxu0
  %v4252 = vadd.f32 0.0, %v4251
  %v4253 = vpop.f32.mrf.mxu0
  %v4254 = vadd.f32 0.0, %v4253
  %4255 = vmatprep.mubr.f32.mxu0 0.0
  %4256 = vmatmul.mubr.f32.gmra.mxu0 %v3858
  %v4257 = vpop.f32.mrf.mxu0
  %v4258 = vadd.f32 0.0, %v4257
  %v4259 = vpop.f32.mrf.mxu0
  %v4260 = vadd.f32 0.0, %v4259
  %4261 = vmatprep.mubr.f32.mxu0 0.0
  %4262 = vmatmul.mubr.f32.gmra.mxu0 %v3860
  %v4263 = vpop.f32.mrf.mxu0
  %v4264 = vadd.f32 0.0, %v4263
  %v4265 = vpop.f32.mrf.mxu0
  %v4266 = vadd.f32 0.0, %v4265
  %4267 = vmatprep.mubr.f32.mxu0 0.0
  %4268 = vmatmul.mubr.f32.gmra.mxu0 %v3862
  %v4269 = vpop.f32.mrf.mxu0
  %v4270 = vadd.f32 0.0, %v4269
  %v4271 = vpop.f32.mrf.mxu0
  %v4272 = vadd.f32 0.0, %v4271
  %4273 = vmatprep.mubr.f32.mxu0 0.0
  %4274 = vmatmul.mubr.f32.gmra.mxu0 %v3864
  %v4275 = vpop.f32.mrf.mxu0
  %v4276 = vadd.f32 0.0, %v4275
  %v4277 = vpop.f32.mrf.mxu0
  %v4278 = vadd.f32 0.0, %v4277
  %4279 = vmatprep.mubr.f32.mxu0 0.0
  %4280 = vmatmul.mubr.f32.gmra.mxu0 %v3866
  %v4281 = vpop.f32.mrf.mxu0
  %v4282 = vadd.f32 0.0, %v4281
  %v4283 = vpop.f32.mrf.mxu0
  %v4284 = vadd.f32 0.0, %v4283
  %4285 = vmatprep.mubr.f32.mxu0 0.0
  %4286 = vmatmul.mubr.f32.gmra.mxu0 %v3868
  %v4287 = vpop.f32.mrf.mxu0
  %v4288 = vadd.f32 0.0, %v4287
  %v4289 = vpop.f32.mrf.mxu0
  %v4290 = vadd.f32 0.0, %v4289
  %4291 = vmatprep.mubr.f32.mxu0 0.0
  %4292 = vmatmul.mubr.f32.gmra.mxu0 %v3870
  %v4293 = vpop.f32.mrf.mxu0
  %v4294 = vadd.f32 0.0, %v4293
  %v4295 = vpop.f32.mrf.mxu0
  %v4296 = vadd.f32 0.0, %v4295
  %4297 = vmatprep.mubr.f32.mxu0 0.0
  %4298 = vmatmul.mubr.f32.gmra.mxu0 %v3872
  %v4299 = vpop.f32.mrf.mxu0
  %v4300 = vadd.f32 0.0, %v4299
  %v4301 = vpop.f32.mrf.mxu0
  %v4302 = vadd.f32 0.0, %v4301
  %4303 = vmatprep.mubr.f32.mxu0 0.0
  %4304 = vmatmul.mubr.f32.gmra.mxu0 %v3874
  %v4305 = vpop.f32.mrf.mxu0
  %v4306 = vadd.f32 0.0, %v4305
  %v4307 = vpop.f32.mrf.mxu0
  %v4308 = vadd.f32 0.0, %v4307
  %4309 = vmatprep.mubr.f32.mxu0 0.0
  %4310 = vmatmul.mubr.f32.gmra.mxu0 %v3876
  %v4311 = vpop.f32.mrf.mxu0
  %v4312 = vadd.f32 0.0, %v4311
  %v4313 = vpop.f32.mrf.mxu0
  %v4314 = vadd.f32 0.0, %v4313
  %4315 = vmatprep.mubr.f32.mxu0 0.0
  %4316 = vmatmul.mubr.f32.gmra.mxu0 %v3878
  %v4317 = vpop.f32.mrf.mxu0
  %v4318 = vadd.f32 0.0, %v4317
  %v4319 = vpop.f32.mrf.mxu0
  %v4320 = vadd.f32 0.0, %v4319
  %4321 = vmatprep.mubr.f32.mxu0 0.0
  %4322 = vmatmul.mubr.f32.gmra.mxu0 %v3880
  %v4323 = vpop.f32.mrf.mxu0
  %v4324 = vadd.f32 0.0, %v4323
  %v4325 = vpop.f32.mrf.mxu0
  %v4326 = vadd.f32 0.0, %v4325
  %4327 = vmatprep.mubr.f32.mxu0 0.0
  %4328 = vmatmul.mubr.f32.gmra.mxu0 %v3882
  %v4329 = vpop.f32.mrf.mxu0
  %v4330 = vadd.f32 0.0, %v4329
  %v4331 = vpop.f32.mrf.mxu0
  %v4332 = vadd.f32 0.0, %v4331
  %4333 = vmatprep.mubr.f32.mxu0 0.0
  %4334 = vmatmul.mubr.f32.gmra.mxu0 %v3884
  %v4335 = vpop.f32.mrf.mxu0
  %v4336 = vadd.f32 0.0, %v4335
  %v4337 = vpop.f32.mrf.mxu0
  %v4338 = vadd.f32 0.0, %v4337
  %4339 = vdwg.mxu0
  %v4348 = vcombine.low %v238, %v240
  %v4349 = vcombine.high %v238, %v240
  %v4351 = vunpack.c.l.s4 1966171168
  %v4352 = vunpack.c.0.s8 %v4351
  %v4353 = vlaneseq
  %v4354 = vshrl.u32 %v4353, 7
  %v4355 = vsub.s32 %v4352, %v4354
  %v4356 = vrot.slane %v4348, %v4355
  %v4358 = vunpack.c.l.s4 1966171168
  %v4359 = vunpack.c.0.s8 %v4358
  %v4360 = vlaneseq
  %v4361 = vshrl.u32 %v4360, 7
  %v4362 = vsub.s32 %v4359, %v4361
  %v4363 = vrot.slane %v4349, %v4362
  %v4364 = vcombine.high %v4356, %v4356
  %v4365 = vcombine.high %v4363, %v4363
  %v4367 = vunpack.c.l.s4 1966171168
  %v4368 = vunpack.c.0.s8 %v4367
  %v4369 = vlaneseq
  %v4370 = vshrl.u32 %v4369, 7
  %v4371 = vsub.s32 %v4368, %v4370
  %v4372 = vrot.slane %v4356, %v4371
  %v4374 = vunpack.c.l.s4 1966171168
  %v4375 = vunpack.c.0.s8 %v4374
  %v4376 = vlaneseq
  %v4377 = vshrl.u32 %v4376, 7
  %v4378 = vsub.s32 %v4375, %v4377
  %v4379 = vrot.slane %v4363, %v4378
  %v4381 = vunpack.c.l.s4 1966171168
  %v4382 = vunpack.c.0.s8 %v4381
  %v4383 = vlaneseq
  %v4384 = vshrl.u32 %v4383, 7
  %v4385 = vsub.s32 %v4382, %v4384
  %v4386 = vrot.slane %v4364, %v4385
  %v4388 = vunpack.c.l.s4 1966171168
  %v4389 = vunpack.c.0.s8 %v4388
  %v4390 = vlaneseq
  %v4391 = vshrl.u32 %v4390, 7
  %v4392 = vsub.s32 %v4389, %v4391
  %v4393 = vrot.slane %v4365, %v4392
  %v4394 = vcombine.high %v4372, %v4372
  %v4395 = vcombine.high %v4379, %v4379
  %v4396 = vcombine.high %v4386, %v4386
  %v4397 = vcombine.high %v4393, %v4393
  %v4398 = vcombine.low %v244, %v246
  %v4399 = vcombine.high %v244, %v246
  %v4401 = vunpack.c.l.s4 1966171168
  %v4402 = vunpack.c.0.s8 %v4401
  %v4403 = vlaneseq
  %v4404 = vshrl.u32 %v4403, 7
  %v4405 = vsub.s32 %v4402, %v4404
  %v4406 = vrot.slane %v4398, %v4405
  %v4408 = vunpack.c.l.s4 1966171168
  %v4409 = vunpack.c.0.s8 %v4408
  %v4410 = vlaneseq
  %v4411 = vshrl.u32 %v4410, 7
  %v4412 = vsub.s32 %v4409, %v4411
  %v4413 = vrot.slane %v4399, %v4412
  %v4414 = vcombine.high %v4406, %v4406
  %v4415 = vcombine.high %v4413, %v4413
  %v4417 = vunpack.c.l.s4 1966171168
  %v4418 = vunpack.c.0.s8 %v4417
  %v4419 = vlaneseq
  %v4420 = vshrl.u32 %v4419, 7
  %v4421 = vsub.s32 %v4418, %v4420
  %v4422 = vrot.slane %v4406, %v4421
  %v4424 = vunpack.c.l.s4 1966171168
  %v4425 = vunpack.c.0.s8 %v4424
  %v4426 = vlaneseq
  %v4427 = vshrl.u32 %v4426, 7
  %v4428 = vsub.s32 %v4425, %v4427
  %v4429 = vrot.slane %v4413, %v4428
  %v4431 = vunpack.c.l.s4 1966171168
  %v4432 = vunpack.c.0.s8 %v4431
  %v4433 = vlaneseq
  %v4434 = vshrl.u32 %v4433, 7
  %v4435 = vsub.s32 %v4432, %v4434
  %v4436 = vrot.slane %v4414, %v4435
  %v4438 = vunpack.c.l.s4 1966171168
  %v4439 = vunpack.c.0.s8 %v4438
  %v4440 = vlaneseq
  %v4441 = vshrl.u32 %v4440, 7
  %v4442 = vsub.s32 %v4439, %v4441
  %v4443 = vrot.slane %v4415, %v4442
  %v4444 = vcombine.high %v4422, %v4422
  %v4445 = vcombine.high %v4429, %v4429
  %v4446 = vcombine.high %v4436, %v4436
  %v4447 = vcombine.high %v4443, %v4443
  %v4448 = vcombine.low %v250, %v252
  %v4449 = vcombine.high %v250, %v252
  %v4451 = vunpack.c.l.s4 1966171168
  %v4452 = vunpack.c.0.s8 %v4451
  %v4453 = vlaneseq
  %v4454 = vshrl.u32 %v4453, 7
  %v4455 = vsub.s32 %v4452, %v4454
  %v4456 = vrot.slane %v4448, %v4455
  %v4458 = vunpack.c.l.s4 1966171168
  %v4459 = vunpack.c.0.s8 %v4458
  %v4460 = vlaneseq
  %v4461 = vshrl.u32 %v4460, 7
  %v4462 = vsub.s32 %v4459, %v4461
  %v4463 = vrot.slane %v4449, %v4462
  %v4464 = vcombine.high %v4456, %v4456
  %v4465 = vcombine.high %v4463, %v4463
  %v4467 = vunpack.c.l.s4 1966171168
  %v4468 = vunpack.c.0.s8 %v4467
  %v4469 = vlaneseq
  %v4470 = vshrl.u32 %v4469, 7
  %v4471 = vsub.s32 %v4468, %v4470
  %v4472 = vrot.slane %v4456, %v4471
  %v4474 = vunpack.c.l.s4 1966171168
  %v4475 = vunpack.c.0.s8 %v4474
  %v4476 = vlaneseq
  %v4477 = vshrl.u32 %v4476, 7
  %v4478 = vsub.s32 %v4475, %v4477
  %v4479 = vrot.slane %v4463, %v4478
  %v4481 = vunpack.c.l.s4 1966171168
  %v4482 = vunpack.c.0.s8 %v4481
  %v4483 = vlaneseq
  %v4484 = vshrl.u32 %v4483, 7
  %v4485 = vsub.s32 %v4482, %v4484
  %v4486 = vrot.slane %v4464, %v4485
  %v4488 = vunpack.c.l.s4 1966171168
  %v4489 = vunpack.c.0.s8 %v4488
  %v4490 = vlaneseq
  %v4491 = vshrl.u32 %v4490, 7
  %v4492 = vsub.s32 %v4489, %v4491
  %v4493 = vrot.slane %v4465, %v4492
  %v4494 = vcombine.high %v4472, %v4472
  %v4495 = vcombine.high %v4479, %v4479
  %v4496 = vcombine.high %v4486, %v4486
  %v4497 = vcombine.high %v4493, %v4493
  %v4498 = vcombine.low %v256, %v258
  %v4499 = vcombine.high %v256, %v258
  %v4501 = vunpack.c.l.s4 1966171168
  %v4502 = vunpack.c.0.s8 %v4501
  %v4503 = vlaneseq
  %v4504 = vshrl.u32 %v4503, 7
  %v4505 = vsub.s32 %v4502, %v4504
  %v4506 = vrot.slane %v4498, %v4505
  %v4508 = vunpack.c.l.s4 1966171168
  %v4509 = vunpack.c.0.s8 %v4508
  %v4510 = vlaneseq
  %v4511 = vshrl.u32 %v4510, 7
  %v4512 = vsub.s32 %v4509, %v4511
  %v4513 = vrot.slane %v4499, %v4512
  %v4514 = vcombine.high %v4506, %v4506
  %v4515 = vcombine.high %v4513, %v4513
  %v4517 = vunpack.c.l.s4 1966171168
  %v4518 = vunpack.c.0.s8 %v4517
  %v4519 = vlaneseq
  %v4520 = vshrl.u32 %v4519, 7
  %v4521 = vsub.s32 %v4518, %v4520
  %v4522 = vrot.slane %v4506, %v4521
  %v4524 = vunpack.c.l.s4 1966171168
  %v4525 = vunpack.c.0.s8 %v4524
  %v4526 = vlaneseq
  %v4527 = vshrl.u32 %v4526, 7
  %v4528 = vsub.s32 %v4525, %v4527
  %v4529 = vrot.slane %v4513, %v4528
  %v4531 = vunpack.c.l.s4 1966171168
  %v4532 = vunpack.c.0.s8 %v4531
  %v4533 = vlaneseq
  %v4534 = vshrl.u32 %v4533, 7
  %v4535 = vsub.s32 %v4532, %v4534
  %v4536 = vrot.slane %v4514, %v4535
  %v4538 = vunpack.c.l.s4 1966171168
  %v4539 = vunpack.c.0.s8 %v4538
  %v4540 = vlaneseq
  %v4541 = vshrl.u32 %v4540, 7
  %v4542 = vsub.s32 %v4539, %v4541
  %v4543 = vrot.slane %v4515, %v4542
  %v4544 = vcombine.high %v4522, %v4522
  %v4545 = vcombine.high %v4529, %v4529
  %v4546 = vcombine.high %v4536, %v4536
  %v4547 = vcombine.high %v4543, %v4543
  %v4548 = vlaneseq
  %v4549 = vshrl.u32 %v4548, 7
  %v4550 = vsub.s32 0, %v4549
  %v4551 = vrot.slane %v4372, %v4550
  %v4552 = vlaneseq
  %v4553 = vshrl.u32 %v4552, 7
  %v4554 = vsub.s32 1, %v4553
  %v4555 = vrot.slane %v4372, %v4554
  %v4556 = vlaneseq
  %v4557 = vshrl.u32 %v4556, 7
  %v4558 = vsub.s32 0, %v4557
  %v4559 = vrot.slane %v4386, %v4558
  %v4560 = vlaneseq
  %v4561 = vshrl.u32 %v4560, 7
  %v4562 = vsub.s32 1, %v4561
  %v4563 = vrot.slane %v4386, %v4562
  %v4564 = vlaneseq
  %v4565 = vshrl.u32 %v4564, 7
  %v4566 = vsub.s32 0, %v4565
  %v4567 = vrot.slane %v4394, %v4566
  %v4568 = vlaneseq
  %v4569 = vshrl.u32 %v4568, 7
  %v4570 = vsub.s32 1, %v4569
  %v4571 = vrot.slane %v4394, %v4570
  %v4572 = vlaneseq
  %v4573 = vshrl.u32 %v4572, 7
  %v4574 = vsub.s32 0, %v4573
  %v4575 = vrot.slane %v4396, %v4574
  %v4576 = vlaneseq
  %v4577 = vshrl.u32 %v4576, 7
  %v4578 = vsub.s32 1, %v4577
  %v4579 = vrot.slane %v4396, %v4578
  %v4580 = vlaneseq
  %v4581 = vshrl.u32 %v4580, 7
  %v4582 = vsub.s32 0, %v4581
  %v4583 = vrot.slane %v4379, %v4582
  %v4584 = vlaneseq
  %v4585 = vshrl.u32 %v4584, 7
  %v4586 = vsub.s32 1, %v4585
  %v4587 = vrot.slane %v4379, %v4586
  %v4588 = vlaneseq
  %v4589 = vshrl.u32 %v4588, 7
  %v4590 = vsub.s32 0, %v4589
  %v4591 = vrot.slane %v4393, %v4590
  %v4592 = vlaneseq
  %v4593 = vshrl.u32 %v4592, 7
  %v4594 = vsub.s32 1, %v4593
  %v4595 = vrot.slane %v4393, %v4594
  %v4596 = vlaneseq
  %v4597 = vshrl.u32 %v4596, 7
  %v4598 = vsub.s32 0, %v4597
  %v4599 = vrot.slane %v4395, %v4598
  %v4600 = vlaneseq
  %v4601 = vshrl.u32 %v4600, 7
  %v4602 = vsub.s32 1, %v4601
  %v4603 = vrot.slane %v4395, %v4602
  %v4604 = vlaneseq
  %v4605 = vshrl.u32 %v4604, 7
  %v4606 = vsub.s32 0, %v4605
  %v4607 = vrot.slane %v4397, %v4606
  %v4608 = vlaneseq
  %v4609 = vshrl.u32 %v4608, 7
  %v4610 = vsub.s32 1, %v4609
  %v4611 = vrot.slane %v4397, %v4610
  %v4612 = vlaneseq
  %v4613 = vshrl.u32 %v4612, 7
  %v4614 = vsub.s32 0, %v4613
  %v4615 = vrot.slane %v4422, %v4614
  %v4616 = vlaneseq
  %v4617 = vshrl.u32 %v4616, 7
  %v4618 = vsub.s32 1, %v4617
  %v4619 = vrot.slane %v4422, %v4618
  %v4620 = vlaneseq
  %v4621 = vshrl.u32 %v4620, 7
  %v4622 = vsub.s32 0, %v4621
  %v4623 = vrot.slane %v4436, %v4622
  %v4624 = vlaneseq
  %v4625 = vshrl.u32 %v4624, 7
  %v4626 = vsub.s32 1, %v4625
  %v4627 = vrot.slane %v4436, %v4626
  %v4628 = vlaneseq
  %v4629 = vshrl.u32 %v4628, 7
  %v4630 = vsub.s32 0, %v4629
  %v4631 = vrot.slane %v4444, %v4630
  %v4632 = vlaneseq
  %v4633 = vshrl.u32 %v4632, 7
  %v4634 = vsub.s32 1, %v4633
  %v4635 = vrot.slane %v4444, %v4634
  %v4636 = vlaneseq
  %v4637 = vshrl.u32 %v4636, 7
  %v4638 = vsub.s32 0, %v4637
  %v4639 = vrot.slane %v4446, %v4638
  %v4640 = vlaneseq
  %v4641 = vshrl.u32 %v4640, 7
  %v4642 = vsub.s32 1, %v4641
  %v4643 = vrot.slane %v4446, %v4642
  %v4644 = vlaneseq
  %v4645 = vshrl.u32 %v4644, 7
  %v4646 = vsub.s32 0, %v4645
  %v4647 = vrot.slane %v4429, %v4646
  %v4648 = vlaneseq
  %v4649 = vshrl.u32 %v4648, 7
  %v4650 = vsub.s32 1, %v4649
  %v4651 = vrot.slane %v4429, %v4650
  %v4652 = vlaneseq
  %v4653 = vshrl.u32 %v4652, 7
  %v4654 = vsub.s32 0, %v4653
  %v4655 = vrot.slane %v4443, %v4654
  %v4656 = vlaneseq
  %v4657 = vshrl.u32 %v4656, 7
  %v4658 = vsub.s32 1, %v4657
  %v4659 = vrot.slane %v4443, %v4658
  %v4660 = vlaneseq
  %v4661 = vshrl.u32 %v4660, 7
  %v4662 = vsub.s32 0, %v4661
  %v4663 = vrot.slane %v4445, %v4662
  %v4664 = vlaneseq
  %v4665 = vshrl.u32 %v4664, 7
  %v4666 = vsub.s32 1, %v4665
  %v4667 = vrot.slane %v4445, %v4666
  %v4668 = vlaneseq
  %v4669 = vshrl.u32 %v4668, 7
  %v4670 = vsub.s32 0, %v4669
  %v4671 = vrot.slane %v4447, %v4670
  %v4672 = vlaneseq
  %v4673 = vshrl.u32 %v4672, 7
  %v4674 = vsub.s32 1, %v4673
  %v4675 = vrot.slane %v4447, %v4674
  %v4676 = vlaneseq
  %v4677 = vshrl.u32 %v4676, 7
  %v4678 = vsub.s32 0, %v4677
  %v4679 = vrot.slane %v4472, %v4678
  %v4680 = vlaneseq
  %v4681 = vshrl.u32 %v4680, 7
  %v4682 = vsub.s32 1, %v4681
  %v4683 = vrot.slane %v4472, %v4682
  %v4684 = vlaneseq
  %v4685 = vshrl.u32 %v4684, 7
  %v4686 = vsub.s32 0, %v4685
  %v4687 = vrot.slane %v4486, %v4686
  %v4688 = vlaneseq
  %v4689 = vshrl.u32 %v4688, 7
  %v4690 = vsub.s32 1, %v4689
  %v4691 = vrot.slane %v4486, %v4690
  %v4692 = vlaneseq
  %v4693 = vshrl.u32 %v4692, 7
  %v4694 = vsub.s32 0, %v4693
  %v4695 = vrot.slane %v4494, %v4694
  %v4696 = vlaneseq
  %v4697 = vshrl.u32 %v4696, 7
  %v4698 = vsub.s32 1, %v4697
  %v4699 = vrot.slane %v4494, %v4698
  %v4700 = vlaneseq
  %v4701 = vshrl.u32 %v4700, 7
  %v4702 = vsub.s32 0, %v4701
  %v4703 = vrot.slane %v4496, %v4702
  %v4704 = vlaneseq
  %v4705 = vshrl.u32 %v4704, 7
  %v4706 = vsub.s32 1, %v4705
  %v4707 = vrot.slane %v4496, %v4706
  %v4708 = vlaneseq
  %v4709 = vshrl.u32 %v4708, 7
  %v4710 = vsub.s32 0, %v4709
  %v4711 = vrot.slane %v4479, %v4710
  %v4712 = vlaneseq
  %v4713 = vshrl.u32 %v4712, 7
  %v4714 = vsub.s32 1, %v4713
  %v4715 = vrot.slane %v4479, %v4714
  %v4716 = vlaneseq
  %v4717 = vshrl.u32 %v4716, 7
  %v4718 = vsub.s32 0, %v4717
  %v4719 = vrot.slane %v4493, %v4718
  %v4720 = vlaneseq
  %v4721 = vshrl.u32 %v4720, 7
  %v4722 = vsub.s32 1, %v4721
  %v4723 = vrot.slane %v4493, %v4722
  %v4724 = vlaneseq
  %v4725 = vshrl.u32 %v4724, 7
  %v4726 = vsub.s32 0, %v4725
  %v4727 = vrot.slane %v4495, %v4726
  %v4728 = vlaneseq
  %v4729 = vshrl.u32 %v4728, 7
  %v4730 = vsub.s32 1, %v4729
  %v4731 = vrot.slane %v4495, %v4730
  %v4732 = vlaneseq
  %v4733 = vshrl.u32 %v4732, 7
  %v4734 = vsub.s32 0, %v4733
  %v4735 = vrot.slane %v4497, %v4734
  %v4736 = vlaneseq
  %v4737 = vshrl.u32 %v4736, 7
  %v4738 = vsub.s32 1, %v4737
  %v4739 = vrot.slane %v4497, %v4738
  %v4740 = vlaneseq
  %v4741 = vshrl.u32 %v4740, 7
  %v4742 = vsub.s32 0, %v4741
  %v4743 = vrot.slane %v4522, %v4742
  %v4744 = vlaneseq
  %v4745 = vshrl.u32 %v4744, 7
  %v4746 = vsub.s32 1, %v4745
  %v4747 = vrot.slane %v4522, %v4746
  %v4748 = vlaneseq
  %v4749 = vshrl.u32 %v4748, 7
  %v4750 = vsub.s32 0, %v4749
  %v4751 = vrot.slane %v4536, %v4750
  %v4752 = vlaneseq
  %v4753 = vshrl.u32 %v4752, 7
  %v4754 = vsub.s32 1, %v4753
  %v4755 = vrot.slane %v4536, %v4754
  %v4756 = vlaneseq
  %v4757 = vshrl.u32 %v4756, 7
  %v4758 = vsub.s32 0, %v4757
  %v4759 = vrot.slane %v4544, %v4758
  %v4760 = vlaneseq
  %v4761 = vshrl.u32 %v4760, 7
  %v4762 = vsub.s32 1, %v4761
  %v4763 = vrot.slane %v4544, %v4762
  %v4764 = vlaneseq
  %v4765 = vshrl.u32 %v4764, 7
  %v4766 = vsub.s32 0, %v4765
  %v4767 = vrot.slane %v4546, %v4766
  %v4768 = vlaneseq
  %v4769 = vshrl.u32 %v4768, 7
  %v4770 = vsub.s32 1, %v4769
  %v4771 = vrot.slane %v4546, %v4770
  %v4772 = vlaneseq
  %v4773 = vshrl.u32 %v4772, 7
  %v4774 = vsub.s32 0, %v4773
  %v4775 = vrot.slane %v4529, %v4774
  %v4776 = vlaneseq
  %v4777 = vshrl.u32 %v4776, 7
  %v4778 = vsub.s32 1, %v4777
  %v4779 = vrot.slane %v4529, %v4778
  %v4780 = vlaneseq
  %v4781 = vshrl.u32 %v4780, 7
  %v4782 = vsub.s32 0, %v4781
  %v4783 = vrot.slane %v4543, %v4782
  %v4784 = vlaneseq
  %v4785 = vshrl.u32 %v4784, 7
  %v4786 = vsub.s32 1, %v4785
  %v4787 = vrot.slane %v4543, %v4786
  %v4788 = vlaneseq
  %v4789 = vshrl.u32 %v4788, 7
  %v4790 = vsub.s32 0, %v4789
  %v4791 = vrot.slane %v4545, %v4790
  %v4792 = vlaneseq
  %v4793 = vshrl.u32 %v4792, 7
  %v4794 = vsub.s32 1, %v4793
  %v4795 = vrot.slane %v4545, %v4794
  %v4796 = vlaneseq
  %v4797 = vshrl.u32 %v4796, 7
  %v4798 = vsub.s32 0, %v4797
  %v4799 = vrot.slane %v4547, %v4798
  %v4800 = vlaneseq
  %v4801 = vshrl.u32 %v4800, 7
  %v4802 = vsub.s32 1, %v4801
  %v4803 = vrot.slane %v4547, %v4802
  %v4868 = vmul.f32 %v4551, %v1142
  %v4869 = vmul.f32 %v4555, %v1144
  %v4870 = vmul.f32 %v4551, %v1148
  %v4871 = vmul.f32 %v4555, %v1150
  %v4872 = vmul.f32 %v4559, %v1154
  %v4873 = vmul.f32 %v4563, %v1156
  %v4874 = vmul.f32 %v4559, %v1160
  %v4875 = vmul.f32 %v4563, %v1162
  %v4876 = vmul.f32 %v4567, %v1166
  %v4877 = vmul.f32 %v4571, %v1168
  %v4878 = vmul.f32 %v4567, %v1172
  %v4879 = vmul.f32 %v4571, %v1174
  %v4880 = vmul.f32 %v4575, %v1178
  %v4881 = vmul.f32 %v4579, %v1180
  %v4882 = vmul.f32 %v4575, %v1184
  %v4883 = vmul.f32 %v4579, %v1186
  %v4884 = vmul.f32 %v4583, %v1190
  %v4885 = vmul.f32 %v4587, %v1192
  %v4886 = vmul.f32 %v4583, %v1196
  %v4887 = vmul.f32 %v4587, %v1198
  %v4888 = vmul.f32 %v4591, %v1202
  %v4889 = vmul.f32 %v4595, %v1204
  %v4890 = vmul.f32 %v4591, %v1208
  %v4891 = vmul.f32 %v4595, %v1210
  %v4892 = vmul.f32 %v4599, %v1214
  %v4893 = vmul.f32 %v4603, %v1216
  %v4894 = vmul.f32 %v4599, %v1220
  %v4895 = vmul.f32 %v4603, %v1222
  %v4896 = vmul.f32 %v4607, %v1226
  %v4897 = vmul.f32 %v4611, %v1228
  %v4898 = vmul.f32 %v4607, %v1232
  %v4899 = vmul.f32 %v4611, %v1234
  %v4900 = vmul.f32 %v4615, %v1238
  %v4901 = vmul.f32 %v4619, %v1240
  %v4902 = vmul.f32 %v4615, %v1244
  %v4903 = vmul.f32 %v4619, %v1246
  %v4904 = vmul.f32 %v4623, %v1250
  %v4905 = vmul.f32 %v4627, %v1252
  %v4906 = vmul.f32 %v4623, %v1256
  %v4907 = vmul.f32 %v4627, %v1258
  %v4908 = vmul.f32 %v4631, %v1262
  %v4909 = vmul.f32 %v4635, %v1264
  %v4910 = vmul.f32 %v4631, %v1268
  %v4911 = vmul.f32 %v4635, %v1270
  %v4912 = vmul.f32 %v4639, %v1274
  %v4913 = vmul.f32 %v4643, %v1276
  %v4914 = vmul.f32 %v4639, %v1280
  %v4915 = vmul.f32 %v4643, %v1282
  %v4916 = vmul.f32 %v4647, %v1286
  %v4917 = vmul.f32 %v4651, %v1288
  %v4918 = vmul.f32 %v4647, %v1292
  %v4919 = vmul.f32 %v4651, %v1294
  %v4920 = vmul.f32 %v4655, %v1298
  %v4921 = vmul.f32 %v4659, %v1300
  %v4922 = vmul.f32 %v4655, %v1304
  %v4923 = vmul.f32 %v4659, %v1306
  %v4924 = vmul.f32 %v4663, %v1310
  %v4925 = vmul.f32 %v4667, %v1312
  %v4926 = vmul.f32 %v4663, %v1316
  %v4927 = vmul.f32 %v4667, %v1318
  %v4928 = vmul.f32 %v4671, %v1322
  %v4929 = vmul.f32 %v4675, %v1324
  %v4930 = vmul.f32 %v4671, %v1328
  %v4931 = vmul.f32 %v4675, %v1330
  %v4932 = vmul.f32 %v4679, %v1334
  %v4933 = vmul.f32 %v4683, %v1336
  %v4934 = vmul.f32 %v4679, %v1340
  %v4935 = vmul.f32 %v4683, %v1342
  %v4936 = vmul.f32 %v4687, %v1346
  %v4937 = vmul.f32 %v4691, %v1348
  %v4938 = vmul.f32 %v4687, %v1352
  %v4939 = vmul.f32 %v4691, %v1354
  %v4940 = vmul.f32 %v4695, %v1358
  %v4941 = vmul.f32 %v4699, %v1360
  %v4942 = vmul.f32 %v4695, %v1364
  %v4943 = vmul.f32 %v4699, %v1366
  %v4944 = vmul.f32 %v4703, %v1370
  %v4945 = vmul.f32 %v4707, %v1372
  %v4946 = vmul.f32 %v4703, %v1376
  %v4947 = vmul.f32 %v4707, %v1378
  %v4948 = vmul.f32 %v4711, %v1382
  %v4949 = vmul.f32 %v4715, %v1384
  %v4950 = vmul.f32 %v4711, %v1388
  %v4951 = vmul.f32 %v4715, %v1390
  %v4952 = vmul.f32 %v4719, %v1394
  %v4953 = vmul.f32 %v4723, %v1396
  %v4954 = vmul.f32 %v4719, %v1400
  %v4955 = vmul.f32 %v4723, %v1402
  %v4956 = vmul.f32 %v4727, %v1406
  %v4957 = vmul.f32 %v4731, %v1408
  %v4958 = vmul.f32 %v4727, %v1412
  %v4959 = vmul.f32 %v4731, %v1414
  %v4960 = vmul.f32 %v4735, %v1418
  %v4961 = vmul.f32 %v4739, %v1420
  %v4962 = vmul.f32 %v4735, %v1424
  %v4963 = vmul.f32 %v4739, %v1426
  %v4964 = vmul.f32 %v4743, %v1430
  %v4965 = vmul.f32 %v4747, %v1432
  %v4966 = vmul.f32 %v4743, %v1436
  %v4967 = vmul.f32 %v4747, %v1438
  %v4968 = vmul.f32 %v4751, %v1442
  %v4969 = vmul.f32 %v4755, %v1444
  %v4970 = vmul.f32 %v4751, %v1448
  %v4971 = vmul.f32 %v4755, %v1450
  %v4972 = vmul.f32 %v4759, %v1454
  %v4973 = vmul.f32 %v4763, %v1456
  %v4974 = vmul.f32 %v4759, %v1460
  %v4975 = vmul.f32 %v4763, %v1462
  %v4976 = vmul.f32 %v4767, %v1466
  %v4977 = vmul.f32 %v4771, %v1468
  %v4978 = vmul.f32 %v4767, %v1472
  %v4979 = vmul.f32 %v4771, %v1474
  %v4980 = vmul.f32 %v4775, %v1478
  %v4981 = vmul.f32 %v4779, %v1480
  %v4982 = vmul.f32 %v4775, %v1484
  %v4983 = vmul.f32 %v4779, %v1486
  %v4984 = vmul.f32 %v4783, %v1490
  %v4985 = vmul.f32 %v4787, %v1492
  %v4986 = vmul.f32 %v4783, %v1496
  %v4987 = vmul.f32 %v4787, %v1498
  %v4988 = vmul.f32 %v4791, %v1502
  %v4989 = vmul.f32 %v4795, %v1504
  %v4990 = vmul.f32 %v4791, %v1508
  %v4991 = vmul.f32 %v4795, %v1510
  %v4992 = vmul.f32 %v4799, %v1514
  %v4993 = vmul.f32 %v4803, %v1516
  %v4994 = vmul.f32 %v4799, %v1520
  %v4995 = vmul.f32 %v4803, %v1522
  %v4996 = vmul.f32 %v4868, %v3958
  %v4997 = vmul.f32 %v4869, %v3960
  %v4998 = vmul.f32 %v4870, %v3964
  %v4999 = vmul.f32 %v4871, %v3966
  %v5000 = vmul.f32 %v4872, %v3970
  %v5001 = vmul.f32 %v4873, %v3972
  %v5002 = vmul.f32 %v4874, %v3976
  %v5003 = vmul.f32 %v4875, %v3978
  %v5004 = vmul.f32 %v4876, %v3982
  %v5005 = vmul.f32 %v4877, %v3984
  %v5006 = vmul.f32 %v4878, %v3988
  %v5007 = vmul.f32 %v4879, %v3990
  %v5008 = vmul.f32 %v4880, %v3994
  %v5009 = vmul.f32 %v4881, %v3996
  %v5010 = vmul.f32 %v4882, %v4000
  %v5011 = vmul.f32 %v4883, %v4002
  %v5012 = vmul.f32 %v4884, %v4006
  %v5013 = vmul.f32 %v4885, %v4008
  %v5014 = vmul.f32 %v4886, %v4012
  %v5015 = vmul.f32 %v4887, %v4014
  %v5016 = vmul.f32 %v4888, %v4018
  %v5017 = vmul.f32 %v4889, %v4020
  %v5018 = vmul.f32 %v4890, %v4024
  %v5019 = vmul.f32 %v4891, %v4026
  %v5020 = vmul.f32 %v4892, %v4030
  %v5021 = vmul.f32 %v4893, %v4032
  %v5022 = vmul.f32 %v4894, %v4036
  %v5023 = vmul.f32 %v4895, %v4038
  %v5024 = vmul.f32 %v4896, %v4042
  %v5025 = vmul.f32 %v4897, %v4044
  %v5026 = vmul.f32 %v4898, %v4048
  %v5027 = vmul.f32 %v4899, %v4050
  %v5028 = vmul.f32 %v4900, %v4054
  %v5029 = vmul.f32 %v4901, %v4056
  %v5030 = vmul.f32 %v4902, %v4060
  %v5031 = vmul.f32 %v4903, %v4062
  %v5032 = vmul.f32 %v4904, %v4066
  %v5033 = vmul.f32 %v4905, %v4068
  %v5034 = vmul.f32 %v4906, %v4072
  %v5035 = vmul.f32 %v4907, %v4074
  %v5036 = vmul.f32 %v4908, %v4078
  %v5037 = vmul.f32 %v4909, %v4080
  %v5038 = vmul.f32 %v4910, %v4084
  %v5039 = vmul.f32 %v4911, %v4086
  %v5040 = vmul.f32 %v4912, %v4090
  %v5041 = vmul.f32 %v4913, %v4092
  %v5042 = vmul.f32 %v4914, %v4096
  %v5043 = vmul.f32 %v4915, %v4098
  %v5044 = vmul.f32 %v4916, %v4102
  %v5045 = vmul.f32 %v4917, %v4104
  %v5046 = vmul.f32 %v4918, %v4108
  %v5047 = vmul.f32 %v4919, %v4110
  %v5048 = vmul.f32 %v4920, %v4114
  %v5049 = vmul.f32 %v4921, %v4116
  %v5050 = vmul.f32 %v4922, %v4120
  %v5051 = vmul.f32 %v4923, %v4122
  %v5052 = vmul.f32 %v4924, %v4126
  %v5053 = vmul.f32 %v4925, %v4128
  %v5054 = vmul.f32 %v4926, %v4132
  %v5055 = vmul.f32 %v4927, %v4134
  %v5056 = vmul.f32 %v4928, %v4138
  %v5057 = vmul.f32 %v4929, %v4140
  %v5058 = vmul.f32 %v4930, %v4144
  %v5059 = vmul.f32 %v4931, %v4146
  %v5060 = vmul.f32 %v4932, %v4150
  %v5061 = vmul.f32 %v4933, %v4152
  %v5062 = vmul.f32 %v4934, %v4156
  %v5063 = vmul.f32 %v4935, %v4158
  %v5064 = vmul.f32 %v4936, %v4162
  %v5065 = vmul.f32 %v4937, %v4164
  %v5066 = vmul.f32 %v4938, %v4168
  %v5067 = vmul.f32 %v4939, %v4170
  %v5068 = vmul.f32 %v4940, %v4174
  %v5069 = vmul.f32 %v4941, %v4176
  %v5070 = vmul.f32 %v4942, %v4180
  %v5071 = vmul.f32 %v4943, %v4182
  %v5072 = vmul.f32 %v4944, %v4186
  %v5073 = vmul.f32 %v4945, %v4188
  %v5074 = vmul.f32 %v4946, %v4192
  %v5075 = vmul.f32 %v4947, %v4194
  %v5076 = vmul.f32 %v4948, %v4198
  %v5077 = vmul.f32 %v4949, %v4200
  %v5078 = vmul.f32 %v4950, %v4204
  %v5079 = vmul.f32 %v4951, %v4206
  %v5080 = vmul.f32 %v4952, %v4210
  %v5081 = vmul.f32 %v4953, %v4212
  %v5082 = vmul.f32 %v4954, %v4216
  %v5083 = vmul.f32 %v4955, %v4218
  %v5084 = vmul.f32 %v4956, %v4222
  %v5085 = vmul.f32 %v4957, %v4224
  %v5086 = vmul.f32 %v4958, %v4228
  %v5087 = vmul.f32 %v4959, %v4230
  %v5088 = vmul.f32 %v4960, %v4234
  %v5089 = vmul.f32 %v4961, %v4236
  %v5090 = vmul.f32 %v4962, %v4240
  %v5091 = vmul.f32 %v4963, %v4242
  %v5092 = vmul.f32 %v4964, %v4246
  %v5093 = vmul.f32 %v4965, %v4248
  %v5094 = vmul.f32 %v4966, %v4252
  %v5095 = vmul.f32 %v4967, %v4254
  %v5096 = vmul.f32 %v4968, %v4258
  %v5097 = vmul.f32 %v4969, %v4260
  %v5098 = vmul.f32 %v4970, %v4264
  %v5099 = vmul.f32 %v4971, %v4266
  %v5100 = vmul.f32 %v4972, %v4270
  %v5101 = vmul.f32 %v4973, %v4272
  %v5102 = vmul.f32 %v4974, %v4276
  %v5103 = vmul.f32 %v4975, %v4278
  %v5104 = vmul.f32 %v4976, %v4282
  %v5105 = vmul.f32 %v4977, %v4284
  %v5106 = vmul.f32 %v4978, %v4288
  %v5107 = vmul.f32 %v4979, %v4290
  %v5108 = vmul.f32 %v4980, %v4294
  %v5109 = vmul.f32 %v4981, %v4296
  %v5110 = vmul.f32 %v4982, %v4300
  %v5111 = vmul.f32 %v4983, %v4302
  %v5112 = vmul.f32 %v4984, %v4306
  %v5113 = vmul.f32 %v4985, %v4308
  %v5114 = vmul.f32 %v4986, %v4312
  %v5115 = vmul.f32 %v4987, %v4314
  %v5116 = vmul.f32 %v4988, %v4318
  %v5117 = vmul.f32 %v4989, %v4320
  %v5118 = vmul.f32 %v4990, %v4324
  %v5119 = vmul.f32 %v4991, %v4326
  %v5120 = vmul.f32 %v4992, %v4330
  %v5121 = vmul.f32 %v4993, %v4332
  %v5122 = vmul.f32 %v4994, %v4336
  %v5123 = vmul.f32 %v4995, %v4338
  %v5124 = vadd.f32 %v4996, %v5000
  %v5125 = vadd.f32 %v5124, %v5004
  %v5126 = vadd.f32 %v5125, %v5008
  %v5127 = vadd.f32 %v5126, %v5012
  %v5128 = vadd.f32 %v5127, %v5016
  %v5129 = vadd.f32 %v5128, %v5020
  %v5130 = vadd.f32 %v5129, %v5024
  %v5131 = vadd.f32 %v5130, %v5028
  %v5132 = vadd.f32 %v5131, %v5032
  %v5133 = vadd.f32 %v5132, %v5036
  %v5134 = vadd.f32 %v5133, %v5040
  %v5135 = vadd.f32 %v5134, %v5044
  %v5136 = vadd.f32 %v5135, %v5048
  %v5137 = vadd.f32 %v5136, %v5052
  %v5138 = vadd.f32 %v5137, %v5056
  %v5139 = vadd.f32 %v4997, %v5001
  %v5140 = vadd.f32 %v5139, %v5005
  %v5141 = vadd.f32 %v5140, %v5009
  %v5142 = vadd.f32 %v5141, %v5013
  %v5143 = vadd.f32 %v5142, %v5017
  %v5144 = vadd.f32 %v5143, %v5021
  %v5145 = vadd.f32 %v5144, %v5025
  %v5146 = vadd.f32 %v5145, %v5029
  %v5147 = vadd.f32 %v5146, %v5033
  %v5148 = vadd.f32 %v5147, %v5037
  %v5149 = vadd.f32 %v5148, %v5041
  %v5150 = vadd.f32 %v5149, %v5045
  %v5151 = vadd.f32 %v5150, %v5049
  %v5152 = vadd.f32 %v5151, %v5053
  %v5153 = vadd.f32 %v5152, %v5057
  %v5154 = vadd.f32 %v4998, %v5002
  %v5155 = vadd.f32 %v5154, %v5006
  %v5156 = vadd.f32 %v5155, %v5010
  %v5157 = vadd.f32 %v5156, %v5014
  %v5158 = vadd.f32 %v5157, %v5018
  %v5159 = vadd.f32 %v5158, %v5022
  %v5160 = vadd.f32 %v5159, %v5026
  %v5161 = vadd.f32 %v5160, %v5030
  %v5162 = vadd.f32 %v5161, %v5034
  %v5163 = vadd.f32 %v5162, %v5038
  %v5164 = vadd.f32 %v5163, %v5042
  %v5165 = vadd.f32 %v5164, %v5046
  %v5166 = vadd.f32 %v5165, %v5050
  %v5167 = vadd.f32 %v5166, %v5054
  %v5168 = vadd.f32 %v5167, %v5058
  %v5169 = vadd.f32 %v4999, %v5003
  %v5170 = vadd.f32 %v5169, %v5007
  %v5171 = vadd.f32 %v5170, %v5011
  %v5172 = vadd.f32 %v5171, %v5015
  %v5173 = vadd.f32 %v5172, %v5019
  %v5174 = vadd.f32 %v5173, %v5023
  %v5175 = vadd.f32 %v5174, %v5027
  %v5176 = vadd.f32 %v5175, %v5031
  %v5177 = vadd.f32 %v5176, %v5035
  %v5178 = vadd.f32 %v5177, %v5039
  %v5179 = vadd.f32 %v5178, %v5043
  %v5180 = vadd.f32 %v5179, %v5047
  %v5181 = vadd.f32 %v5180, %v5051
  %v5182 = vadd.f32 %v5181, %v5055
  %v5183 = vadd.f32 %v5182, %v5059
  %v5184 = vadd.f32 %v5060, %v5064
  %v5185 = vadd.f32 %v5184, %v5068
  %v5186 = vadd.f32 %v5185, %v5072
  %v5187 = vadd.f32 %v5186, %v5076
  %v5188 = vadd.f32 %v5187, %v5080
  %v5189 = vadd.f32 %v5188, %v5084
  %v5190 = vadd.f32 %v5189, %v5088
  %v5191 = vadd.f32 %v5190, %v5092
  %v5192 = vadd.f32 %v5191, %v5096
  %v5193 = vadd.f32 %v5192, %v5100
  %v5194 = vadd.f32 %v5193, %v5104
  %v5195 = vadd.f32 %v5194, %v5108
  %v5196 = vadd.f32 %v5195, %v5112
  %v5197 = vadd.f32 %v5196, %v5116
  %v5198 = vadd.f32 %v5197, %v5120
  %v5199 = vadd.f32 %v5061, %v5065
  %v5200 = vadd.f32 %v5199, %v5069
  %v5201 = vadd.f32 %v5200, %v5073
  %v5202 = vadd.f32 %v5201, %v5077
  %v5203 = vadd.f32 %v5202, %v5081
  %v5204 = vadd.f32 %v5203, %v5085
  %v5205 = vadd.f32 %v5204, %v5089
  %v5206 = vadd.f32 %v5205, %v5093
  %v5207 = vadd.f32 %v5206, %v5097
  %v5208 = vadd.f32 %v5207, %v5101
  %v5209 = vadd.f32 %v5208, %v5105
  %v5210 = vadd.f32 %v5209, %v5109
  %v5211 = vadd.f32 %v5210, %v5113
  %v5212 = vadd.f32 %v5211, %v5117
  %v5213 = vadd.f32 %v5212, %v5121
  %v5214 = vadd.f32 %v5062, %v5066
  %v5215 = vadd.f32 %v5214, %v5070
  %v5216 = vadd.f32 %v5215, %v5074
  %v5217 = vadd.f32 %v5216, %v5078
  %v5218 = vadd.f32 %v5217, %v5082
  %v5219 = vadd.f32 %v5218, %v5086
  %v5220 = vadd.f32 %v5219, %v5090
  %v5221 = vadd.f32 %v5220, %v5094
  %v5222 = vadd.f32 %v5221, %v5098
  %v5223 = vadd.f32 %v5222, %v5102
  %v5224 = vadd.f32 %v5223, %v5106
  %v5225 = vadd.f32 %v5224, %v5110
  %v5226 = vadd.f32 %v5225, %v5114
  %v5227 = vadd.f32 %v5226, %v5118
  %v5228 = vadd.f32 %v5227, %v5122
  %v5229 = vadd.f32 %v5063, %v5067
  %v5230 = vadd.f32 %v5229, %v5071
  %v5231 = vadd.f32 %v5230, %v5075
  %v5232 = vadd.f32 %v5231, %v5079
  %v5233 = vadd.f32 %v5232, %v5083
  %v5234 = vadd.f32 %v5233, %v5087
  %v5235 = vadd.f32 %v5234, %v5091
  %v5236 = vadd.f32 %v5235, %v5095
  %v5237 = vadd.f32 %v5236, %v5099
  %v5238 = vadd.f32 %v5237, %v5103
  %v5239 = vadd.f32 %v5238, %v5107
  %v5240 = vadd.f32 %v5239, %v5111
  %v5241 = vadd.f32 %v5240, %v5115
  %v5242 = vadd.f32 %v5241, %v5119
  %v5243 = vadd.f32 %v5242, %v5123
  %v5244 = vadd.f32 %v5138, %v35
  %v5245 = vadd.f32 %v5153, %v36
  %v5246 = vadd.f32 %v5168, %v37
  %v5247 = vadd.f32 %v5183, %v38
  %v5248 = vadd.f32 %v5198, %v39
  %v5249 = vadd.f32 %v5213, %v40
  %v5250 = vadd.f32 %v5228, %v41
  %v5251 = vadd.f32 %v5243, %v42
  %v5252 = vld [vmem:[%s7] sm:$0x3]
  %v5254 = vlaneseq
  %v5255 = vshrl.u32 %v5254, 7
  %v5256 = vsub.s32 0, %v5255
  %v5257 = vrot.slane %v5252, %v5256
  %v5258 = vlaneseq
  %v5259 = vshrl.u32 %v5258, 7
  %v5260 = vsub.s32 1, %v5259
  %v5261 = vrot.slane %v5252, %v5260
  %v5264 = vadd.f32 %v5244, %v5257
  %v5265 = vadd.f32 %v5245, %v5261
  %v5266 = vadd.f32 %v5246, %v5257
  %v5267 = vadd.f32 %v5247, %v5261
  %v5268 = vadd.f32 %v5248, %v5257
  %v5269 = vadd.f32 %v5249, %v5261
  %v5270 = vadd.f32 %v5250, %v5257
  %v5271 = vadd.f32 %v5251, %v5261
  %vm5272 = vcmp.gt.f32.partialorder %v5264, 0.0
  %vm5273 = vcmp.gt.f32.partialorder %v5265, 0.0
  %vm5274 = vcmp.gt.f32.partialorder %v5266, 0.0
  %vm5275 = vcmp.gt.f32.partialorder %v5267, 0.0
  %vm5276 = vcmp.gt.f32.partialorder %v5268, 0.0
  %vm5277 = vcmp.gt.f32.partialorder %v5269, 0.0
  %vm5278 = vcmp.gt.f32.partialorder %v5270, 0.0
  %vm5279 = vcmp.gt.f32.partialorder %v5271, 0.0
  %v5280 = vmul.f32 %v5264, 1.442695
  %v5281 = vpow.pop %v5280
  %v5282 = vmul.f32 %v5265, 1.442695
  %v5283 = vpow.pop %v5282
  %v5284 = vmul.f32 %v5266, 1.442695
  %v5285 = vpow.pop %v5284
  %v5286 = vmul.f32 %v5267, 1.442695
  %v5287 = vpow.pop %v5286
  %v5288 = vmul.f32 %v5268, 1.442695
  %v5289 = vpow.pop %v5288
  %v5290 = vmul.f32 %v5269, 1.442695
  %v5291 = vpow.pop %v5290
  %v5292 = vmul.f32 %v5270, 1.442695
  %v5293 = vpow.pop %v5292
  %v5294 = vmul.f32 %v5271, 1.442695
  %v5295 = vpow.pop %v5294
  %v5296 = vsub.f32 %v5281, 1.0
  %v5297 = vsub.f32 %v5283, 1.0
  %v5298 = vsub.f32 %v5285, 1.0
  %v5299 = vsub.f32 %v5287, 1.0
  %v5300 = vsub.f32 %v5289, 1.0
  %v5301 = vsub.f32 %v5291, 1.0
  %v5302 = vsub.f32 %v5293, 1.0
  %v5303 = vsub.f32 %v5295, 1.0
  %v5304 = vsel %vm5272, %v5264, %v5296
  %v5305 = vsel %vm5273, %v5265, %v5297
  %v5306 = vsel %vm5274, %v5266, %v5298
  %v5307 = vsel %vm5275, %v5267, %v5299
  %v5308 = vsel %vm5276, %v5268, %v5300
  %v5309 = vsel %vm5277, %v5269, %v5301
  %v5310 = vsel %vm5278, %v5270, %v5302
  %v5311 = vsel %vm5279, %v5271, %v5303
  %5312 = vst [vmem:[%s10] sm:$0xff] %v5304
  %5313 = vst [vmem:[%s10 + $0x8] sm:$0xff] %v5305
  %5314 = vst [vmem:[%s10 + $0x10] sm:$0xff] %v5306
  %5315 = vst [vmem:[%s10 + $0x18] sm:$0xff] %v5307
  %5316 = vst [vmem:[%s10 + $0x20] sm:$0xff] %v5308
  %5317 = vst [vmem:[%s10 + $0x28] sm:$0xff] %v5309
  %5318 = vst [vmem:[%s10 + $0x30] sm:$0xff] %v5310
  %5319 = vst [vmem:[%s10 + $0x38] sm:$0xff] %v5311
  // Predicated region
  $region42: #{gnn_forward.4} parent=0 // pred_check
    _
  $region43: #{gnn_forward.4} parent=0 // pred_check_branch
    %5321 = sbr.rel (0) target = $region45
  $region44: #{gnn_forward.4} parent=0 // pred_region
    _
  $region45: #{gnn_forward.4} parent=0 // pred_fallthru
    _
  // Predicated region
  $region46: #{gnn_forward.4} parent=0 // pred_check
    _
  $region47: #{gnn_forward.4} parent=0 // pred_check_branch
    %5323 = sbr.rel (0) target = $region49
  $region48: #{gnn_forward.4} parent=0 // pred_region
    _
  $region49: #{gnn_forward.4} parent=0 // pred_fallthru
    _

</llo_original>
